<compile_context>
chip_gen: v7x
topology: tpu7x:2x2x1
jax: 0.10.0
libtpu: 0.0.40
codegen_flags: <defaults>
</compile_context>

<pallas_src>
import math
from functools import partial

import numpy as np
import jax
import jax.numpy as jnp
from jax.experimental import pallas as pl
from jax.experimental.pallas import tpu as pltpu

# ----------------------------- config (small, constructor-consistent) -----------------------------
IMG = 64
STRIDES = [4, 8, 16, 32, 64]          # resnet50 branch of FasterRCNN.__init__
ANCHOR_SIZES = [32, 64, 128, 256, 512]
RATIOS = [2.0, 1.0, 0.5]
NUM_ANCHORS = len(RATIOS)             # 3 anchors / location (scales=[1])
C_FPN = 256
ROI_SIZE = 7
CLIN = 1024
NUM_CLASSES = 8                       # constructor arg (kept small for the demo)
RPN_CONVDEPTH = 1
ROI_MLP_DEPTH = 2
# (score_thr, iou_thr, imtop, min_size, lvtop)  -- inference RPN settings (small imtop/lvtop)
BXSET1 = (0.0, 0.7, 32, 0.0, 64)
# (score_thr, iou_thr, imtop, min_size)         -- inference RoI settings
BXSET2 = (0.05, 0.5, 10, 0.0)
LOG_CLAMP = math.log(1000.0 / 16.0)


def _rnd(v, m):
    return ((v + m - 1) // m) * m


def _pick_tile(p, cap):
    """Largest tile (multiple of 128) that divides padded dim p and is <= cap."""
    if p <= cap:
        return p
    best = 128
    for t in range(128, cap + 1, 128):
        if p % t == 0:
            best = t
    return best


# ----------------------------- Pallas matmul kernel (the MXU hot path) -----------------------------

def _mm_kernel(x_ref, w_ref, b_ref, o_ref, acc_ref, *, act):
    @pl.when(pl.program_id(2) == 0)
    def _():
        acc_ref[...] = jnp.zeros_like(acc_ref)

    # bf16 operands on the MXU, f32 accumulation.
    acc_ref[...] += jnp.dot(x_ref[...].astype(jnp.bfloat16),
                            w_ref[...].astype(jnp.bfloat16),
                            preferred_element_type=jnp.float32)

    @pl.when(pl.program_id(2) == pl.num_programs(2) - 1)
    def _():
        r = acc_ref[...] + b_ref[...]
        if act == "relu":
            r = jnp.maximum(r, 0.0)
        o_ref[...] = r


def apply_linear(x, wp, bp, act=None):
    """y = act(x @ W + b).  wp:(Kp,Np) pre-padded (bf16 for big K), bp:(1,Np) f32.
    Returns (M, Np); caller slices the columns it needs (padded cols are exactly 0)."""
    x = x.astype(jnp.float32)
    M, K = x.shape
    Kp, Np = wp.shape
    tm = min(256, _rnd(max(M, 1), 8))
    Mp = _rnd(max(M, 1), tm)
    tk = _pick_tile(Kp, 2048)
    tn = _pick_tile(Np, 512)
    if (Mp, Kp) != (M, K):
        x = jnp.pad(x, ((0, Mp - M), (0, Kp - K)))
    grid = (Mp // tm, Np // tn, Kp // tk)
    out = pl.pallas_call(
        partial(_mm_kernel, act=act),
        out_shape=jax.ShapeDtypeStruct((Mp, Np), jnp.float32),
        grid_spec=pltpu.PrefetchScalarGridSpec(
            num_scalar_prefetch=0,
            grid=grid,
            in_specs=[
                pl.BlockSpec((tm, tk), lambda i, j, k: (i, k)),
                pl.BlockSpec((tk, tn), lambda i, j, k: (k, j)),
                pl.BlockSpec((1, tn), lambda i, j, k: (0, j)),
            ],
            out_specs=pl.BlockSpec((tm, tn), lambda i, j, k: (i, j)),
            scratch_shapes=[pltpu.VMEM((tm, tn), jnp.float32)],
        ),
        compiler_params=pltpu.CompilerParams(
            dimension_semantics=("parallel", "parallel", "arbitrary"),
            vmem_limit_bytes=32 * 1024 * 1024),
    )(x, wp, bp)
    return out[:M]


# ----------------------------- parameters (deterministic, pre-padded / pre-cast) -------------------

def prep_linear(w, b):
    """Pad weights to TPU-friendly shapes once, cast large weights to bf16 once."""
    K, N = w.shape
    Kp = _rnd(K, 128) if K >= 128 else _rnd(K, 8)
    Np = _rnd(N, 128)
    wp = jnp.pad(w.astype(jnp.float32), ((0, Kp - K), (0, Np - N)))
    if Kp >= 128:
        wp = wp.astype(jnp.bfloat16)
    bp = jnp.pad(b.astype(jnp.float32).reshape(1, -1), ((0, 0), (0, Np - N)))
    return {"w": wp, "b": bp}


def init_params(key):
    def nrm(k, shape, scale=0.05):
        return jax.random.normal(k, shape, jnp.float32) * scale

    keys = iter(jax.random.split(key, 32))
    p = {}
    # backbone+FPN stand-in: per-level 1x1 projection (3 -> 256) fused into ONE
    # block-diagonal weight (3*L -> 256) so all levels run as a single matmul.
    fpn_blocks = [nrm(next(keys), (3, C_FPN)) for _ in STRIDES]
    p["fpn"] = prep_linear(jnp.concatenate(fpn_blocks, axis=0),
                           jnp.zeros((C_FPN,), jnp.float32))
    # RPN: ConvUnit(256,256,3,1,1,'relu') x rpn_convdepth (as im2col matmul, shared over levels)
    p["rpn_conv"] = [prep_linear(nrm(next(keys), (9 * C_FPN, C_FPN)),
                                 jnp.zeros((C_FPN,), jnp.float32))
                     for _ in range(RPN_CONVDEPTH)]
    # fused RPN reg(12) + log(3) 1x1 heads -> one matmul with N=15
    rpn_reg_w = nrm(next(keys), (C_FPN, NUM_ANCHORS * 4))
    rpn_log_w = nrm(next(keys), (C_FPN, NUM_ANCHORS))
    p["rpn_head"] = prep_linear(jnp.concatenate([rpn_reg_w, rpn_log_w], axis=1),
                                jnp.zeros((NUM_ANCHORS * 5,), jnp.float32))
    # RoI head: fc(12544->1024), fc(1024->1024), fused reg(32)+cls(9)
    c1 = C_FPN * ROI_SIZE ** 2
    p["roi_fc"] = []
    for i in range(ROI_MLP_DEPTH):
        p["roi_fc"].append(prep_linear(nrm(next(keys), (c1 if i == 0 else CLIN, CLIN), 0.01),
                                       jnp.zeros((CLIN,), jnp.float32)))
    roi_reg_w = nrm(next(keys), (CLIN, NUM_CLASSES * 4), 0.01)
    roi_cls_w = nrm(next(keys), (CLIN, 1 + NUM_CLASSES), 0.01)
    p["roi_head"] = prep_linear(jnp.concatenate([roi_reg_w, roi_cls_w], axis=1),
                                jnp.zeros((NUM_CLASSES * 4 + 1 + NUM_CLASSES,), jnp.float32))
    return p


# ----------------------------- anchors / priors -----------------------------

def make_anchors(sizes, scales, ratios):
    per_level = []
    for s in sizes:
        anchs = []
        for r in ratios:
            for sc in scales:
                h = s * sc * math.sqrt(r)
                w = s * sc / math.sqrt(r)
                anchs.append((-w / 2, -h / 2, w / 2, h / 2))
        per_level.append(np.asarray(anchs, np.float32))
    return per_level


def get_priors(hw, strides, anchors_per_level):
    H, W = hw
    priors = []
    for stride, anch in zip(strides, anchors_per_level):
        hs, ws = H // stride, W // stride
        ys = np.arange(hs, dtype=np.float32) * stride
        xs = np.arange(ws, dtype=np.float32) * stride
        yy, xx = np.meshgrid(ys, xs, indexing="ij")
        ctr = np.stack([xx, yy, xx, yy], axis=-1).reshape(-1, 1, 4)
        priors.append(jnp.asarray((ctr + anch[None]).reshape(-1, 4)))
    return priors


# ----------------------------- small math helpers (plain JAX, fused by XLA) ------------------------

def decode_boxes(reg, priors, mults):
    """decode_boxes(reg, priors, mults, clamp=True); priors are corner boxes (corner->cwh inside)."""
    mxy, mwh = mults
    pw = priors[..., 2] - priors[..., 0]
    ph = priors[..., 3] - priors[..., 1]
    pcx = priors[..., 0] + 0.5 * pw
    pcy = priors[..., 1] + 0.5 * ph
    dx = reg[..., 0] * mxy
    dy = reg[..., 1] * mxy
    dw = jnp.minimum(reg[..., 2] * mwh, LOG_CLAMP)
    dh = jnp.minimum(reg[..., 3] * mwh, LOG_CLAMP)
    cx = pcx + dx * pw
    cy = pcy + dy * ph
    w = pw * jnp.exp(dw)
    h = ph * jnp.exp(dh)
    return jnp.stack([cx - 0.5 * w, cy - 0.5 * h, cx + 0.5 * w, cy + 0.5 * h], axis=-1)


def clamp_to_canvas(boxes, imsizes, imidx):
    sizes = jnp.asarray(imsizes, jnp.float32)           # (n, 2) = (h, w)
    h = sizes[imidx, 0]
    w = sizes[imidx, 1]
    return jnp.stack([jnp.clip(boxes[:, 0], 0, w), jnp.clip(boxes[:, 1], 0, h),
                      jnp.clip(boxes[:, 2], 0, w), jnp.clip(boxes[:, 3], 0, h)], axis=-1)


def remove_small(boxes, min_size, *extras):
    keep = jnp.nonzero((boxes[:, 2] - boxes[:, 0] >= min_size) &
                       (boxes[:, 3] - boxes[:, 1] >= min_size))[0]
    return (boxes[keep],) + tuple(e[keep] for e in extras)


def get_lvidx(pos, lvlen):
    cum = jnp.cumsum(jnp.asarray(lvlen, jnp.int32))
    return jnp.searchsorted(cum, pos, side="right")


def batched_nms(boxes, scores, groups, iou_thr):
    # TODO(synk): torchvision.ops.batched_nms replaced by plain-JAX greedy NMS (same semantics).
    P = boxes.shape[0]
    if P == 0:
        return jnp.zeros((0,), jnp.int32)
    order = jnp.argsort(-scores)
    b = boxes[order]
    g = groups[order]
    x1, y1, x2, y2 = b[:, 0], b[:, 1], b[:, 2], b[:, 3]
    area = jnp.maximum(x2 - x1, 0) * jnp.maximum(y2 - y1, 0)
    xx1 = jnp.maximum(x1[:, None], x1[None, :])
    yy1 = jnp.maximum(y1[:, None], y1[None, :])
    xx2 = jnp.minimum(x2[:, None], x2[None, :])
    yy2 = jnp.minimum(y2[:, None], y2[None, :])
    inter = jnp.maximum(xx2 - xx1, 0) * jnp.maximum(yy2 - yy1, 0)
    iou = inter / (area[:, None] + area[None, :] - inter + 1e-9)
    supmat = (iou > iou_thr) & (g[:, None] == g[None, :])
    rng = jnp.arange(P)

    def body(i, keep):
        sup = supmat[i] & (rng > i) & keep[i]
        return keep & (~sup)

    keep = jax.lax.fori_loop(0, P, body, jnp.ones((P,), bool))
    return order[jnp.nonzero(keep)[0]]


# ----------------------------- backbone + FPN stand-in -----------------------------

def backbone_fpn_standin(x_nhwc, params):
    # TODO(synk): ResNet50 body + FeaturePyramidNetwork not implemented; stand-in =
    # stride-s average pooling + per-level 1x1 projection (3 -> 256, ReLU).  All levels
    # are projected in ONE Pallas matmul via a block-diagonal weight.
    N, H, W, C = x_nhwc.shape
    L = len(STRIDES)
    rows, shapes = [], []
    for li, s in enumerate(STRIDES):
        hs, ws = H // s, W // s
        pooled = x_nhwc.reshape(N, hs, s, ws, s, C).mean(axis=(2, 4)).reshape(N * hs * ws, C)
        block = jnp.zeros((pooled.shape[0], C * L), pooled.dtype)
        block = block.at[:, li * C:(li + 1) * C].set(pooled)
        rows.append(block)
        shapes.append((N, hs, ws))
    xcat = jnp.concatenate(rows, axis=0)
    proj = apply_linear(xcat, params["fpn"]["w"], params["fpn"]["b"], act="relu")[:, :C_FPN]
    feats, off = [], 0
    for (Nn, hs, ws) in shapes:
        cnt = Nn * hs * ws
        feats.append(proj[off:off + cnt].reshape(Nn, hs, ws, C_FPN))
        off += cnt
    return tuple(feats)


# ----------------------------- RPN -----------------------------

def im2col3x3(x):
    # TODO(synk): materialized im2col (9x activation inflation through HBM); an in-kernel
    # 9-tap accumulation would avoid it at realistic image sizes.
    N, H, W, C = x.shape
    xp = jnp.pad(x, ((0, 0), (1, 1), (1, 1), (0, 0)))
    cols = [xp[:, ky:ky + H, kx:kx + W, :] for ky in range(3) for kx in range(3)]
    return jnp.concatenate(cols, axis=-1).reshape(N * H * W, 9 * C)


def rpn_heads_all_levels(feats, params):
    """RPN conv + fused reg/log 1x1 head, shared across levels -> row-concatenate the
    levels and run ONE conv matmul + ONE head matmul (per conv depth)."""
    shapes = [(f.shape[0], f.shape[1], f.shape[2]) for f in feats]
    cur = list(feats)
    for lay in params["rpn_conv"]:
        cols = jnp.concatenate([im2col3x3(f) for f in cur], axis=0)
        y = apply_linear(cols, lay["w"], lay["b"], act="relu")[:, :C_FPN]
        new, off = [], 0
        for (Nn, Hh, Ww) in shapes:
            cnt = Nn * Hh * Ww
            new.append(y[off:off + cnt].reshape(Nn, Hh, Ww, C_FPN))
            off += cnt
        cur = new
    flat = jnp.concatenate([f.reshape(-1, C_FPN) for f in cur], axis=0)
    head = apply_linear(flat, params["rpn_head"]["w"], params["rpn_head"]["b"])
    regs, logs, off = [], [], 0
    for (Nn, Hh, Ww) in shapes:
        cnt = Nn * Hh * Ww
        h = head[off:off + cnt]
        regs.append(h[:, :NUM_ANCHORS * 4].reshape(Nn, Hh * Ww * NUM_ANCHORS, 4))
        logs.append(h[:, NUM_ANCHORS * 4:NUM_ANCHORS * 5].reshape(Nn, Hh * Ww * NUM_ANCHORS, 1))
        off += cnt
    return regs, logs


def _stage1(x_nhwc, priors, params):
    """Dense pipeline: backbone/FPN stand-in + RPN heads + per-level topk/decode/sigmoid."""
    n = x_nhwc.shape[0]
    feats = backbone_fpn_standin(x_nhwc, params)
    regs, logs = rpn_heads_all_levels(feats, params)
    lvtop = BXSET1[4]
    boxes_l, obj_l = [], []
    for reg, log, pri in zip(regs, logs, priors):
        k = min(lvtop, log.shape[1])
        vals, top = jax.lax.top_k(log[..., 0], k)                       # (n, k)
        reg_g = jnp.take_along_axis(reg, top[..., None], axis=1)        # (n, k, 4)
        pri_g = jnp.take_along_axis(jnp.broadcast_to(pri[None], (n,) + pri.shape),
                                    top[..., None], axis=1)
        boxes_l.append(decode_boxes(reg_g, pri_g, (1.0, 1.0)))
        obj_l.append(jax.nn.sigmoid(vals))
    boxes = jnp.concatenate(boxes_l, axis=1)                            # (n, dim, 4)
    obj = jnp.concatenate(obj_l, axis=1)                                # (n, dim)
    return feats, boxes, obj


stage1 = jax.jit(_stage1)


# ----------------------------- RoI head -----------------------------

def roi_align_multilevel(proposals, imidx, feats, strides, out_size=ROI_SIZE):
    # TODO(synk): simplified RoIAlign — one bilinear sample per output bin (sampling_ratio
    # forced to 1) with clamped borders; aligned=True (-0.5 offset) is applied.
    L = len(feats)
    Hm, Wm = feats[0].shape[1], feats[0].shape[2]
    fstack = jnp.stack([jnp.pad(f, ((0, 0), (0, Hm - f.shape[1]), (0, Wm - f.shape[2]), (0, 0)))
                        for f in feats])
    lvl_h = jnp.asarray([f.shape[1] for f in feats], jnp.int32)
    lvl_w = jnp.asarray([f.shape[2] for f in feats], jnp.int32)
    sarr = jnp.asarray(strides, jnp.float32)

    ws = proposals[:, 2] - proposals[:, 0]
    hs = proposals[:, 3] - proposals[:, 1]
    lvl = jnp.clip(jnp.floor(4 + jnp.log2(jnp.sqrt(jnp.maximum(ws * hs, 1e-6)) / 224.0)),
                   2, 2 + L - 1).astype(jnp.int32) - 2
    grid = jnp.arange(out_size, dtype=jnp.float32) + 0.5

    def one(box, im, lv):
        fmap = fstack[lv, im]
        s = sarr[lv]
        x1 = box[0] / s - 0.5
        y1 = box[1] / s - 0.5
        x2 = box[2] / s - 0.5
        y2 = box[3] / s - 0.5
        xs = x1 + grid * (x2 - x1) / out_size
        ys = y1 + grid * (y2 - y1) / out_size
        yg, xg = jnp.meshgrid(ys, xs, indexing="ij")
        Hl, Wl = lvl_h[lv], lvl_w[lv]
        y0 = jnp.floor(yg)
        x0 = jnp.floor(xg)
        ly = (yg - y0)[..., None]
        lx = (xg - x0)[..., None]
        y0i = jnp.clip(y0.astype(jnp.int32), 0, Hl - 1)
        y1i = jnp.clip(y0.astype(jnp.int32) + 1, 0, Hl - 1)
        x0i = jnp.clip(x0.astype(jnp.int32), 0, Wl - 1)
        x1i = jnp.clip(x0.astype(jnp.int32) + 1, 0, Wl - 1)
        return (fmap[y0i, x0i] * (1 - ly) * (1 - lx) + fmap[y0i, x1i] * (1 - ly) * lx +
                fmap[y1i, x0i] * ly * (1 - lx) + fmap[y1i, x1i] * ly * lx)

    return jax.vmap(one)(proposals, imidx, lvl)       # (P, 7, 7, C)


def _stage2(proposals, imidx, feats, params):
    """Dense RoI pipeline on a fixed-size (padded) proposal set."""
    roi_maps = roi_align_multilevel(proposals, imidx, feats, STRIDES[:len(feats)])
    # match PyTorch flatten order of (P, C, 7, 7)
    x = jnp.transpose(roi_maps, (0, 3, 1, 2)).reshape(roi_maps.shape[0], -1)
    for lay in params["roi_fc"]:
        x = apply_linear(x, lay["w"], lay["b"], act="relu")[:, :CLIN]
    head = apply_linear(x, params["roi_head"]["w"], params["roi_head"]["b"])
    reg = head[:, :NUM_CLASSES * 4].reshape(-1, NUM_CLASSES, 4)
    log = head[:, NUM_CLASSES * 4:NUM_CLASSES * 4 + 1 + NUM_CLASSES]
    scr = jax.nn.softmax(log, axis=-1)
    return reg, scr


stage2 = jax.jit(_stage2)


def roi_postprocess(proposals, imidx, reg, scr_full, imsizes, settings, n):
    score_thr, iou_thr, imtop, min_size = settings
    P = reg.shape[0]
    scr = scr_full[:, :-1]          # bckg_class_first=False -> background is last column
    cls = jnp.broadcast_to(jnp.arange(1 + NUM_CLASSES), (P, 1 + NUM_CLASSES))[:, :-1]
    dim = reg.shape[1]
    regf = reg.reshape(-1, 4)
    scrf = scr.reshape(-1)
    clsf = cls.reshape(-1)
    fidx = jnp.nonzero(scrf > score_thr)[0]
    regf, scrf, clsf = regf[fidx], scrf[fidx], clsf[fidx]
    idx = fidx // dim
    props, pimidx = proposals[idx], imidx[idx]

    # decode_boxes(reg, convert_to_cwh(proposals), mults=(0.1, 0.2), clamp=True)
    boxes = decode_boxes(regf, props, (0.1, 0.2))
    boxes = clamp_to_canvas(boxes, imsizes, pimidx)
    boxes, scrf, clsf, pimidx = remove_small(boxes, min_size, scrf, clsf, pimidx)

    groups = pimidx * 1000 + clsf
    keep = batched_nms(boxes, scrf, groups, iou_thr)
    keep = jnp.concatenate([keep[pimidx[keep] == i][:imtop] for i in range(n)])
    boxes, scrf, clsf, pimidx = boxes[keep], scrf[keep], clsf[keep], pimidx[keep]
    b = [boxes[pimidx == i] for i in range(n)]
    s = [scrf[pimidx == i] for i in range(n)]
    c = [clsf[pimidx == i] for i in range(n)]
    return b, s, c


# ----------------------------- full model forward (inference) -----------------------------

def faster_rcnn_forward(imgs_nchw, params):
    # TODO(synk): preprocess() resize/normalization and prep_targets/training losses are not
    # implemented; sz_orig == sz_used so scale_boxes is the identity.
    N, C, H, W = imgs_nchw.shape
    x = jnp.transpose(imgs_nchw, (0, 2, 3, 1)).astype(jnp.float32)   # NCHW -> NHWC
    imsizes = [(H, W)] * N
    anchors = make_anchors(ANCHOR_SIZES, [1.0], RATIOS)
    priors = tuple(get_priors((H, W), STRIDES, anchors))

    # ---- jitted dense stage 1: backbone/FPN + RPN heads + per-level topk/decode ----
    feats, boxes, obj = stage1(x, priors, params)

    # ---- eager RPN glue (data-dependent shapes: nonzero / NMS / per-image top) ----
    score_thr, iou_thr, imtop1, min_size1, lvtop = BXSET1
    lvlen = [min(lvtop, int(p.shape[0])) for p in priors]
    n, dim = boxes.shape[:2]
    boxes = boxes.reshape(-1, 4)
    obj = obj.reshape(-1)
    idx = jnp.nonzero(obj >= score_thr)[0]
    boxes, obj = boxes[idx], obj[idx]
    imidx = idx // dim
    boxes = clamp_to_canvas(boxes, imsizes, imidx)
    boxes, obj, idx, imidx = remove_small(boxes, min_size1, obj, idx, imidx)
    groups = imidx * 10 + get_lvidx(idx % dim, lvlen)
    keep = batched_nms(boxes, obj, groups, iou_thr)
    keep = jnp.concatenate([keep[imidx[keep] == i][:imtop1] for i in range(n)])
    proposals, pim = boxes[keep], imidx[keep].astype(jnp.int32)

    # ---- jitted dense stage 2: RoIAlign + RoI MLP/heads on fixed-size padded proposals ----
    P = int(proposals.shape[0])
    P_PAD = max(8, _rnd(max(N * imtop1, P), 8))
    props_pad = jnp.pad(proposals, ((0, P_PAD - P), (0, 0)))
    imidx_pad = jnp.pad(pim, (0, P_PAD - P))
    reg, scr = stage2(props_pad, imidx_pad, feats[:-1], params)
    reg, scr = reg[:P], scr[:P]

    # ---- eager RoI glue ----
    return roi_postprocess(proposals, pim, reg, scr, imsizes, BXSET2, N)


# ----------------------------- main -----------------------------

if __name__ == "__main__":
    key = jax.random.PRNGKey(0)
    kp, kx = jax.random.split(key)
    params = init_params(kp)
    imgs = jax.random.uniform(kx, (2, 3, IMG, IMG), jnp.float32)     # PyTorch-style NCHW images
    b, s, c = faster_rcnn_forward(imgs, params)
    jax.block_until_ready((b, s, c))
    b = [np.asarray(t) for t in b]
    s = [np.asarray(t) for t in s]
    c = [np.asarray(t) for t in c]
    print("KERNEL_OK")
</pallas_src>

<mosaic_0001>
module attributes {stable_mosaic.version = 11 : i64} {
  func.func @_mm_kernel(%arg0: i32, %arg1: i32, %arg2: i32, %arg3: memref<256x16xf32, #tpu.memory_space<vmem>>, %arg4: memref<16x256xf32, #tpu.memory_space<vmem>>, %arg5: memref<1x256xf32, #tpu.memory_space<vmem>>, %arg6: memref<256x256xf32, #tpu.memory_space<vmem>>, %arg7: memref<256x256xf32, #tpu.memory_space<vmem>>) attributes {dimension_semantics = [#tpu.dimension_semantics<parallel>, #tpu.dimension_semantics<parallel>, #tpu.dimension_semantics<arbitrary>], iteration_bounds = array<i64: 3, 1, 1>, scalar_prefetch = 0 : i64, scratch_operands = 1 : i64, tpu.core_type = #tpu.core_type<tc>, window_params = [{transform_indices = @transform_0, window_bounds = array<i64: 256, 16>}, {transform_indices = @transform_1, window_bounds = array<i64: 16, 256>}, {transform_indices = @transform_2, window_bounds = array<i64: 1, 256>}, {transform_indices = @transform_3, window_bounds = array<i64: 256, 256>}]} {
    %c0_i32 = arith.constant 0 : i32
    %0 = arith.cmpi eq, %arg2, %c0_i32 : i32
    %1 = arith.extui %0 : i1 to i32
    %c0_i32_0 = arith.constant 0 : i32
    %2 = arith.cmpi ne, %1, %c0_i32_0 : i32
    scf.if %2 {
      %cst_10 = arith.constant 0.000000e+00 : f32
      %14 = vector.broadcast %cst_10 : f32 to vector<256x256xf32>
      %c0_11 = arith.constant 0 : index
      %c0_12 = arith.constant 0 : index
      %15 = vector.load %arg7[%c0_11, %c0_12] : memref<256x256xf32, #tpu.memory_space<vmem>>, vector<256x256xf32>
      tpu.vector_store %arg7[%c0_11, %c0_12], %14 {strides = array<i32>} : memref<256x256xf32, #tpu.memory_space<vmem>>, vector<256x256xf32>,
    } else {
    }
    %c0 = arith.constant 0 : index
    %c0_1 = arith.constant 0 : index
    %3 = vector.load %arg7[%c0, %c0_1] : memref<256x256xf32, #tpu.memory_space<vmem>>, vector<256x256xf32>
    %c0_2 = arith.constant 0 : index
    %c0_3 = arith.constant 0 : index
    %4 = vector.load %arg3[%c0_2, %c0_3] : memref<256x16xf32, #tpu.memory_space<vmem>>, vector<256x16xf32>
    %5 = arith.truncf %4 : vector<256x16xf32> to vector<256x16xbf16>
    %c0_4 = arith.constant 0 : index
    %c0_5 = arith.constant 0 : index
    %6 = vector.load %arg4[%c0_4, %c0_5] : memref<16x256xf32, #tpu.memory_space<vmem>>, vector<16x256xf32>
    %7 = arith.truncf %6 : vector<16x256xf32> to vector<16x256xbf16>
    %cst = arith.constant dense<0.000000e+00> : vector<256x256xf32>
    %8 = tpu.matmul %5, %7, %cst {dimension_numbers = #tpu.dot_dimension_numbers<[1], [0], [0], [1], [0, 0, 1, 1], [], []>} : vector<256x16xbf16>, vector<16x256xbf16>, vector<256x256xf32> -> vector<256x256xf32>
    %9 = arith.addf %3, %8 : vector<256x256xf32>
    %c0_6 = arith.constant 0 : index
    %c0_7 = arith.constant 0 : index
    %10 = vector.load %arg7[%c0_6, %c0_7] : memref<256x256xf32, #tpu.memory_space<vmem>>, vector<256x256xf32>
    tpu.vector_store %arg7[%c0_6, %c0_7], %9 {strides = array<i32>} : memref<256x256xf32, #tpu.memory_space<vmem>>, vector<256x256xf32>,
    %c0_i32_8 = arith.constant 0 : i32
    %11 = arith.cmpi eq, %arg2, %c0_i32_8 : i32
    %12 = arith.extui %11 : i1 to i32
    %c0_i32_9 = arith.constant 0 : i32
    %13 = arith.cmpi ne, %12, %c0_i32_9 : i32
    scf.if %13 {
      %c0_10 = arith.constant 0 : index
      %c0_11 = arith.constant 0 : index
      %14 = vector.load %arg7[%c0_10, %c0_11] : memref<256x256xf32, #tpu.memory_space<vmem>>, vector<256x256xf32>
      %c0_12 = arith.constant 0 : index
      %c0_13 = arith.constant 0 : index
      %15 = vector.load %arg5[%c0_12, %c0_13] : memref<1x256xf32, #tpu.memory_space<vmem>>, vector<1x256xf32>
      %16 = vector.broadcast %15 : vector<1x256xf32> to vector<256x256xf32>
      %17 = arith.addf %14, %16 : vector<256x256xf32>
      %cst_14 = arith.constant 0.000000e+00 : f32
      %18 = vector.broadcast %cst_14 : f32 to vector<256x256xf32>
      %19 = arith.maximumf %17, %18 : vector<256x256xf32>
      %c0_15 = arith.constant 0 : index
      %c0_16 = arith.constant 0 : index
      %20 = vector.load %arg6[%c0_15, %c0_16] : memref<256x256xf32, #tpu.memory_space<vmem>>, vector<256x256xf32>
      tpu.vector_store %arg6[%c0_15, %c0_16], %19 {strides = array<i32>} : memref<256x256xf32, #tpu.memory_space<vmem>>, vector<256x256xf32>,
    } else {
    }
    return
  }
  func.func @transform_0(%arg0: i32, %arg1: i32, %arg2: i32) -> (i32, i32) {
    %c0_i32 = arith.constant 0 : i32
    return %arg0, %arg2 : i32, i32
  }
  func.func @transform_1(%arg0: i32, %arg1: i32, %arg2: i32) -> (i32, i32) {
    %c0_i32 = arith.constant 0 : i32
    return %arg2, %arg1 : i32, i32
  }
  func.func @transform_2(%arg0: i32, %arg1: i32, %arg2: i32) -> (i32, i32) {
    %c0_i32 = arith.constant 0 : i32
    %c0_i32_0 = arith.constant 0 : i32
    return %c0_i32, %arg1 : i32, i32
  }
  func.func @transform_3(%arg0: i32, %arg1: i32, %arg2: i32) -> (i32, i32) {
    %c0_i32 = arith.constant 0 : i32
    return %arg0, %arg1 : i32, i32
  }
}

module attributes {stable_mosaic.version = 11 : i64} {
  func.func @_mm_kernel(%arg0: i32, %arg1: i32, %arg2: i32, %arg3: memref<256x1152xf32, #tpu.memory_space<vmem>>, %arg4: memref<1152x256xbf16, #tpu.memory_space<vmem>>, %arg5: memref<1x256xf32, #tpu.memory_space<vmem>>, %arg6: memref<256x256xf32, #tpu.memory_space<vmem>>, %arg7: memref<256x256xf32, #tpu.memory_space<vmem>>) attributes {dimension_semantics = [#tpu.dimension_semantics<parallel>, #tpu.dimension_semantics<parallel>, #tpu.dimension_semantics<arbitrary>], iteration_bounds = array<i64: 3, 1, 2>, scalar_prefetch = 0 : i64, scratch_operands = 1 : i64, tpu.core_type = #tpu.core_type<tc>, window_params = [{transform_indices = @transform_0, window_bounds = array<i64: 256, 1152>}, {transform_indices = @transform_1, window_bounds = array<i64: 1152, 256>}, {transform_indices = @transform_2, window_bounds = array<i64: 1, 256>}, {transform_indices = @transform_3, window_bounds = array<i64: 256, 256>}]} {
    %c0_i32 = arith.constant 0 : i32
    %0 = arith.cmpi eq, %arg2, %c0_i32 : i32
    %1 = arith.extui %0 : i1 to i32
    %c0_i32_0 = arith.constant 0 : i32
    %2 = arith.cmpi ne, %1, %c0_i32_0 : i32
    scf.if %2 {
      %cst_9 = arith.constant 0.000000e+00 : f32
      %13 = vector.broadcast %cst_9 : f32 to vector<256x256xf32>
      %c0_10 = arith.constant 0 : index
      %c0_11 = arith.constant 0 : index
      %14 = vector.load %arg7[%c0_10, %c0_11] : memref<256x256xf32, #tpu.memory_space<vmem>>, vector<256x256xf32>
      tpu.vector_store %arg7[%c0_10, %c0_11], %13 {strides = array<i32>} : memref<256x256xf32, #tpu.memory_space<vmem>>, vector<256x256xf32>,
    } else {
    }
    %c0 = arith.constant 0 : index
    %c0_1 = arith.constant 0 : index
    %3 = vector.load %arg7[%c0, %c0_1] : memref<256x256xf32, #tpu.memory_space<vmem>>, vector<256x256xf32>
    %c0_2 = arith.constant 0 : index
    %c0_3 = arith.constant 0 : index
    %4 = vector.load %arg3[%c0_2, %c0_3] : memref<256x1152xf32, #tpu.memory_space<vmem>>, vector<256x1152xf32>
    %5 = arith.truncf %4 : vector<256x1152xf32> to vector<256x1152xbf16>
    %c0_4 = arith.constant 0 : index
    %c0_5 = arith.constant 0 : index
    %6 = vector.load %arg4[%c0_4, %c0_5] : memref<1152x256xbf16, #tpu.memory_space<vmem>>, vector<1152x256xbf16>
    %cst = arith.constant dense<0.000000e+00> : vector<256x256xf32>
    %7 = tpu.matmul %5, %6, %cst {dimension_numbers = #tpu.dot_dimension_numbers<[1], [0], [0], [1], [0, 0, 1, 1], [], []>} : vector<256x1152xbf16>, vector<1152x256xbf16>, vector<256x256xf32> -> vector<256x256xf32>
    %8 = arith.addf %3, %7 : vector<256x256xf32>
    %c0_6 = arith.constant 0 : index
    %c0_7 = arith.constant 0 : index
    %9 = vector.load %arg7[%c0_6, %c0_7] : memref<256x256xf32, #tpu.memory_space<vmem>>, vector<256x256xf32>
    tpu.vector_store %arg7[%c0_6, %c0_7], %8 {strides = array<i32>} : memref<256x256xf32, #tpu.memory_space<vmem>>, vector<256x256xf32>,
    %c1_i32 = arith.constant 1 : i32
    %10 = arith.cmpi eq, %arg2, %c1_i32 : i32
    %11 = arith.extui %10 : i1 to i32
    %c0_i32_8 = arith.constant 0 : i32
    %12 = arith.cmpi ne, %11, %c0_i32_8 : i32
    scf.if %12 {
      %c0_9 = arith.constant 0 : index
      %c0_10 = arith.constant 0 : index
      %13 = vector.load %arg7[%c0_9, %c0_10] : memref<256x256xf32, #tpu.memory_space<vmem>>, vector<256x256xf32>
      %c0_11 = arith.constant 0 : index
      %c0_12 = arith.constant 0 : index
      %14 = vector.load %arg5[%c0_11, %c0_12] : memref<1x256xf32, #tpu.memory_space<vmem>>, vector<1x256xf32>
      %15 = vector.broadcast %14 : vector<1x256xf32> to vector<256x256xf32>
      %16 = arith.addf %13, %15 : vector<256x256xf32>
      %cst_13 = arith.constant 0.000000e+00 : f32
      %17 = vector.broadcast %cst_13 : f32 to vector<256x256xf32>
      %18 = arith.maximumf %16, %17 : vector<256x256xf32>
      %c0_14 = arith.constant 0 : index
      %c0_15 = arith.constant 0 : index
      %19 = vector.load %arg6[%c0_14, %c0_15] : memref<256x256xf32, #tpu.memory_space<vmem>>, vector<256x256xf32>
      tpu.vector_store %arg6[%c0_14, %c0_15], %18 {strides = array<i32>} : memref<256x256xf32, #tpu.memory_space<vmem>>, vector<256x256xf32>,
    } else {
    }
    return
  }
  func.func @transform_0(%arg0: i32, %arg1: i32, %arg2: i32) -> (i32, i32) {
    %c0_i32 = arith.constant 0 : i32
    return %arg0, %arg2 : i32, i32
  }
  func.func @transform_1(%arg0: i32, %arg1: i32, %arg2: i32) -> (i32, i32) {
    %c0_i32 = arith.constant 0 : i32
    return %arg2, %arg1 : i32, i32
  }
  func.func @transform_2(%arg0: i32, %arg1: i32, %arg2: i32) -> (i32, i32) {
    %c0_i32 = arith.constant 0 : i32
    %c0_i32_0 = arith.constant 0 : i32
    return %c0_i32, %arg1 : i32, i32
  }
  func.func @transform_3(%arg0: i32, %arg1: i32, %arg2: i32) -> (i32, i32) {
    %c0_i32 = arith.constant 0 : i32
    return %arg0, %arg1 : i32, i32
  }
}

module attributes {stable_mosaic.version = 11 : i64} {
  func.func @_mm_kernel(%arg0: i32, %arg1: i32, %arg2: i32, %arg3: memref<256x256xf32, #tpu.memory_space<vmem>>, %arg4: memref<256x128xbf16, #tpu.memory_space<vmem>>, %arg5: memref<1x128xf32, #tpu.memory_space<vmem>>, %arg6: memref<256x128xf32, #tpu.memory_space<vmem>>, %arg7: memref<256x128xf32, #tpu.memory_space<vmem>>) attributes {dimension_semantics = [#tpu.dimension_semantics<parallel>, #tpu.dimension_semantics<parallel>, #tpu.dimension_semantics<arbitrary>], iteration_bounds = array<i64: 3, 1, 1>, scalar_prefetch = 0 : i64, scratch_operands = 1 : i64, tpu.core_type = #tpu.core_type<tc>, window_params = [{transform_indices = @transform_0, window_bounds = array<i64: 256, 256>}, {transform_indices = @transform_1, window_bounds = array<i64: 256, 128>}, {transform_indices = @transform_2, window_bounds = array<i64: 1, 128>}, {transform_indices = @transform_3, window_bounds = array<i64: 256, 128>}]} {
    %c0_i32 = arith.constant 0 : i32
    %0 = arith.cmpi eq, %arg2, %c0_i32 : i32
    %1 = arith.extui %0 : i1 to i32
    %c0_i32_0 = arith.constant 0 : i32
    %2 = arith.cmpi ne, %1, %c0_i32_0 : i32
    scf.if %2 {
      %cst_10 = arith.constant 0.000000e+00 : f32
      %13 = vector.broadcast %cst_10 : f32 to vector<256x128xf32>
      %c0_11 = arith.constant 0 : index
      %c0_12 = arith.constant 0 : index
      %14 = vector.load %arg7[%c0_11, %c0_12] : memref<256x128xf32, #tpu.memory_space<vmem>>, vector<256x128xf32>
      tpu.vector_store %arg7[%c0_11, %c0_12], %13 {strides = array<i32>} : memref<256x128xf32, #tpu.memory_space<vmem>>, vector<256x128xf32>,
    } else {
    }
    %c0 = arith.constant 0 : index
    %c0_1 = arith.constant 0 : index
    %3 = vector.load %arg7[%c0, %c0_1] : memref<256x128xf32, #tpu.memory_space<vmem>>, vector<256x128xf32>
    %c0_2 = arith.constant 0 : index
    %c0_3 = arith.constant 0 : index
    %4 = vector.load %arg3[%c0_2, %c0_3] : memref<256x256xf32, #tpu.memory_space<vmem>>, vector<256x256xf32>
    %5 = arith.truncf %4 : vector<256x256xf32> to vector<256x256xbf16>
    %c0_4 = arith.constant 0 : index
    %c0_5 = arith.constant 0 : index
    %6 = vector.load %arg4[%c0_4, %c0_5] : memref<256x128xbf16, #tpu.memory_space<vmem>>, vector<256x128xbf16>
    %cst = arith.constant dense<0.000000e+00> : vector<256x128xf32>
    %7 = tpu.matmul %5, %6, %cst {dimension_numbers = #tpu.dot_dimension_numbers<[1], [0], [0], [1], [0, 0, 1, 1], [], []>} : vector<256x256xbf16>, vector<256x128xbf16>, vector<256x128xf32> -> vector<256x128xf32>
    %8 = arith.addf %3, %7 : vector<256x128xf32>
    %c0_6 = arith.constant 0 : index
    %c0_7 = arith.constant 0 : index
    %9 = vector.load %arg7[%c0_6, %c0_7] : memref<256x128xf32, #tpu.memory_space<vmem>>, vector<256x128xf32>
    tpu.vector_store %arg7[%c0_6, %c0_7], %8 {strides = array<i32>} : memref<256x128xf32, #tpu.memory_space<vmem>>, vector<256x128xf32>,
    %c0_i32_8 = arith.constant 0 : i32
    %10 = arith.cmpi eq, %arg2, %c0_i32_8 : i32
    %11 = arith.extui %10 : i1 to i32
    %c0_i32_9 = arith.constant 0 : i32
    %12 = arith.cmpi ne, %11, %c0_i32_9 : i32
    scf.if %12 {
      %c0_10 = arith.constant 0 : index
      %c0_11 = arith.constant 0 : index
      %13 = vector.load %arg7[%c0_10, %c0_11] : memref<256x128xf32, #tpu.memory_space<vmem>>, vector<256x128xf32>
      %c0_12 = arith.constant 0 : index
      %c0_13 = arith.constant 0 : index
      %14 = vector.load %arg5[%c0_12, %c0_13] : memref<1x128xf32, #tpu.memory_space<vmem>>, vector<1x128xf32>
      %15 = vector.broadcast %14 : vector<1x128xf32> to vector<256x128xf32>
      %16 = arith.addf %13, %15 : vector<256x128xf32>
      %c0_14 = arith.constant 0 : index
      %c0_15 = arith.constant 0 : index
      %17 = vector.load %arg6[%c0_14, %c0_15] : memref<256x128xf32, #tpu.memory_space<vmem>>, vector<256x128xf32>
      tpu.vector_store %arg6[%c0_14, %c0_15], %16 {strides = array<i32>} : memref<256x128xf32, #tpu.memory_space<vmem>>, vector<256x128xf32>,
    } else {
    }
    return
  }
  func.func @transform_0(%arg0: i32, %arg1: i32, %arg2: i32) -> (i32, i32) {
    %c0_i32 = arith.constant 0 : i32
    return %arg0, %arg2 : i32, i32
  }
  func.func @transform_1(%arg0: i32, %arg1: i32, %arg2: i32) -> (i32, i32) {
    %c0_i32 = arith.constant 0 : i32
    return %arg2, %arg1 : i32, i32
  }
  func.func @transform_2(%arg0: i32, %arg1: i32, %arg2: i32) -> (i32, i32) {
    %c0_i32 = arith.constant 0 : i32
    %c0_i32_0 = arith.constant 0 : i32
    return %c0_i32, %arg1 : i32, i32
  }
  func.func @transform_3(%arg0: i32, %arg1: i32, %arg2: i32) -> (i32, i32) {
    %c0_i32 = arith.constant 0 : i32
    return %arg0, %arg1 : i32, i32
  }
}

</mosaic_0001>

<llo_original>
// kernel: _stage1.3
$region0: #{_stage1.3}
  #allocation0 [shape = 'u32[]', space=smem, size = 0x4, offset = 0x4, fixed_abs, tag = 'smem constant byte address 0x4 - core index']
  #allocation1 [shape = 'u32[144,128]{1,0:T(1,128)}', space=vmem, size = 0x12000, scoped, tag = 'internal scratch']
  #allocation2 [shape = 'f32[256,256]{1,0:T(8,128)}', space=vmem, size = 0x40000, scoped, tag = 'scratch operand']
  %s0 = inlined_call_operand.vmem [shape: f32[768,16], index: 0, kind: input, shape index: {}]
  %s1 = inlined_call_operand.vmem [shape: f32[16,256], index: 1, kind: input, shape index: {}]
  %s2 = inlined_call_operand.vmem [shape: f32[1,256], index: 2, kind: input, shape index: {}]
  %s3 = inlined_call_operand.vmem [shape: f32[768,256], index: 3, kind: output, shape index: {}]
  %s4 = sld [smem:[#allocation0]]
  $region53: #{_stage1.3} parent=0
    _
  %s6 = ssub.s32 1, %s4
  %s7 = scalar_select 0, %s6, %s4
  loop: start=0, step=1, limit=5
  $region2: #{_stage1.3} parent=0 // loop_pre_header
    _
  $region3: #{_stage1.3} parent=0 // loop_header
    %s9 = sphi 0, %s13
    %p10 = scmp.ge.s32.totalorder %s9, 5
    %s16 = sphi 0, %s35
    %s17 = sphi 0, %s31
    %s18 = sphi 0, %s27
    %s19 = sphi 0, %s16
    %s20 = sphi 0, %s17
    %s21 = sphi 0, %s18
    %s22 = sphi 0, %s19
    %s23 = sphi 0, %s20
    %s24 = sphi 0, %s21
    %s40 = sphi 0, %s42
    %s43 = sphi 0, %s40
    %s44 = sphi 0, %s43
    %s60 = sphi 0, %s44
    %s68 = sphi 0, %s70
    %s71 = sphi 0, %s68
    %s72 = sphi 0, %s71
    %s88 = sphi 0, %s72
    %s94 = sphi 0, %s96
    %s97 = sphi 0, %s94
    %s98 = sphi 0, %s97
    %s114 = sphi 0, %s98
    %s122 = sphi 0, %s124
    %s125 = sphi 0, %s122
    %s126 = sphi 0, %s125
    %s142 = sphi 0, %s126
  $region4: #{_stage1.3} parent=0 // loop_header_branch
    %12 = sbr.rel (%p10) target = $region8
  $region5: #{_stage1.3} parent=0 // loop_body
    %s14 = ssub.s32 %s9, 1
    %s15 = ssub.s32 %s9, 2
    %s25 = sadd.s32 1, %s18
    %p26 = scmp.ge.s32.totalorder %s25, 1
    %s27 = scalar_select %p26, 0, %s25
    %s28 = sadd.s32 1, %s17
    %s29 = scalar_select %p26, %s28, %s17
    %p30 = scmp.ge.s32.totalorder %s29, 1
    %s31 = scalar_select %p30, 0, %s29
    %s32 = sadd.s32 1, %s16
    %s33 = scalar_select %p30, %s32, %s16
    %p34 = scmp.ge.s32.totalorder %s33, 3
    %s35 = scalar_select %p34, 0, %s33
    %s36 = ssub.s32 %s16, %s35
    %s37 = ssub.s32 %s18, %s27
    %s38 = sor.u32 %s36, %s37
    %p39 = scmp.eq.s32.totalorder %s38, 0
    %s41 = sadd.s32 %s40, 1
    %s42 = scalar_select %p39, %s40, %s41
    %p45 = pneg %p39
    %p46 = scmp.eq.s32.totalorder %s9, 2
    %p47 = por %p45, %p46
    %p48 = scmp.ne.s32.totalorder %s40, %s43
    %p49 = scmp.eq.s32.totalorder %s9, 0
    %p50 = por %p48, %p49
    %p51 = scmp.ne.s32.totalorder %s40, %s43
    %p52 = scmp.eq.s32.totalorder %s14, 2
    %p53 = por %p51, %p52
    %p54 = scmp.ne.s32.totalorder %s43, %s44
    %p55 = scmp.eq.s32.totalorder %s14, 0
    %p56 = por %p54, %p55
    %p57 = scmp.ne.s32.totalorder %s43, %s44
    %p58 = scmp.eq.s32.totalorder %s15, 2
    %p59 = por %p57, %p58
    %p61 = scmp.ne.s32.totalorder %s44, %s60
    %p62 = scmp.eq.s32.totalorder %s15, 0
    %p63 = por %p61, %p62
    %s64 = ssub.s32 %s18, %s27
    %s65 = ssub.s32 %s17, %s31
    %s66 = sor.u32 %s64, %s65
    %p67 = scmp.eq.s32.totalorder %s66, 0
    %s69 = sadd.s32 %s68, 1
    %s70 = scalar_select %p67, %s68, %s69
    %p73 = pneg %p67
    %p74 = scmp.eq.s32.totalorder %s9, 2
    %p75 = por %p73, %p74
    %p76 = scmp.ne.s32.totalorder %s68, %s71
    %p77 = scmp.eq.s32.totalorder %s9, 0
    %p78 = por %p76, %p77
    %p79 = scmp.ne.s32.totalorder %s68, %s71
    %p80 = scmp.eq.s32.totalorder %s14, 2
    %p81 = por %p79, %p80
    %p82 = scmp.ne.s32.totalorder %s71, %s72
    %p83 = scmp.eq.s32.totalorder %s14, 0
    %p84 = por %p82, %p83
    %p85 = scmp.ne.s32.totalorder %s71, %s72
    %p86 = scmp.eq.s32.totalorder %s15, 2
    %p87 = por %p85, %p86
    %p89 = scmp.ne.s32.totalorder %s72, %s88
    %p90 = scmp.eq.s32.totalorder %s15, 0
    %p91 = por %p89, %p90
    %s92 = ssub.s32 %s17, %s31
    %p93 = scmp.eq.s32.totalorder %s92, 0
    %s95 = sadd.s32 %s94, 1
    %s96 = scalar_select %p93, %s94, %s95
    %p99 = pneg %p93
    %p100 = scmp.eq.s32.totalorder %s9, 2
    %p101 = por %p99, %p100
    %p102 = scmp.ne.s32.totalorder %s94, %s97
    %p103 = scmp.eq.s32.totalorder %s9, 0
    %p104 = por %p102, %p103
    %p105 = scmp.ne.s32.totalorder %s94, %s97
    %p106 = scmp.eq.s32.totalorder %s14, 2
    %p107 = por %p105, %p106
    %p108 = scmp.ne.s32.totalorder %s97, %s98
    %p109 = scmp.eq.s32.totalorder %s14, 0
    %p110 = por %p108, %p109
    %p111 = scmp.ne.s32.totalorder %s97, %s98
    %p112 = scmp.eq.s32.totalorder %s15, 2
    %p113 = por %p111, %p112
    %p115 = scmp.ne.s32.totalorder %s98, %s114
    %p116 = scmp.eq.s32.totalorder %s15, 0
    %p117 = por %p115, %p116
    %s118 = ssub.s32 %s16, %s35
    %s119 = ssub.s32 %s17, %s31
    %s120 = sor.u32 %s118, %s119
    %p121 = scmp.eq.s32.totalorder %s120, 0
    %s123 = sadd.s32 %s122, 1
    %s124 = scalar_select %p121, %s122, %s123
    %p127 = pneg %p121
    %p128 = scmp.eq.s32.totalorder %s9, 2
    %p129 = por %p127, %p128
    %p130 = scmp.ne.s32.totalorder %s122, %s125
    %p131 = scmp.eq.s32.totalorder %s9, 0
    %p132 = por %p130, %p131
    %p133 = scmp.ne.s32.totalorder %s122, %s125
    %p134 = scmp.eq.s32.totalorder %s14, 2
    %p135 = por %p133, %p134
    %p136 = scmp.ne.s32.totalorder %s125, %s126
    %p137 = scmp.eq.s32.totalorder %s14, 0
    %p138 = por %p136, %p137
    %p139 = scmp.ne.s32.totalorder %s125, %s126
    %p140 = scmp.eq.s32.totalorder %s15, 2
    %p141 = por %p139, %p140
    %p143 = scmp.ne.s32.totalorder %s126, %s142
    %p144 = scmp.eq.s32.totalorder %s15, 0
    %p145 = por %p143, %p144
    %p146 = scmp.le.s32.totalorder 1, %s9
    %p147 = scmp.lt.s32.totalorder %s9, 4
    %p148 = pnand %p146, %p147
    %p149 = pneg %p148
    // Predicated region
    $region9: #{_stage1.3} parent=5 // pred_check
      _
    $region10: #{_stage1.3} parent=5 // pred_check_branch
      %151 = sbr.rel (%p148) target = $region12
    $region11: #{_stage1.3} parent=5 // pred_region
      %s152 = ssub.s32 %s9, 1
      // Predicated region
      $region13: #{_stage1.3} parent=11 // pred_check
        %p153 = pneg %p84
      $region14: #{_stage1.3} parent=11 // pred_check_branch
        %155 = sbr.rel (%p153) target = $region16
      $region15: #{_stage1.3} parent=11 // pred_region
        %s156 = smul.u32 2, %s21
        %s157 = smul.u32 2, %s20
        %p158 = scmp.lt.s32.totalorder %s156, 1
        %s159 = scalar_select %p158, %s156, 1
        %p160 = scmp.lt.s32.totalorder %s157, 1
        %s161 = scalar_select %p160, %s157, 1
        %s162 = smul.addr %s159, 2
        %s163 = sadd.s32 %s161, %s162
        %s164 = smul.addr %s163, 8
        %s165 = scalar_lea.vmem %s1, %s164
        %s166 = smul.u32 2, %s21
        %s167 = smul.u32 2, %s20
      $region16: #{_stage1.3} parent=11 // pred_fallthru
        _
      // Predicated region
      $region17: #{_stage1.3} parent=11 // pred_check
        %p168 = pneg %p110
      $region18: #{_stage1.3} parent=11 // pred_check_branch
        %170 = sbr.rel (%p168) target = $region20
      $region19: #{_stage1.3} parent=11 // pred_region
        %s171 = smul.u32 2, %s20
        %p172 = scmp.lt.s32.totalorder %s171, 1
        %s173 = scalar_select %p172, %s171, 1
        %s174 = scalar_lea.vmem %s2, %s173
        %s175 = smul.u32 2, %s20
      $region20: #{_stage1.3} parent=11 // pred_fallthru
        _
    $region12: #{_stage1.3} parent=5 // pred_fallthru
      _
    %p176 = scmp.lt.s32.totalorder %s9, 3
    // Predicated region
    $region21: #{_stage1.3} parent=5 // pred_check
      %p177 = pneg %p176
    $region22: #{_stage1.3} parent=5 // pred_check_branch
      %179 = sbr.rel (%p177) target = $region24
    $region23: #{_stage1.3} parent=5 // pred_region
      // Predicated region
      $region25: #{_stage1.3} parent=23 // pred_check
        %p180 = pneg %p50
      $region26: #{_stage1.3} parent=23 // pred_check_branch
        %182 = sbr.rel (%p180) target = $region28
      $region27: #{_stage1.3} parent=23 // pred_region
        %s183 = smul.u32 32, %s16
        %p184 = scmp.lt.s32.totalorder %s183, 95
        %s185 = scalar_select %p184, %s183, 95
        %p186 = scmp.lt.s32.totalorder %s18, 0
        %s187 = scalar_select %p186, %s18, 0
        %s188 = sadd.s32 %s187, %s185
        %s189 = smul.addr %s188, 8
        %s190 = scalar_lea.vmem %s0, %s189
        %s191 = smul.u32 32, %s16
      $region28: #{_stage1.3} parent=23 // pred_fallthru
        _
    $region24: #{_stage1.3} parent=5 // pred_fallthru
      _
    %p192 = scmp.le.s32.totalorder 1, %s9
    %p193 = scmp.lt.s32.totalorder %s9, 4
    %p194 = pnand %p192, %p193
    %p195 = pneg %p194
    // Predicated region
    $region29: #{_stage1.3} parent=5 // pred_check
      _
    $region30: #{_stage1.3} parent=5 // pred_check_branch
      %197 = sbr.rel (%p194) target = $region32
    $region31: #{_stage1.3} parent=5 // pred_region
      %s198 = ssub.s32 %s9, 1
      %s199 = smul.u32 32, %s19
      %p200 = scmp.lt.s32.totalorder %s199, 95
      %s201 = scalar_select %p200, %s199, 95
      %p202 = scmp.lt.s32.totalorder %s21, 0
      %s203 = scalar_select %p202, %s21, 0
      %s204 = sadd.s32 %s203, %s201
      %s205 = smul.addr %s204, 8
      %s206 = scalar_lea.vmem %s0, %s205
      %p207 = pneg %p56
      %p208 = pneg %p53
      %s209 = smul.u32 2, %s21
      %s210 = smul.u32 2, %s20
      %p211 = scmp.lt.s32.totalorder %s209, 1
      %s212 = scalar_select %p211, %s209, 1
      %p213 = scmp.lt.s32.totalorder %s210, 1
      %s214 = scalar_select %p213, %s210, 1
      %s215 = smul.addr %s212, 2
      %s216 = sadd.s32 %s214, %s215
      %s217 = smul.addr %s216, 8
      %s218 = scalar_lea.vmem %s1, %s217
      %p219 = pneg %p84
      %p220 = pneg %p81
      %s221 = smul.u32 2, %s20
      %p222 = scmp.lt.s32.totalorder %s221, 1
      %s223 = scalar_select %p222, %s221, 1
      %s224 = scalar_lea.vmem %s2, %s223
      %p225 = pneg %p110
      %p226 = pneg %p107
      %p227 = pneg %p138
      %p228 = pneg %p135
      %s229 = smul.u32 32, %s19
      %s230 = smul.u32 2, %s20
      %p231 = scmp.lt.s32.totalorder %s229, 95
      %s232 = scalar_select %p231, %s229, 95
      %p233 = scmp.lt.s32.totalorder %s230, 1
      %s234 = scalar_select %p233, %s230, 1
      %s235 = smul.addr %s232, 2
      %s236 = sadd.s32 %s234, %s235
      %s237 = smul.addr %s236, 8
      %s238 = scalar_lea.vmem %s3, %s237
      %s239 = smul.u32 32, %s19
      %p240 = scmp.lt.s32.totalorder %s239, 95
      %s241 = scalar_select %p240, %s239, 95
      %p242 = scmp.lt.s32.totalorder %s21, 0
      %s243 = scalar_select %p242, %s21, 0
      %s244 = sadd.s32 %s243, %s241
      %s245 = smul.addr %s244, 8
      %s246 = scalar_lea.vmem %s0, %s245
      %s247 = smul.u32 32, %s19
      %s248 = smul.u32 2, %s21
      %s249 = smul.u32 2, %s20
      %p250 = scmp.lt.s32.totalorder %s248, 1
      %s251 = scalar_select %p250, %s248, 1
      %p252 = scmp.lt.s32.totalorder %s249, 1
      %s253 = scalar_select %p252, %s249, 1
      %s254 = smul.addr %s251, 2
      %s255 = sadd.s32 %s253, %s254
      %s256 = smul.addr %s255, 8
      %s257 = scalar_lea.vmem %s1, %s256
      %s258 = smul.u32 2, %s21
      %s259 = smul.u32 2, %s20
      %s260 = smul.u32 2, %s20
      %p261 = scmp.lt.s32.totalorder %s260, 1
      %s262 = scalar_select %p261, %s260, 1
      %s263 = scalar_lea.vmem %s2, %s262
      %s264 = smul.u32 2, %s20
      %s265 = smul.u32 32, %s19
      %s266 = smul.u32 2, %s20
      %p267 = scmp.lt.s32.totalorder %s265, 95
      %s268 = scalar_select %p267, %s265, 95
      %p269 = scmp.lt.s32.totalorder %s266, 1
      %s270 = scalar_select %p269, %s266, 1
      %s271 = smul.addr %s268, 2
      %s272 = sadd.s32 %s270, %s271
      %s273 = smul.addr %s272, 8
      %s274 = scalar_lea.vmem %s3, %s273
      %s275 = smul.u32 32, %s19
      %s276 = smul.u32 2, %s20
      %p278 = scmp.eq.s32.totalorder %s21, 0
      // Predicated region
      $region33: #{_stage1.3} parent=31 // pred_check
        %p279 = pneg %p278
      $region34: #{_stage1.3} parent=31 // pred_check_branch
        %281 = sbr.rel (%p279) target = $region36
      $region35: #{_stage1.3} parent=31 // pred_region
        %282 = vst [vmem:[#allocation2] sm:$0xff] 0.0
        %283 = vst [vmem:[#allocation2 + $0x8] sm:$0xff] 0.0
        %284 = vst [vmem:[#allocation2 + $0x10] sm:$0xff] 0.0
        %285 = vst [vmem:[#allocation2 + $0x18] sm:$0xff] 0.0
        %286 = vst [vmem:[#allocation2 + $0x20] sm:$0xff] 0.0
        %287 = vst [vmem:[#allocation2 + $0x28] sm:$0xff] 0.0
        %288 = vst [vmem:[#allocation2 + $0x30] sm:$0xff] 0.0
        %289 = vst [vmem:[#allocation2 + $0x38] sm:$0xff] 0.0
        %290 = vst [vmem:[#allocation2 + $0x40] sm:$0xff] 0.0
        %291 = vst [vmem:[#allocation2 + $0x48] sm:$0xff] 0.0
        %292 = vst [vmem:[#allocation2 + $0x50] sm:$0xff] 0.0
        %293 = vst [vmem:[#allocation2 + $0x58] sm:$0xff] 0.0
        %294 = vst [vmem:[#allocation2 + $0x60] sm:$0xff] 0.0
        %295 = vst [vmem:[#allocation2 + $0x68] sm:$0xff] 0.0
        %296 = vst [vmem:[#allocation2 + $0x70] sm:$0xff] 0.0
        %297 = vst [vmem:[#allocation2 + $0x78] sm:$0xff] 0.0
        %298 = vst [vmem:[#allocation2 + $0x80] sm:$0xff] 0.0
        %299 = vst [vmem:[#allocation2 + $0x88] sm:$0xff] 0.0
        %300 = vst [vmem:[#allocation2 + $0x90] sm:$0xff] 0.0
        %301 = vst [vmem:[#allocation2 + $0x98] sm:$0xff] 0.0
        %302 = vst [vmem:[#allocation2 + $0xa0] sm:$0xff] 0.0
        %303 = vst [vmem:[#allocation2 + $0xa8] sm:$0xff] 0.0
        %304 = vst [vmem:[#allocation2 + $0xb0] sm:$0xff] 0.0
        %305 = vst [vmem:[#allocation2 + $0xb8] sm:$0xff] 0.0
        %306 = vst [vmem:[#allocation2 + $0xc0] sm:$0xff] 0.0
        %307 = vst [vmem:[#allocation2 + $0xc8] sm:$0xff] 0.0
        %308 = vst [vmem:[#allocation2 + $0xd0] sm:$0xff] 0.0
        %309 = vst [vmem:[#allocation2 + $0xd8] sm:$0xff] 0.0
        %310 = vst [vmem:[#allocation2 + $0xe0] sm:$0xff] 0.0
        %311 = vst [vmem:[#allocation2 + $0xe8] sm:$0xff] 0.0
        %312 = vst [vmem:[#allocation2 + $0xf0] sm:$0xff] 0.0
        %313 = vst [vmem:[#allocation2 + $0xf8] sm:$0xff] 0.0
        %314 = vst [vmem:[#allocation2 + $0x100] sm:$0xff] 0.0
        %315 = vst [vmem:[#allocation2 + $0x108] sm:$0xff] 0.0
        %316 = vst [vmem:[#allocation2 + $0x110] sm:$0xff] 0.0
        %317 = vst [vmem:[#allocation2 + $0x118] sm:$0xff] 0.0
        %318 = vst [vmem:[#allocation2 + $0x120] sm:$0xff] 0.0
        %319 = vst [vmem:[#allocation2 + $0x128] sm:$0xff] 0.0
        %320 = vst [vmem:[#allocation2 + $0x130] sm:$0xff] 0.0
        %321 = vst [vmem:[#allocation2 + $0x138] sm:$0xff] 0.0
        %322 = vst [vmem:[#allocation2 + $0x140] sm:$0xff] 0.0
        %323 = vst [vmem:[#allocation2 + $0x148] sm:$0xff] 0.0
        %324 = vst [vmem:[#allocation2 + $0x150] sm:$0xff] 0.0
        %325 = vst [vmem:[#allocation2 + $0x158] sm:$0xff] 0.0
        %326 = vst [vmem:[#allocation2 + $0x160] sm:$0xff] 0.0
        %327 = vst [vmem:[#allocation2 + $0x168] sm:$0xff] 0.0
        %328 = vst [vmem:[#allocation2 + $0x170] sm:$0xff] 0.0
        %329 = vst [vmem:[#allocation2 + $0x178] sm:$0xff] 0.0
        %330 = vst [vmem:[#allocation2 + $0x180] sm:$0xff] 0.0
        %331 = vst [vmem:[#allocation2 + $0x188] sm:$0xff] 0.0
        %332 = vst [vmem:[#allocation2 + $0x190] sm:$0xff] 0.0
        %333 = vst [vmem:[#allocation2 + $0x198] sm:$0xff] 0.0
        %334 = vst [vmem:[#allocation2 + $0x1a0] sm:$0xff] 0.0
        %335 = vst [vmem:[#allocation2 + $0x1a8] sm:$0xff] 0.0
        %336 = vst [vmem:[#allocation2 + $0x1b0] sm:$0xff] 0.0
        %337 = vst [vmem:[#allocation2 + $0x1b8] sm:$0xff] 0.0
        %338 = vst [vmem:[#allocation2 + $0x1c0] sm:$0xff] 0.0
        %339 = vst [vmem:[#allocation2 + $0x1c8] sm:$0xff] 0.0
        %340 = vst [vmem:[#allocation2 + $0x1d0] sm:$0xff] 0.0
        %341 = vst [vmem:[#allocation2 + $0x1d8] sm:$0xff] 0.0
        %342 = vst [vmem:[#allocation2 + $0x1e0] sm:$0xff] 0.0
        %343 = vst [vmem:[#allocation2 + $0x1e8] sm:$0xff] 0.0
        %344 = vst [vmem:[#allocation2 + $0x1f0] sm:$0xff] 0.0
        %345 = vst [vmem:[#allocation2 + $0x1f8] sm:$0xff] 0.0
      $region36: #{_stage1.3} parent=31 // pred_fallthru
        _
      %v346 = vld [vmem:[#allocation2] sm:$0xff]
      %v347 = vld [vmem:[#allocation2 + $0x8] sm:$0xff]
      %v348 = vld [vmem:[#allocation2 + $0x10] sm:$0xff]
      %v349 = vld [vmem:[#allocation2 + $0x18] sm:$0xff]
      %v350 = vld [vmem:[#allocation2 + $0x20] sm:$0xff]
      %v351 = vld [vmem:[#allocation2 + $0x28] sm:$0xff]
      %v352 = vld [vmem:[#allocation2 + $0x30] sm:$0xff]
      %v353 = vld [vmem:[#allocation2 + $0x38] sm:$0xff]
      %v354 = vld [vmem:[#allocation2 + $0x40] sm:$0xff]
      %v355 = vld [vmem:[#allocation2 + $0x48] sm:$0xff]
      %v356 = vld [vmem:[#allocation2 + $0x50] sm:$0xff]
      %v357 = vld [vmem:[#allocation2 + $0x58] sm:$0xff]
      %v358 = vld [vmem:[#allocation2 + $0x60] sm:$0xff]
      %v359 = vld [vmem:[#allocation2 + $0x68] sm:$0xff]
      %v360 = vld [vmem:[#allocation2 + $0x70] sm:$0xff]
      %v361 = vld [vmem:[#allocation2 + $0x78] sm:$0xff]
      %v362 = vld [vmem:[#allocation2 + $0x80] sm:$0xff]
      %v363 = vld [vmem:[#allocation2 + $0x88] sm:$0xff]
      %v364 = vld [vmem:[#allocation2 + $0x90] sm:$0xff]
      %v365 = vld [vmem:[#allocation2 + $0x98] sm:$0xff]
      %v366 = vld [vmem:[#allocation2 + $0xa0] sm:$0xff]
      %v367 = vld [vmem:[#allocation2 + $0xa8] sm:$0xff]
      %v368 = vld [vmem:[#allocation2 + $0xb0] sm:$0xff]
      %v369 = vld [vmem:[#allocation2 + $0xb8] sm:$0xff]
      %v370 = vld [vmem:[#allocation2 + $0xc0] sm:$0xff]
      %v371 = vld [vmem:[#allocation2 + $0xc8] sm:$0xff]
      %v372 = vld [vmem:[#allocation2 + $0xd0] sm:$0xff]
      %v373 = vld [vmem:[#allocation2 + $0xd8] sm:$0xff]
      %v374 = vld [vmem:[#allocation2 + $0xe0] sm:$0xff]
      %v375 = vld [vmem:[#allocation2 + $0xe8] sm:$0xff]
      %v376 = vld [vmem:[#allocation2 + $0xf0] sm:$0xff]
      %v377 = vld [vmem:[#allocation2 + $0xf8] sm:$0xff]
      %v378 = vld [vmem:[#allocation2 + $0x100] sm:$0xff]
      %v379 = vld [vmem:[#allocation2 + $0x108] sm:$0xff]
      %v380 = vld [vmem:[#allocation2 + $0x110] sm:$0xff]
      %v381 = vld [vmem:[#allocation2 + $0x118] sm:$0xff]
      %v382 = vld [vmem:[#allocation2 + $0x120] sm:$0xff]
      %v383 = vld [vmem:[#allocation2 + $0x128] sm:$0xff]
      %v384 = vld [vmem:[#allocation2 + $0x130] sm:$0xff]
      %v385 = vld [vmem:[#allocation2 + $0x138] sm:$0xff]
      %v386 = vld [vmem:[#allocation2 + $0x140] sm:$0xff]
      %v387 = vld [vmem:[#allocation2 + $0x148] sm:$0xff]
      %v388 = vld [vmem:[#allocation2 + $0x150] sm:$0xff]
      %v389 = vld [vmem:[#allocation2 + $0x158] sm:$0xff]
      %v390 = vld [vmem:[#allocation2 + $0x160] sm:$0xff]
      %v391 = vld [vmem:[#allocation2 + $0x168] sm:$0xff]
      %v392 = vld [vmem:[#allocation2 + $0x170] sm:$0xff]
      %v393 = vld [vmem:[#allocation2 + $0x178] sm:$0xff]
      %v394 = vld [vmem:[#allocation2 + $0x180] sm:$0xff]
      %v395 = vld [vmem:[#allocation2 + $0x188] sm:$0xff]
      %v396 = vld [vmem:[#allocation2 + $0x190] sm:$0xff]
      %v397 = vld [vmem:[#allocation2 + $0x198] sm:$0xff]
      %v398 = vld [vmem:[#allocation2 + $0x1a0] sm:$0xff]
      %v399 = vld [vmem:[#allocation2 + $0x1a8] sm:$0xff]
      %v400 = vld [vmem:[#allocation2 + $0x1b0] sm:$0xff]
      %v401 = vld [vmem:[#allocation2 + $0x1b8] sm:$0xff]
      %v402 = vld [vmem:[#allocation2 + $0x1c0] sm:$0xff]
      %v403 = vld [vmem:[#allocation2 + $0x1c8] sm:$0xff]
      %v404 = vld [vmem:[#allocation2 + $0x1d0] sm:$0xff]
      %v405 = vld [vmem:[#allocation2 + $0x1d8] sm:$0xff]
      %v406 = vld [vmem:[#allocation2 + $0x1e0] sm:$0xff]
      %v407 = vld [vmem:[#allocation2 + $0x1e8] sm:$0xff]
      %v408 = vld [vmem:[#allocation2 + $0x1f0] sm:$0xff]
      %v409 = vld [vmem:[#allocation2 + $0x1f8] sm:$0xff]
      %v410 = vld [vmem:[%s246] sm:$0xff]
      %v411 = vld [vmem:[%s246 + $0x8] sm:$0xff]
      %v412 = vld [vmem:[%s246 + $0x10] sm:$0xff]
      %v413 = vld [vmem:[%s246 + $0x18] sm:$0xff]
      %v414 = vld [vmem:[%s246 + $0x20] sm:$0xff]
      %v415 = vld [vmem:[%s246 + $0x28] sm:$0xff]
      %v416 = vld [vmem:[%s246 + $0x30] sm:$0xff]
      %v417 = vld [vmem:[%s246 + $0x38] sm:$0xff]
      %v418 = vld [vmem:[%s246 + $0x40] sm:$0xff]
      %v419 = vld [vmem:[%s246 + $0x48] sm:$0xff]
      %v420 = vld [vmem:[%s246 + $0x50] sm:$0xff]
      %v421 = vld [vmem:[%s246 + $0x58] sm:$0xff]
      %v422 = vld [vmem:[%s246 + $0x60] sm:$0xff]
      %v423 = vld [vmem:[%s246 + $0x68] sm:$0xff]
      %v424 = vld [vmem:[%s246 + $0x70] sm:$0xff]
      %v425 = vld [vmem:[%s246 + $0x78] sm:$0xff]
      %v426 = vld [vmem:[%s246 + $0x80] sm:$0xff]
      %v427 = vld [vmem:[%s246 + $0x88] sm:$0xff]
      %v428 = vld [vmem:[%s246 + $0x90] sm:$0xff]
      %v429 = vld [vmem:[%s246 + $0x98] sm:$0xff]
      %v430 = vld [vmem:[%s246 + $0xa0] sm:$0xff]
      %v431 = vld [vmem:[%s246 + $0xa8] sm:$0xff]
      %v432 = vld [vmem:[%s246 + $0xb0] sm:$0xff]
      %v433 = vld [vmem:[%s246 + $0xb8] sm:$0xff]
      %v434 = vld [vmem:[%s246 + $0xc0] sm:$0xff]
      %v435 = vld [vmem:[%s246 + $0xc8] sm:$0xff]
      %v436 = vld [vmem:[%s246 + $0xd0] sm:$0xff]
      %v437 = vld [vmem:[%s246 + $0xd8] sm:$0xff]
      %v438 = vld [vmem:[%s246 + $0xe0] sm:$0xff]
      %v439 = vld [vmem:[%s246 + $0xe8] sm:$0xff]
      %v440 = vld [vmem:[%s246 + $0xf0] sm:$0xff]
      %v441 = vld [vmem:[%s246 + $0xf8] sm:$0xff]
      %v442 = vpack.c.bf16 %v411, %v410
      %v443 = vpack.c.bf16 %v413, %v412
      %v444 = vpack.c.bf16 %v415, %v414
      %v445 = vpack.c.bf16 %v417, %v416
      %v446 = vpack.c.bf16 %v419, %v418
      %v447 = vpack.c.bf16 %v421, %v420
      %v448 = vpack.c.bf16 %v423, %v422
      %v449 = vpack.c.bf16 %v425, %v424
      %v450 = vpack.c.bf16 %v427, %v426
      %v451 = vpack.c.bf16 %v429, %v428
      %v452 = vpack.c.bf16 %v431, %v430
      %v453 = vpack.c.bf16 %v433, %v432
      %v454 = vpack.c.bf16 %v435, %v434
      %v455 = vpack.c.bf16 %v437, %v436
      %v456 = vpack.c.bf16 %v439, %v438
      %v457 = vpack.c.bf16 %v441, %v440
      %v458 = vld [vmem:[%s257] sm:$0xff]
      %v459 = vld [vmem:[%s257 + $0x8] sm:$0xff]
      %v460 = vld [vmem:[%s257 + $0x10] sm:$0xff]
      %v461 = vld [vmem:[%s257 + $0x18] sm:$0xff]
      %v462 = vpack.c.bf16 %v460, %v458
      %v463 = vpack.c.bf16 %v461, %v459
      %vm464 = vcmask 130048
      %v466 = vsel %vm464, %v442, 0
      %v469 = vsel %vm464, %v443, 0
      %v472 = vsel %vm464, %v444, 0
      %v475 = vsel %vm464, %v445, 0
      %v478 = vsel %vm464, %v446, 0
      %v481 = vsel %vm464, %v447, 0
      %v484 = vsel %vm464, %v448, 0
      %v487 = vsel %vm464, %v449, 0
      %v490 = vsel %vm464, %v450, 0
      %v493 = vsel %vm464, %v451, 0
      %v496 = vsel %vm464, %v452, 0
      %v499 = vsel %vm464, %v453, 0
      %v502 = vsel %vm464, %v454, 0
      %v505 = vsel %vm464, %v455, 0
      %v508 = vsel %vm464, %v456, 0
      %v511 = vsel %vm464, %v457, 0
      %513 = vmatprep.subr.bf16.mxu0 %v463
      %514 = vmatpush1.bf16.msra.mxu0 %v462
      %515 = vmatprep.subr.bf16.mxu0 0
      %516 = vmatpush1.bf16.msra.mxu0 0
      %517 = vmatprep.subr.bf16.mxu0 0
      %518 = vmatpush1.bf16.msra.mxu0 0
      %519 = vmatprep.subr.bf16.mxu0 0
      %520 = vmatpush1.bf16.msra.mxu0 0
      %521 = vmatprep.subr.bf16.mxu0 0
      %522 = vmatpush1.bf16.msra.mxu0 0
      %523 = vmatprep.subr.bf16.mxu0 0
      %524 = vmatpush1.bf16.msra.mxu0 0
      %525 = vmatprep.subr.bf16.mxu0 0
      %526 = vmatpush1.bf16.msra.mxu0 0
      %527 = vmatprep.subr.bf16.mxu0 0
      %528 = vmatpush1.bf16.msra.mxu0 0
      %529 = vmatprep.subr.bf16.mxu0 0
      %530 = vmatpush1.bf16.msra.mxu0 0
      %531 = vmatprep.subr.bf16.mxu0 0
      %532 = vmatpush1.bf16.msra.mxu0 0
      %533 = vmatprep.subr.bf16.mxu0 0
      %534 = vmatpush1.bf16.msra.mxu0 0
      %535 = vmatprep.subr.bf16.mxu0 0
      %536 = vmatpush1.bf16.msra.mxu0 0
      %537 = vmatprep.subr.bf16.mxu0 0
      %538 = vmatpush1.bf16.msra.mxu0 0
      %539 = vmatprep.subr.bf16.mxu0 0
      %540 = vmatpush1.bf16.msra.mxu0 0
      %541 = vmatprep.subr.bf16.mxu0 0
      %542 = vmatpush1.bf16.msra.mxu0 0
      %543 = vmatprep.subr.bf16.mxu0 0
      %544 = vmatpush1.bf16.msra.mxu0 0
      %545 = vmatprep.mubr.bf16.mxu0 0
      %546 = vmatmul.mubr.bf16.gmra.mrb[0].mxu0 %v466
      %v547 = vpop.f32.mrb[0].mxu0
      %v548 = vadd.f32 0.0, %v547
      %v549 = vpop.f32.mrb[0].mxu0
      %v550 = vadd.f32 0.0, %v549
      %v551 = vpop.f32.mrb[0].mxu0
      %v552 = vadd.f32 0.0, %v551
      %v553 = vpop.f32.mrb[0].mxu0
      %v554 = vadd.f32 0.0, %v553
      %555 = vmatprep.mubr.bf16.mxu0 0
      %556 = vmatmul.mubr.bf16.gmra.mrb[0].mxu0 %v469
      %v557 = vpop.f32.mrb[0].mxu0
      %v558 = vadd.f32 0.0, %v557
      %v559 = vpop.f32.mrb[0].mxu0
      %v560 = vadd.f32 0.0, %v559
      %v561 = vpop.f32.mrb[0].mxu0
      %v562 = vadd.f32 0.0, %v561
      %v563 = vpop.f32.mrb[0].mxu0
      %v564 = vadd.f32 0.0, %v563
      %565 = vmatprep.mubr.bf16.mxu0 0
      %566 = vmatmul.mubr.bf16.gmra.mrb[0].mxu0 %v472
      %v567 = vpop.f32.mrb[0].mxu0
      %v568 = vadd.f32 0.0, %v567
      %v569 = vpop.f32.mrb[0].mxu0
      %v570 = vadd.f32 0.0, %v569
      %v571 = vpop.f32.mrb[0].mxu0
      %v572 = vadd.f32 0.0, %v571
      %v573 = vpop.f32.mrb[0].mxu0
      %v574 = vadd.f32 0.0, %v573
      %575 = vmatprep.mubr.bf16.mxu0 0
      %576 = vmatmul.mubr.bf16.gmra.mrb[0].mxu0 %v475
      %v577 = vpop.f32.mrb[0].mxu0
      %v578 = vadd.f32 0.0, %v577
      %v579 = vpop.f32.mrb[0].mxu0
      %v580 = vadd.f32 0.0, %v579
      %v581 = vpop.f32.mrb[0].mxu0
      %v582 = vadd.f32 0.0, %v581
      %v583 = vpop.f32.mrb[0].mxu0
      %v584 = vadd.f32 0.0, %v583
      %585 = vmatprep.mubr.bf16.mxu0 0
      %586 = vmatmul.mubr.bf16.gmra.mrb[0].mxu0 %v478
      %v587 = vpop.f32.mrb[0].mxu0
      %v588 = vadd.f32 0.0, %v587
      %v589 = vpop.f32.mrb[0].mxu0
      %v590 = vadd.f32 0.0, %v589
      %v591 = vpop.f32.mrb[0].mxu0
      %v592 = vadd.f32 0.0, %v591
      %v593 = vpop.f32.mrb[0].mxu0
      %v594 = vadd.f32 0.0, %v593
      %595 = vmatprep.mubr.bf16.mxu0 0
      %596 = vmatmul.mubr.bf16.gmra.mrb[0].mxu0 %v481
      %v597 = vpop.f32.mrb[0].mxu0
      %v598 = vadd.f32 0.0, %v597
      %v599 = vpop.f32.mrb[0].mxu0
      %v600 = vadd.f32 0.0, %v599
      %v601 = vpop.f32.mrb[0].mxu0
      %v602 = vadd.f32 0.0, %v601
      %v603 = vpop.f32.mrb[0].mxu0
      %v604 = vadd.f32 0.0, %v603
      %605 = vmatprep.mubr.bf16.mxu0 0
      %606 = vmatmul.mubr.bf16.gmra.mrb[0].mxu0 %v484
      %v607 = vpop.f32.mrb[0].mxu0
      %v608 = vadd.f32 0.0, %v607
      %v609 = vpop.f32.mrb[0].mxu0
      %v610 = vadd.f32 0.0, %v609
      %v611 = vpop.f32.mrb[0].mxu0
      %v612 = vadd.f32 0.0, %v611
      %v613 = vpop.f32.mrb[0].mxu0
      %v614 = vadd.f32 0.0, %v613
      %615 = vmatprep.mubr.bf16.mxu0 0
      %616 = vmatmul.mubr.bf16.gmra.mrb[0].mxu0 %v487
      %v617 = vpop.f32.mrb[0].mxu0
      %v618 = vadd.f32 0.0, %v617
      %v619 = vpop.f32.mrb[0].mxu0
      %v620 = vadd.f32 0.0, %v619
      %v621 = vpop.f32.mrb[0].mxu0
      %v622 = vadd.f32 0.0, %v621
      %v623 = vpop.f32.mrb[0].mxu0
      %v624 = vadd.f32 0.0, %v623
      %625 = vmatprep.mubr.bf16.mxu0 0
      %626 = vmatmul.mubr.bf16.gmra.mrb[0].mxu0 %v490
      %v627 = vpop.f32.mrb[0].mxu0
      %v628 = vadd.f32 0.0, %v627
      %v629 = vpop.f32.mrb[0].mxu0
      %v630 = vadd.f32 0.0, %v629
      %v631 = vpop.f32.mrb[0].mxu0
      %v632 = vadd.f32 0.0, %v631
      %v633 = vpop.f32.mrb[0].mxu0
      %v634 = vadd.f32 0.0, %v633
      %635 = vmatprep.mubr.bf16.mxu0 0
      %636 = vmatmul.mubr.bf16.gmra.mrb[0].mxu0 %v493
      %v637 = vpop.f32.mrb[0].mxu0
      %v638 = vadd.f32 0.0, %v637
      %v639 = vpop.f32.mrb[0].mxu0
      %v640 = vadd.f32 0.0, %v639
      %v641 = vpop.f32.mrb[0].mxu0
      %v642 = vadd.f32 0.0, %v641
      %v643 = vpop.f32.mrb[0].mxu0
      %v644 = vadd.f32 0.0, %v643
      %645 = vmatprep.mubr.bf16.mxu0 0
      %646 = vmatmul.mubr.bf16.gmra.mrb[0].mxu0 %v496
      %v647 = vpop.f32.mrb[0].mxu0
      %v648 = vadd.f32 0.0, %v647
      %v649 = vpop.f32.mrb[0].mxu0
      %v650 = vadd.f32 0.0, %v649
      %v651 = vpop.f32.mrb[0].mxu0
      %v652 = vadd.f32 0.0, %v651
      %v653 = vpop.f32.mrb[0].mxu0
      %v654 = vadd.f32 0.0, %v653
      %655 = vmatprep.mubr.bf16.mxu0 0
      %656 = vmatmul.mubr.bf16.gmra.mrb[0].mxu0 %v499
      %v657 = vpop.f32.mrb[0].mxu0
      %v658 = vadd.f32 0.0, %v657
      %v659 = vpop.f32.mrb[0].mxu0
      %v660 = vadd.f32 0.0, %v659
      %v661 = vpop.f32.mrb[0].mxu0
      %v662 = vadd.f32 0.0, %v661
      %v663 = vpop.f32.mrb[0].mxu0
      %v664 = vadd.f32 0.0, %v663
      %665 = vmatprep.mubr.bf16.mxu0 0
      %666 = vmatmul.mubr.bf16.gmra.mrb[0].mxu0 %v502
      %v667 = vpop.f32.mrb[0].mxu0
      %v668 = vadd.f32 0.0, %v667
      %v669 = vpop.f32.mrb[0].mxu0
      %v670 = vadd.f32 0.0, %v669
      %v671 = vpop.f32.mrb[0].mxu0
      %v672 = vadd.f32 0.0, %v671
      %v673 = vpop.f32.mrb[0].mxu0
      %v674 = vadd.f32 0.0, %v673
      %675 = vmatprep.mubr.bf16.mxu0 0
      %676 = vmatmul.mubr.bf16.gmra.mrb[0].mxu0 %v505
      %v677 = vpop.f32.mrb[0].mxu0
      %v678 = vadd.f32 0.0, %v677
      %v679 = vpop.f32.mrb[0].mxu0
      %v680 = vadd.f32 0.0, %v679
      %v681 = vpop.f32.mrb[0].mxu0
      %v682 = vadd.f32 0.0, %v681
      %v683 = vpop.f32.mrb[0].mxu0
      %v684 = vadd.f32 0.0, %v683
      %685 = vmatprep.mubr.bf16.mxu0 0
      %686 = vmatmul.mubr.bf16.gmra.mrb[0].mxu0 %v508
      %v687 = vpop.f32.mrb[0].mxu0
      %v688 = vadd.f32 0.0, %v687
      %v689 = vpop.f32.mrb[0].mxu0
      %v690 = vadd.f32 0.0, %v689
      %v691 = vpop.f32.mrb[0].mxu0
      %v692 = vadd.f32 0.0, %v691
      %v693 = vpop.f32.mrb[0].mxu0
      %v694 = vadd.f32 0.0, %v693
      %695 = vmatprep.mubr.bf16.mxu0 0
      %696 = vmatmul.mubr.bf16.gmra.mrb[0].mxu0 %v511
      %v697 = vpop.f32.mrb[0].mxu0
      %v698 = vadd.f32 0.0, %v697
      %v699 = vpop.f32.mrb[0].mxu0
      %v700 = vadd.f32 0.0, %v699
      %v701 = vpop.f32.mrb[0].mxu0
      %v702 = vadd.f32 0.0, %v701
      %v703 = vpop.f32.mrb[0].mxu0
      %v704 = vadd.f32 0.0, %v703
      %705 = vdwg.mxu0
      %v706 = vadd.f32 %v346, %v548
      %v707 = vadd.f32 %v347, %v550
      %v708 = vadd.f32 %v348, %v552
      %v709 = vadd.f32 %v349, %v554
      %v710 = vadd.f32 %v350, %v558
      %v711 = vadd.f32 %v351, %v560
      %v712 = vadd.f32 %v352, %v562
      %v713 = vadd.f32 %v353, %v564
      %v714 = vadd.f32 %v354, %v568
      %v715 = vadd.f32 %v355, %v570
      %v716 = vadd.f32 %v356, %v572
      %v717 = vadd.f32 %v357, %v574
      %v718 = vadd.f32 %v358, %v578
      %v719 = vadd.f32 %v359, %v580
      %v720 = vadd.f32 %v360, %v582
      %v721 = vadd.f32 %v361, %v584
      %v722 = vadd.f32 %v362, %v588
      %v723 = vadd.f32 %v363, %v590
      %v724 = vadd.f32 %v364, %v592
      %v725 = vadd.f32 %v365, %v594
      %v726 = vadd.f32 %v366, %v598
      %v727 = vadd.f32 %v367, %v600
      %v728 = vadd.f32 %v368, %v602
      %v729 = vadd.f32 %v369, %v604
      %v730 = vadd.f32 %v370, %v608
      %v731 = vadd.f32 %v371, %v610
      %v732 = vadd.f32 %v372, %v612
      %v733 = vadd.f32 %v373, %v614
      %v734 = vadd.f32 %v374, %v618
      %v735 = vadd.f32 %v375, %v620
      %v736 = vadd.f32 %v376, %v622
      %v737 = vadd.f32 %v377, %v624
      %v738 = vadd.f32 %v378, %v628
      %v739 = vadd.f32 %v379, %v630
      %v740 = vadd.f32 %v380, %v632
      %v741 = vadd.f32 %v381, %v634
      %v742 = vadd.f32 %v382, %v638
      %v743 = vadd.f32 %v383, %v640
      %v744 = vadd.f32 %v384, %v642
      %v745 = vadd.f32 %v385, %v644
      %v746 = vadd.f32 %v386, %v648
      %v747 = vadd.f32 %v387, %v650
      %v748 = vadd.f32 %v388, %v652
      %v749 = vadd.f32 %v389, %v654
      %v750 = vadd.f32 %v390, %v658
      %v751 = vadd.f32 %v391, %v660
      %v752 = vadd.f32 %v392, %v662
      %v753 = vadd.f32 %v393, %v664
      %v754 = vadd.f32 %v394, %v668
      %v755 = vadd.f32 %v395, %v670
      %v756 = vadd.f32 %v396, %v672
      %v757 = vadd.f32 %v397, %v674
      %v758 = vadd.f32 %v398, %v678
      %v759 = vadd.f32 %v399, %v680
      %v760 = vadd.f32 %v400, %v682
      %v761 = vadd.f32 %v401, %v684
      %v762 = vadd.f32 %v402, %v688
      %v763 = vadd.f32 %v403, %v690
      %v764 = vadd.f32 %v404, %v692
      %v765 = vadd.f32 %v405, %v694
      %v766 = vadd.f32 %v406, %v698
      %v767 = vadd.f32 %v407, %v700
      %v768 = vadd.f32 %v408, %v702
      %v769 = vadd.f32 %v409, %v704
      %770 = vst [vmem:[#allocation2] sm:$0xff] %v706
      %771 = vst [vmem:[#allocation2 + $0x8] sm:$0xff] %v707
      %772 = vst [vmem:[#allocation2 + $0x10] sm:$0xff] %v708
      %773 = vst [vmem:[#allocation2 + $0x18] sm:$0xff] %v709
      %774 = vst [vmem:[#allocation2 + $0x20] sm:$0xff] %v710
      %775 = vst [vmem:[#allocation2 + $0x28] sm:$0xff] %v711
      %776 = vst [vmem:[#allocation2 + $0x30] sm:$0xff] %v712
      %777 = vst [vmem:[#allocation2 + $0x38] sm:$0xff] %v713
      %778 = vst [vmem:[#allocation2 + $0x40] sm:$0xff] %v714
      %779 = vst [vmem:[#allocation2 + $0x48] sm:$0xff] %v715
      %780 = vst [vmem:[#allocation2 + $0x50] sm:$0xff] %v716
      %781 = vst [vmem:[#allocation2 + $0x58] sm:$0xff] %v717
      %782 = vst [vmem:[#allocation2 + $0x60] sm:$0xff] %v718
      %783 = vst [vmem:[#allocation2 + $0x68] sm:$0xff] %v719
      %784 = vst [vmem:[#allocation2 + $0x70] sm:$0xff] %v720
      %785 = vst [vmem:[#allocation2 + $0x78] sm:$0xff] %v721
      %786 = vst [vmem:[#allocation2 + $0x80] sm:$0xff] %v722
      %787 = vst [vmem:[#allocation2 + $0x88] sm:$0xff] %v723
      %788 = vst [vmem:[#allocation2 + $0x90] sm:$0xff] %v724
      %789 = vst [vmem:[#allocation2 + $0x98] sm:$0xff] %v725
      %790 = vst [vmem:[#allocation2 + $0xa0] sm:$0xff] %v726
      %791 = vst [vmem:[#allocation2 + $0xa8] sm:$0xff] %v727
      %792 = vst [vmem:[#allocation2 + $0xb0] sm:$0xff] %v728
      %793 = vst [vmem:[#allocation2 + $0xb8] sm:$0xff] %v729
      %794 = vst [vmem:[#allocation2 + $0xc0] sm:$0xff] %v730
      %795 = vst [vmem:[#allocation2 + $0xc8] sm:$0xff] %v731
      %796 = vst [vmem:[#allocation2 + $0xd0] sm:$0xff] %v732
      %797 = vst [vmem:[#allocation2 + $0xd8] sm:$0xff] %v733
      %798 = vst [vmem:[#allocation2 + $0xe0] sm:$0xff] %v734
      %799 = vst [vmem:[#allocation2 + $0xe8] sm:$0xff] %v735
      %800 = vst [vmem:[#allocation2 + $0xf0] sm:$0xff] %v736
      %801 = vst [vmem:[#allocation2 + $0xf8] sm:$0xff] %v737
      %802 = vst [vmem:[#allocation2 + $0x100] sm:$0xff] %v738
      %803 = vst [vmem:[#allocation2 + $0x108] sm:$0xff] %v739
      %804 = vst [vmem:[#allocation2 + $0x110] sm:$0xff] %v740
      %805 = vst [vmem:[#allocation2 + $0x118] sm:$0xff] %v741
      %806 = vst [vmem:[#allocation2 + $0x120] sm:$0xff] %v742
      %807 = vst [vmem:[#allocation2 + $0x128] sm:$0xff] %v743
      %808 = vst [vmem:[#allocation2 + $0x130] sm:$0xff] %v744
      %809 = vst [vmem:[#allocation2 + $0x138] sm:$0xff] %v745
      %810 = vst [vmem:[#allocation2 + $0x140] sm:$0xff] %v746
      %811 = vst [vmem:[#allocation2 + $0x148] sm:$0xff] %v747
      %812 = vst [vmem:[#allocation2 + $0x150] sm:$0xff] %v748
      %813 = vst [vmem:[#allocation2 + $0x158] sm:$0xff] %v749
      %814 = vst [vmem:[#allocation2 + $0x160] sm:$0xff] %v750
      %815 = vst [vmem:[#allocation2 + $0x168] sm:$0xff] %v751
      %816 = vst [vmem:[#allocation2 + $0x170] sm:$0xff] %v752
      %817 = vst [vmem:[#allocation2 + $0x178] sm:$0xff] %v753
      %818 = vst [vmem:[#allocation2 + $0x180] sm:$0xff] %v754
      %819 = vst [vmem:[#allocation2 + $0x188] sm:$0xff] %v755
      %820 = vst [vmem:[#allocation2 + $0x190] sm:$0xff] %v756
      %821 = vst [vmem:[#allocation2 + $0x198] sm:$0xff] %v757
      %822 = vst [vmem:[#allocation2 + $0x1a0] sm:$0xff] %v758
      %823 = vst [vmem:[#allocation2 + $0x1a8] sm:$0xff] %v759
      %824 = vst [vmem:[#allocation2 + $0x1b0] sm:$0xff] %v760
      %825 = vst [vmem:[#allocation2 + $0x1b8] sm:$0xff] %v761
      %826 = vst [vmem:[#allocation2 + $0x1c0] sm:$0xff] %v762
      %827 = vst [vmem:[#allocation2 + $0x1c8] sm:$0xff] %v763
      %828 = vst [vmem:[#allocation2 + $0x1d0] sm:$0xff] %v764
      %829 = vst [vmem:[#allocation2 + $0x1d8] sm:$0xff] %v765
      %830 = vst [vmem:[#allocation2 + $0x1e0] sm:$0xff] %v766
      %831 = vst [vmem:[#allocation2 + $0x1e8] sm:$0xff] %v767
      %832 = vst [vmem:[#allocation2 + $0x1f0] sm:$0xff] %v768
      %833 = vst [vmem:[#allocation2 + $0x1f8] sm:$0xff] %v769
      // Predicated region
      $region37: #{_stage1.3} parent=31 // pred_check
        %p834 = pneg %p278
      $region38: #{_stage1.3} parent=31 // pred_check_branch
        %836 = sbr.rel (%p834) target = $region40
      $region39: #{_stage1.3} parent=31 // pred_region
        %v837 = vld [vmem:[#allocation2] sm:$0xff]
        %v838 = vld [vmem:[#allocation2 + $0x8] sm:$0xff]
        %v839 = vld [vmem:[#allocation2 + $0x10] sm:$0xff]
        %v840 = vld [vmem:[#allocation2 + $0x18] sm:$0xff]
        %v841 = vld [vmem:[#allocation2 + $0x20] sm:$0xff]
        %v842 = vld [vmem:[#allocation2 + $0x28] sm:$0xff]
        %v843 = vld [vmem:[#allocation2 + $0x30] sm:$0xff]
        %v844 = vld [vmem:[#allocation2 + $0x38] sm:$0xff]
        %v845 = vld [vmem:[#allocation2 + $0x40] sm:$0xff]
        %v846 = vld [vmem:[#allocation2 + $0x48] sm:$0xff]
        %v847 = vld [vmem:[#allocation2 + $0x50] sm:$0xff]
        %v848 = vld [vmem:[#allocation2 + $0x58] sm:$0xff]
        %v849 = vld [vmem:[#allocation2 + $0x60] sm:$0xff]
        %v850 = vld [vmem:[#allocation2 + $0x68] sm:$0xff]
        %v851 = vld [vmem:[#allocation2 + $0x70] sm:$0xff]
        %v852 = vld [vmem:[#allocation2 + $0x78] sm:$0xff]
        %v853 = vld [vmem:[#allocation2 + $0x80] sm:$0xff]
        %v854 = vld [vmem:[#allocation2 + $0x88] sm:$0xff]
        %v855 = vld [vmem:[#allocation2 + $0x90] sm:$0xff]
        %v856 = vld [vmem:[#allocation2 + $0x98] sm:$0xff]
        %v857 = vld [vmem:[#allocation2 + $0xa0] sm:$0xff]
        %v858 = vld [vmem:[#allocation2 + $0xa8] sm:$0xff]
        %v859 = vld [vmem:[#allocation2 + $0xb0] sm:$0xff]
        %v860 = vld [vmem:[#allocation2 + $0xb8] sm:$0xff]
        %v861 = vld [vmem:[#allocation2 + $0xc0] sm:$0xff]
        %v862 = vld [vmem:[#allocation2 + $0xc8] sm:$0xff]
        %v863 = vld [vmem:[#allocation2 + $0xd0] sm:$0xff]
        %v864 = vld [vmem:[#allocation2 + $0xd8] sm:$0xff]
        %v865 = vld [vmem:[#allocation2 + $0xe0] sm:$0xff]
        %v866 = vld [vmem:[#allocation2 + $0xe8] sm:$0xff]
        %v867 = vld [vmem:[#allocation2 + $0xf0] sm:$0xff]
        %v868 = vld [vmem:[#allocation2 + $0xf8] sm:$0xff]
        %v869 = vld [vmem:[#allocation2 + $0x100] sm:$0xff]
        %v870 = vld [vmem:[#allocation2 + $0x108] sm:$0xff]
        %v871 = vld [vmem:[#allocation2 + $0x110] sm:$0xff]
        %v872 = vld [vmem:[#allocation2 + $0x118] sm:$0xff]
        %v873 = vld [vmem:[#allocation2 + $0x120] sm:$0xff]
        %v874 = vld [vmem:[#allocation2 + $0x128] sm:$0xff]
        %v875 = vld [vmem:[#allocation2 + $0x130] sm:$0xff]
        %v876 = vld [vmem:[#allocation2 + $0x138] sm:$0xff]
        %v877 = vld [vmem:[#allocation2 + $0x140] sm:$0xff]
        %v878 = vld [vmem:[#allocation2 + $0x148] sm:$0xff]
        %v879 = vld [vmem:[#allocation2 + $0x150] sm:$0xff]
        %v880 = vld [vmem:[#allocation2 + $0x158] sm:$0xff]
        %v881 = vld [vmem:[#allocation2 + $0x160] sm:$0xff]
        %v882 = vld [vmem:[#allocation2 + $0x168] sm:$0xff]
        %v883 = vld [vmem:[#allocation2 + $0x170] sm:$0xff]
        %v884 = vld [vmem:[#allocation2 + $0x178] sm:$0xff]
        %v885 = vld [vmem:[#allocation2 + $0x180] sm:$0xff]
        %v886 = vld [vmem:[#allocation2 + $0x188] sm:$0xff]
        %v887 = vld [vmem:[#allocation2 + $0x190] sm:$0xff]
        %v888 = vld [vmem:[#allocation2 + $0x198] sm:$0xff]
        %v889 = vld [vmem:[#allocation2 + $0x1a0] sm:$0xff]
        %v890 = vld [vmem:[#allocation2 + $0x1a8] sm:$0xff]
        %v891 = vld [vmem:[#allocation2 + $0x1b0] sm:$0xff]
        %v892 = vld [vmem:[#allocation2 + $0x1b8] sm:$0xff]
        %v893 = vld [vmem:[#allocation2 + $0x1c0] sm:$0xff]
        %v894 = vld [vmem:[#allocation2 + $0x1c8] sm:$0xff]
        %v895 = vld [vmem:[#allocation2 + $0x1d0] sm:$0xff]
        %v896 = vld [vmem:[#allocation2 + $0x1d8] sm:$0xff]
        %v897 = vld [vmem:[#allocation2 + $0x1e0] sm:$0xff]
        %v898 = vld [vmem:[#allocation2 + $0x1e8] sm:$0xff]
        %v899 = vld [vmem:[#allocation2 + $0x1f0] sm:$0xff]
        %v900 = vld [vmem:[#allocation2 + $0x1f8] sm:$0xff]
        %v901 = vld [vmem:[%s263] sm:$0x3]
        %v903 = vlaneseq
        %v904 = vshrl.u32 %v903, 7
        %v905 = vsub.s32 0, %v904
        %v906 = vrot.slane %v901, %v905
        %v907 = vlaneseq
        %v908 = vshrl.u32 %v907, 7
        %v909 = vsub.s32 1, %v908
        %v910 = vrot.slane %v901, %v909
        %v913 = vadd.f32 %v837, %v906
        %v914 = vadd.f32 %v838, %v910
        %v915 = vadd.f32 %v839, %v906
        %v916 = vadd.f32 %v840, %v910
        %v917 = vadd.f32 %v841, %v906
        %v918 = vadd.f32 %v842, %v910
        %v919 = vadd.f32 %v843, %v906
        %v920 = vadd.f32 %v844, %v910
        %v921 = vadd.f32 %v845, %v906
        %v922 = vadd.f32 %v846, %v910
        %v923 = vadd.f32 %v847, %v906
        %v924 = vadd.f32 %v848, %v910
        %v925 = vadd.f32 %v849, %v906
        %v926 = vadd.f32 %v850, %v910
        %v927 = vadd.f32 %v851, %v906
        %v928 = vadd.f32 %v852, %v910
        %v929 = vadd.f32 %v853, %v906
        %v930 = vadd.f32 %v854, %v910
        %v931 = vadd.f32 %v855, %v906
        %v932 = vadd.f32 %v856, %v910
        %v933 = vadd.f32 %v857, %v906
        %v934 = vadd.f32 %v858, %v910
        %v935 = vadd.f32 %v859, %v906
        %v936 = vadd.f32 %v860, %v910
        %v937 = vadd.f32 %v861, %v906
        %v938 = vadd.f32 %v862, %v910
        %v939 = vadd.f32 %v863, %v906
        %v940 = vadd.f32 %v864, %v910
        %v941 = vadd.f32 %v865, %v906
        %v942 = vadd.f32 %v866, %v910
        %v943 = vadd.f32 %v867, %v906
        %v944 = vadd.f32 %v868, %v910
        %v945 = vadd.f32 %v869, %v906
        %v946 = vadd.f32 %v870, %v910
        %v947 = vadd.f32 %v871, %v906
        %v948 = vadd.f32 %v872, %v910
        %v949 = vadd.f32 %v873, %v906
        %v950 = vadd.f32 %v874, %v910
        %v951 = vadd.f32 %v875, %v906
        %v952 = vadd.f32 %v876, %v910
        %v953 = vadd.f32 %v877, %v906
        %v954 = vadd.f32 %v878, %v910
        %v955 = vadd.f32 %v879, %v906
        %v956 = vadd.f32 %v880, %v910
        %v957 = vadd.f32 %v881, %v906
        %v958 = vadd.f32 %v882, %v910
        %v959 = vadd.f32 %v883, %v906
        %v960 = vadd.f32 %v884, %v910
        %v961 = vadd.f32 %v885, %v906
        %v962 = vadd.f32 %v886, %v910
        %v963 = vadd.f32 %v887, %v906
        %v964 = vadd.f32 %v888, %v910
        %v965 = vadd.f32 %v889, %v906
        %v966 = vadd.f32 %v890, %v910
        %v967 = vadd.f32 %v891, %v906
        %v968 = vadd.f32 %v892, %v910
        %v969 = vadd.f32 %v893, %v906
        %v970 = vadd.f32 %v894, %v910
        %v971 = vadd.f32 %v895, %v906
        %v972 = vadd.f32 %v896, %v910
        %v973 = vadd.f32 %v897, %v906
        %v974 = vadd.f32 %v898, %v910
        %v975 = vadd.f32 %v899, %v906
        %v976 = vadd.f32 %v900, %v910
        %v977 = vmax.f32 %v913, 0.0
        %v978 = vmax.f32 %v914, 0.0
        %v979 = vmax.f32 %v915, 0.0
        %v980 = vmax.f32 %v916, 0.0
        %v981 = vmax.f32 %v917, 0.0
        %v982 = vmax.f32 %v918, 0.0
        %v983 = vmax.f32 %v919, 0.0
        %v984 = vmax.f32 %v920, 0.0
        %v985 = vmax.f32 %v921, 0.0
        %v986 = vmax.f32 %v922, 0.0
        %v987 = vmax.f32 %v923, 0.0
        %v988 = vmax.f32 %v924, 0.0
        %v989 = vmax.f32 %v925, 0.0
        %v990 = vmax.f32 %v926, 0.0
        %v991 = vmax.f32 %v927, 0.0
        %v992 = vmax.f32 %v928, 0.0
        %v993 = vmax.f32 %v929, 0.0
        %v994 = vmax.f32 %v930, 0.0
        %v995 = vmax.f32 %v931, 0.0
        %v996 = vmax.f32 %v932, 0.0
        %v997 = vmax.f32 %v933, 0.0
        %v998 = vmax.f32 %v934, 0.0
        %v999 = vmax.f32 %v935, 0.0
        %v1000 = vmax.f32 %v936, 0.0
        %v1001 = vmax.f32 %v937, 0.0
        %v1002 = vmax.f32 %v938, 0.0
        %v1003 = vmax.f32 %v939, 0.0
        %v1004 = vmax.f32 %v940, 0.0
        %v1005 = vmax.f32 %v941, 0.0
        %v1006 = vmax.f32 %v942, 0.0
        %v1007 = vmax.f32 %v943, 0.0
        %v1008 = vmax.f32 %v944, 0.0
        %v1009 = vmax.f32 %v945, 0.0
        %v1010 = vmax.f32 %v946, 0.0
        %v1011 = vmax.f32 %v947, 0.0
        %v1012 = vmax.f32 %v948, 0.0
        %v1013 = vmax.f32 %v949, 0.0
        %v1014 = vmax.f32 %v950, 0.0
        %v1015 = vmax.f32 %v951, 0.0
        %v1016 = vmax.f32 %v952, 0.0
        %v1017 = vmax.f32 %v953, 0.0
        %v1018 = vmax.f32 %v954, 0.0
        %v1019 = vmax.f32 %v955, 0.0
        %v1020 = vmax.f32 %v956, 0.0
        %v1021 = vmax.f32 %v957, 0.0
        %v1022 = vmax.f32 %v958, 0.0
        %v1023 = vmax.f32 %v959, 0.0
        %v1024 = vmax.f32 %v960, 0.0
        %v1025 = vmax.f32 %v961, 0.0
        %v1026 = vmax.f32 %v962, 0.0
        %v1027 = vmax.f32 %v963, 0.0
        %v1028 = vmax.f32 %v964, 0.0
        %v1029 = vmax.f32 %v965, 0.0
        %v1030 = vmax.f32 %v966, 0.0
        %v1031 = vmax.f32 %v967, 0.0
        %v1032 = vmax.f32 %v968, 0.0
        %v1033 = vmax.f32 %v969, 0.0
        %v1034 = vmax.f32 %v970, 0.0
        %v1035 = vmax.f32 %v971, 0.0
        %v1036 = vmax.f32 %v972, 0.0
        %v1037 = vmax.f32 %v973, 0.0
        %v1038 = vmax.f32 %v974, 0.0
        %v1039 = vmax.f32 %v975, 0.0
        %v1040 = vmax.f32 %v976, 0.0
        %1041 = vst [vmem:[%s274] sm:$0xff] %v977
        %1042 = vst [vmem:[%s274 + $0x8] sm:$0xff] %v978
        %1043 = vst [vmem:[%s274 + $0x10] sm:$0xff] %v979
        %1044 = vst [vmem:[%s274 + $0x18] sm:$0xff] %v980
        %1045 = vst [vmem:[%s274 + $0x20] sm:$0xff] %v981
        %1046 = vst [vmem:[%s274 + $0x28] sm:$0xff] %v982
        %1047 = vst [vmem:[%s274 + $0x30] sm:$0xff] %v983
        %1048 = vst [vmem:[%s274 + $0x38] sm:$0xff] %v984
        %1049 = vst [vmem:[%s274 + $0x40] sm:$0xff] %v985
        %1050 = vst [vmem:[%s274 + $0x48] sm:$0xff] %v986
        %1051 = vst [vmem:[%s274 + $0x50] sm:$0xff] %v987
        %1052 = vst [vmem:[%s274 + $0x58] sm:$0xff] %v988
        %1053 = vst [vmem:[%s274 + $0x60] sm:$0xff] %v989
        %1054 = vst [vmem:[%s274 + $0x68] sm:$0xff] %v990
        %1055 = vst [vmem:[%s274 + $0x70] sm:$0xff] %v991
        %1056 = vst [vmem:[%s274 + $0x78] sm:$0xff] %v992
        %1057 = vst [vmem:[%s274 + $0x80] sm:$0xff] %v993
        %1058 = vst [vmem:[%s274 + $0x88] sm:$0xff] %v994
        %1059 = vst [vmem:[%s274 + $0x90] sm:$0xff] %v995
        %1060 = vst [vmem:[%s274 + $0x98] sm:$0xff] %v996
        %1061 = vst [vmem:[%s274 + $0xa0] sm:$0xff] %v997
        %1062 = vst [vmem:[%s274 + $0xa8] sm:$0xff] %v998
        %1063 = vst [vmem:[%s274 + $0xb0] sm:$0xff] %v999
        %1064 = vst [vmem:[%s274 + $0xb8] sm:$0xff] %v1000
        %1065 = vst [vmem:[%s274 + $0xc0] sm:$0xff] %v1001
        %1066 = vst [vmem:[%s274 + $0xc8] sm:$0xff] %v1002
        %1067 = vst [vmem:[%s274 + $0xd0] sm:$0xff] %v1003
        %1068 = vst [vmem:[%s274 + $0xd8] sm:$0xff] %v1004
        %1069 = vst [vmem:[%s274 + $0xe0] sm:$0xff] %v1005
        %1070 = vst [vmem:[%s274 + $0xe8] sm:$0xff] %v1006
        %1071 = vst [vmem:[%s274 + $0xf0] sm:$0xff] %v1007
        %1072 = vst [vmem:[%s274 + $0xf8] sm:$0xff] %v1008
        %1073 = vst [vmem:[%s274 + $0x100] sm:$0xff] %v1009
        %1074 = vst [vmem:[%s274 + $0x108] sm:$0xff] %v1010
        %1075 = vst [vmem:[%s274 + $0x110] sm:$0xff] %v1011
        %1076 = vst [vmem:[%s274 + $0x118] sm:$0xff] %v1012
        %1077 = vst [vmem:[%s274 + $0x120] sm:$0xff] %v1013
        %1078 = vst [vmem:[%s274 + $0x128] sm:$0xff] %v1014
        %1079 = vst [vmem:[%s274 + $0x130] sm:$0xff] %v1015
        %1080 = vst [vmem:[%s274 + $0x138] sm:$0xff] %v1016
        %1081 = vst [vmem:[%s274 + $0x140] sm:$0xff] %v1017
        %1082 = vst [vmem:[%s274 + $0x148] sm:$0xff] %v1018
        %1083 = vst [vmem:[%s274 + $0x150] sm:$0xff] %v1019
        %1084 = vst [vmem:[%s274 + $0x158] sm:$0xff] %v1020
        %1085 = vst [vmem:[%s274 + $0x160] sm:$0xff] %v1021
        %1086 = vst [vmem:[%s274 + $0x168] sm:$0xff] %v1022
        %1087 = vst [vmem:[%s274 + $0x170] sm:$0xff] %v1023
        %1088 = vst [vmem:[%s274 + $0x178] sm:$0xff] %v1024
        %1089 = vst [vmem:[%s274 + $0x180] sm:$0xff] %v1025
        %1090 = vst [vmem:[%s274 + $0x188] sm:$0xff] %v1026
        %1091 = vst [vmem:[%s274 + $0x190] sm:$0xff] %v1027
        %1092 = vst [vmem:[%s274 + $0x198] sm:$0xff] %v1028
        %1093 = vst [vmem:[%s274 + $0x1a0] sm:$0xff] %v1029
        %1094 = vst [vmem:[%s274 + $0x1a8] sm:$0xff] %v1030
        %1095 = vst [vmem:[%s274 + $0x1b0] sm:$0xff] %v1031
        %1096 = vst [vmem:[%s274 + $0x1b8] sm:$0xff] %v1032
        %1097 = vst [vmem:[%s274 + $0x1c0] sm:$0xff] %v1033
        %1098 = vst [vmem:[%s274 + $0x1c8] sm:$0xff] %v1034
        %1099 = vst [vmem:[%s274 + $0x1d0] sm:$0xff] %v1035
        %1100 = vst [vmem:[%s274 + $0x1d8] sm:$0xff] %v1036
        %1101 = vst [vmem:[%s274 + $0x1e0] sm:$0xff] %v1037
        %1102 = vst [vmem:[%s274 + $0x1e8] sm:$0xff] %v1038
        %1103 = vst [vmem:[%s274 + $0x1f0] sm:$0xff] %v1039
        %1104 = vst [vmem:[%s274 + $0x1f8] sm:$0xff] %v1040
      $region40: #{_stage1.3} parent=31 // pred_fallthru
        _
      %s1105 = smul.u32 32, %s19
      %s1106 = smul.u32 2, %s20
      %p1107 = scmp.lt.s32.totalorder %s1105, 95
      %s1108 = scalar_select %p1107, %s1105, 95
      %p1109 = scmp.lt.s32.totalorder %s1106, 1
      %s1110 = scalar_select %p1109, %s1106, 1
      %s1111 = smul.addr %s1108, 2
      %s1112 = sadd.s32 %s1110, %s1111
      %s1113 = smul.addr %s1112, 8
      %s1114 = scalar_lea.vmem %s3, %s1113
      // Predicated region
      $region41: #{_stage1.3} parent=31 // pred_check
        %p1115 = pneg %p135
      $region42: #{_stage1.3} parent=31 // pred_check_branch
        %1117 = sbr.rel (%p1115) target = $region44
      $region43: #{_stage1.3} parent=31 // pred_region
        %s1118 = smul.u32 32, %s19
        %s1119 = smul.u32 2, %s20
      $region44: #{_stage1.3} parent=31 // pred_fallthru
        _
    $region32: #{_stage1.3} parent=5 // pred_fallthru
      _
    %p1120 = scmp.le.s32.totalorder 2, %s9
    // Predicated region
    $region45: #{_stage1.3} parent=5 // pred_check
      %p1121 = pneg %p1120
    $region46: #{_stage1.3} parent=5 // pred_check_branch
      %1123 = sbr.rel (%p1121) target = $region48
    $region47: #{_stage1.3} parent=5 // pred_region
      %s1124 = ssub.s32 %s9, 2
      // Predicated region
      $region49: #{_stage1.3} parent=47 // pred_check
        %p1125 = pneg %p141
      $region50: #{_stage1.3} parent=47 // pred_check_branch
        %1127 = sbr.rel (%p1125) target = $region52
      $region51: #{_stage1.3} parent=47 // pred_region
        %s1128 = smul.u32 32, %s22
        %s1129 = smul.u32 2, %s23
        %p1130 = scmp.lt.s32.totalorder %s1128, 95
        %s1131 = scalar_select %p1130, %s1128, 95
        %p1132 = scmp.lt.s32.totalorder %s1129, 1
        %s1133 = scalar_select %p1132, %s1129, 1
        %s1134 = smul.addr %s1131, 2
        %s1135 = sadd.s32 %s1133, %s1134
        %s1136 = smul.addr %s1135, 8
        %s1137 = scalar_lea.vmem %s3, %s1136
      $region52: #{_stage1.3} parent=47 // pred_fallthru
        _
    $region48: #{_stage1.3} parent=5 // pred_fallthru
      _
  $region6: #{_stage1.3} parent=0 // loop_footer
    %s13 = sadd.s32 1, %s9
  $region7: #{_stage1.3} parent=0 // loop_footer_branch
    %8 = sbr.rel target = $region3
  $region8: #{_stage1.3} parent=0 // loop_exit
    _

// kernel: _stage1.5
$region0: #{_stage1.5}
  #allocation0 [shape = 'u32[]', space=smem, size = 0x4, offset = 0x4, fixed_abs, tag = 'smem constant byte address 0x4 - core index']
  #allocation1 [shape = 'u32[144,128]{1,0:T(1,128)}', space=vmem, size = 0x12000, scoped, tag = 'internal scratch']
  #allocation2 [shape = 'f32[256,128]{1,0:T(8,128)}', space=vmem, size = 0x20000, scoped, tag = 'scratch operand']
  %s0 = inlined_call_operand.vmem [shape: f32[768,256], index: 0, kind: input, shape index: {}]
  %s1 = inlined_call_operand.vmem [shape: bf16[256,128], index: 1, kind: input, shape index: {}]
  %s2 = inlined_call_operand.vmem [shape: f32[1,128], index: 2, kind: input, shape index: {}]
  %s3 = inlined_call_operand.vmem [shape: f32[768,128], index: 3, kind: output, shape index: {}]
  %s4 = sld [smem:[#allocation0]]
  $region53: #{_stage1.5} parent=0
    _
  %s6 = ssub.s32 1, %s4
  %s7 = scalar_select 0, %s6, %s4
  loop: start=0, step=1, limit=5
  $region2: #{_stage1.5} parent=0 // loop_pre_header
    _
  $region3: #{_stage1.5} parent=0 // loop_header
    %s9 = sphi 0, %s13
    %p10 = scmp.ge.s32.totalorder %s9, 5
    %s16 = sphi 0, %s35
    %s17 = sphi 0, %s31
    %s18 = sphi 0, %s27
    %s19 = sphi 0, %s16
    %s20 = sphi 0, %s17
    %s21 = sphi 0, %s18
    %s22 = sphi 0, %s19
    %s23 = sphi 0, %s20
    %s24 = sphi 0, %s21
    %s40 = sphi 0, %s42
    %s43 = sphi 0, %s40
    %s44 = sphi 0, %s43
    %s60 = sphi 0, %s44
    %s68 = sphi 0, %s70
    %s71 = sphi 0, %s68
    %s72 = sphi 0, %s71
    %s88 = sphi 0, %s72
    %s94 = sphi 0, %s96
    %s97 = sphi 0, %s94
    %s98 = sphi 0, %s97
    %s114 = sphi 0, %s98
    %s122 = sphi 0, %s124
    %s125 = sphi 0, %s122
    %s126 = sphi 0, %s125
    %s142 = sphi 0, %s126
  $region4: #{_stage1.5} parent=0 // loop_header_branch
    %12 = sbr.rel (%p10) target = $region8
  $region5: #{_stage1.5} parent=0 // loop_body
    %s14 = ssub.s32 %s9, 1
    %s15 = ssub.s32 %s9, 2
    %s25 = sadd.s32 1, %s18
    %p26 = scmp.ge.s32.totalorder %s25, 1
    %s27 = scalar_select %p26, 0, %s25
    %s28 = sadd.s32 1, %s17
    %s29 = scalar_select %p26, %s28, %s17
    %p30 = scmp.ge.s32.totalorder %s29, 1
    %s31 = scalar_select %p30, 0, %s29
    %s32 = sadd.s32 1, %s16
    %s33 = scalar_select %p30, %s32, %s16
    %p34 = scmp.ge.s32.totalorder %s33, 3
    %s35 = scalar_select %p34, 0, %s33
    %s36 = ssub.s32 %s16, %s35
    %s37 = ssub.s32 %s18, %s27
    %s38 = sor.u32 %s36, %s37
    %p39 = scmp.eq.s32.totalorder %s38, 0
    %s41 = sadd.s32 %s40, 1
    %s42 = scalar_select %p39, %s40, %s41
    %p45 = pneg %p39
    %p46 = scmp.eq.s32.totalorder %s9, 2
    %p47 = por %p45, %p46
    %p48 = scmp.ne.s32.totalorder %s40, %s43
    %p49 = scmp.eq.s32.totalorder %s9, 0
    %p50 = por %p48, %p49
    %p51 = scmp.ne.s32.totalorder %s40, %s43
    %p52 = scmp.eq.s32.totalorder %s14, 2
    %p53 = por %p51, %p52
    %p54 = scmp.ne.s32.totalorder %s43, %s44
    %p55 = scmp.eq.s32.totalorder %s14, 0
    %p56 = por %p54, %p55
    %p57 = scmp.ne.s32.totalorder %s43, %s44
    %p58 = scmp.eq.s32.totalorder %s15, 2
    %p59 = por %p57, %p58
    %p61 = scmp.ne.s32.totalorder %s44, %s60
    %p62 = scmp.eq.s32.totalorder %s15, 0
    %p63 = por %p61, %p62
    %s64 = ssub.s32 %s18, %s27
    %s65 = ssub.s32 %s17, %s31
    %s66 = sor.u32 %s64, %s65
    %p67 = scmp.eq.s32.totalorder %s66, 0
    %s69 = sadd.s32 %s68, 1
    %s70 = scalar_select %p67, %s68, %s69
    %p73 = pneg %p67
    %p74 = scmp.eq.s32.totalorder %s9, 2
    %p75 = por %p73, %p74
    %p76 = scmp.ne.s32.totalorder %s68, %s71
    %p77 = scmp.eq.s32.totalorder %s9, 0
    %p78 = por %p76, %p77
    %p79 = scmp.ne.s32.totalorder %s68, %s71
    %p80 = scmp.eq.s32.totalorder %s14, 2
    %p81 = por %p79, %p80
    %p82 = scmp.ne.s32.totalorder %s71, %s72
    %p83 = scmp.eq.s32.totalorder %s14, 0
    %p84 = por %p82, %p83
    %p85 = scmp.ne.s32.totalorder %s71, %s72
    %p86 = scmp.eq.s32.totalorder %s15, 2
    %p87 = por %p85, %p86
    %p89 = scmp.ne.s32.totalorder %s72, %s88
    %p90 = scmp.eq.s32.totalorder %s15, 0
    %p91 = por %p89, %p90
    %s92 = ssub.s32 %s17, %s31
    %p93 = scmp.eq.s32.totalorder %s92, 0
    %s95 = sadd.s32 %s94, 1
    %s96 = scalar_select %p93, %s94, %s95
    %p99 = pneg %p93
    %p100 = scmp.eq.s32.totalorder %s9, 2
    %p101 = por %p99, %p100
    %p102 = scmp.ne.s32.totalorder %s94, %s97
    %p103 = scmp.eq.s32.totalorder %s9, 0
    %p104 = por %p102, %p103
    %p105 = scmp.ne.s32.totalorder %s94, %s97
    %p106 = scmp.eq.s32.totalorder %s14, 2
    %p107 = por %p105, %p106
    %p108 = scmp.ne.s32.totalorder %s97, %s98
    %p109 = scmp.eq.s32.totalorder %s14, 0
    %p110 = por %p108, %p109
    %p111 = scmp.ne.s32.totalorder %s97, %s98
    %p112 = scmp.eq.s32.totalorder %s15, 2
    %p113 = por %p111, %p112
    %p115 = scmp.ne.s32.totalorder %s98, %s114
    %p116 = scmp.eq.s32.totalorder %s15, 0
    %p117 = por %p115, %p116
    %s118 = ssub.s32 %s16, %s35
    %s119 = ssub.s32 %s17, %s31
    %s120 = sor.u32 %s118, %s119
    %p121 = scmp.eq.s32.totalorder %s120, 0
    %s123 = sadd.s32 %s122, 1
    %s124 = scalar_select %p121, %s122, %s123
    %p127 = pneg %p121
    %p128 = scmp.eq.s32.totalorder %s9, 2
    %p129 = por %p127, %p128
    %p130 = scmp.ne.s32.totalorder %s122, %s125
    %p131 = scmp.eq.s32.totalorder %s9, 0
    %p132 = por %p130, %p131
    %p133 = scmp.ne.s32.totalorder %s122, %s125
    %p134 = scmp.eq.s32.totalorder %s14, 2
    %p135 = por %p133, %p134
    %p136 = scmp.ne.s32.totalorder %s125, %s126
    %p137 = scmp.eq.s32.totalorder %s14, 0
    %p138 = por %p136, %p137
    %p139 = scmp.ne.s32.totalorder %s125, %s126
    %p140 = scmp.eq.s32.totalorder %s15, 2
    %p141 = por %p139, %p140
    %p143 = scmp.ne.s32.totalorder %s126, %s142
    %p144 = scmp.eq.s32.totalorder %s15, 0
    %p145 = por %p143, %p144
    %p146 = scmp.le.s32.totalorder 1, %s9
    %p147 = scmp.lt.s32.totalorder %s9, 4
    %p148 = pnand %p146, %p147
    %p149 = pneg %p148
    // Predicated region
    $region9: #{_stage1.5} parent=5 // pred_check
      _
    $region10: #{_stage1.5} parent=5 // pred_check_branch
      %151 = sbr.rel (%p148) target = $region12
    $region11: #{_stage1.5} parent=5 // pred_region
      %s152 = ssub.s32 %s9, 1
      // Predicated region
      $region13: #{_stage1.5} parent=11 // pred_check
        %p153 = pneg %p84
      $region14: #{_stage1.5} parent=11 // pred_check_branch
        %155 = sbr.rel (%p153) target = $region16
      $region15: #{_stage1.5} parent=11 // pred_region
        %s156 = smul.u32 32, %s21
        %p157 = scmp.lt.s32.totalorder %s156, 31
        %s158 = scalar_select %p157, %s156, 31
        %p159 = scmp.lt.s32.totalorder %s20, 0
        %s160 = scalar_select %p159, %s20, 0
        %s161 = sadd.s32 %s160, %s158
        %s162 = smul.addr %s161, 4
        %s163 = scalar_lea.vmem %s1, %s162
        %s164 = smul.u32 32, %s21
      $region16: #{_stage1.5} parent=11 // pred_fallthru
        _
      // Predicated region
      $region17: #{_stage1.5} parent=11 // pred_check
        %p165 = pneg %p110
      $region18: #{_stage1.5} parent=11 // pred_check_branch
        %167 = sbr.rel (%p165) target = $region20
      $region19: #{_stage1.5} parent=11 // pred_region
        %p168 = scmp.lt.s32.totalorder %s20, 0
        %s169 = scalar_select %p168, %s20, 0
        %s170 = scalar_lea.vmem %s2, %s169
      $region20: #{_stage1.5} parent=11 // pred_fallthru
        _
    $region12: #{_stage1.5} parent=5 // pred_fallthru
      _
    %p171 = scmp.lt.s32.totalorder %s9, 3
    // Predicated region
    $region21: #{_stage1.5} parent=5 // pred_check
      %p172 = pneg %p171
    $region22: #{_stage1.5} parent=5 // pred_check_branch
      %174 = sbr.rel (%p172) target = $region24
    $region23: #{_stage1.5} parent=5 // pred_region
      // Predicated region
      $region25: #{_stage1.5} parent=23 // pred_check
        %p175 = pneg %p50
      $region26: #{_stage1.5} parent=23 // pred_check_branch
        %177 = sbr.rel (%p175) target = $region28
      $region27: #{_stage1.5} parent=23 // pred_region
        %s178 = smul.u32 32, %s16
        %s179 = smul.u32 2, %s18
        %p180 = scmp.lt.s32.totalorder %s178, 95
        %s181 = scalar_select %p180, %s178, 95
        %p182 = scmp.lt.s32.totalorder %s179, 1
        %s183 = scalar_select %p182, %s179, 1
        %s184 = smul.addr %s181, 2
        %s185 = sadd.s32 %s183, %s184
        %s186 = smul.addr %s185, 8
        %s187 = scalar_lea.vmem %s0, %s186
        %s188 = smul.u32 32, %s16
        %s189 = smul.u32 2, %s18
      $region28: #{_stage1.5} parent=23 // pred_fallthru
        _
    $region24: #{_stage1.5} parent=5 // pred_fallthru
      _
    %p190 = scmp.le.s32.totalorder 1, %s9
    %p191 = scmp.lt.s32.totalorder %s9, 4
    %p192 = pnand %p190, %p191
    %p193 = pneg %p192
    // Predicated region
    $region29: #{_stage1.5} parent=5 // pred_check
      _
    $region30: #{_stage1.5} parent=5 // pred_check_branch
      %195 = sbr.rel (%p192) target = $region32
    $region31: #{_stage1.5} parent=5 // pred_region
      %s196 = ssub.s32 %s9, 1
      %s197 = smul.u32 32, %s19
      %s198 = smul.u32 2, %s21
      %p199 = scmp.lt.s32.totalorder %s197, 95
      %s200 = scalar_select %p199, %s197, 95
      %p201 = scmp.lt.s32.totalorder %s198, 1
      %s202 = scalar_select %p201, %s198, 1
      %s203 = smul.addr %s200, 2
      %s204 = sadd.s32 %s202, %s203
      %s205 = smul.addr %s204, 8
      %s206 = scalar_lea.vmem %s0, %s205
      %p207 = pneg %p56
      %p208 = pneg %p53
      %s209 = smul.u32 32, %s21
      %p210 = scmp.lt.s32.totalorder %s209, 31
      %s211 = scalar_select %p210, %s209, 31
      %p212 = scmp.lt.s32.totalorder %s20, 0
      %s213 = scalar_select %p212, %s20, 0
      %s214 = sadd.s32 %s213, %s211
      %s215 = smul.addr %s214, 4
      %s216 = scalar_lea.vmem %s1, %s215
      %p217 = pneg %p84
      %p218 = pneg %p81
      %p219 = scmp.lt.s32.totalorder %s20, 0
      %s220 = scalar_select %p219, %s20, 0
      %s221 = scalar_lea.vmem %s2, %s220
      %p222 = pneg %p110
      %p223 = pneg %p107
      %p224 = pneg %p138
      %p225 = pneg %p135
      %s226 = smul.u32 32, %s19
      %p227 = scmp.lt.s32.totalorder %s226, 95
      %s228 = scalar_select %p227, %s226, 95
      %p229 = scmp.lt.s32.totalorder %s20, 0
      %s230 = scalar_select %p229, %s20, 0
      %s231 = sadd.s32 %s230, %s228
      %s232 = smul.addr %s231, 8
      %s233 = scalar_lea.vmem %s3, %s232
      %s234 = smul.u32 32, %s19
      %s235 = smul.u32 2, %s21
      %p236 = scmp.lt.s32.totalorder %s234, 95
      %s237 = scalar_select %p236, %s234, 95
      %p238 = scmp.lt.s32.totalorder %s235, 1
      %s239 = scalar_select %p238, %s235, 1
      %s240 = smul.addr %s237, 2
      %s241 = sadd.s32 %s239, %s240
      %s242 = smul.addr %s241, 8
      %s243 = scalar_lea.vmem %s0, %s242
      %s244 = smul.u32 32, %s19
      %s245 = smul.u32 2, %s21
      %s246 = smul.u32 32, %s21
      %p247 = scmp.lt.s32.totalorder %s246, 31
      %s248 = scalar_select %p247, %s246, 31
      %p249 = scmp.lt.s32.totalorder %s20, 0
      %s250 = scalar_select %p249, %s20, 0
      %s251 = sadd.s32 %s250, %s248
      %s252 = smul.addr %s251, 4
      %s253 = scalar_lea.vmem %s1, %s252
      %s254 = smul.u32 32, %s21
      %p255 = scmp.lt.s32.totalorder %s20, 0
      %s256 = scalar_select %p255, %s20, 0
      %s257 = scalar_lea.vmem %s2, %s256
      %s258 = smul.u32 32, %s19
      %p259 = scmp.lt.s32.totalorder %s258, 95
      %s260 = scalar_select %p259, %s258, 95
      %p261 = scmp.lt.s32.totalorder %s20, 0
      %s262 = scalar_select %p261, %s20, 0
      %s263 = sadd.s32 %s262, %s260
      %s264 = smul.addr %s263, 8
      %s265 = scalar_lea.vmem %s3, %s264
      %s266 = smul.u32 32, %s19
      %p268 = scmp.eq.s32.totalorder %s21, 0
      // Predicated region
      $region33: #{_stage1.5} parent=31 // pred_check
        %p269 = pneg %p268
      $region34: #{_stage1.5} parent=31 // pred_check_branch
        %271 = sbr.rel (%p269) target = $region36
      $region35: #{_stage1.5} parent=31 // pred_region
        %272 = vst [vmem:[#allocation2] sm:$0xff] 0.0
        %273 = vst [vmem:[#allocation2 + $0x8] sm:$0xff] 0.0
        %274 = vst [vmem:[#allocation2 + $0x10] sm:$0xff] 0.0
        %275 = vst [vmem:[#allocation2 + $0x18] sm:$0xff] 0.0
        %276 = vst [vmem:[#allocation2 + $0x20] sm:$0xff] 0.0
        %277 = vst [vmem:[#allocation2 + $0x28] sm:$0xff] 0.0
        %278 = vst [vmem:[#allocation2 + $0x30] sm:$0xff] 0.0
        %279 = vst [vmem:[#allocation2 + $0x38] sm:$0xff] 0.0
        %280 = vst [vmem:[#allocation2 + $0x40] sm:$0xff] 0.0
        %281 = vst [vmem:[#allocation2 + $0x48] sm:$0xff] 0.0
        %282 = vst [vmem:[#allocation2 + $0x50] sm:$0xff] 0.0
        %283 = vst [vmem:[#allocation2 + $0x58] sm:$0xff] 0.0
        %284 = vst [vmem:[#allocation2 + $0x60] sm:$0xff] 0.0
        %285 = vst [vmem:[#allocation2 + $0x68] sm:$0xff] 0.0
        %286 = vst [vmem:[#allocation2 + $0x70] sm:$0xff] 0.0
        %287 = vst [vmem:[#allocation2 + $0x78] sm:$0xff] 0.0
        %288 = vst [vmem:[#allocation2 + $0x80] sm:$0xff] 0.0
        %289 = vst [vmem:[#allocation2 + $0x88] sm:$0xff] 0.0
        %290 = vst [vmem:[#allocation2 + $0x90] sm:$0xff] 0.0
        %291 = vst [vmem:[#allocation2 + $0x98] sm:$0xff] 0.0
        %292 = vst [vmem:[#allocation2 + $0xa0] sm:$0xff] 0.0
        %293 = vst [vmem:[#allocation2 + $0xa8] sm:$0xff] 0.0
        %294 = vst [vmem:[#allocation2 + $0xb0] sm:$0xff] 0.0
        %295 = vst [vmem:[#allocation2 + $0xb8] sm:$0xff] 0.0
        %296 = vst [vmem:[#allocation2 + $0xc0] sm:$0xff] 0.0
        %297 = vst [vmem:[#allocation2 + $0xc8] sm:$0xff] 0.0
        %298 = vst [vmem:[#allocation2 + $0xd0] sm:$0xff] 0.0
        %299 = vst [vmem:[#allocation2 + $0xd8] sm:$0xff] 0.0
        %300 = vst [vmem:[#allocation2 + $0xe0] sm:$0xff] 0.0
        %301 = vst [vmem:[#allocation2 + $0xe8] sm:$0xff] 0.0
        %302 = vst [vmem:[#allocation2 + $0xf0] sm:$0xff] 0.0
        %303 = vst [vmem:[#allocation2 + $0xf8] sm:$0xff] 0.0
      $region36: #{_stage1.5} parent=31 // pred_fallthru
        _
      %v304 = vld [vmem:[#allocation2] sm:$0xff]
      %v305 = vld [vmem:[#allocation2 + $0x8] sm:$0xff]
      %v306 = vld [vmem:[#allocation2 + $0x10] sm:$0xff]
      %v307 = vld [vmem:[#allocation2 + $0x18] sm:$0xff]
      %v308 = vld [vmem:[#allocation2 + $0x20] sm:$0xff]
      %v309 = vld [vmem:[#allocation2 + $0x28] sm:$0xff]
      %v310 = vld [vmem:[#allocation2 + $0x30] sm:$0xff]
      %v311 = vld [vmem:[#allocation2 + $0x38] sm:$0xff]
      %v312 = vld [vmem:[#allocation2 + $0x40] sm:$0xff]
      %v313 = vld [vmem:[#allocation2 + $0x48] sm:$0xff]
      %v314 = vld [vmem:[#allocation2 + $0x50] sm:$0xff]
      %v315 = vld [vmem:[#allocation2 + $0x58] sm:$0xff]
      %v316 = vld [vmem:[#allocation2 + $0x60] sm:$0xff]
      %v317 = vld [vmem:[#allocation2 + $0x68] sm:$0xff]
      %v318 = vld [vmem:[#allocation2 + $0x70] sm:$0xff]
      %v319 = vld [vmem:[#allocation2 + $0x78] sm:$0xff]
      %v320 = vld [vmem:[#allocation2 + $0x80] sm:$0xff]
      %v321 = vld [vmem:[#allocation2 + $0x88] sm:$0xff]
      %v322 = vld [vmem:[#allocation2 + $0x90] sm:$0xff]
      %v323 = vld [vmem:[#allocation2 + $0x98] sm:$0xff]
      %v324 = vld [vmem:[#allocation2 + $0xa0] sm:$0xff]
      %v325 = vld [vmem:[#allocation2 + $0xa8] sm:$0xff]
      %v326 = vld [vmem:[#allocation2 + $0xb0] sm:$0xff]
      %v327 = vld [vmem:[#allocation2 + $0xb8] sm:$0xff]
      %v328 = vld [vmem:[#allocation2 + $0xc0] sm:$0xff]
      %v329 = vld [vmem:[#allocation2 + $0xc8] sm:$0xff]
      %v330 = vld [vmem:[#allocation2 + $0xd0] sm:$0xff]
      %v331 = vld [vmem:[#allocation2 + $0xd8] sm:$0xff]
      %v332 = vld [vmem:[#allocation2 + $0xe0] sm:$0xff]
      %v333 = vld [vmem:[#allocation2 + $0xe8] sm:$0xff]
      %v334 = vld [vmem:[#allocation2 + $0xf0] sm:$0xff]
      %v335 = vld [vmem:[#allocation2 + $0xf8] sm:$0xff]
      %v336 = vld [vmem:[%s243] sm:$0xff]
      %v337 = vld [vmem:[%s243 + $0x8] sm:$0xff]
      %v338 = vld [vmem:[%s243 + $0x10] sm:$0xff]
      %v339 = vld [vmem:[%s243 + $0x18] sm:$0xff]
      %v340 = vld [vmem:[%s243 + $0x20] sm:$0xff]
      %v341 = vld [vmem:[%s243 + $0x28] sm:$0xff]
      %v342 = vld [vmem:[%s243 + $0x30] sm:$0xff]
      %v343 = vld [vmem:[%s243 + $0x38] sm:$0xff]
      %v344 = vld [vmem:[%s243 + $0x40] sm:$0xff]
      %v345 = vld [vmem:[%s243 + $0x48] sm:$0xff]
      %v346 = vld [vmem:[%s243 + $0x50] sm:$0xff]
      %v347 = vld [vmem:[%s243 + $0x58] sm:$0xff]
      %v348 = vld [vmem:[%s243 + $0x60] sm:$0xff]
      %v349 = vld [vmem:[%s243 + $0x68] sm:$0xff]
      %v350 = vld [vmem:[%s243 + $0x70] sm:$0xff]
      %v351 = vld [vmem:[%s243 + $0x78] sm:$0xff]
      %v352 = vld [vmem:[%s243 + $0x80] sm:$0xff]
      %v353 = vld [vmem:[%s243 + $0x88] sm:$0xff]
      %v354 = vld [vmem:[%s243 + $0x90] sm:$0xff]
      %v355 = vld [vmem:[%s243 + $0x98] sm:$0xff]
      %v356 = vld [vmem:[%s243 + $0xa0] sm:$0xff]
      %v357 = vld [vmem:[%s243 + $0xa8] sm:$0xff]
      %v358 = vld [vmem:[%s243 + $0xb0] sm:$0xff]
      %v359 = vld [vmem:[%s243 + $0xb8] sm:$0xff]
      %v360 = vld [vmem:[%s243 + $0xc0] sm:$0xff]
      %v361 = vld [vmem:[%s243 + $0xc8] sm:$0xff]
      %v362 = vld [vmem:[%s243 + $0xd0] sm:$0xff]
      %v363 = vld [vmem:[%s243 + $0xd8] sm:$0xff]
      %v364 = vld [vmem:[%s243 + $0xe0] sm:$0xff]
      %v365 = vld [vmem:[%s243 + $0xe8] sm:$0xff]
      %v366 = vld [vmem:[%s243 + $0xf0] sm:$0xff]
      %v367 = vld [vmem:[%s243 + $0xf8] sm:$0xff]
      %v368 = vld [vmem:[%s243 + $0x100] sm:$0xff]
      %v369 = vld [vmem:[%s243 + $0x108] sm:$0xff]
      %v370 = vld [vmem:[%s243 + $0x110] sm:$0xff]
      %v371 = vld [vmem:[%s243 + $0x118] sm:$0xff]
      %v372 = vld [vmem:[%s243 + $0x120] sm:$0xff]
      %v373 = vld [vmem:[%s243 + $0x128] sm:$0xff]
      %v374 = vld [vmem:[%s243 + $0x130] sm:$0xff]
      %v375 = vld [vmem:[%s243 + $0x138] sm:$0xff]
      %v376 = vld [vmem:[%s243 + $0x140] sm:$0xff]
      %v377 = vld [vmem:[%s243 + $0x148] sm:$0xff]
      %v378 = vld [vmem:[%s243 + $0x150] sm:$0xff]
      %v379 = vld [vmem:[%s243 + $0x158] sm:$0xff]
      %v380 = vld [vmem:[%s243 + $0x160] sm:$0xff]
      %v381 = vld [vmem:[%s243 + $0x168] sm:$0xff]
      %v382 = vld [vmem:[%s243 + $0x170] sm:$0xff]
      %v383 = vld [vmem:[%s243 + $0x178] sm:$0xff]
      %v384 = vld [vmem:[%s243 + $0x180] sm:$0xff]
      %v385 = vld [vmem:[%s243 + $0x188] sm:$0xff]
      %v386 = vld [vmem:[%s243 + $0x190] sm:$0xff]
      %v387 = vld [vmem:[%s243 + $0x198] sm:$0xff]
      %v388 = vld [vmem:[%s243 + $0x1a0] sm:$0xff]
      %v389 = vld [vmem:[%s243 + $0x1a8] sm:$0xff]
      %v390 = vld [vmem:[%s243 + $0x1b0] sm:$0xff]
      %v391 = vld [vmem:[%s243 + $0x1b8] sm:$0xff]
      %v392 = vld [vmem:[%s243 + $0x1c0] sm:$0xff]
      %v393 = vld [vmem:[%s243 + $0x1c8] sm:$0xff]
      %v394 = vld [vmem:[%s243 + $0x1d0] sm:$0xff]
      %v395 = vld [vmem:[%s243 + $0x1d8] sm:$0xff]
      %v396 = vld [vmem:[%s243 + $0x1e0] sm:$0xff]
      %v397 = vld [vmem:[%s243 + $0x1e8] sm:$0xff]
      %v398 = vld [vmem:[%s243 + $0x1f0] sm:$0xff]
      %v399 = vld [vmem:[%s243 + $0x1f8] sm:$0xff]
      %v400 = vpack.c.bf16 %v338, %v336
      %v401 = vpack.c.bf16 %v339, %v337
      %v402 = vpack.c.bf16 %v342, %v340
      %v403 = vpack.c.bf16 %v343, %v341
      %v404 = vpack.c.bf16 %v346, %v344
      %v405 = vpack.c.bf16 %v347, %v345
      %v406 = vpack.c.bf16 %v350, %v348
      %v407 = vpack.c.bf16 %v351, %v349
      %v408 = vpack.c.bf16 %v354, %v352
      %v409 = vpack.c.bf16 %v355, %v353
      %v410 = vpack.c.bf16 %v358, %v356
      %v411 = vpack.c.bf16 %v359, %v357
      %v412 = vpack.c.bf16 %v362, %v360
      %v413 = vpack.c.bf16 %v363, %v361
      %v414 = vpack.c.bf16 %v366, %v364
      %v415 = vpack.c.bf16 %v367, %v365
      %v416 = vpack.c.bf16 %v370, %v368
      %v417 = vpack.c.bf16 %v371, %v369
      %v418 = vpack.c.bf16 %v374, %v372
      %v419 = vpack.c.bf16 %v375, %v373
      %v420 = vpack.c.bf16 %v378, %v376
      %v421 = vpack.c.bf16 %v379, %v377
      %v422 = vpack.c.bf16 %v382, %v380
      %v423 = vpack.c.bf16 %v383, %v381
      %v424 = vpack.c.bf16 %v386, %v384
      %v425 = vpack.c.bf16 %v387, %v385
      %v426 = vpack.c.bf16 %v390, %v388
      %v427 = vpack.c.bf16 %v391, %v389
      %v428 = vpack.c.bf16 %v394, %v392
      %v429 = vpack.c.bf16 %v395, %v393
      %v430 = vpack.c.bf16 %v398, %v396
      %v431 = vpack.c.bf16 %v399, %v397
      %v432 = vld [vmem:[%s253] sm:$0xf]
      %v433 = vld [vmem:[%s253 + $0x4] sm:$0xf]
      %v434 = vld [vmem:[%s253 + $0x8] sm:$0xf]
      %v435 = vld [vmem:[%s253 + $0xc] sm:$0xf]
      %v436 = vld [vmem:[%s253 + $0x10] sm:$0xf]
      %v437 = vld [vmem:[%s253 + $0x14] sm:$0xf]
      %v438 = vld [vmem:[%s253 + $0x18] sm:$0xf]
      %v439 = vld [vmem:[%s253 + $0x1c] sm:$0xf]
      %v440 = vld [vmem:[%s253 + $0x20] sm:$0xf]
      %v441 = vld [vmem:[%s253 + $0x24] sm:$0xf]
      %v442 = vld [vmem:[%s253 + $0x28] sm:$0xf]
      %v443 = vld [vmem:[%s253 + $0x2c] sm:$0xf]
      %v444 = vld [vmem:[%s253 + $0x30] sm:$0xf]
      %v445 = vld [vmem:[%s253 + $0x34] sm:$0xf]
      %v446 = vld [vmem:[%s253 + $0x38] sm:$0xf]
      %v447 = vld [vmem:[%s253 + $0x3c] sm:$0xf]
      %v448 = vld [vmem:[%s253 + $0x40] sm:$0xf]
      %v449 = vld [vmem:[%s253 + $0x44] sm:$0xf]
      %v450 = vld [vmem:[%s253 + $0x48] sm:$0xf]
      %v451 = vld [vmem:[%s253 + $0x4c] sm:$0xf]
      %v452 = vld [vmem:[%s253 + $0x50] sm:$0xf]
      %v453 = vld [vmem:[%s253 + $0x54] sm:$0xf]
      %v454 = vld [vmem:[%s253 + $0x58] sm:$0xf]
      %v455 = vld [vmem:[%s253 + $0x5c] sm:$0xf]
      %v456 = vld [vmem:[%s253 + $0x60] sm:$0xf]
      %v457 = vld [vmem:[%s253 + $0x64] sm:$0xf]
      %v458 = vld [vmem:[%s253 + $0x68] sm:$0xf]
      %v459 = vld [vmem:[%s253 + $0x6c] sm:$0xf]
      %v460 = vld [vmem:[%s253 + $0x70] sm:$0xf]
      %v461 = vld [vmem:[%s253 + $0x74] sm:$0xf]
      %v462 = vld [vmem:[%s253 + $0x78] sm:$0xf]
      %v463 = vld [vmem:[%s253 + $0x7c] sm:$0xf]
      %v496 = vunpack.c.l.b16 %v432
      %v497 = vunpack.c.l.b16 %v433
      %v498 = vunpack.c.l.b16 %v434
      %v499 = vunpack.c.l.b16 %v435
      %v500 = vunpack.c.l.b16 %v436
      %v501 = vunpack.c.l.b16 %v437
      %v502 = vunpack.c.l.b16 %v438
      %v503 = vunpack.c.l.b16 %v439
      %v504 = vunpack.c.l.b16 %v440
      %v505 = vunpack.c.l.b16 %v441
      %v506 = vunpack.c.l.b16 %v442
      %v507 = vunpack.c.l.b16 %v443
      %v508 = vunpack.c.l.b16 %v444
      %v509 = vunpack.c.l.b16 %v445
      %v510 = vunpack.c.l.b16 %v446
      %v511 = vunpack.c.l.b16 %v447
      %v512 = vunpack.c.l.b16 %v448
      %v513 = vunpack.c.l.b16 %v449
      %v514 = vunpack.c.l.b16 %v450
      %v515 = vunpack.c.l.b16 %v451
      %v516 = vunpack.c.l.b16 %v452
      %v517 = vunpack.c.l.b16 %v453
      %v518 = vunpack.c.l.b16 %v454
      %v519 = vunpack.c.l.b16 %v455
      %v520 = vunpack.c.l.b16 %v456
      %v521 = vunpack.c.l.b16 %v457
      %v522 = vunpack.c.l.b16 %v458
      %v523 = vunpack.c.l.b16 %v459
      %v524 = vunpack.c.l.b16 %v460
      %v525 = vunpack.c.l.b16 %v461
      %v526 = vunpack.c.l.b16 %v462
      %v527 = vunpack.c.l.b16 %v463
      %v528 = vpack.c.b16 %v497, %v496
      %v529 = vpack.c.b16 %v499, %v498
      %v530 = vpack.c.b16 %v501, %v500
      %v531 = vpack.c.b16 %v503, %v502
      %v532 = vpack.c.b16 %v505, %v504
      %v533 = vpack.c.b16 %v507, %v506
      %v534 = vpack.c.b16 %v509, %v508
      %v535 = vpack.c.b16 %v511, %v510
      %v536 = vpack.c.b16 %v513, %v512
      %v537 = vpack.c.b16 %v515, %v514
      %v538 = vpack.c.b16 %v517, %v516
      %v539 = vpack.c.b16 %v519, %v518
      %v540 = vpack.c.b16 %v521, %v520
      %v541 = vpack.c.b16 %v523, %v522
      %v542 = vpack.c.b16 %v525, %v524
      %v543 = vpack.c.b16 %v527, %v526
      %560 = vmatprep.subr.bf16.mxu0 0
      %561 = vmatpush1.bf16.msra.mxu0 %v528
      %562 = vmatprep.subr.bf16.mxu0 0
      %563 = vmatpush1.bf16.msra.mxu0 %v529
      %564 = vmatprep.subr.bf16.mxu0 0
      %565 = vmatpush1.bf16.msra.mxu0 %v530
      %566 = vmatprep.subr.bf16.mxu0 0
      %567 = vmatpush1.bf16.msra.mxu0 %v531
      %568 = vmatprep.subr.bf16.mxu0 0
      %569 = vmatpush1.bf16.msra.mxu0 %v532
      %570 = vmatprep.subr.bf16.mxu0 0
      %571 = vmatpush1.bf16.msra.mxu0 %v533
      %572 = vmatprep.subr.bf16.mxu0 0
      %573 = vmatpush1.bf16.msra.mxu0 %v534
      %574 = vmatprep.subr.bf16.mxu0 0
      %575 = vmatpush1.bf16.msra.mxu0 %v535
      %576 = vmatprep.subr.bf16.mxu0 0
      %577 = vmatpush1.bf16.msra.mxu0 %v536
      %578 = vmatprep.subr.bf16.mxu0 0
      %579 = vmatpush1.bf16.msra.mxu0 %v537
      %580 = vmatprep.subr.bf16.mxu0 0
      %581 = vmatpush1.bf16.msra.mxu0 %v538
      %582 = vmatprep.subr.bf16.mxu0 0
      %583 = vmatpush1.bf16.msra.mxu0 %v539
      %584 = vmatprep.subr.bf16.mxu0 0
      %585 = vmatpush1.bf16.msra.mxu0 %v540
      %586 = vmatprep.subr.bf16.mxu0 0
      %587 = vmatpush1.bf16.msra.mxu0 %v541
      %588 = vmatprep.subr.bf16.mxu0 0
      %589 = vmatpush1.bf16.msra.mxu0 %v542
      %590 = vmatprep.subr.bf16.mxu0 0
      %591 = vmatpush1.bf16.msra.mxu0 %v543
      %592 = vmatprep.mubr.bf16.mxu0 %v401
      %593 = vmatmul.mubr.bf16.gmra.mrb[0].mxu0 %v400
      %v594 = vpop.f32.mrb[0].mxu0
      %v595 = vadd.f32 0.0, %v594
      %v596 = vpop.f32.mrb[0].mxu0
      %v597 = vpop.f32.mrb[0].mxu0
      %v598 = vadd.f32 0.0, %v597
      %v599 = vpop.f32.mrb[0].mxu0
      %600 = vmatprep.mubr.bf16.mxu0 %v403
      %601 = vmatmul.mubr.bf16.gmra.mrb[0].mxu0 %v402
      %v602 = vpop.f32.mrb[0].mxu0
      %v603 = vadd.f32 0.0, %v602
      %v604 = vpop.f32.mrb[0].mxu0
      %v605 = vpop.f32.mrb[0].mxu0
      %v606 = vadd.f32 0.0, %v605
      %v607 = vpop.f32.mrb[0].mxu0
      %608 = vmatprep.mubr.bf16.mxu0 %v405
      %609 = vmatmul.mubr.bf16.gmra.mrb[0].mxu0 %v404
      %v610 = vpop.f32.mrb[0].mxu0
      %v611 = vadd.f32 0.0, %v610
      %v612 = vpop.f32.mrb[0].mxu0
      %v613 = vpop.f32.mrb[0].mxu0
      %v614 = vadd.f32 0.0, %v613
      %v615 = vpop.f32.mrb[0].mxu0
      %616 = vmatprep.mubr.bf16.mxu0 %v407
      %617 = vmatmul.mubr.bf16.gmra.mrb[0].mxu0 %v406
      %v618 = vpop.f32.mrb[0].mxu0
      %v619 = vadd.f32 0.0, %v618
      %v620 = vpop.f32.mrb[0].mxu0
      %v621 = vpop.f32.mrb[0].mxu0
      %v622 = vadd.f32 0.0, %v621
      %v623 = vpop.f32.mrb[0].mxu0
      %624 = vmatprep.mubr.bf16.mxu0 %v409
      %625 = vmatmul.mubr.bf16.gmra.mrb[0].mxu0 %v408
      %v626 = vpop.f32.mrb[0].mxu0
      %v627 = vadd.f32 0.0, %v626
      %v628 = vpop.f32.mrb[0].mxu0
      %v629 = vpop.f32.mrb[0].mxu0
      %v630 = vadd.f32 0.0, %v629
      %v631 = vpop.f32.mrb[0].mxu0
      %632 = vmatprep.mubr.bf16.mxu0 %v411
      %633 = vmatmul.mubr.bf16.gmra.mrb[0].mxu0 %v410
      %v634 = vpop.f32.mrb[0].mxu0
      %v635 = vadd.f32 0.0, %v634
      %v636 = vpop.f32.mrb[0].mxu0
      %v637 = vpop.f32.mrb[0].mxu0
      %v638 = vadd.f32 0.0, %v637
      %v639 = vpop.f32.mrb[0].mxu0
      %640 = vmatprep.mubr.bf16.mxu0 %v413
      %641 = vmatmul.mubr.bf16.gmra.mrb[0].mxu0 %v412
      %v642 = vpop.f32.mrb[0].mxu0
      %v643 = vadd.f32 0.0, %v642
      %v644 = vpop.f32.mrb[0].mxu0
      %v645 = vpop.f32.mrb[0].mxu0
      %v646 = vadd.f32 0.0, %v645
      %v647 = vpop.f32.mrb[0].mxu0
      %648 = vmatprep.mubr.bf16.mxu0 %v415
      %649 = vmatmul.mubr.bf16.gmra.mrb[0].mxu0 %v414
      %v650 = vpop.f32.mrb[0].mxu0
      %v651 = vadd.f32 0.0, %v650
      %v652 = vpop.f32.mrb[0].mxu0
      %v653 = vpop.f32.mrb[0].mxu0
      %v654 = vadd.f32 0.0, %v653
      %v655 = vpop.f32.mrb[0].mxu0
      %656 = vmatprep.mubr.bf16.mxu0 %v417
      %657 = vmatmul.mubr.bf16.gmra.mrb[0].mxu0 %v416
      %v658 = vpop.f32.mrb[0].mxu0
      %v659 = vadd.f32 0.0, %v658
      %v660 = vpop.f32.mrb[0].mxu0
      %v661 = vpop.f32.mrb[0].mxu0
      %v662 = vadd.f32 0.0, %v661
      %v663 = vpop.f32.mrb[0].mxu0
      %664 = vmatprep.mubr.bf16.mxu0 %v419
      %665 = vmatmul.mubr.bf16.gmra.mrb[0].mxu0 %v418
      %v666 = vpop.f32.mrb[0].mxu0
      %v667 = vadd.f32 0.0, %v666
      %v668 = vpop.f32.mrb[0].mxu0
      %v669 = vpop.f32.mrb[0].mxu0
      %v670 = vadd.f32 0.0, %v669
      %v671 = vpop.f32.mrb[0].mxu0
      %672 = vmatprep.mubr.bf16.mxu0 %v421
      %673 = vmatmul.mubr.bf16.gmra.mrb[0].mxu0 %v420
      %v674 = vpop.f32.mrb[0].mxu0
      %v675 = vadd.f32 0.0, %v674
      %v676 = vpop.f32.mrb[0].mxu0
      %v677 = vpop.f32.mrb[0].mxu0
      %v678 = vadd.f32 0.0, %v677
      %v679 = vpop.f32.mrb[0].mxu0
      %680 = vmatprep.mubr.bf16.mxu0 %v423
      %681 = vmatmul.mubr.bf16.gmra.mrb[0].mxu0 %v422
      %v682 = vpop.f32.mrb[0].mxu0
      %v683 = vadd.f32 0.0, %v682
      %v684 = vpop.f32.mrb[0].mxu0
      %v685 = vpop.f32.mrb[0].mxu0
      %v686 = vadd.f32 0.0, %v685
      %v687 = vpop.f32.mrb[0].mxu0
      %688 = vmatprep.mubr.bf16.mxu0 %v425
      %689 = vmatmul.mubr.bf16.gmra.mrb[0].mxu0 %v424
      %v690 = vpop.f32.mrb[0].mxu0
      %v691 = vadd.f32 0.0, %v690
      %v692 = vpop.f32.mrb[0].mxu0
      %v693 = vpop.f32.mrb[0].mxu0
      %v694 = vadd.f32 0.0, %v693
      %v695 = vpop.f32.mrb[0].mxu0
      %696 = vmatprep.mubr.bf16.mxu0 %v427
      %697 = vmatmul.mubr.bf16.gmra.mrb[0].mxu0 %v426
      %v698 = vpop.f32.mrb[0].mxu0
      %v699 = vadd.f32 0.0, %v698
      %v700 = vpop.f32.mrb[0].mxu0
      %v701 = vpop.f32.mrb[0].mxu0
      %v702 = vadd.f32 0.0, %v701
      %v703 = vpop.f32.mrb[0].mxu0
      %704 = vmatprep.mubr.bf16.mxu0 %v429
      %705 = vmatmul.mubr.bf16.gmra.mrb[0].mxu0 %v428
      %v706 = vpop.f32.mrb[0].mxu0
      %v707 = vadd.f32 0.0, %v706
      %v708 = vpop.f32.mrb[0].mxu0
      %v709 = vpop.f32.mrb[0].mxu0
      %v710 = vadd.f32 0.0, %v709
      %v711 = vpop.f32.mrb[0].mxu0
      %712 = vmatprep.mubr.bf16.mxu0 %v431
      %713 = vmatmul.mubr.bf16.gmra.mrb[0].mxu0 %v430
      %v714 = vpop.f32.mrb[0].mxu0
      %v715 = vadd.f32 0.0, %v714
      %v716 = vpop.f32.mrb[0].mxu0
      %v717 = vpop.f32.mrb[0].mxu0
      %v718 = vadd.f32 0.0, %v717
      %v719 = vpop.f32.mrb[0].mxu0
      %720 = vdwg.mxu0
      %v721 = vadd.f32 %v304, %v595
      %v722 = vadd.f32 %v305, %v598
      %v723 = vadd.f32 %v306, %v603
      %v724 = vadd.f32 %v307, %v606
      %v725 = vadd.f32 %v308, %v611
      %v726 = vadd.f32 %v309, %v614
      %v727 = vadd.f32 %v310, %v619
      %v728 = vadd.f32 %v311, %v622
      %v729 = vadd.f32 %v312, %v627
      %v730 = vadd.f32 %v313, %v630
      %v731 = vadd.f32 %v314, %v635
      %v732 = vadd.f32 %v315, %v638
      %v733 = vadd.f32 %v316, %v643
      %v734 = vadd.f32 %v317, %v646
      %v735 = vadd.f32 %v318, %v651
      %v736 = vadd.f32 %v319, %v654
      %v737 = vadd.f32 %v320, %v659
      %v738 = vadd.f32 %v321, %v662
      %v739 = vadd.f32 %v322, %v667
      %v740 = vadd.f32 %v323, %v670
      %v741 = vadd.f32 %v324, %v675
      %v742 = vadd.f32 %v325, %v678
      %v743 = vadd.f32 %v326, %v683
      %v744 = vadd.f32 %v327, %v686
      %v745 = vadd.f32 %v328, %v691
      %v746 = vadd.f32 %v329, %v694
      %v747 = vadd.f32 %v330, %v699
      %v748 = vadd.f32 %v331, %v702
      %v749 = vadd.f32 %v332, %v707
      %v750 = vadd.f32 %v333, %v710
      %v751 = vadd.f32 %v334, %v715
      %v752 = vadd.f32 %v335, %v718
      %753 = vst [vmem:[#allocation2] sm:$0xff] %v721
      %754 = vst [vmem:[#allocation2 + $0x8] sm:$0xff] %v722
      %755 = vst [vmem:[#allocation2 + $0x10] sm:$0xff] %v723
      %756 = vst [vmem:[#allocation2 + $0x18] sm:$0xff] %v724
      %757 = vst [vmem:[#allocation2 + $0x20] sm:$0xff] %v725
      %758 = vst [vmem:[#allocation2 + $0x28] sm:$0xff] %v726
      %759 = vst [vmem:[#allocation2 + $0x30] sm:$0xff] %v727
      %760 = vst [vmem:[#allocation2 + $0x38] sm:$0xff] %v728
      %761 = vst [vmem:[#allocation2 + $0x40] sm:$0xff] %v729
      %762 = vst [vmem:[#allocation2 + $0x48] sm:$0xff] %v730
      %763 = vst [vmem:[#allocation2 + $0x50] sm:$0xff] %v731
      %764 = vst [vmem:[#allocation2 + $0x58] sm:$0xff] %v732
      %765 = vst [vmem:[#allocation2 + $0x60] sm:$0xff] %v733
      %766 = vst [vmem:[#allocation2 + $0x68] sm:$0xff] %v734
      %767 = vst [vmem:[#allocation2 + $0x70] sm:$0xff] %v735
      %768 = vst [vmem:[#allocation2 + $0x78] sm:$0xff] %v736
      %769 = vst [vmem:[#allocation2 + $0x80] sm:$0xff] %v737
      %770 = vst [vmem:[#allocation2 + $0x88] sm:$0xff] %v738
      %771 = vst [vmem:[#allocation2 + $0x90] sm:$0xff] %v739
      %772 = vst [vmem:[#allocation2 + $0x98] sm:$0xff] %v740
      %773 = vst [vmem:[#allocation2 + $0xa0] sm:$0xff] %v741
      %774 = vst [vmem:[#allocation2 + $0xa8] sm:$0xff] %v742
      %775 = vst [vmem:[#allocation2 + $0xb0] sm:$0xff] %v743
      %776 = vst [vmem:[#allocation2 + $0xb8] sm:$0xff] %v744
      %777 = vst [vmem:[#allocation2 + $0xc0] sm:$0xff] %v745
      %778 = vst [vmem:[#allocation2 + $0xc8] sm:$0xff] %v746
      %779 = vst [vmem:[#allocation2 + $0xd0] sm:$0xff] %v747
      %780 = vst [vmem:[#allocation2 + $0xd8] sm:$0xff] %v748
      %781 = vst [vmem:[#allocation2 + $0xe0] sm:$0xff] %v749
      %782 = vst [vmem:[#allocation2 + $0xe8] sm:$0xff] %v750
      %783 = vst [vmem:[#allocation2 + $0xf0] sm:$0xff] %v751
      %784 = vst [vmem:[#allocation2 + $0xf8] sm:$0xff] %v752
      // Predicated region
      $region37: #{_stage1.5} parent=31 // pred_check
        %p785 = pneg %p268
      $region38: #{_stage1.5} parent=31 // pred_check_branch
        %787 = sbr.rel (%p785) target = $region40
      $region39: #{_stage1.5} parent=31 // pred_region
        %v788 = vld [vmem:[#allocation2] sm:$0xff]
        %v789 = vld [vmem:[#allocation2 + $0x8] sm:$0xff]
        %v790 = vld [vmem:[#allocation2 + $0x10] sm:$0xff]
        %v791 = vld [vmem:[#allocation2 + $0x18] sm:$0xff]
        %v792 = vld [vmem:[#allocation2 + $0x20] sm:$0xff]
        %v793 = vld [vmem:[#allocation2 + $0x28] sm:$0xff]
        %v794 = vld [vmem:[#allocation2 + $0x30] sm:$0xff]
        %v795 = vld [vmem:[#allocation2 + $0x38] sm:$0xff]
        %v796 = vld [vmem:[#allocation2 + $0x40] sm:$0xff]
        %v797 = vld [vmem:[#allocation2 + $0x48] sm:$0xff]
        %v798 = vld [vmem:[#allocation2 + $0x50] sm:$0xff]
        %v799 = vld [vmem:[#allocation2 + $0x58] sm:$0xff]
        %v800 = vld [vmem:[#allocation2 + $0x60] sm:$0xff]
        %v801 = vld [vmem:[#allocation2 + $0x68] sm:$0xff]
        %v802 = vld [vmem:[#allocation2 + $0x70] sm:$0xff]
        %v803 = vld [vmem:[#allocation2 + $0x78] sm:$0xff]
        %v804 = vld [vmem:[#allocation2 + $0x80] sm:$0xff]
        %v805 = vld [vmem:[#allocation2 + $0x88] sm:$0xff]
        %v806 = vld [vmem:[#allocation2 + $0x90] sm:$0xff]
        %v807 = vld [vmem:[#allocation2 + $0x98] sm:$0xff]
        %v808 = vld [vmem:[#allocation2 + $0xa0] sm:$0xff]
        %v809 = vld [vmem:[#allocation2 + $0xa8] sm:$0xff]
        %v810 = vld [vmem:[#allocation2 + $0xb0] sm:$0xff]
        %v811 = vld [vmem:[#allocation2 + $0xb8] sm:$0xff]
        %v812 = vld [vmem:[#allocation2 + $0xc0] sm:$0xff]
        %v813 = vld [vmem:[#allocation2 + $0xc8] sm:$0xff]
        %v814 = vld [vmem:[#allocation2 + $0xd0] sm:$0xff]
        %v815 = vld [vmem:[#allocation2 + $0xd8] sm:$0xff]
        %v816 = vld [vmem:[#allocation2 + $0xe0] sm:$0xff]
        %v817 = vld [vmem:[#allocation2 + $0xe8] sm:$0xff]
        %v818 = vld [vmem:[#allocation2 + $0xf0] sm:$0xff]
        %v819 = vld [vmem:[#allocation2 + $0xf8] sm:$0xff]
        %v820 = vld [vmem:[%s257] sm:$0x1]
        %v822 = vlaneseq
        %v823 = vshrl.u32 %v822, 7
        %v824 = vsub.s32 0, %v823
        %v825 = vrot.slane %v820, %v824
        %v827 = vadd.f32 %v788, %v825
        %v828 = vadd.f32 %v789, %v825
        %v829 = vadd.f32 %v790, %v825
        %v830 = vadd.f32 %v791, %v825
        %v831 = vadd.f32 %v792, %v825
        %v832 = vadd.f32 %v793, %v825
        %v833 = vadd.f32 %v794, %v825
        %v834 = vadd.f32 %v795, %v825
        %v835 = vadd.f32 %v796, %v825
        %v836 = vadd.f32 %v797, %v825
        %v837 = vadd.f32 %v798, %v825
        %v838 = vadd.f32 %v799, %v825
        %v839 = vadd.f32 %v800, %v825
        %v840 = vadd.f32 %v801, %v825
        %v841 = vadd.f32 %v802, %v825
        %v842 = vadd.f32 %v803, %v825
        %v843 = vadd.f32 %v804, %v825
        %v844 = vadd.f32 %v805, %v825
        %v845 = vadd.f32 %v806, %v825
        %v846 = vadd.f32 %v807, %v825
        %v847 = vadd.f32 %v808, %v825
        %v848 = vadd.f32 %v809, %v825
        %v849 = vadd.f32 %v810, %v825
        %v850 = vadd.f32 %v811, %v825
        %v851 = vadd.f32 %v812, %v825
        %v852 = vadd.f32 %v813, %v825
        %v853 = vadd.f32 %v814, %v825
        %v854 = vadd.f32 %v815, %v825
        %v855 = vadd.f32 %v816, %v825
        %v856 = vadd.f32 %v817, %v825
        %v857 = vadd.f32 %v818, %v825
        %v858 = vadd.f32 %v819, %v825
        %859 = vst [vmem:[%s265] sm:$0xff] %v827
        %860 = vst [vmem:[%s265 + $0x8] sm:$0xff] %v828
        %861 = vst [vmem:[%s265 + $0x10] sm:$0xff] %v829
        %862 = vst [vmem:[%s265 + $0x18] sm:$0xff] %v830
        %863 = vst [vmem:[%s265 + $0x20] sm:$0xff] %v831
        %864 = vst [vmem:[%s265 + $0x28] sm:$0xff] %v832
        %865 = vst [vmem:[%s265 + $0x30] sm:$0xff] %v833
        %866 = vst [vmem:[%s265 + $0x38] sm:$0xff] %v834
        %867 = vst [vmem:[%s265 + $0x40] sm:$0xff] %v835
        %868 = vst [vmem:[%s265 + $0x48] sm:$0xff] %v836
        %869 = vst [vmem:[%s265 + $0x50] sm:$0xff] %v837
        %870 = vst [vmem:[%s265 + $0x58] sm:$0xff] %v838
        %871 = vst [vmem:[%s265 + $0x60] sm:$0xff] %v839
        %872 = vst [vmem:[%s265 + $0x68] sm:$0xff] %v840
        %873 = vst [vmem:[%s265 + $0x70] sm:$0xff] %v841
        %874 = vst [vmem:[%s265 + $0x78] sm:$0xff] %v842
        %875 = vst [vmem:[%s265 + $0x80] sm:$0xff] %v843
        %876 = vst [vmem:[%s265 + $0x88] sm:$0xff] %v844
        %877 = vst [vmem:[%s265 + $0x90] sm:$0xff] %v845
        %878 = vst [vmem:[%s265 + $0x98] sm:$0xff] %v846
        %879 = vst [vmem:[%s265 + $0xa0] sm:$0xff] %v847
        %880 = vst [vmem:[%s265 + $0xa8] sm:$0xff] %v848
        %881 = vst [vmem:[%s265 + $0xb0] sm:$0xff] %v849
        %882 = vst [vmem:[%s265 + $0xb8] sm:$0xff] %v850
        %883 = vst [vmem:[%s265 + $0xc0] sm:$0xff] %v851
        %884 = vst [vmem:[%s265 + $0xc8] sm:$0xff] %v852
        %885 = vst [vmem:[%s265 + $0xd0] sm:$0xff] %v853
        %886 = vst [vmem:[%s265 + $0xd8] sm:$0xff] %v854
        %887 = vst [vmem:[%s265 + $0xe0] sm:$0xff] %v855
        %888 = vst [vmem:[%s265 + $0xe8] sm:$0xff] %v856
        %889 = vst [vmem:[%s265 + $0xf0] sm:$0xff] %v857
        %890 = vst [vmem:[%s265 + $0xf8] sm:$0xff] %v858
      $region40: #{_stage1.5} parent=31 // pred_fallthru
        _
      %s891 = smul.u32 32, %s19
      %p892 = scmp.lt.s32.totalorder %s891, 95
      %s893 = scalar_select %p892, %s891, 95
      %p894 = scmp.lt.s32.totalorder %s20, 0
      %s895 = scalar_select %p894, %s20, 0
      %s896 = sadd.s32 %s895, %s893
      %s897 = smul.addr %s896, 8
      %s898 = scalar_lea.vmem %s3, %s897
      // Predicated region
      $region41: #{_stage1.5} parent=31 // pred_check
        %p899 = pneg %p135
      $region42: #{_stage1.5} parent=31 // pred_check_branch
        %901 = sbr.rel (%p899) target = $region44
      $region43: #{_stage1.5} parent=31 // pred_region
        %s902 = smul.u32 32, %s19
      $region44: #{_stage1.5} parent=31 // pred_fallthru
        _
    $region32: #{_stage1.5} parent=5 // pred_fallthru
      _
    %p903 = scmp.le.s32.totalorder 2, %s9
    // Predicated region
    $region45: #{_stage1.5} parent=5 // pred_check
      %p904 = pneg %p903
    $region46: #{_stage1.5} parent=5 // pred_check_branch
      %906 = sbr.rel (%p904) target = $region48
    $region47: #{_stage1.5} parent=5 // pred_region
      %s907 = ssub.s32 %s9, 2
      // Predicated region
      $region49: #{_stage1.5} parent=47 // pred_check
        %p908 = pneg %p141
      $region50: #{_stage1.5} parent=47 // pred_check_branch
        %910 = sbr.rel (%p908) target = $region52
      $region51: #{_stage1.5} parent=47 // pred_region
        %s911 = smul.u32 32, %s22
        %p912 = scmp.lt.s32.totalorder %s911, 95
        %s913 = scalar_select %p912, %s911, 95
        %p914 = scmp.lt.s32.totalorder %s23, 0
        %s915 = scalar_select %p914, %s23, 0
        %s916 = sadd.s32 %s915, %s913
        %s917 = smul.addr %s916, 8
        %s918 = scalar_lea.vmem %s3, %s917
      $region52: #{_stage1.5} parent=47 // pred_fallthru
        _
    $region48: #{_stage1.5} parent=5 // pred_fallthru
      _
  $region6: #{_stage1.5} parent=0 // loop_footer
    %s13 = sadd.s32 1, %s9
  $region7: #{_stage1.5} parent=0 // loop_footer_branch
    %8 = sbr.rel target = $region3
  $region8: #{_stage1.5} parent=0 // loop_exit
    _

// kernel: _stage1.4
$region0: #{_stage1.4}
  #allocation0 [shape = 'u32[]', space=smem, size = 0x4, offset = 0x4, fixed_abs, tag = 'smem constant byte address 0x4 - core index']
  #allocation1 [shape = 'u32[144,128]{1,0:T(1,128)}', space=vmem, size = 0x12000, scoped, tag = 'internal scratch']
  #allocation2 [shape = 'f32[256,256]{1,0:T(8,128)}', space=vmem, size = 0x40000, scoped, tag = 'scratch operand']
  %s0 = inlined_call_operand.vmem [shape: f32[768,2304], index: 0, kind: input, shape index: {}]
  %s1 = inlined_call_operand.vmem [shape: bf16[2304,256], index: 1, kind: input, shape index: {}]
  %s2 = inlined_call_operand.vmem [shape: f32[1,256], index: 2, kind: input, shape index: {}]
  %s3 = inlined_call_operand.vmem [shape: f32[768,256], index: 3, kind: output, shape index: {}]
  %s4 = sld [smem:[#allocation0]]
  $region76: #{_stage1.4} parent=0
    _
  %s6 = ssub.s32 1, %s4
  %s7 = scalar_select 0, %s6, %s4
  $region1: #{_stage1.4} parent=0
    #allocation3 [shape = 'u8[2359296]{0}', space=vmem, size = 0x240000, scoped, tag = 'input window, operand 0']
    loop: start=0, step=1, limit=8
    $region2: #{_stage1.4} parent=1 // loop_pre_header
      _
    $region3: #{_stage1.4} parent=1 // loop_header
      %s9 = sphi 0, %s13
      %p10 = scmp.ge.s32.totalorder %s9, 8
      %s16 = sphi 0, %s35
      %s17 = sphi 0, %s31
      %s18 = sphi 0, %s27
      %s19 = sphi 0, %s16
      %s20 = sphi 0, %s17
      %s21 = sphi 0, %s18
      %s22 = sphi 0, %s19
      %s23 = sphi 0, %s20
      %s24 = sphi 0, %s21
      %s40 = sphi 0, %s42
      %s43 = sphi 0, %s40
      %s44 = sphi 0, %s43
      %s60 = sphi 0, %s44
      %s68 = sphi 0, %s70
      %s71 = sphi 0, %s68
      %s72 = sphi 0, %s71
      %s88 = sphi 0, %s72
      %s94 = sphi 0, %s96
      %s97 = sphi 0, %s94
      %s98 = sphi 0, %s97
      %s114 = sphi 0, %s98
      %s122 = sphi 0, %s124
      %s125 = sphi 0, %s122
      %s126 = sphi 0, %s125
      %s142 = sphi 0, %s126
    $region4: #{_stage1.4} parent=1 // loop_header_branch
      %12 = sbr.rel (%p10) target = $region8
    $region5: #{_stage1.4} parent=1 // loop_body
      %s14 = ssub.s32 %s9, 1
      %s15 = ssub.s32 %s9, 2
      %s25 = sadd.s32 1, %s18
      %p26 = scmp.ge.s32.totalorder %s25, 2
      %s27 = scalar_select %p26, 0, %s25
      %s28 = sadd.s32 1, %s17
      %s29 = scalar_select %p26, %s28, %s17
      %p30 = scmp.ge.s32.totalorder %s29, 1
      %s31 = scalar_select %p30, 0, %s29
      %s32 = sadd.s32 1, %s16
      %s33 = scalar_select %p30, %s32, %s16
      %p34 = scmp.ge.s32.totalorder %s33, 3
      %s35 = scalar_select %p34, 0, %s33
      %s36 = ssub.s32 %s16, %s35
      %s37 = ssub.s32 %s18, %s27
      %s38 = sor.u32 %s36, %s37
      %p39 = scmp.eq.s32.totalorder %s38, 0
      %s41 = sadd.s32 %s40, 1
      %s42 = scalar_select %p39, %s40, %s41
      %p45 = pneg %p39
      %p46 = scmp.eq.s32.totalorder %s9, 5
      %p47 = por %p45, %p46
      %p48 = scmp.ne.s32.totalorder %s40, %s43
      %p49 = scmp.eq.s32.totalorder %s9, 0
      %p50 = por %p48, %p49
      %p51 = scmp.ne.s32.totalorder %s40, %s43
      %p52 = scmp.eq.s32.totalorder %s14, 5
      %p53 = por %p51, %p52
      %p54 = scmp.ne.s32.totalorder %s43, %s44
      %p55 = scmp.eq.s32.totalorder %s14, 0
      %p56 = por %p54, %p55
      %p57 = scmp.ne.s32.totalorder %s43, %s44
      %p58 = scmp.eq.s32.totalorder %s15, 5
      %p59 = por %p57, %p58
      %p61 = scmp.ne.s32.totalorder %s44, %s60
      %p62 = scmp.eq.s32.totalorder %s15, 0
      %p63 = por %p61, %p62
      %s64 = ssub.s32 %s18, %s27
      %s65 = ssub.s32 %s17, %s31
      %s66 = sor.u32 %s64, %s65
      %p67 = scmp.eq.s32.totalorder %s66, 0
      %s69 = sadd.s32 %s68, 1
      %s70 = scalar_select %p67, %s68, %s69
      %p73 = pneg %p67
      %p74 = scmp.eq.s32.totalorder %s9, 5
      %p75 = por %p73, %p74
      %p76 = scmp.ne.s32.totalorder %s68, %s71
      %p77 = scmp.eq.s32.totalorder %s9, 0
      %p78 = por %p76, %p77
      %p79 = scmp.ne.s32.totalorder %s68, %s71
      %p80 = scmp.eq.s32.totalorder %s14, 5
      %p81 = por %p79, %p80
      %p82 = scmp.ne.s32.totalorder %s71, %s72
      %p83 = scmp.eq.s32.totalorder %s14, 0
      %p84 = por %p82, %p83
      %p85 = scmp.ne.s32.totalorder %s71, %s72
      %p86 = scmp.eq.s32.totalorder %s15, 5
      %p87 = por %p85, %p86
      %p89 = scmp.ne.s32.totalorder %s72, %s88
      %p90 = scmp.eq.s32.totalorder %s15, 0
      %p91 = por %p89, %p90
      %s92 = ssub.s32 %s17, %s31
      %p93 = scmp.eq.s32.totalorder %s92, 0
      %s95 = sadd.s32 %s94, 1
      %s96 = scalar_select %p93, %s94, %s95
      %p99 = pneg %p93
      %p100 = scmp.eq.s32.totalorder %s9, 5
      %p101 = por %p99, %p100
      %p102 = scmp.ne.s32.totalorder %s94, %s97
      %p103 = scmp.eq.s32.totalorder %s9, 0
      %p104 = por %p102, %p103
      %p105 = scmp.ne.s32.totalorder %s94, %s97
      %p106 = scmp.eq.s32.totalorder %s14, 5
      %p107 = por %p105, %p106
      %p108 = scmp.ne.s32.totalorder %s97, %s98
      %p109 = scmp.eq.s32.totalorder %s14, 0
      %p110 = por %p108, %p109
      %p111 = scmp.ne.s32.totalorder %s97, %s98
      %p112 = scmp.eq.s32.totalorder %s15, 5
      %p113 = por %p111, %p112
      %p115 = scmp.ne.s32.totalorder %s98, %s114
      %p116 = scmp.eq.s32.totalorder %s15, 0
      %p117 = por %p115, %p116
      %s118 = ssub.s32 %s16, %s35
      %s119 = ssub.s32 %s17, %s31
      %s120 = sor.u32 %s118, %s119
      %p121 = scmp.eq.s32.totalorder %s120, 0
      %s123 = sadd.s32 %s122, 1
      %s124 = scalar_select %p121, %s122, %s123
      %p127 = pneg %p121
      %p128 = scmp.eq.s32.totalorder %s9, 5
      %p129 = por %p127, %p128
      %p130 = scmp.ne.s32.totalorder %s122, %s125
      %p131 = scmp.eq.s32.totalorder %s9, 0
      %p132 = por %p130, %p131
      %p133 = scmp.ne.s32.totalorder %s122, %s125
      %p134 = scmp.eq.s32.totalorder %s14, 5
      %p135 = por %p133, %p134
      %p136 = scmp.ne.s32.totalorder %s125, %s126
      %p137 = scmp.eq.s32.totalorder %s14, 0
      %p138 = por %p136, %p137
      %p139 = scmp.ne.s32.totalorder %s125, %s126
      %p140 = scmp.eq.s32.totalorder %s15, 5
      %p141 = por %p139, %p140
      %p143 = scmp.ne.s32.totalorder %s126, %s142
      %p144 = scmp.eq.s32.totalorder %s15, 0
      %p145 = por %p143, %p144
      %p146 = scmp.le.s32.totalorder 1, %s9
      %p147 = scmp.lt.s32.totalorder %s9, 7
      %p148 = pnand %p146, %p147
      %p149 = pneg %p148
      // Predicated region
      $region9: #{_stage1.4} parent=5 // pred_check
        _
      $region10: #{_stage1.4} parent=5 // pred_check_branch
        %151 = sbr.rel (%p148) target = $region12
      $region11: #{_stage1.4} parent=5 // pred_region
        %s152 = ssub.s32 %s9, 1
        // Predicated region
        $region13: #{_stage1.4} parent=11 // pred_check
          %p153 = pneg %p110
        $region14: #{_stage1.4} parent=11 // pred_check_branch
          %155 = sbr.rel (%p153) target = $region16
        $region15: #{_stage1.4} parent=11 // pred_region
          %s156 = smul.u32 2, %s20
          %p157 = scmp.lt.s32.totalorder %s156, 1
          %s158 = scalar_select %p157, %s156, 1
          %s159 = scalar_lea.vmem %s2, %s158
          %s160 = smul.u32 2, %s20
        $region16: #{_stage1.4} parent=11 // pred_fallthru
          _
      $region12: #{_stage1.4} parent=5 // pred_fallthru
        _
      %p161 = scmp.lt.s32.totalorder %s9, 6
      // Predicated region
      $region17: #{_stage1.4} parent=5 // pred_check
        %p162 = pneg %p161
      $region18: #{_stage1.4} parent=5 // pred_check_branch
        %164 = sbr.rel (%p162) target = $region20
      $region19: #{_stage1.4} parent=5 // pred_region
        // Predicated region
        $region21: #{_stage1.4} parent=19 // pred_check
          %p165 = pneg %p50
        $region22: #{_stage1.4} parent=19 // pred_check_branch
          %167 = sbr.rel (%p165) target = $region24
        $region23: #{_stage1.4} parent=19 // pred_region
          %s168 = sand.u32 %s40, 1
          %s169 = sand.u32 %s40, 1
          %s170 = smul.addr %s169, 2304
          %s171 = scalar_lea.vmem [#allocation3], %s170
          %s172 = smul.u32 32, %s16
          %s173 = smul.u32 9, %s18
          %s174 = smul.addr %s172, 18
          %s175 = sadd.s32 %s173, %s174
          %s176 = smul.addr %s175, 8
          %s177 = scalar_lea.vmem %s0, %s176
          // Predicated region
          $region25: #{_stage1.4} parent=23 // pred_check
            _
          $region26: #{_stage1.4} parent=23 // pred_check_branch
            %179 = sbr.rel (0) target = $region28
          $region27: #{_stage1.4} parent=23 // pred_region
            // Predicated region
            $region29: #{_stage1.4} parent=27 // pred_check
              _
            $region30: #{_stage1.4} parent=27 // pred_check_branch
              %181 = sbr.rel (0) target = $region32
            $region31: #{_stage1.4} parent=27 // pred_region
              loop: start=0, step=1, limit=1
              $region33: #{_stage1.4} parent=31 // loop_pre_header
                _
              $region34: #{_stage1.4} parent=31 // loop_header
                %s183 = sphi 0, %s187
                %p184 = scmp.ge.s32.totalorder %s183, 1
                %s188 = sphi %s177, %s177
                %s189 = sphi %s171, %s171
              $region35: #{_stage1.4} parent=31 // loop_header_branch
                %186 = sbr.rel (%p184) target = $region39
              $region36: #{_stage1.4} parent=31 // loop_body
                %v190 = vld [vmem:[%s188] sm:$0xff]
                %191 = vst [vmem:[%s189] sm:$0xff] %v190
                %v192 = vld [vmem:[%s188 + $0x8] sm:$0xff]
                %193 = vst [vmem:[%s189 + $0x8] sm:$0xff] %v192
                %v194 = vld [vmem:[%s188 + $0x10] sm:$0xff]
                %195 = vst [vmem:[%s189 + $0x10] sm:$0xff] %v194
                %v196 = vld [vmem:[%s188 + $0x18] sm:$0xff]
                %197 = vst [vmem:[%s189 + $0x18] sm:$0xff] %v196
                %v198 = vld [vmem:[%s188 + $0x20] sm:$0xff]
                %199 = vst [vmem:[%s189 + $0x20] sm:$0xff] %v198
                %v200 = vld [vmem:[%s188 + $0x28] sm:$0xff]
                %201 = vst [vmem:[%s189 + $0x28] sm:$0xff] %v200
                %v202 = vld [vmem:[%s188 + $0x30] sm:$0xff]
                %203 = vst [vmem:[%s189 + $0x30] sm:$0xff] %v202
                %v204 = vld [vmem:[%s188 + $0x38] sm:$0xff]
                %205 = vst [vmem:[%s189 + $0x38] sm:$0xff] %v204
                %v206 = vld [vmem:[%s188 + $0x40] sm:$0xff]
                %207 = vst [vmem:[%s189 + $0x40] sm:$0xff] %v206
                %v208 = vld [vmem:[%s188 + $0x90] sm:$0xff]
                %209 = vst [vmem:[%s189 + $0x48] sm:$0xff] %v208
                %v210 = vld [vmem:[%s188 + $0x98] sm:$0xff]
                %211 = vst [vmem:[%s189 + $0x50] sm:$0xff] %v210
                %v212 = vld [vmem:[%s188 + $0xa0] sm:$0xff]
                %213 = vst [vmem:[%s189 + $0x58] sm:$0xff] %v212
                %v214 = vld [vmem:[%s188 + $0xa8] sm:$0xff]
                %215 = vst [vmem:[%s189 + $0x60] sm:$0xff] %v214
                %v216 = vld [vmem:[%s188 + $0xb0] sm:$0xff]
                %217 = vst [vmem:[%s189 + $0x68] sm:$0xff] %v216
                %v218 = vld [vmem:[%s188 + $0xb8] sm:$0xff]
                %219 = vst [vmem:[%s189 + $0x70] sm:$0xff] %v218
                %v220 = vld [vmem:[%s188 + $0xc0] sm:$0xff]
                %221 = vst [vmem:[%s189 + $0x78] sm:$0xff] %v220
                %v222 = vld [vmem:[%s188 + $0xc8] sm:$0xff]
                %223 = vst [vmem:[%s189 + $0x80] sm:$0xff] %v222
                %v224 = vld [vmem:[%s188 + $0xd0] sm:$0xff]
                %225 = vst [vmem:[%s189 + $0x88] sm:$0xff] %v224
                %v226 = vld [vmem:[%s188 + $0x120] sm:$0xff]
                %227 = vst [vmem:[%s189 + $0x90] sm:$0xff] %v226
                %v228 = vld [vmem:[%s188 + $0x128] sm:$0xff]
                %229 = vst [vmem:[%s189 + $0x98] sm:$0xff] %v228
                %v230 = vld [vmem:[%s188 + $0x130] sm:$0xff]
                %231 = vst [vmem:[%s189 + $0xa0] sm:$0xff] %v230
                %v232 = vld [vmem:[%s188 + $0x138] sm:$0xff]
                %233 = vst [vmem:[%s189 + $0xa8] sm:$0xff] %v232
                %v234 = vld [vmem:[%s188 + $0x140] sm:$0xff]
                %235 = vst [vmem:[%s189 + $0xb0] sm:$0xff] %v234
                %v236 = vld [vmem:[%s188 + $0x148] sm:$0xff]
                %237 = vst [vmem:[%s189 + $0xb8] sm:$0xff] %v236
                %v238 = vld [vmem:[%s188 + $0x150] sm:$0xff]
                %239 = vst [vmem:[%s189 + $0xc0] sm:$0xff] %v238
                %v240 = vld [vmem:[%s188 + $0x158] sm:$0xff]
                %241 = vst [vmem:[%s189 + $0xc8] sm:$0xff] %v240
                %v242 = vld [vmem:[%s188 + $0x160] sm:$0xff]
                %243 = vst [vmem:[%s189 + $0xd0] sm:$0xff] %v242
                %v244 = vld [vmem:[%s188 + $0x1b0] sm:$0xff]
                %245 = vst [vmem:[%s189 + $0xd8] sm:$0xff] %v244
                %v246 = vld [vmem:[%s188 + $0x1b8] sm:$0xff]
                %247 = vst [vmem:[%s189 + $0xe0] sm:$0xff] %v246
                %v248 = vld [vmem:[%s188 + $0x1c0] sm:$0xff]
                %249 = vst [vmem:[%s189 + $0xe8] sm:$0xff] %v248
                %v250 = vld [vmem:[%s188 + $0x1c8] sm:$0xff]
                %251 = vst [vmem:[%s189 + $0xf0] sm:$0xff] %v250
                %v252 = vld [vmem:[%s188 + $0x1d0] sm:$0xff]
                %253 = vst [vmem:[%s189 + $0xf8] sm:$0xff] %v252
                %v254 = vld [vmem:[%s188 + $0x1d8] sm:$0xff]
                %255 = vst [vmem:[%s189 + $0x100] sm:$0xff] %v254
                %v256 = vld [vmem:[%s188 + $0x1e0] sm:$0xff]
                %257 = vst [vmem:[%s189 + $0x108] sm:$0xff] %v256
                %v258 = vld [vmem:[%s188 + $0x1e8] sm:$0xff]
                %259 = vst [vmem:[%s189 + $0x110] sm:$0xff] %v258
                %v260 = vld [vmem:[%s188 + $0x1f0] sm:$0xff]
                %261 = vst [vmem:[%s189 + $0x118] sm:$0xff] %v260
                %v262 = vld [vmem:[%s188 + $0x240] sm:$0xff]
                %263 = vst [vmem:[%s189 + $0x120] sm:$0xff] %v262
                %v264 = vld [vmem:[%s188 + $0x248] sm:$0xff]
                %265 = vst [vmem:[%s189 + $0x128] sm:$0xff] %v264
                %v266 = vld [vmem:[%s188 + $0x250] sm:$0xff]
                %267 = vst [vmem:[%s189 + $0x130] sm:$0xff] %v266
                %v268 = vld [vmem:[%s188 + $0x258] sm:$0xff]
                %269 = vst [vmem:[%s189 + $0x138] sm:$0xff] %v268
                %v270 = vld [vmem:[%s188 + $0x260] sm:$0xff]
                %271 = vst [vmem:[%s189 + $0x140] sm:$0xff] %v270
                %v272 = vld [vmem:[%s188 + $0x268] sm:$0xff]
                %273 = vst [vmem:[%s189 + $0x148] sm:$0xff] %v272
                %v274 = vld [vmem:[%s188 + $0x270] sm:$0xff]
                %275 = vst [vmem:[%s189 + $0x150] sm:$0xff] %v274
                %v276 = vld [vmem:[%s188 + $0x278] sm:$0xff]
                %277 = vst [vmem:[%s189 + $0x158] sm:$0xff] %v276
                %v278 = vld [vmem:[%s188 + $0x280] sm:$0xff]
                %279 = vst [vmem:[%s189 + $0x160] sm:$0xff] %v278
                %v280 = vld [vmem:[%s188 + $0x2d0] sm:$0xff]
                %281 = vst [vmem:[%s189 + $0x168] sm:$0xff] %v280
                %v282 = vld [vmem:[%s188 + $0x2d8] sm:$0xff]
                %283 = vst [vmem:[%s189 + $0x170] sm:$0xff] %v282
                %v284 = vld [vmem:[%s188 + $0x2e0] sm:$0xff]
                %285 = vst [vmem:[%s189 + $0x178] sm:$0xff] %v284
                %v286 = vld [vmem:[%s188 + $0x2e8] sm:$0xff]
                %287 = vst [vmem:[%s189 + $0x180] sm:$0xff] %v286
                %v288 = vld [vmem:[%s188 + $0x2f0] sm:$0xff]
                %289 = vst [vmem:[%s189 + $0x188] sm:$0xff] %v288
                %v290 = vld [vmem:[%s188 + $0x2f8] sm:$0xff]
                %291 = vst [vmem:[%s189 + $0x190] sm:$0xff] %v290
                %v292 = vld [vmem:[%s188 + $0x300] sm:$0xff]
                %293 = vst [vmem:[%s189 + $0x198] sm:$0xff] %v292
                %v294 = vld [vmem:[%s188 + $0x308] sm:$0xff]
                %295 = vst [vmem:[%s189 + $0x1a0] sm:$0xff] %v294
                %v296 = vld [vmem:[%s188 + $0x310] sm:$0xff]
                %297 = vst [vmem:[%s189 + $0x1a8] sm:$0xff] %v296
                %v298 = vld [vmem:[%s188 + $0x360] sm:$0xff]
                %299 = vst [vmem:[%s189 + $0x1b0] sm:$0xff] %v298
                %v300 = vld [vmem:[%s188 + $0x368] sm:$0xff]
                %301 = vst [vmem:[%s189 + $0x1b8] sm:$0xff] %v300
                %v302 = vld [vmem:[%s188 + $0x370] sm:$0xff]
                %303 = vst [vmem:[%s189 + $0x1c0] sm:$0xff] %v302
                %v304 = vld [vmem:[%s188 + $0x378] sm:$0xff]
                %305 = vst [vmem:[%s189 + $0x1c8] sm:$0xff] %v304
                %v306 = vld [vmem:[%s188 + $0x380] sm:$0xff]
                %307 = vst [vmem:[%s189 + $0x1d0] sm:$0xff] %v306
                %v308 = vld [vmem:[%s188 + $0x388] sm:$0xff]
                %309 = vst [vmem:[%s189 + $0x1d8] sm:$0xff] %v308
                %v310 = vld [vmem:[%s188 + $0x390] sm:$0xff]
                %311 = vst [vmem:[%s189 + $0x1e0] sm:$0xff] %v310
                %v312 = vld [vmem:[%s188 + $0x398] sm:$0xff]
                %313 = vst [vmem:[%s189 + $0x1e8] sm:$0xff] %v312
                %v314 = vld [vmem:[%s188 + $0x3a0] sm:$0xff]
                %315 = vst [vmem:[%s189 + $0x1f0] sm:$0xff] %v314
                %v316 = vld [vmem:[%s188 + $0x3f0] sm:$0xff]
                %317 = vst [vmem:[%s189 + $0x1f8] sm:$0xff] %v316
                %v318 = vld [vmem:[%s188 + $0x3f8] sm:$0xff]
                %319 = vst [vmem:[%s189 + $0x200] sm:$0xff] %v318
                %v320 = vld [vmem:[%s188 + $0x400] sm:$0xff]
                %321 = vst [vmem:[%s189 + $0x208] sm:$0xff] %v320
                %v322 = vld [vmem:[%s188 + $0x408] sm:$0xff]
                %323 = vst [vmem:[%s189 + $0x210] sm:$0xff] %v322
                %v324 = vld [vmem:[%s188 + $0x410] sm:$0xff]
                %325 = vst [vmem:[%s189 + $0x218] sm:$0xff] %v324
                %v326 = vld [vmem:[%s188 + $0x418] sm:$0xff]
                %327 = vst [vmem:[%s189 + $0x220] sm:$0xff] %v326
                %v328 = vld [vmem:[%s188 + $0x420] sm:$0xff]
                %329 = vst [vmem:[%s189 + $0x228] sm:$0xff] %v328
                %v330 = vld [vmem:[%s188 + $0x428] sm:$0xff]
                %331 = vst [vmem:[%s189 + $0x230] sm:$0xff] %v330
                %v332 = vld [vmem:[%s188 + $0x430] sm:$0xff]
                %333 = vst [vmem:[%s189 + $0x238] sm:$0xff] %v332
                %v334 = vld [vmem:[%s188 + $0x480] sm:$0xff]
                %335 = vst [vmem:[%s189 + $0x240] sm:$0xff] %v334
                %v336 = vld [vmem:[%s188 + $0x488] sm:$0xff]
                %337 = vst [vmem:[%s189 + $0x248] sm:$0xff] %v336
                %v338 = vld [vmem:[%s188 + $0x490] sm:$0xff]
                %339 = vst [vmem:[%s189 + $0x250] sm:$0xff] %v338
                %v340 = vld [vmem:[%s188 + $0x498] sm:$0xff]
                %341 = vst [vmem:[%s189 + $0x258] sm:$0xff] %v340
                %v342 = vld [vmem:[%s188 + $0x4a0] sm:$0xff]
                %343 = vst [vmem:[%s189 + $0x260] sm:$0xff] %v342
                %v344 = vld [vmem:[%s188 + $0x4a8] sm:$0xff]
                %345 = vst [vmem:[%s189 + $0x268] sm:$0xff] %v344
                %v346 = vld [vmem:[%s188 + $0x4b0] sm:$0xff]
                %347 = vst [vmem:[%s189 + $0x270] sm:$0xff] %v346
                %v348 = vld [vmem:[%s188 + $0x4b8] sm:$0xff]
                %349 = vst [vmem:[%s189 + $0x278] sm:$0xff] %v348
                %v350 = vld [vmem:[%s188 + $0x4c0] sm:$0xff]
                %351 = vst [vmem:[%s189 + $0x280] sm:$0xff] %v350
                %v352 = vld [vmem:[%s188 + $0x510] sm:$0xff]
                %353 = vst [vmem:[%s189 + $0x288] sm:$0xff] %v352
                %v354 = vld [vmem:[%s188 + $0x518] sm:$0xff]
                %355 = vst [vmem:[%s189 + $0x290] sm:$0xff] %v354
                %v356 = vld [vmem:[%s188 + $0x520] sm:$0xff]
                %357 = vst [vmem:[%s189 + $0x298] sm:$0xff] %v356
                %v358 = vld [vmem:[%s188 + $0x528] sm:$0xff]
                %359 = vst [vmem:[%s189 + $0x2a0] sm:$0xff] %v358
                %v360 = vld [vmem:[%s188 + $0x530] sm:$0xff]
                %361 = vst [vmem:[%s189 + $0x2a8] sm:$0xff] %v360
                %v362 = vld [vmem:[%s188 + $0x538] sm:$0xff]
                %363 = vst [vmem:[%s189 + $0x2b0] sm:$0xff] %v362
                %v364 = vld [vmem:[%s188 + $0x540] sm:$0xff]
                %365 = vst [vmem:[%s189 + $0x2b8] sm:$0xff] %v364
                %v366 = vld [vmem:[%s188 + $0x548] sm:$0xff]
                %367 = vst [vmem:[%s189 + $0x2c0] sm:$0xff] %v366
                %v368 = vld [vmem:[%s188 + $0x550] sm:$0xff]
                %369 = vst [vmem:[%s189 + $0x2c8] sm:$0xff] %v368
                %v370 = vld [vmem:[%s188 + $0x5a0] sm:$0xff]
                %371 = vst [vmem:[%s189 + $0x2d0] sm:$0xff] %v370
                %v372 = vld [vmem:[%s188 + $0x5a8] sm:$0xff]
                %373 = vst [vmem:[%s189 + $0x2d8] sm:$0xff] %v372
                %v374 = vld [vmem:[%s188 + $0x5b0] sm:$0xff]
                %375 = vst [vmem:[%s189 + $0x2e0] sm:$0xff] %v374
                %v376 = vld [vmem:[%s188 + $0x5b8] sm:$0xff]
                %377 = vst [vmem:[%s189 + $0x2e8] sm:$0xff] %v376
                %v378 = vld [vmem:[%s188 + $0x5c0] sm:$0xff]
                %379 = vst [vmem:[%s189 + $0x2f0] sm:$0xff] %v378
                %v380 = vld [vmem:[%s188 + $0x5c8] sm:$0xff]
                %381 = vst [vmem:[%s189 + $0x2f8] sm:$0xff] %v380
                %v382 = vld [vmem:[%s188 + $0x5d0] sm:$0xff]
                %383 = vst [vmem:[%s189 + $0x300] sm:$0xff] %v382
                %v384 = vld [vmem:[%s188 + $0x5d8] sm:$0xff]
                %385 = vst [vmem:[%s189 + $0x308] sm:$0xff] %v384
                %v386 = vld [vmem:[%s188 + $0x5e0] sm:$0xff]
                %387 = vst [vmem:[%s189 + $0x310] sm:$0xff] %v386
                %v388 = vld [vmem:[%s188 + $0x630] sm:$0xff]
                %389 = vst [vmem:[%s189 + $0x318] sm:$0xff] %v388
                %v390 = vld [vmem:[%s188 + $0x638] sm:$0xff]
                %391 = vst [vmem:[%s189 + $0x320] sm:$0xff] %v390
                %v392 = vld [vmem:[%s188 + $0x640] sm:$0xff]
                %393 = vst [vmem:[%s189 + $0x328] sm:$0xff] %v392
                %v394 = vld [vmem:[%s188 + $0x648] sm:$0xff]
                %395 = vst [vmem:[%s189 + $0x330] sm:$0xff] %v394
                %v396 = vld [vmem:[%s188 + $0x650] sm:$0xff]
                %397 = vst [vmem:[%s189 + $0x338] sm:$0xff] %v396
                %v398 = vld [vmem:[%s188 + $0x658] sm:$0xff]
                %399 = vst [vmem:[%s189 + $0x340] sm:$0xff] %v398
                %v400 = vld [vmem:[%s188 + $0x660] sm:$0xff]
                %401 = vst [vmem:[%s189 + $0x348] sm:$0xff] %v400
                %v402 = vld [vmem:[%s188 + $0x668] sm:$0xff]
                %403 = vst [vmem:[%s189 + $0x350] sm:$0xff] %v402
                %v404 = vld [vmem:[%s188 + $0x670] sm:$0xff]
                %405 = vst [vmem:[%s189 + $0x358] sm:$0xff] %v404
                %v406 = vld [vmem:[%s188 + $0x6c0] sm:$0xff]
                %407 = vst [vmem:[%s189 + $0x360] sm:$0xff] %v406
                %v408 = vld [vmem:[%s188 + $0x6c8] sm:$0xff]
                %409 = vst [vmem:[%s189 + $0x368] sm:$0xff] %v408
                %v410 = vld [vmem:[%s188 + $0x6d0] sm:$0xff]
                %411 = vst [vmem:[%s189 + $0x370] sm:$0xff] %v410
                %v412 = vld [vmem:[%s188 + $0x6d8] sm:$0xff]
                %413 = vst [vmem:[%s189 + $0x378] sm:$0xff] %v412
                %v414 = vld [vmem:[%s188 + $0x6e0] sm:$0xff]
                %415 = vst [vmem:[%s189 + $0x380] sm:$0xff] %v414
                %v416 = vld [vmem:[%s188 + $0x6e8] sm:$0xff]
                %417 = vst [vmem:[%s189 + $0x388] sm:$0xff] %v416
                %v418 = vld [vmem:[%s188 + $0x6f0] sm:$0xff]
                %419 = vst [vmem:[%s189 + $0x390] sm:$0xff] %v418
                %v420 = vld [vmem:[%s188 + $0x6f8] sm:$0xff]
                %421 = vst [vmem:[%s189 + $0x398] sm:$0xff] %v420
                %v422 = vld [vmem:[%s188 + $0x700] sm:$0xff]
                %423 = vst [vmem:[%s189 + $0x3a0] sm:$0xff] %v422
                %v424 = vld [vmem:[%s188 + $0x750] sm:$0xff]
                %425 = vst [vmem:[%s189 + $0x3a8] sm:$0xff] %v424
                %v426 = vld [vmem:[%s188 + $0x758] sm:$0xff]
                %427 = vst [vmem:[%s189 + $0x3b0] sm:$0xff] %v426
                %v428 = vld [vmem:[%s188 + $0x760] sm:$0xff]
                %429 = vst [vmem:[%s189 + $0x3b8] sm:$0xff] %v428
                %v430 = vld [vmem:[%s188 + $0x768] sm:$0xff]
                %431 = vst [vmem:[%s189 + $0x3c0] sm:$0xff] %v430
                %v432 = vld [vmem:[%s188 + $0x770] sm:$0xff]
                %433 = vst [vmem:[%s189 + $0x3c8] sm:$0xff] %v432
                %v434 = vld [vmem:[%s188 + $0x778] sm:$0xff]
                %435 = vst [vmem:[%s189 + $0x3d0] sm:$0xff] %v434
                %v436 = vld [vmem:[%s188 + $0x780] sm:$0xff]
                %437 = vst [vmem:[%s189 + $0x3d8] sm:$0xff] %v436
                %v438 = vld [vmem:[%s188 + $0x788] sm:$0xff]
                %439 = vst [vmem:[%s189 + $0x3e0] sm:$0xff] %v438
                %v440 = vld [vmem:[%s188 + $0x790] sm:$0xff]
                %441 = vst [vmem:[%s189 + $0x3e8] sm:$0xff] %v440
                %v442 = vld [vmem:[%s188 + $0x7e0] sm:$0xff]
                %443 = vst [vmem:[%s189 + $0x3f0] sm:$0xff] %v442
                %v444 = vld [vmem:[%s188 + $0x7e8] sm:$0xff]
                %445 = vst [vmem:[%s189 + $0x3f8] sm:$0xff] %v444
                %v446 = vld [vmem:[%s188 + $0x7f0] sm:$0xff]
                %447 = vst [vmem:[%s189 + $0x400] sm:$0xff] %v446
                %v448 = vld [vmem:[%s188 + $0x7f8] sm:$0xff]
                %449 = vst [vmem:[%s189 + $0x408] sm:$0xff] %v448
                %v450 = vld [vmem:[%s188 + $0x800] sm:$0xff]
                %451 = vst [vmem:[%s189 + $0x410] sm:$0xff] %v450
                %v452 = vld [vmem:[%s188 + $0x808] sm:$0xff]
                %453 = vst [vmem:[%s189 + $0x418] sm:$0xff] %v452
                %v454 = vld [vmem:[%s188 + $0x810] sm:$0xff]
                %455 = vst [vmem:[%s189 + $0x420] sm:$0xff] %v454
                %v456 = vld [vmem:[%s188 + $0x818] sm:$0xff]
                %457 = vst [vmem:[%s189 + $0x428] sm:$0xff] %v456
                %v458 = vld [vmem:[%s188 + $0x820] sm:$0xff]
                %459 = vst [vmem:[%s189 + $0x430] sm:$0xff] %v458
                %v460 = vld [vmem:[%s188 + $0x870] sm:$0xff]
                %461 = vst [vmem:[%s189 + $0x438] sm:$0xff] %v460
                %v462 = vld [vmem:[%s188 + $0x878] sm:$0xff]
                %463 = vst [vmem:[%s189 + $0x440] sm:$0xff] %v462
                %v464 = vld [vmem:[%s188 + $0x880] sm:$0xff]
                %465 = vst [vmem:[%s189 + $0x448] sm:$0xff] %v464
                %v466 = vld [vmem:[%s188 + $0x888] sm:$0xff]
                %467 = vst [vmem:[%s189 + $0x450] sm:$0xff] %v466
                %v468 = vld [vmem:[%s188 + $0x890] sm:$0xff]
                %469 = vst [vmem:[%s189 + $0x458] sm:$0xff] %v468
                %v470 = vld [vmem:[%s188 + $0x898] sm:$0xff]
                %471 = vst [vmem:[%s189 + $0x460] sm:$0xff] %v470
                %v472 = vld [vmem:[%s188 + $0x8a0] sm:$0xff]
                %473 = vst [vmem:[%s189 + $0x468] sm:$0xff] %v472
                %v474 = vld [vmem:[%s188 + $0x8a8] sm:$0xff]
                %475 = vst [vmem:[%s189 + $0x470] sm:$0xff] %v474
                %v476 = vld [vmem:[%s188 + $0x8b0] sm:$0xff]
                %477 = vst [vmem:[%s189 + $0x478] sm:$0xff] %v476
                %v478 = vld [vmem:[%s188 + $0x900] sm:$0xff]
                %479 = vst [vmem:[%s189 + $0x480] sm:$0xff] %v478
                %v480 = vld [vmem:[%s188 + $0x908] sm:$0xff]
                %481 = vst [vmem:[%s189 + $0x488] sm:$0xff] %v480
                %v482 = vld [vmem:[%s188 + $0x910] sm:$0xff]
                %483 = vst [vmem:[%s189 + $0x490] sm:$0xff] %v482
                %v484 = vld [vmem:[%s188 + $0x918] sm:$0xff]
                %485 = vst [vmem:[%s189 + $0x498] sm:$0xff] %v484
                %v486 = vld [vmem:[%s188 + $0x920] sm:$0xff]
                %487 = vst [vmem:[%s189 + $0x4a0] sm:$0xff] %v486
                %v488 = vld [vmem:[%s188 + $0x928] sm:$0xff]
                %489 = vst [vmem:[%s189 + $0x4a8] sm:$0xff] %v488
                %v490 = vld [vmem:[%s188 + $0x930] sm:$0xff]
                %491 = vst [vmem:[%s189 + $0x4b0] sm:$0xff] %v490
                %v492 = vld [vmem:[%s188 + $0x938] sm:$0xff]
                %493 = vst [vmem:[%s189 + $0x4b8] sm:$0xff] %v492
                %v494 = vld [vmem:[%s188 + $0x940] sm:$0xff]
                %495 = vst [vmem:[%s189 + $0x4c0] sm:$0xff] %v494
                %v496 = vld [vmem:[%s188 + $0x990] sm:$0xff]
                %497 = vst [vmem:[%s189 + $0x4c8] sm:$0xff] %v496
                %v498 = vld [vmem:[%s188 + $0x998] sm:$0xff]
                %499 = vst [vmem:[%s189 + $0x4d0] sm:$0xff] %v498
                %v500 = vld [vmem:[%s188 + $0x9a0] sm:$0xff]
                %501 = vst [vmem:[%s189 + $0x4d8] sm:$0xff] %v500
                %v502 = vld [vmem:[%s188 + $0x9a8] sm:$0xff]
                %503 = vst [vmem:[%s189 + $0x4e0] sm:$0xff] %v502
                %v504 = vld [vmem:[%s188 + $0x9b0] sm:$0xff]
                %505 = vst [vmem:[%s189 + $0x4e8] sm:$0xff] %v504
                %v506 = vld [vmem:[%s188 + $0x9b8] sm:$0xff]
                %507 = vst [vmem:[%s189 + $0x4f0] sm:$0xff] %v506
                %v508 = vld [vmem:[%s188 + $0x9c0] sm:$0xff]
                %509 = vst [vmem:[%s189 + $0x4f8] sm:$0xff] %v508
                %v510 = vld [vmem:[%s188 + $0x9c8] sm:$0xff]
                %511 = vst [vmem:[%s189 + $0x500] sm:$0xff] %v510
                %v512 = vld [vmem:[%s188 + $0x9d0] sm:$0xff]
                %513 = vst [vmem:[%s189 + $0x508] sm:$0xff] %v512
                %v514 = vld [vmem:[%s188 + $0xa20] sm:$0xff]
                %515 = vst [vmem:[%s189 + $0x510] sm:$0xff] %v514
                %v516 = vld [vmem:[%s188 + $0xa28] sm:$0xff]
                %517 = vst [vmem:[%s189 + $0x518] sm:$0xff] %v516
                %v518 = vld [vmem:[%s188 + $0xa30] sm:$0xff]
                %519 = vst [vmem:[%s189 + $0x520] sm:$0xff] %v518
                %v520 = vld [vmem:[%s188 + $0xa38] sm:$0xff]
                %521 = vst [vmem:[%s189 + $0x528] sm:$0xff] %v520
                %v522 = vld [vmem:[%s188 + $0xa40] sm:$0xff]
                %523 = vst [vmem:[%s189 + $0x530] sm:$0xff] %v522
                %v524 = vld [vmem:[%s188 + $0xa48] sm:$0xff]
                %525 = vst [vmem:[%s189 + $0x538] sm:$0xff] %v524
                %v526 = vld [vmem:[%s188 + $0xa50] sm:$0xff]
                %527 = vst [vmem:[%s189 + $0x540] sm:$0xff] %v526
                %v528 = vld [vmem:[%s188 + $0xa58] sm:$0xff]
                %529 = vst [vmem:[%s189 + $0x548] sm:$0xff] %v528
                %v530 = vld [vmem:[%s188 + $0xa60] sm:$0xff]
                %531 = vst [vmem:[%s189 + $0x550] sm:$0xff] %v530
                %v532 = vld [vmem:[%s188 + $0xab0] sm:$0xff]
                %533 = vst [vmem:[%s189 + $0x558] sm:$0xff] %v532
                %v534 = vld [vmem:[%s188 + $0xab8] sm:$0xff]
                %535 = vst [vmem:[%s189 + $0x560] sm:$0xff] %v534
                %v536 = vld [vmem:[%s188 + $0xac0] sm:$0xff]
                %537 = vst [vmem:[%s189 + $0x568] sm:$0xff] %v536
                %v538 = vld [vmem:[%s188 + $0xac8] sm:$0xff]
                %539 = vst [vmem:[%s189 + $0x570] sm:$0xff] %v538
                %v540 = vld [vmem:[%s188 + $0xad0] sm:$0xff]
                %541 = vst [vmem:[%s189 + $0x578] sm:$0xff] %v540
                %v542 = vld [vmem:[%s188 + $0xad8] sm:$0xff]
                %543 = vst [vmem:[%s189 + $0x580] sm:$0xff] %v542
                %v544 = vld [vmem:[%s188 + $0xae0] sm:$0xff]
                %545 = vst [vmem:[%s189 + $0x588] sm:$0xff] %v544
                %v546 = vld [vmem:[%s188 + $0xae8] sm:$0xff]
                %547 = vst [vmem:[%s189 + $0x590] sm:$0xff] %v546
                %v548 = vld [vmem:[%s188 + $0xaf0] sm:$0xff]
                %549 = vst [vmem:[%s189 + $0x598] sm:$0xff] %v548
                %v550 = vld [vmem:[%s188 + $0xb40] sm:$0xff]
                %551 = vst [vmem:[%s189 + $0x5a0] sm:$0xff] %v550
                %v552 = vld [vmem:[%s188 + $0xb48] sm:$0xff]
                %553 = vst [vmem:[%s189 + $0x5a8] sm:$0xff] %v552
                %v554 = vld [vmem:[%s188 + $0xb50] sm:$0xff]
                %555 = vst [vmem:[%s189 + $0x5b0] sm:$0xff] %v554
                %v556 = vld [vmem:[%s188 + $0xb58] sm:$0xff]
                %557 = vst [vmem:[%s189 + $0x5b8] sm:$0xff] %v556
                %v558 = vld [vmem:[%s188 + $0xb60] sm:$0xff]
                %559 = vst [vmem:[%s189 + $0x5c0] sm:$0xff] %v558
                %v560 = vld [vmem:[%s188 + $0xb68] sm:$0xff]
                %561 = vst [vmem:[%s189 + $0x5c8] sm:$0xff] %v560
                %v562 = vld [vmem:[%s188 + $0xb70] sm:$0xff]
                %563 = vst [vmem:[%s189 + $0x5d0] sm:$0xff] %v562
                %v564 = vld [vmem:[%s188 + $0xb78] sm:$0xff]
                %565 = vst [vmem:[%s189 + $0x5d8] sm:$0xff] %v564
                %v566 = vld [vmem:[%s188 + $0xb80] sm:$0xff]
                %567 = vst [vmem:[%s189 + $0x5e0] sm:$0xff] %v566
                %v568 = vld [vmem:[%s188 + $0xbd0] sm:$0xff]
                %569 = vst [vmem:[%s189 + $0x5e8] sm:$0xff] %v568
                %v570 = vld [vmem:[%s188 + $0xbd8] sm:$0xff]
                %571 = vst [vmem:[%s189 + $0x5f0] sm:$0xff] %v570
                %v572 = vld [vmem:[%s188 + $0xbe0] sm:$0xff]
                %573 = vst [vmem:[%s189 + $0x5f8] sm:$0xff] %v572
                %v574 = vld [vmem:[%s188 + $0xbe8] sm:$0xff]
                %575 = vst [vmem:[%s189 + $0x600] sm:$0xff] %v574
                %v576 = vld [vmem:[%s188 + $0xbf0] sm:$0xff]
                %577 = vst [vmem:[%s189 + $0x608] sm:$0xff] %v576
                %v578 = vld [vmem:[%s188 + $0xbf8] sm:$0xff]
                %579 = vst [vmem:[%s189 + $0x610] sm:$0xff] %v578
                %v580 = vld [vmem:[%s188 + $0xc00] sm:$0xff]
                %581 = vst [vmem:[%s189 + $0x618] sm:$0xff] %v580
                %v582 = vld [vmem:[%s188 + $0xc08] sm:$0xff]
                %583 = vst [vmem:[%s189 + $0x620] sm:$0xff] %v582
                %v584 = vld [vmem:[%s188 + $0xc10] sm:$0xff]
                %585 = vst [vmem:[%s189 + $0x628] sm:$0xff] %v584
                %v586 = vld [vmem:[%s188 + $0xc60] sm:$0xff]
                %587 = vst [vmem:[%s189 + $0x630] sm:$0xff] %v586
                %v588 = vld [vmem:[%s188 + $0xc68] sm:$0xff]
                %589 = vst [vmem:[%s189 + $0x638] sm:$0xff] %v588
                %v590 = vld [vmem:[%s188 + $0xc70] sm:$0xff]
                %591 = vst [vmem:[%s189 + $0x640] sm:$0xff] %v590
                %v592 = vld [vmem:[%s188 + $0xc78] sm:$0xff]
                %593 = vst [vmem:[%s189 + $0x648] sm:$0xff] %v592
                %v594 = vld [vmem:[%s188 + $0xc80] sm:$0xff]
                %595 = vst [vmem:[%s189 + $0x650] sm:$0xff] %v594
                %v596 = vld [vmem:[%s188 + $0xc88] sm:$0xff]
                %597 = vst [vmem:[%s189 + $0x658] sm:$0xff] %v596
                %v598 = vld [vmem:[%s188 + $0xc90] sm:$0xff]
                %599 = vst [vmem:[%s189 + $0x660] sm:$0xff] %v598
                %v600 = vld [vmem:[%s188 + $0xc98] sm:$0xff]
                %601 = vst [vmem:[%s189 + $0x668] sm:$0xff] %v600
                %v602 = vld [vmem:[%s188 + $0xca0] sm:$0xff]
                %603 = vst [vmem:[%s189 + $0x670] sm:$0xff] %v602
                %v604 = vld [vmem:[%s188 + $0xcf0] sm:$0xff]
                %605 = vst [vmem:[%s189 + $0x678] sm:$0xff] %v604
                %v606 = vld [vmem:[%s188 + $0xcf8] sm:$0xff]
                %607 = vst [vmem:[%s189 + $0x680] sm:$0xff] %v606
                %v608 = vld [vmem:[%s188 + $0xd00] sm:$0xff]
                %609 = vst [vmem:[%s189 + $0x688] sm:$0xff] %v608
                %v610 = vld [vmem:[%s188 + $0xd08] sm:$0xff]
                %611 = vst [vmem:[%s189 + $0x690] sm:$0xff] %v610
                %v612 = vld [vmem:[%s188 + $0xd10] sm:$0xff]
                %613 = vst [vmem:[%s189 + $0x698] sm:$0xff] %v612
                %v614 = vld [vmem:[%s188 + $0xd18] sm:$0xff]
                %615 = vst [vmem:[%s189 + $0x6a0] sm:$0xff] %v614
                %v616 = vld [vmem:[%s188 + $0xd20] sm:$0xff]
                %617 = vst [vmem:[%s189 + $0x6a8] sm:$0xff] %v616
                %v618 = vld [vmem:[%s188 + $0xd28] sm:$0xff]
                %619 = vst [vmem:[%s189 + $0x6b0] sm:$0xff] %v618
                %v620 = vld [vmem:[%s188 + $0xd30] sm:$0xff]
                %621 = vst [vmem:[%s189 + $0x6b8] sm:$0xff] %v620
                %v622 = vld [vmem:[%s188 + $0xd80] sm:$0xff]
                %623 = vst [vmem:[%s189 + $0x6c0] sm:$0xff] %v622
                %v624 = vld [vmem:[%s188 + $0xd88] sm:$0xff]
                %625 = vst [vmem:[%s189 + $0x6c8] sm:$0xff] %v624
                %v626 = vld [vmem:[%s188 + $0xd90] sm:$0xff]
                %627 = vst [vmem:[%s189 + $0x6d0] sm:$0xff] %v626
                %v628 = vld [vmem:[%s188 + $0xd98] sm:$0xff]
                %629 = vst [vmem:[%s189 + $0x6d8] sm:$0xff] %v628
                %v630 = vld [vmem:[%s188 + $0xda0] sm:$0xff]
                %631 = vst [vmem:[%s189 + $0x6e0] sm:$0xff] %v630
                %v632 = vld [vmem:[%s188 + $0xda8] sm:$0xff]
                %633 = vst [vmem:[%s189 + $0x6e8] sm:$0xff] %v632
                %v634 = vld [vmem:[%s188 + $0xdb0] sm:$0xff]
                %635 = vst [vmem:[%s189 + $0x6f0] sm:$0xff] %v634
                %v636 = vld [vmem:[%s188 + $0xdb8] sm:$0xff]
                %637 = vst [vmem:[%s189 + $0x6f8] sm:$0xff] %v636
                %v638 = vld [vmem:[%s188 + $0xdc0] sm:$0xff]
                %639 = vst [vmem:[%s189 + $0x700] sm:$0xff] %v638
                %v640 = vld [vmem:[%s188 + $0xe10] sm:$0xff]
                %641 = vst [vmem:[%s189 + $0x708] sm:$0xff] %v640
                %v642 = vld [vmem:[%s188 + $0xe18] sm:$0xff]
                %643 = vst [vmem:[%s189 + $0x710] sm:$0xff] %v642
                %v644 = vld [vmem:[%s188 + $0xe20] sm:$0xff]
                %645 = vst [vmem:[%s189 + $0x718] sm:$0xff] %v644
                %v646 = vld [vmem:[%s188 + $0xe28] sm:$0xff]
                %647 = vst [vmem:[%s189 + $0x720] sm:$0xff] %v646
                %v648 = vld [vmem:[%s188 + $0xe30] sm:$0xff]
                %649 = vst [vmem:[%s189 + $0x728] sm:$0xff] %v648
                %v650 = vld [vmem:[%s188 + $0xe38] sm:$0xff]
                %651 = vst [vmem:[%s189 + $0x730] sm:$0xff] %v650
                %v652 = vld [vmem:[%s188 + $0xe40] sm:$0xff]
                %653 = vst [vmem:[%s189 + $0x738] sm:$0xff] %v652
                %v654 = vld [vmem:[%s188 + $0xe48] sm:$0xff]
                %655 = vst [vmem:[%s189 + $0x740] sm:$0xff] %v654
                %v656 = vld [vmem:[%s188 + $0xe50] sm:$0xff]
                %657 = vst [vmem:[%s189 + $0x748] sm:$0xff] %v656
                %v658 = vld [vmem:[%s188 + $0xea0] sm:$0xff]
                %659 = vst [vmem:[%s189 + $0x750] sm:$0xff] %v658
                %v660 = vld [vmem:[%s188 + $0xea8] sm:$0xff]
                %661 = vst [vmem:[%s189 + $0x758] sm:$0xff] %v660
                %v662 = vld [vmem:[%s188 + $0xeb0] sm:$0xff]
                %663 = vst [vmem:[%s189 + $0x760] sm:$0xff] %v662
                %v664 = vld [vmem:[%s188 + $0xeb8] sm:$0xff]
                %665 = vst [vmem:[%s189 + $0x768] sm:$0xff] %v664
                %v666 = vld [vmem:[%s188 + $0xec0] sm:$0xff]
                %667 = vst [vmem:[%s189 + $0x770] sm:$0xff] %v666
                %v668 = vld [vmem:[%s188 + $0xec8] sm:$0xff]
                %669 = vst [vmem:[%s189 + $0x778] sm:$0xff] %v668
                %v670 = vld [vmem:[%s188 + $0xed0] sm:$0xff]
                %671 = vst [vmem:[%s189 + $0x780] sm:$0xff] %v670
                %v672 = vld [vmem:[%s188 + $0xed8] sm:$0xff]
                %673 = vst [vmem:[%s189 + $0x788] sm:$0xff] %v672
                %v674 = vld [vmem:[%s188 + $0xee0] sm:$0xff]
                %675 = vst [vmem:[%s189 + $0x790] sm:$0xff] %v674
                %v676 = vld [vmem:[%s188 + $0xf30] sm:$0xff]
                %677 = vst [vmem:[%s189 + $0x798] sm:$0xff] %v676
                %v678 = vld [vmem:[%s188 + $0xf38] sm:$0xff]
                %679 = vst [vmem:[%s189 + $0x7a0] sm:$0xff] %v678
                %v680 = vld [vmem:[%s188 + $0xf40] sm:$0xff]
                %681 = vst [vmem:[%s189 + $0x7a8] sm:$0xff] %v680
                %v682 = vld [vmem:[%s188 + $0xf48] sm:$0xff]
                %683 = vst [vmem:[%s189 + $0x7b0] sm:$0xff] %v682
                %v684 = vld [vmem:[%s188 + $0xf50] sm:$0xff]
                %685 = vst [vmem:[%s189 + $0x7b8] sm:$0xff] %v684
                %v686 = vld [vmem:[%s188 + $0xf58] sm:$0xff]
                %687 = vst [vmem:[%s189 + $0x7c0] sm:$0xff] %v686
                %v688 = vld [vmem:[%s188 + $0xf60] sm:$0xff]
                %689 = vst [vmem:[%s189 + $0x7c8] sm:$0xff] %v688
                %v690 = vld [vmem:[%s188 + $0xf68] sm:$0xff]
                %691 = vst [vmem:[%s189 + $0x7d0] sm:$0xff] %v690
                %v692 = vld [vmem:[%s188 + $0xf70] sm:$0xff]
                %693 = vst [vmem:[%s189 + $0x7d8] sm:$0xff] %v692
                %v694 = vld [vmem:[%s188 + $0xfc0] sm:$0xff]
                %695 = vst [vmem:[%s189 + $0x7e0] sm:$0xff] %v694
                %v696 = vld [vmem:[%s188 + $0xfc8] sm:$0xff]
                %697 = vst [vmem:[%s189 + $0x7e8] sm:$0xff] %v696
                %v698 = vld [vmem:[%s188 + $0xfd0] sm:$0xff]
                %699 = vst [vmem:[%s189 + $0x7f0] sm:$0xff] %v698
                %v700 = vld [vmem:[%s188 + $0xfd8] sm:$0xff]
                %701 = vst [vmem:[%s189 + $0x7f8] sm:$0xff] %v700
                %v702 = vld [vmem:[%s188 + $0xfe0] sm:$0xff]
                %703 = vst [vmem:[%s189 + $0x800] sm:$0xff] %v702
                %v704 = vld [vmem:[%s188 + $0xfe8] sm:$0xff]
                %705 = vst [vmem:[%s189 + $0x808] sm:$0xff] %v704
                %v706 = vld [vmem:[%s188 + $0xff0] sm:$0xff]
                %707 = vst [vmem:[%s189 + $0x810] sm:$0xff] %v706
                %v708 = vld [vmem:[%s188 + $0xff8] sm:$0xff]
                %709 = vst [vmem:[%s189 + $0x818] sm:$0xff] %v708
                %v710 = vld [vmem:[%s188 + $0x1000] sm:$0xff]
                %711 = vst [vmem:[%s189 + $0x820] sm:$0xff] %v710
                %v712 = vld [vmem:[%s188 + $0x1050] sm:$0xff]
                %713 = vst [vmem:[%s189 + $0x828] sm:$0xff] %v712
                %v714 = vld [vmem:[%s188 + $0x1058] sm:$0xff]
                %715 = vst [vmem:[%s189 + $0x830] sm:$0xff] %v714
                %v716 = vld [vmem:[%s188 + $0x1060] sm:$0xff]
                %717 = vst [vmem:[%s189 + $0x838] sm:$0xff] %v716
                %v718 = vld [vmem:[%s188 + $0x1068] sm:$0xff]
                %719 = vst [vmem:[%s189 + $0x840] sm:$0xff] %v718
                %v720 = vld [vmem:[%s188 + $0x1070] sm:$0xff]
                %721 = vst [vmem:[%s189 + $0x848] sm:$0xff] %v720
                %v722 = vld [vmem:[%s188 + $0x1078] sm:$0xff]
                %723 = vst [vmem:[%s189 + $0x850] sm:$0xff] %v722
                %v724 = vld [vmem:[%s188 + $0x1080] sm:$0xff]
                %725 = vst [vmem:[%s189 + $0x858] sm:$0xff] %v724
                %v726 = vld [vmem:[%s188 + $0x1088] sm:$0xff]
                %727 = vst [vmem:[%s189 + $0x860] sm:$0xff] %v726
                %v728 = vld [vmem:[%s188 + $0x1090] sm:$0xff]
                %729 = vst [vmem:[%s189 + $0x868] sm:$0xff] %v728
                %v730 = vld [vmem:[%s188 + $0x10e0] sm:$0xff]
                %731 = vst [vmem:[%s189 + $0x870] sm:$0xff] %v730
                %v732 = vld [vmem:[%s188 + $0x10e8] sm:$0xff]
                %733 = vst [vmem:[%s189 + $0x878] sm:$0xff] %v732
                %v734 = vld [vmem:[%s188 + $0x10f0] sm:$0xff]
                %735 = vst [vmem:[%s189 + $0x880] sm:$0xff] %v734
                %v736 = vld [vmem:[%s188 + $0x10f8] sm:$0xff]
                %737 = vst [vmem:[%s189 + $0x888] sm:$0xff] %v736
                %v738 = vld [vmem:[%s188 + $0x1100] sm:$0xff]
                %739 = vst [vmem:[%s189 + $0x890] sm:$0xff] %v738
                %v740 = vld [vmem:[%s188 + $0x1108] sm:$0xff]
                %741 = vst [vmem:[%s189 + $0x898] sm:$0xff] %v740
                %v742 = vld [vmem:[%s188 + $0x1110] sm:$0xff]
                %743 = vst [vmem:[%s189 + $0x8a0] sm:$0xff] %v742
                %v744 = vld [vmem:[%s188 + $0x1118] sm:$0xff]
                %745 = vst [vmem:[%s189 + $0x8a8] sm:$0xff] %v744
                %v746 = vld [vmem:[%s188 + $0x1120] sm:$0xff]
                %747 = vst [vmem:[%s189 + $0x8b0] sm:$0xff] %v746
                %v748 = vld [vmem:[%s188 + $0x1170] sm:$0xff]
                %749 = vst [vmem:[%s189 + $0x8b8] sm:$0xff] %v748
                %v750 = vld [vmem:[%s188 + $0x1178] sm:$0xff]
                %751 = vst [vmem:[%s189 + $0x8c0] sm:$0xff] %v750
                %v752 = vld [vmem:[%s188 + $0x1180] sm:$0xff]
                %753 = vst [vmem:[%s189 + $0x8c8] sm:$0xff] %v752
                %v754 = vld [vmem:[%s188 + $0x1188] sm:$0xff]
                %755 = vst [vmem:[%s189 + $0x8d0] sm:$0xff] %v754
                %v756 = vld [vmem:[%s188 + $0x1190] sm:$0xff]
                %757 = vst [vmem:[%s189 + $0x8d8] sm:$0xff] %v756
                %v758 = vld [vmem:[%s188 + $0x1198] sm:$0xff]
                %759 = vst [vmem:[%s189 + $0x8e0] sm:$0xff] %v758
                %v760 = vld [vmem:[%s188 + $0x11a0] sm:$0xff]
                %761 = vst [vmem:[%s189 + $0x8e8] sm:$0xff] %v760
                %v762 = vld [vmem:[%s188 + $0x11a8] sm:$0xff]
                %763 = vst [vmem:[%s189 + $0x8f0] sm:$0xff] %v762
                %v764 = vld [vmem:[%s188 + $0x11b0] sm:$0xff]
                %765 = vst [vmem:[%s189 + $0x8f8] sm:$0xff] %v764
              $region37: #{_stage1.4} parent=31 // loop_footer
                %s187 = sadd.s32 1, %s183
              $region38: #{_stage1.4} parent=31 // loop_footer_branch
                %182 = sbr.rel target = $region34
              $region39: #{_stage1.4} parent=31 // loop_exit
                _
            $region32: #{_stage1.4} parent=27 // pred_fallthru
              _
            // Predicated region
            $region40: #{_stage1.4} parent=27 // pred_check
              _
            $region41: #{_stage1.4} parent=27 // pred_check_branch
              %767 = sbr.rel target = $region43
            $region42: #{_stage1.4} parent=27 // pred_region
              _
            $region43: #{_stage1.4} parent=27 // pred_fallthru
              _
          $region28: #{_stage1.4} parent=23 // pred_fallthru
            _
          %768 = vnop
        $region24: #{_stage1.4} parent=19 // pred_fallthru
          _
        // Predicated region
        $region44: #{_stage1.4} parent=19 // pred_check
          %p769 = pneg %p78
        $region45: #{_stage1.4} parent=19 // pred_check_branch
          %771 = sbr.rel (%p769) target = $region47
        $region46: #{_stage1.4} parent=19 // pred_region
          %s772 = smul.u32 144, %s18
          %s773 = smul.u32 2, %s17
          %p774 = scmp.lt.s32.totalorder %s772, 287
          %s775 = scalar_select %p774, %s772, 287
          %p776 = scmp.lt.s32.totalorder %s773, 1
          %s777 = scalar_select %p776, %s773, 1
          %s778 = smul.addr %s775, 2
          %s779 = sadd.s32 %s777, %s778
          %s780 = smul.addr %s779, 4
          %s781 = scalar_lea.vmem %s1, %s780
          %s782 = smul.u32 144, %s18
          %s783 = smul.u32 2, %s17
        $region47: #{_stage1.4} parent=19 // pred_fallthru
          _
      $region20: #{_stage1.4} parent=5 // pred_fallthru
        _
      %p784 = scmp.le.s32.totalorder 1, %s9
      %p785 = scmp.lt.s32.totalorder %s9, 7
      %p786 = pnand %p784, %p785
      %p787 = pneg %p786
      // Predicated region
      $region48: #{_stage1.4} parent=5 // pred_check
        _
      $region49: #{_stage1.4} parent=5 // pred_check_branch
        %789 = sbr.rel (%p786) target = $region51
      $region50: #{_stage1.4} parent=5 // pred_region
        %s790 = ssub.s32 %s9, 1
        %s791 = sand.u32 %s43, 1
        %s792 = sand.u32 %s43, 1
        %s793 = smul.addr %s792, 2304
        %s794 = scalar_lea.vmem [#allocation3], %s793
        // Predicated region
        $region52: #{_stage1.4} parent=50 // pred_check
          %p795 = pneg %p56
        $region53: #{_stage1.4} parent=50 // pred_check_branch
          %797 = sbr.rel (%p795) target = $region55
        $region54: #{_stage1.4} parent=50 // pred_region
          _
        $region55: #{_stage1.4} parent=50 // pred_fallthru
          _
        %s798 = sand.u32 %s43, 1
        %s799 = sand.u32 %s43, 1
        %s800 = smul.addr %s799, 2304
        %s801 = scalar_lea.vmem [#allocation3], %s800
        %p802 = pneg %p56
        %p803 = pneg %p53
        %s804 = smul.u32 144, %s21
        %s805 = smul.u32 2, %s20
        %p806 = scmp.lt.s32.totalorder %s804, 287
        %s807 = scalar_select %p806, %s804, 287
        %p808 = scmp.lt.s32.totalorder %s805, 1
        %s809 = scalar_select %p808, %s805, 1
        %s810 = smul.addr %s807, 2
        %s811 = sadd.s32 %s809, %s810
        %s812 = smul.addr %s811, 4
        %s813 = scalar_lea.vmem %s1, %s812
        %p814 = pneg %p84
        %p815 = pneg %p81
        %s816 = smul.u32 2, %s20
        %p817 = scmp.lt.s32.totalorder %s816, 1
        %s818 = scalar_select %p817, %s816, 1
        %s819 = scalar_lea.vmem %s2, %s818
        %p820 = pneg %p110
        %p821 = pneg %p107
        %p822 = pneg %p138
        %p823 = pneg %p135
        %s824 = smul.u32 32, %s19
        %s825 = smul.u32 2, %s20
        %p826 = scmp.lt.s32.totalorder %s824, 95
        %s827 = scalar_select %p826, %s824, 95
        %p828 = scmp.lt.s32.totalorder %s825, 1
        %s829 = scalar_select %p828, %s825, 1
        %s830 = smul.addr %s827, 2
        %s831 = sadd.s32 %s829, %s830
        %s832 = smul.addr %s831, 8
        %s833 = scalar_lea.vmem %s3, %s832
        %s834 = smul.u32 32, %s19
        %s835 = smul.u32 9, %s21
        %s836 = smul.u32 144, %s21
        %s837 = smul.u32 2, %s20
        %p838 = scmp.lt.s32.totalorder %s836, 287
        %s839 = scalar_select %p838, %s836, 287
        %p840 = scmp.lt.s32.totalorder %s837, 1
        %s841 = scalar_select %p840, %s837, 1
        %s842 = smul.addr %s839, 2
        %s843 = sadd.s32 %s841, %s842
        %s844 = smul.addr %s843, 4
        %s845 = scalar_lea.vmem %s1, %s844
        %s846 = smul.u32 144, %s21
        %s847 = smul.u32 2, %s20
        %s848 = smul.u32 2, %s20
        %p849 = scmp.lt.s32.totalorder %s848, 1
        %s850 = scalar_select %p849, %s848, 1
        %s851 = scalar_lea.vmem %s2, %s850
        %s852 = smul.u32 2, %s20
        %s853 = smul.u32 32, %s19
        %s854 = smul.u32 2, %s20
        %p855 = scmp.lt.s32.totalorder %s853, 95
        %s856 = scalar_select %p855, %s853, 95
        %p857 = scmp.lt.s32.totalorder %s854, 1
        %s858 = scalar_select %p857, %s854, 1
        %s859 = smul.addr %s856, 2
        %s860 = sadd.s32 %s858, %s859
        %s861 = smul.addr %s860, 8
        %s862 = scalar_lea.vmem %s3, %s861
        %s863 = smul.u32 32, %s19
        %s864 = smul.u32 2, %s20
        %p866 = scmp.eq.s32.totalorder %s21, 0
        // Predicated region
        $region56: #{_stage1.4} parent=50 // pred_check
          %p867 = pneg %p866
        $region57: #{_stage1.4} parent=50 // pred_check_branch
          %869 = sbr.rel (%p867) target = $region59
        $region58: #{_stage1.4} parent=50 // pred_region
          %870 = vst [vmem:[#allocation2] sm:$0xff] 0.0
          %871 = vst [vmem:[#allocation2 + $0x8] sm:$0xff] 0.0
          %872 = vst [vmem:[#allocation2 + $0x10] sm:$0xff] 0.0
          %873 = vst [vmem:[#allocation2 + $0x18] sm:$0xff] 0.0
          %874 = vst [vmem:[#allocation2 + $0x20] sm:$0xff] 0.0
          %875 = vst [vmem:[#allocation2 + $0x28] sm:$0xff] 0.0
          %876 = vst [vmem:[#allocation2 + $0x30] sm:$0xff] 0.0
          %877 = vst [vmem:[#allocation2 + $0x38] sm:$0xff] 0.0
          %878 = vst [vmem:[#allocation2 + $0x40] sm:$0xff] 0.0
          %879 = vst [vmem:[#allocation2 + $0x48] sm:$0xff] 0.0
          %880 = vst [vmem:[#allocation2 + $0x50] sm:$0xff] 0.0
          %881 = vst [vmem:[#allocation2 + $0x58] sm:$0xff] 0.0
          %882 = vst [vmem:[#allocation2 + $0x60] sm:$0xff] 0.0
          %883 = vst [vmem:[#allocation2 + $0x68] sm:$0xff] 0.0
          %884 = vst [vmem:[#allocation2 + $0x70] sm:$0xff] 0.0
          %885 = vst [vmem:[#allocation2 + $0x78] sm:$0xff] 0.0
          %886 = vst [vmem:[#allocation2 + $0x80] sm:$0xff] 0.0
          %887 = vst [vmem:[#allocation2 + $0x88] sm:$0xff] 0.0
          %888 = vst [vmem:[#allocation2 + $0x90] sm:$0xff] 0.0
          %889 = vst [vmem:[#allocation2 + $0x98] sm:$0xff] 0.0
          %890 = vst [vmem:[#allocation2 + $0xa0] sm:$0xff] 0.0
          %891 = vst [vmem:[#allocation2 + $0xa8] sm:$0xff] 0.0
          %892 = vst [vmem:[#allocation2 + $0xb0] sm:$0xff] 0.0
          %893 = vst [vmem:[#allocation2 + $0xb8] sm:$0xff] 0.0
          %894 = vst [vmem:[#allocation2 + $0xc0] sm:$0xff] 0.0
          %895 = vst [vmem:[#allocation2 + $0xc8] sm:$0xff] 0.0
          %896 = vst [vmem:[#allocation2 + $0xd0] sm:$0xff] 0.0
          %897 = vst [vmem:[#allocation2 + $0xd8] sm:$0xff] 0.0
          %898 = vst [vmem:[#allocation2 + $0xe0] sm:$0xff] 0.0
          %899 = vst [vmem:[#allocation2 + $0xe8] sm:$0xff] 0.0
          %900 = vst [vmem:[#allocation2 + $0xf0] sm:$0xff] 0.0
          %901 = vst [vmem:[#allocation2 + $0xf8] sm:$0xff] 0.0
          %902 = vst [vmem:[#allocation2 + $0x100] sm:$0xff] 0.0
          %903 = vst [vmem:[#allocation2 + $0x108] sm:$0xff] 0.0
          %904 = vst [vmem:[#allocation2 + $0x110] sm:$0xff] 0.0
          %905 = vst [vmem:[#allocation2 + $0x118] sm:$0xff] 0.0
          %906 = vst [vmem:[#allocation2 + $0x120] sm:$0xff] 0.0
          %907 = vst [vmem:[#allocation2 + $0x128] sm:$0xff] 0.0
          %908 = vst [vmem:[#allocation2 + $0x130] sm:$0xff] 0.0
          %909 = vst [vmem:[#allocation2 + $0x138] sm:$0xff] 0.0
          %910 = vst [vmem:[#allocation2 + $0x140] sm:$0xff] 0.0
          %911 = vst [vmem:[#allocation2 + $0x148] sm:$0xff] 0.0
          %912 = vst [vmem:[#allocation2 + $0x150] sm:$0xff] 0.0
          %913 = vst [vmem:[#allocation2 + $0x158] sm:$0xff] 0.0
          %914 = vst [vmem:[#allocation2 + $0x160] sm:$0xff] 0.0
          %915 = vst [vmem:[#allocation2 + $0x168] sm:$0xff] 0.0
          %916 = vst [vmem:[#allocation2 + $0x170] sm:$0xff] 0.0
          %917 = vst [vmem:[#allocation2 + $0x178] sm:$0xff] 0.0
          %918 = vst [vmem:[#allocation2 + $0x180] sm:$0xff] 0.0
          %919 = vst [vmem:[#allocation2 + $0x188] sm:$0xff] 0.0
          %920 = vst [vmem:[#allocation2 + $0x190] sm:$0xff] 0.0
          %921 = vst [vmem:[#allocation2 + $0x198] sm:$0xff] 0.0
          %922 = vst [vmem:[#allocation2 + $0x1a0] sm:$0xff] 0.0
          %923 = vst [vmem:[#allocation2 + $0x1a8] sm:$0xff] 0.0
          %924 = vst [vmem:[#allocation2 + $0x1b0] sm:$0xff] 0.0
          %925 = vst [vmem:[#allocation2 + $0x1b8] sm:$0xff] 0.0
          %926 = vst [vmem:[#allocation2 + $0x1c0] sm:$0xff] 0.0
          %927 = vst [vmem:[#allocation2 + $0x1c8] sm:$0xff] 0.0
          %928 = vst [vmem:[#allocation2 + $0x1d0] sm:$0xff] 0.0
          %929 = vst [vmem:[#allocation2 + $0x1d8] sm:$0xff] 0.0
          %930 = vst [vmem:[#allocation2 + $0x1e0] sm:$0xff] 0.0
          %931 = vst [vmem:[#allocation2 + $0x1e8] sm:$0xff] 0.0
          %932 = vst [vmem:[#allocation2 + $0x1f0] sm:$0xff] 0.0
          %933 = vst [vmem:[#allocation2 + $0x1f8] sm:$0xff] 0.0
        $region59: #{_stage1.4} parent=50 // pred_fallthru
          _
        %v934 = vld [vmem:[#allocation2] sm:$0xff]
        %v935 = vld [vmem:[#allocation2 + $0x8] sm:$0xff]
        %v936 = vld [vmem:[#allocation2 + $0x10] sm:$0xff]
        %v937 = vld [vmem:[#allocation2 + $0x18] sm:$0xff]
        %v938 = vld [vmem:[#allocation2 + $0x20] sm:$0xff]
        %v939 = vld [vmem:[#allocation2 + $0x28] sm:$0xff]
        %v940 = vld [vmem:[#allocation2 + $0x30] sm:$0xff]
        %v941 = vld [vmem:[#allocation2 + $0x38] sm:$0xff]
        %v942 = vld [vmem:[#allocation2 + $0x40] sm:$0xff]
        %v943 = vld [vmem:[#allocation2 + $0x48] sm:$0xff]
        %v944 = vld [vmem:[#allocation2 + $0x50] sm:$0xff]
        %v945 = vld [vmem:[#allocation2 + $0x58] sm:$0xff]
        %v946 = vld [vmem:[#allocation2 + $0x60] sm:$0xff]
        %v947 = vld [vmem:[#allocation2 + $0x68] sm:$0xff]
        %v948 = vld [vmem:[#allocation2 + $0x70] sm:$0xff]
        %v949 = vld [vmem:[#allocation2 + $0x78] sm:$0xff]
        %v950 = vld [vmem:[#allocation2 + $0x80] sm:$0xff]
        %v951 = vld [vmem:[#allocation2 + $0x88] sm:$0xff]
        %v952 = vld [vmem:[#allocation2 + $0x90] sm:$0xff]
        %v953 = vld [vmem:[#allocation2 + $0x98] sm:$0xff]
        %v954 = vld [vmem:[#allocation2 + $0xa0] sm:$0xff]
        %v955 = vld [vmem:[#allocation2 + $0xa8] sm:$0xff]
        %v956 = vld [vmem:[#allocation2 + $0xb0] sm:$0xff]
        %v957 = vld [vmem:[#allocation2 + $0xb8] sm:$0xff]
        %v958 = vld [vmem:[#allocation2 + $0xc0] sm:$0xff]
        %v959 = vld [vmem:[#allocation2 + $0xc8] sm:$0xff]
        %v960 = vld [vmem:[#allocation2 + $0xd0] sm:$0xff]
        %v961 = vld [vmem:[#allocation2 + $0xd8] sm:$0xff]
        %v962 = vld [vmem:[#allocation2 + $0xe0] sm:$0xff]
        %v963 = vld [vmem:[#allocation2 + $0xe8] sm:$0xff]
        %v964 = vld [vmem:[#allocation2 + $0xf0] sm:$0xff]
        %v965 = vld [vmem:[#allocation2 + $0xf8] sm:$0xff]
        %v966 = vld [vmem:[#allocation2 + $0x100] sm:$0xff]
        %v967 = vld [vmem:[#allocation2 + $0x108] sm:$0xff]
        %v968 = vld [vmem:[#allocation2 + $0x110] sm:$0xff]
        %v969 = vld [vmem:[#allocation2 + $0x118] sm:$0xff]
        %v970 = vld [vmem:[#allocation2 + $0x120] sm:$0xff]
        %v971 = vld [vmem:[#allocation2 + $0x128] sm:$0xff]
        %v972 = vld [vmem:[#allocation2 + $0x130] sm:$0xff]
        %v973 = vld [vmem:[#allocation2 + $0x138] sm:$0xff]
        %v974 = vld [vmem:[#allocation2 + $0x140] sm:$0xff]
        %v975 = vld [vmem:[#allocation2 + $0x148] sm:$0xff]
        %v976 = vld [vmem:[#allocation2 + $0x150] sm:$0xff]
        %v977 = vld [vmem:[#allocation2 + $0x158] sm:$0xff]
        %v978 = vld [vmem:[#allocation2 + $0x160] sm:$0xff]
        %v979 = vld [vmem:[#allocation2 + $0x168] sm:$0xff]
        %v980 = vld [vmem:[#allocation2 + $0x170] sm:$0xff]
        %v981 = vld [vmem:[#allocation2 + $0x178] sm:$0xff]
        %v982 = vld [vmem:[#allocation2 + $0x180] sm:$0xff]
        %v983 = vld [vmem:[#allocation2 + $0x188] sm:$0xff]
        %v984 = vld [vmem:[#allocation2 + $0x190] sm:$0xff]
        %v985 = vld [vmem:[#allocation2 + $0x198] sm:$0xff]
        %v986 = vld [vmem:[#allocation2 + $0x1a0] sm:$0xff]
        %v987 = vld [vmem:[#allocation2 + $0x1a8] sm:$0xff]
        %v988 = vld [vmem:[#allocation2 + $0x1b0] sm:$0xff]
        %v989 = vld [vmem:[#allocation2 + $0x1b8] sm:$0xff]
        %v990 = vld [vmem:[#allocation2 + $0x1c0] sm:$0xff]
        %v991 = vld [vmem:[#allocation2 + $0x1c8] sm:$0xff]
        %v992 = vld [vmem:[#allocation2 + $0x1d0] sm:$0xff]
        %v993 = vld [vmem:[#allocation2 + $0x1d8] sm:$0xff]
        %v994 = vld [vmem:[#allocation2 + $0x1e0] sm:$0xff]
        %v995 = vld [vmem:[#allocation2 + $0x1e8] sm:$0xff]
        %v996 = vld [vmem:[#allocation2 + $0x1f0] sm:$0xff]
        %v997 = vld [vmem:[#allocation2 + $0x1f8] sm:$0xff]
        %v998 = vld [vmem:[%s794] sm:$0xff]
        %v999 = vld [vmem:[%s794 + $0x8] sm:$0xff]
        %v1000 = vld [vmem:[%s794 + $0x10] sm:$0xff]
        %v1001 = vld [vmem:[%s794 + $0x18] sm:$0xff]
        %v1002 = vld [vmem:[%s794 + $0x20] sm:$0xff]
        %v1003 = vld [vmem:[%s794 + $0x28] sm:$0xff]
        %v1004 = vld [vmem:[%s794 + $0x30] sm:$0xff]
        %v1005 = vld [vmem:[%s794 + $0x38] sm:$0xff]
        %v1006 = vld [vmem:[%s794 + $0x40] sm:$0xff]
        %v1007 = vld [vmem:[%s794 + $0x48] sm:$0xff]
        %v1008 = vld [vmem:[%s794 + $0x50] sm:$0xff]
        %v1009 = vld [vmem:[%s794 + $0x58] sm:$0xff]
        %v1010 = vld [vmem:[%s794 + $0x60] sm:$0xff]
        %v1011 = vld [vmem:[%s794 + $0x68] sm:$0xff]
        %v1012 = vld [vmem:[%s794 + $0x70] sm:$0xff]
        %v1013 = vld [vmem:[%s794 + $0x78] sm:$0xff]
        %v1014 = vld [vmem:[%s794 + $0x80] sm:$0xff]
        %v1015 = vld [vmem:[%s794 + $0x88] sm:$0xff]
        %v1016 = vld [vmem:[%s794 + $0x90] sm:$0xff]
        %v1017 = vld [vmem:[%s794 + $0x98] sm:$0xff]
        %v1018 = vld [vmem:[%s794 + $0xa0] sm:$0xff]
        %v1019 = vld [vmem:[%s794 + $0xa8] sm:$0xff]
        %v1020 = vld [vmem:[%s794 + $0xb0] sm:$0xff]
        %v1021 = vld [vmem:[%s794 + $0xb8] sm:$0xff]
        %v1022 = vld [vmem:[%s794 + $0xc0] sm:$0xff]
        %v1023 = vld [vmem:[%s794 + $0xc8] sm:$0xff]
        %v1024 = vld [vmem:[%s794 + $0xd0] sm:$0xff]
        %v1025 = vld [vmem:[%s794 + $0xd8] sm:$0xff]
        %v1026 = vld [vmem:[%s794 + $0xe0] sm:$0xff]
        %v1027 = vld [vmem:[%s794 + $0xe8] sm:$0xff]
        %v1028 = vld [vmem:[%s794 + $0xf0] sm:$0xff]
        %v1029 = vld [vmem:[%s794 + $0xf8] sm:$0xff]
        %v1030 = vld [vmem:[%s794 + $0x100] sm:$0xff]
        %v1031 = vld [vmem:[%s794 + $0x108] sm:$0xff]
        %v1032 = vld [vmem:[%s794 + $0x110] sm:$0xff]
        %v1033 = vld [vmem:[%s794 + $0x118] sm:$0xff]
        %v1034 = vld [vmem:[%s794 + $0x120] sm:$0xff]
        %v1035 = vld [vmem:[%s794 + $0x128] sm:$0xff]
        %v1036 = vld [vmem:[%s794 + $0x130] sm:$0xff]
        %v1037 = vld [vmem:[%s794 + $0x138] sm:$0xff]
        %v1038 = vld [vmem:[%s794 + $0x140] sm:$0xff]
        %v1039 = vld [vmem:[%s794 + $0x148] sm:$0xff]
        %v1040 = vld [vmem:[%s794 + $0x150] sm:$0xff]
        %v1041 = vld [vmem:[%s794 + $0x158] sm:$0xff]
        %v1042 = vld [vmem:[%s794 + $0x160] sm:$0xff]
        %v1043 = vld [vmem:[%s794 + $0x168] sm:$0xff]
        %v1044 = vld [vmem:[%s794 + $0x170] sm:$0xff]
        %v1045 = vld [vmem:[%s794 + $0x178] sm:$0xff]
        %v1046 = vld [vmem:[%s794 + $0x180] sm:$0xff]
        %v1047 = vld [vmem:[%s794 + $0x188] sm:$0xff]
        %v1048 = vld [vmem:[%s794 + $0x190] sm:$0xff]
        %v1049 = vld [vmem:[%s794 + $0x198] sm:$0xff]
        %v1050 = vld [vmem:[%s794 + $0x1a0] sm:$0xff]
        %v1051 = vld [vmem:[%s794 + $0x1a8] sm:$0xff]
        %v1052 = vld [vmem:[%s794 + $0x1b0] sm:$0xff]
        %v1053 = vld [vmem:[%s794 + $0x1b8] sm:$0xff]
        %v1054 = vld [vmem:[%s794 + $0x1c0] sm:$0xff]
        %v1055 = vld [vmem:[%s794 + $0x1c8] sm:$0xff]
        %v1056 = vld [vmem:[%s794 + $0x1d0] sm:$0xff]
        %v1057 = vld [vmem:[%s794 + $0x1d8] sm:$0xff]
        %v1058 = vld [vmem:[%s794 + $0x1e0] sm:$0xff]
        %v1059 = vld [vmem:[%s794 + $0x1e8] sm:$0xff]
        %v1060 = vld [vmem:[%s794 + $0x1f0] sm:$0xff]
        %v1061 = vld [vmem:[%s794 + $0x1f8] sm:$0xff]
        %v1062 = vld [vmem:[%s794 + $0x200] sm:$0xff]
        %v1063 = vld [vmem:[%s794 + $0x208] sm:$0xff]
        %v1064 = vld [vmem:[%s794 + $0x210] sm:$0xff]
        %v1065 = vld [vmem:[%s794 + $0x218] sm:$0xff]
        %v1066 = vld [vmem:[%s794 + $0x220] sm:$0xff]
        %v1067 = vld [vmem:[%s794 + $0x228] sm:$0xff]
        %v1068 = vld [vmem:[%s794 + $0x230] sm:$0xff]
        %v1069 = vld [vmem:[%s794 + $0x238] sm:$0xff]
        %v1070 = vld [vmem:[%s794 + $0x240] sm:$0xff]
        %v1071 = vld [vmem:[%s794 + $0x248] sm:$0xff]
        %v1072 = vld [vmem:[%s794 + $0x250] sm:$0xff]
        %v1073 = vld [vmem:[%s794 + $0x258] sm:$0xff]
        %v1074 = vld [vmem:[%s794 + $0x260] sm:$0xff]
        %v1075 = vld [vmem:[%s794 + $0x268] sm:$0xff]
        %v1076 = vld [vmem:[%s794 + $0x270] sm:$0xff]
        %v1077 = vld [vmem:[%s794 + $0x278] sm:$0xff]
        %v1078 = vld [vmem:[%s794 + $0x280] sm:$0xff]
        %v1079 = vld [vmem:[%s794 + $0x288] sm:$0xff]
        %v1080 = vld [vmem:[%s794 + $0x290] sm:$0xff]
        %v1081 = vld [vmem:[%s794 + $0x298] sm:$0xff]
        %v1082 = vld [vmem:[%s794 + $0x2a0] sm:$0xff]
        %v1083 = vld [vmem:[%s794 + $0x2a8] sm:$0xff]
        %v1084 = vld [vmem:[%s794 + $0x2b0] sm:$0xff]
        %v1085 = vld [vmem:[%s794 + $0x2b8] sm:$0xff]
        %v1086 = vld [vmem:[%s794 + $0x2c0] sm:$0xff]
        %v1087 = vld [vmem:[%s794 + $0x2c8] sm:$0xff]
        %v1088 = vld [vmem:[%s794 + $0x2d0] sm:$0xff]
        %v1089 = vld [vmem:[%s794 + $0x2d8] sm:$0xff]
        %v1090 = vld [vmem:[%s794 + $0x2e0] sm:$0xff]
        %v1091 = vld [vmem:[%s794 + $0x2e8] sm:$0xff]
        %v1092 = vld [vmem:[%s794 + $0x2f0] sm:$0xff]
        %v1093 = vld [vmem:[%s794 + $0x2f8] sm:$0xff]
        %v1094 = vld [vmem:[%s794 + $0x300] sm:$0xff]
        %v1095 = vld [vmem:[%s794 + $0x308] sm:$0xff]
        %v1096 = vld [vmem:[%s794 + $0x310] sm:$0xff]
        %v1097 = vld [vmem:[%s794 + $0x318] sm:$0xff]
        %v1098 = vld [vmem:[%s794 + $0x320] sm:$0xff]
        %v1099 = vld [vmem:[%s794 + $0x328] sm:$0xff]
        %v1100 = vld [vmem:[%s794 + $0x330] sm:$0xff]
        %v1101 = vld [vmem:[%s794 + $0x338] sm:$0xff]
        %v1102 = vld [vmem:[%s794 + $0x340] sm:$0xff]
        %v1103 = vld [vmem:[%s794 + $0x348] sm:$0xff]
        %v1104 = vld [vmem:[%s794 + $0x350] sm:$0xff]
        %v1105 = vld [vmem:[%s794 + $0x358] sm:$0xff]
        %v1106 = vld [vmem:[%s794 + $0x360] sm:$0xff]
        %v1107 = vld [vmem:[%s794 + $0x368] sm:$0xff]
        %v1108 = vld [vmem:[%s794 + $0x370] sm:$0xff]
        %v1109 = vld [vmem:[%s794 + $0x378] sm:$0xff]
        %v1110 = vld [vmem:[%s794 + $0x380] sm:$0xff]
        %v1111 = vld [vmem:[%s794 + $0x388] sm:$0xff]
        %v1112 = vld [vmem:[%s794 + $0x390] sm:$0xff]
        %v1113 = vld [vmem:[%s794 + $0x398] sm:$0xff]
        %v1114 = vld [vmem:[%s794 + $0x3a0] sm:$0xff]
        %v1115 = vld [vmem:[%s794 + $0x3a8] sm:$0xff]
        %v1116 = vld [vmem:[%s794 + $0x3b0] sm:$0xff]
        %v1117 = vld [vmem:[%s794 + $0x3b8] sm:$0xff]
        %v1118 = vld [vmem:[%s794 + $0x3c0] sm:$0xff]
        %v1119 = vld [vmem:[%s794 + $0x3c8] sm:$0xff]
        %v1120 = vld [vmem:[%s794 + $0x3d0] sm:$0xff]
        %v1121 = vld [vmem:[%s794 + $0x3d8] sm:$0xff]
        %v1122 = vld [vmem:[%s794 + $0x3e0] sm:$0xff]
        %v1123 = vld [vmem:[%s794 + $0x3e8] sm:$0xff]
        %v1124 = vld [vmem:[%s794 + $0x3f0] sm:$0xff]
        %v1125 = vld [vmem:[%s794 + $0x3f8] sm:$0xff]
        %v1126 = vld [vmem:[%s794 + $0x400] sm:$0xff]
        %v1127 = vld [vmem:[%s794 + $0x408] sm:$0xff]
        %v1128 = vld [vmem:[%s794 + $0x410] sm:$0xff]
        %v1129 = vld [vmem:[%s794 + $0x418] sm:$0xff]
        %v1130 = vld [vmem:[%s794 + $0x420] sm:$0xff]
        %v1131 = vld [vmem:[%s794 + $0x428] sm:$0xff]
        %v1132 = vld [vmem:[%s794 + $0x430] sm:$0xff]
        %v1133 = vld [vmem:[%s794 + $0x438] sm:$0xff]
        %v1134 = vld [vmem:[%s794 + $0x440] sm:$0xff]
        %v1135 = vld [vmem:[%s794 + $0x448] sm:$0xff]
        %v1136 = vld [vmem:[%s794 + $0x450] sm:$0xff]
        %v1137 = vld [vmem:[%s794 + $0x458] sm:$0xff]
        %v1138 = vld [vmem:[%s794 + $0x460] sm:$0xff]
        %v1139 = vld [vmem:[%s794 + $0x468] sm:$0xff]
        %v1140 = vld [vmem:[%s794 + $0x470] sm:$0xff]
        %v1141 = vld [vmem:[%s794 + $0x478] sm:$0xff]
        %v1142 = vld [vmem:[%s794 + $0x480] sm:$0xff]
        %v1143 = vld [vmem:[%s794 + $0x488] sm:$0xff]
        %v1144 = vld [vmem:[%s794 + $0x490] sm:$0xff]
        %v1145 = vld [vmem:[%s794 + $0x498] sm:$0xff]
        %v1146 = vld [vmem:[%s794 + $0x4a0] sm:$0xff]
        %v1147 = vld [vmem:[%s794 + $0x4a8] sm:$0xff]
        %v1148 = vld [vmem:[%s794 + $0x4b0] sm:$0xff]
        %v1149 = vld [vmem:[%s794 + $0x4b8] sm:$0xff]
        %v1150 = vld [vmem:[%s794 + $0x4c0] sm:$0xff]
        %v1151 = vld [vmem:[%s794 + $0x4c8] sm:$0xff]
        %v1152 = vld [vmem:[%s794 + $0x4d0] sm:$0xff]
        %v1153 = vld [vmem:[%s794 + $0x4d8] sm:$0xff]
        %v1154 = vld [vmem:[%s794 + $0x4e0] sm:$0xff]
        %v1155 = vld [vmem:[%s794 + $0x4e8] sm:$0xff]
        %v1156 = vld [vmem:[%s794 + $0x4f0] sm:$0xff]
        %v1157 = vld [vmem:[%s794 + $0x4f8] sm:$0xff]
        %v1158 = vld [vmem:[%s794 + $0x500] sm:$0xff]
        %v1159 = vld [vmem:[%s794 + $0x508] sm:$0xff]
        %v1160 = vld [vmem:[%s794 + $0x510] sm:$0xff]
        %v1161 = vld [vmem:[%s794 + $0x518] sm:$0xff]
        %v1162 = vld [vmem:[%s794 + $0x520] sm:$0xff]
        %v1163 = vld [vmem:[%s794 + $0x528] sm:$0xff]
        %v1164 = vld [vmem:[%s794 + $0x530] sm:$0xff]
        %v1165 = vld [vmem:[%s794 + $0x538] sm:$0xff]
        %v1166 = vld [vmem:[%s794 + $0x540] sm:$0xff]
        %v1167 = vld [vmem:[%s794 + $0x548] sm:$0xff]
        %v1168 = vld [vmem:[%s794 + $0x550] sm:$0xff]
        %v1169 = vld [vmem:[%s794 + $0x558] sm:$0xff]
        %v1170 = vld [vmem:[%s794 + $0x560] sm:$0xff]
        %v1171 = vld [vmem:[%s794 + $0x568] sm:$0xff]
        %v1172 = vld [vmem:[%s794 + $0x570] sm:$0xff]
        %v1173 = vld [vmem:[%s794 + $0x578] sm:$0xff]
        %v1174 = vld [vmem:[%s794 + $0x580] sm:$0xff]
        %v1175 = vld [vmem:[%s794 + $0x588] sm:$0xff]
        %v1176 = vld [vmem:[%s794 + $0x590] sm:$0xff]
        %v1177 = vld [vmem:[%s794 + $0x598] sm:$0xff]
        %v1178 = vld [vmem:[%s794 + $0x5a0] sm:$0xff]
        %v1179 = vld [vmem:[%s794 + $0x5a8] sm:$0xff]
        %v1180 = vld [vmem:[%s794 + $0x5b0] sm:$0xff]
        %v1181 = vld [vmem:[%s794 + $0x5b8] sm:$0xff]
        %v1182 = vld [vmem:[%s794 + $0x5c0] sm:$0xff]
        %v1183 = vld [vmem:[%s794 + $0x5c8] sm:$0xff]
        %v1184 = vld [vmem:[%s794 + $0x5d0] sm:$0xff]
        %v1185 = vld [vmem:[%s794 + $0x5d8] sm:$0xff]
        %v1186 = vld [vmem:[%s794 + $0x5e0] sm:$0xff]
        %v1187 = vld [vmem:[%s794 + $0x5e8] sm:$0xff]
        %v1188 = vld [vmem:[%s794 + $0x5f0] sm:$0xff]
        %v1189 = vld [vmem:[%s794 + $0x5f8] sm:$0xff]
        %v1190 = vld [vmem:[%s794 + $0x600] sm:$0xff]
        %v1191 = vld [vmem:[%s794 + $0x608] sm:$0xff]
        %v1192 = vld [vmem:[%s794 + $0x610] sm:$0xff]
        %v1193 = vld [vmem:[%s794 + $0x618] sm:$0xff]
        %v1194 = vld [vmem:[%s794 + $0x620] sm:$0xff]
        %v1195 = vld [vmem:[%s794 + $0x628] sm:$0xff]
        %v1196 = vld [vmem:[%s794 + $0x630] sm:$0xff]
        %v1197 = vld [vmem:[%s794 + $0x638] sm:$0xff]
        %v1198 = vld [vmem:[%s794 + $0x640] sm:$0xff]
        %v1199 = vld [vmem:[%s794 + $0x648] sm:$0xff]
        %v1200 = vld [vmem:[%s794 + $0x650] sm:$0xff]
        %v1201 = vld [vmem:[%s794 + $0x658] sm:$0xff]
        %v1202 = vld [vmem:[%s794 + $0x660] sm:$0xff]
        %v1203 = vld [vmem:[%s794 + $0x668] sm:$0xff]
        %v1204 = vld [vmem:[%s794 + $0x670] sm:$0xff]
        %v1205 = vld [vmem:[%s794 + $0x678] sm:$0xff]
        %v1206 = vld [vmem:[%s794 + $0x680] sm:$0xff]
        %v1207 = vld [vmem:[%s794 + $0x688] sm:$0xff]
        %v1208 = vld [vmem:[%s794 + $0x690] sm:$0xff]
        %v1209 = vld [vmem:[%s794 + $0x698] sm:$0xff]
        %v1210 = vld [vmem:[%s794 + $0x6a0] sm:$0xff]
        %v1211 = vld [vmem:[%s794 + $0x6a8] sm:$0xff]
        %v1212 = vld [vmem:[%s794 + $0x6b0] sm:$0xff]
        %v1213 = vld [vmem:[%s794 + $0x6b8] sm:$0xff]
        %v1214 = vld [vmem:[%s794 + $0x6c0] sm:$0xff]
        %v1215 = vld [vmem:[%s794 + $0x6c8] sm:$0xff]
        %v1216 = vld [vmem:[%s794 + $0x6d0] sm:$0xff]
        %v1217 = vld [vmem:[%s794 + $0x6d8] sm:$0xff]
        %v1218 = vld [vmem:[%s794 + $0x6e0] sm:$0xff]
        %v1219 = vld [vmem:[%s794 + $0x6e8] sm:$0xff]
        %v1220 = vld [vmem:[%s794 + $0x6f0] sm:$0xff]
        %v1221 = vld [vmem:[%s794 + $0x6f8] sm:$0xff]
        %v1222 = vld [vmem:[%s794 + $0x700] sm:$0xff]
        %v1223 = vld [vmem:[%s794 + $0x708] sm:$0xff]
        %v1224 = vld [vmem:[%s794 + $0x710] sm:$0xff]
        %v1225 = vld [vmem:[%s794 + $0x718] sm:$0xff]
        %v1226 = vld [vmem:[%s794 + $0x720] sm:$0xff]
        %v1227 = vld [vmem:[%s794 + $0x728] sm:$0xff]
        %v1228 = vld [vmem:[%s794 + $0x730] sm:$0xff]
        %v1229 = vld [vmem:[%s794 + $0x738] sm:$0xff]
        %v1230 = vld [vmem:[%s794 + $0x740] sm:$0xff]
        %v1231 = vld [vmem:[%s794 + $0x748] sm:$0xff]
        %v1232 = vld [vmem:[%s794 + $0x750] sm:$0xff]
        %v1233 = vld [vmem:[%s794 + $0x758] sm:$0xff]
        %v1234 = vld [vmem:[%s794 + $0x760] sm:$0xff]
        %v1235 = vld [vmem:[%s794 + $0x768] sm:$0xff]
        %v1236 = vld [vmem:[%s794 + $0x770] sm:$0xff]
        %v1237 = vld [vmem:[%s794 + $0x778] sm:$0xff]
        %v1238 = vld [vmem:[%s794 + $0x780] sm:$0xff]
        %v1239 = vld [vmem:[%s794 + $0x788] sm:$0xff]
        %v1240 = vld [vmem:[%s794 + $0x790] sm:$0xff]
        %v1241 = vld [vmem:[%s794 + $0x798] sm:$0xff]
        %v1242 = vld [vmem:[%s794 + $0x7a0] sm:$0xff]
        %v1243 = vld [vmem:[%s794 + $0x7a8] sm:$0xff]
        %v1244 = vld [vmem:[%s794 + $0x7b0] sm:$0xff]
        %v1245 = vld [vmem:[%s794 + $0x7b8] sm:$0xff]
        %v1246 = vld [vmem:[%s794 + $0x7c0] sm:$0xff]
        %v1247 = vld [vmem:[%s794 + $0x7c8] sm:$0xff]
        %v1248 = vld [vmem:[%s794 + $0x7d0] sm:$0xff]
        %v1249 = vld [vmem:[%s794 + $0x7d8] sm:$0xff]
        %v1250 = vld [vmem:[%s794 + $0x7e0] sm:$0xff]
        %v1251 = vld [vmem:[%s794 + $0x7e8] sm:$0xff]
        %v1252 = vld [vmem:[%s794 + $0x7f0] sm:$0xff]
        %v1253 = vld [vmem:[%s794 + $0x7f8] sm:$0xff]
        %v1254 = vld [vmem:[%s794 + $0x800] sm:$0xff]
        %v1255 = vld [vmem:[%s794 + $0x808] sm:$0xff]
        %v1256 = vld [vmem:[%s794 + $0x810] sm:$0xff]
        %v1257 = vld [vmem:[%s794 + $0x818] sm:$0xff]
        %v1258 = vld [vmem:[%s794 + $0x820] sm:$0xff]
        %v1259 = vld [vmem:[%s794 + $0x828] sm:$0xff]
        %v1260 = vld [vmem:[%s794 + $0x830] sm:$0xff]
        %v1261 = vld [vmem:[%s794 + $0x838] sm:$0xff]
        %v1262 = vld [vmem:[%s794 + $0x840] sm:$0xff]
        %v1263 = vld [vmem:[%s794 + $0x848] sm:$0xff]
        %v1264 = vld [vmem:[%s794 + $0x850] sm:$0xff]
        %v1265 = vld [vmem:[%s794 + $0x858] sm:$0xff]
        %v1266 = vld [vmem:[%s794 + $0x860] sm:$0xff]
        %v1267 = vld [vmem:[%s794 + $0x868] sm:$0xff]
        %v1268 = vld [vmem:[%s794 + $0x870] sm:$0xff]
        %v1269 = vld [vmem:[%s794 + $0x878] sm:$0xff]
        %v1270 = vld [vmem:[%s794 + $0x880] sm:$0xff]
        %v1271 = vld [vmem:[%s794 + $0x888] sm:$0xff]
        %v1272 = vld [vmem:[%s794 + $0x890] sm:$0xff]
        %v1273 = vld [vmem:[%s794 + $0x898] sm:$0xff]
        %v1274 = vld [vmem:[%s794 + $0x8a0] sm:$0xff]
        %v1275 = vld [vmem:[%s794 + $0x8a8] sm:$0xff]
        %v1276 = vld [vmem:[%s794 + $0x8b0] sm:$0xff]
        %v1277 = vld [vmem:[%s794 + $0x8b8] sm:$0xff]
        %v1278 = vld [vmem:[%s794 + $0x8c0] sm:$0xff]
        %v1279 = vld [vmem:[%s794 + $0x8c8] sm:$0xff]
        %v1280 = vld [vmem:[%s794 + $0x8d0] sm:$0xff]
        %v1281 = vld [vmem:[%s794 + $0x8d8] sm:$0xff]
        %v1282 = vld [vmem:[%s794 + $0x8e0] sm:$0xff]
        %v1283 = vld [vmem:[%s794 + $0x8e8] sm:$0xff]
        %v1284 = vld [vmem:[%s794 + $0x8f0] sm:$0xff]
        %v1285 = vld [vmem:[%s794 + $0x8f8] sm:$0xff]
        %v1286 = vpack.c.bf16 %v1007, %v998
        %v1287 = vpack.c.bf16 %v1008, %v999
        %v1288 = vpack.c.bf16 %v1009, %v1000
        %v1289 = vpack.c.bf16 %v1010, %v1001
        %v1290 = vpack.c.bf16 %v1011, %v1002
        %v1291 = vpack.c.bf16 %v1012, %v1003
        %v1292 = vpack.c.bf16 %v1013, %v1004
        %v1293 = vpack.c.bf16 %v1014, %v1005
        %v1294 = vpack.c.bf16 %v1015, %v1006
        %v1295 = vpack.c.bf16 %v1025, %v1016
        %v1296 = vpack.c.bf16 %v1026, %v1017
        %v1297 = vpack.c.bf16 %v1027, %v1018
        %v1298 = vpack.c.bf16 %v1028, %v1019
        %v1299 = vpack.c.bf16 %v1029, %v1020
        %v1300 = vpack.c.bf16 %v1030, %v1021
        %v1301 = vpack.c.bf16 %v1031, %v1022
        %v1302 = vpack.c.bf16 %v1032, %v1023
        %v1303 = vpack.c.bf16 %v1033, %v1024
        %v1304 = vpack.c.bf16 %v1043, %v1034
        %v1305 = vpack.c.bf16 %v1044, %v1035
        %v1306 = vpack.c.bf16 %v1045, %v1036
        %v1307 = vpack.c.bf16 %v1046, %v1037
        %v1308 = vpack.c.bf16 %v1047, %v1038
        %v1309 = vpack.c.bf16 %v1048, %v1039
        %v1310 = vpack.c.bf16 %v1049, %v1040
        %v1311 = vpack.c.bf16 %v1050, %v1041
        %v1312 = vpack.c.bf16 %v1051, %v1042
        %v1313 = vpack.c.bf16 %v1061, %v1052
        %v1314 = vpack.c.bf16 %v1062, %v1053
        %v1315 = vpack.c.bf16 %v1063, %v1054
        %v1316 = vpack.c.bf16 %v1064, %v1055
        %v1317 = vpack.c.bf16 %v1065, %v1056
        %v1318 = vpack.c.bf16 %v1066, %v1057
        %v1319 = vpack.c.bf16 %v1067, %v1058
        %v1320 = vpack.c.bf16 %v1068, %v1059
        %v1321 = vpack.c.bf16 %v1069, %v1060
        %v1322 = vpack.c.bf16 %v1079, %v1070
        %v1323 = vpack.c.bf16 %v1080, %v1071
        %v1324 = vpack.c.bf16 %v1081, %v1072
        %v1325 = vpack.c.bf16 %v1082, %v1073
        %v1326 = vpack.c.bf16 %v1083, %v1074
        %v1327 = vpack.c.bf16 %v1084, %v1075
        %v1328 = vpack.c.bf16 %v1085, %v1076
        %v1329 = vpack.c.bf16 %v1086, %v1077
        %v1330 = vpack.c.bf16 %v1087, %v1078
        %v1331 = vpack.c.bf16 %v1097, %v1088
        %v1332 = vpack.c.bf16 %v1098, %v1089
        %v1333 = vpack.c.bf16 %v1099, %v1090
        %v1334 = vpack.c.bf16 %v1100, %v1091
        %v1335 = vpack.c.bf16 %v1101, %v1092
        %v1336 = vpack.c.bf16 %v1102, %v1093
        %v1337 = vpack.c.bf16 %v1103, %v1094
        %v1338 = vpack.c.bf16 %v1104, %v1095
        %v1339 = vpack.c.bf16 %v1105, %v1096
        %v1340 = vpack.c.bf16 %v1115, %v1106
        %v1341 = vpack.c.bf16 %v1116, %v1107
        %v1342 = vpack.c.bf16 %v1117, %v1108
        %v1343 = vpack.c.bf16 %v1118, %v1109
        %v1344 = vpack.c.bf16 %v1119, %v1110
        %v1345 = vpack.c.bf16 %v1120, %v1111
        %v1346 = vpack.c.bf16 %v1121, %v1112
        %v1347 = vpack.c.bf16 %v1122, %v1113
        %v1348 = vpack.c.bf16 %v1123, %v1114
        %v1349 = vpack.c.bf16 %v1133, %v1124
        %v1350 = vpack.c.bf16 %v1134, %v1125
        %v1351 = vpack.c.bf16 %v1135, %v1126
        %v1352 = vpack.c.bf16 %v1136, %v1127
        %v1353 = vpack.c.bf16 %v1137, %v1128
        %v1354 = vpack.c.bf16 %v1138, %v1129
        %v1355 = vpack.c.bf16 %v1139, %v1130
        %v1356 = vpack.c.bf16 %v1140, %v1131
        %v1357 = vpack.c.bf16 %v1141, %v1132
        %v1358 = vpack.c.bf16 %v1151, %v1142
        %v1359 = vpack.c.bf16 %v1152, %v1143
        %v1360 = vpack.c.bf16 %v1153, %v1144
        %v1361 = vpack.c.bf16 %v1154, %v1145
        %v1362 = vpack.c.bf16 %v1155, %v1146
        %v1363 = vpack.c.bf16 %v1156, %v1147
        %v1364 = vpack.c.bf16 %v1157, %v1148
        %v1365 = vpack.c.bf16 %v1158, %v1149
        %v1366 = vpack.c.bf16 %v1159, %v1150
        %v1367 = vpack.c.bf16 %v1169, %v1160
        %v1368 = vpack.c.bf16 %v1170, %v1161
        %v1369 = vpack.c.bf16 %v1171, %v1162
        %v1370 = vpack.c.bf16 %v1172, %v1163
        %v1371 = vpack.c.bf16 %v1173, %v1164
        %v1372 = vpack.c.bf16 %v1174, %v1165
        %v1373 = vpack.c.bf16 %v1175, %v1166
        %v1374 = vpack.c.bf16 %v1176, %v1167
        %v1375 = vpack.c.bf16 %v1177, %v1168
        %v1376 = vpack.c.bf16 %v1187, %v1178
        %v1377 = vpack.c.bf16 %v1188, %v1179
        %v1378 = vpack.c.bf16 %v1189, %v1180
        %v1379 = vpack.c.bf16 %v1190, %v1181
        %v1380 = vpack.c.bf16 %v1191, %v1182
        %v1381 = vpack.c.bf16 %v1192, %v1183
        %v1382 = vpack.c.bf16 %v1193, %v1184
        %v1383 = vpack.c.bf16 %v1194, %v1185
        %v1384 = vpack.c.bf16 %v1195, %v1186
        %v1385 = vpack.c.bf16 %v1205, %v1196
        %v1386 = vpack.c.bf16 %v1206, %v1197
        %v1387 = vpack.c.bf16 %v1207, %v1198
        %v1388 = vpack.c.bf16 %v1208, %v1199
        %v1389 = vpack.c.bf16 %v1209, %v1200
        %v1390 = vpack.c.bf16 %v1210, %v1201
        %v1391 = vpack.c.bf16 %v1211, %v1202
        %v1392 = vpack.c.bf16 %v1212, %v1203
        %v1393 = vpack.c.bf16 %v1213, %v1204
        %v1394 = vpack.c.bf16 %v1223, %v1214
        %v1395 = vpack.c.bf16 %v1224, %v1215
        %v1396 = vpack.c.bf16 %v1225, %v1216
        %v1397 = vpack.c.bf16 %v1226, %v1217
        %v1398 = vpack.c.bf16 %v1227, %v1218
        %v1399 = vpack.c.bf16 %v1228, %v1219
        %v1400 = vpack.c.bf16 %v1229, %v1220
        %v1401 = vpack.c.bf16 %v1230, %v1221
        %v1402 = vpack.c.bf16 %v1231, %v1222
        %v1403 = vpack.c.bf16 %v1241, %v1232
        %v1404 = vpack.c.bf16 %v1242, %v1233
        %v1405 = vpack.c.bf16 %v1243, %v1234
        %v1406 = vpack.c.bf16 %v1244, %v1235
        %v1407 = vpack.c.bf16 %v1245, %v1236
        %v1408 = vpack.c.bf16 %v1246, %v1237
        %v1409 = vpack.c.bf16 %v1247, %v1238
        %v1410 = vpack.c.bf16 %v1248, %v1239
        %v1411 = vpack.c.bf16 %v1249, %v1240
        %v1412 = vpack.c.bf16 %v1259, %v1250
        %v1413 = vpack.c.bf16 %v1260, %v1251
        %v1414 = vpack.c.bf16 %v1261, %v1252
        %v1415 = vpack.c.bf16 %v1262, %v1253
        %v1416 = vpack.c.bf16 %v1263, %v1254
        %v1417 = vpack.c.bf16 %v1264, %v1255
        %v1418 = vpack.c.bf16 %v1265, %v1256
        %v1419 = vpack.c.bf16 %v1266, %v1257
        %v1420 = vpack.c.bf16 %v1267, %v1258
        %v1421 = vpack.c.bf16 %v1277, %v1268
        %v1422 = vpack.c.bf16 %v1278, %v1269
        %v1423 = vpack.c.bf16 %v1279, %v1270
        %v1424 = vpack.c.bf16 %v1280, %v1271
        %v1425 = vpack.c.bf16 %v1281, %v1272
        %v1426 = vpack.c.bf16 %v1282, %v1273
        %v1427 = vpack.c.bf16 %v1283, %v1274
        %v1428 = vpack.c.bf16 %v1284, %v1275
        %v1429 = vpack.c.bf16 %v1285, %v1276
        %v1430 = vld [vmem:[%s845] sm:$0xff]
        %v1431 = vld [vmem:[%s845 + $0x8] sm:$0xff]
        %v1432 = vld [vmem:[%s845 + $0x10] sm:$0xff]
        %v1433 = vld [vmem:[%s845 + $0x18] sm:$0xff]
        %v1434 = vld [vmem:[%s845 + $0x20] sm:$0xff]
        %v1435 = vld [vmem:[%s845 + $0x28] sm:$0xff]
        %v1436 = vld [vmem:[%s845 + $0x30] sm:$0xff]
        %v1437 = vld [vmem:[%s845 + $0x38] sm:$0xff]
        %v1438 = vld [vmem:[%s845 + $0x40] sm:$0xff]
        %v1439 = vld [vmem:[%s845 + $0x48] sm:$0xff]
        %v1440 = vld [vmem:[%s845 + $0x50] sm:$0xff]
        %v1441 = vld [vmem:[%s845 + $0x58] sm:$0xff]
        %v1442 = vld [vmem:[%s845 + $0x60] sm:$0xff]
        %v1443 = vld [vmem:[%s845 + $0x68] sm:$0xff]
        %v1444 = vld [vmem:[%s845 + $0x70] sm:$0xff]
        %v1445 = vld [vmem:[%s845 + $0x78] sm:$0xff]
        %v1446 = vld [vmem:[%s845 + $0x80] sm:$0xff]
        %v1447 = vld [vmem:[%s845 + $0x88] sm:$0xff]
        %v1448 = vld [vmem:[%s845 + $0x90] sm:$0xff]
        %v1449 = vld [vmem:[%s845 + $0x98] sm:$0xff]
        %v1450 = vld [vmem:[%s845 + $0xa0] sm:$0xff]
        %v1451 = vld [vmem:[%s845 + $0xa8] sm:$0xff]
        %v1452 = vld [vmem:[%s845 + $0xb0] sm:$0xff]
        %v1453 = vld [vmem:[%s845 + $0xb8] sm:$0xff]
        %v1454 = vld [vmem:[%s845 + $0xc0] sm:$0xff]
        %v1455 = vld [vmem:[%s845 + $0xc8] sm:$0xff]
        %v1456 = vld [vmem:[%s845 + $0xd0] sm:$0xff]
        %v1457 = vld [vmem:[%s845 + $0xd8] sm:$0xff]
        %v1458 = vld [vmem:[%s845 + $0xe0] sm:$0xff]
        %v1459 = vld [vmem:[%s845 + $0xe8] sm:$0xff]
        %v1460 = vld [vmem:[%s845 + $0xf0] sm:$0xff]
        %v1461 = vld [vmem:[%s845 + $0xf8] sm:$0xff]
        %v1462 = vld [vmem:[%s845 + $0x100] sm:$0xff]
        %v1463 = vld [vmem:[%s845 + $0x108] sm:$0xff]
        %v1464 = vld [vmem:[%s845 + $0x110] sm:$0xff]
        %v1465 = vld [vmem:[%s845 + $0x118] sm:$0xff]
        %v1466 = vld [vmem:[%s845 + $0x120] sm:$0xff]
        %v1467 = vld [vmem:[%s845 + $0x128] sm:$0xff]
        %v1468 = vld [vmem:[%s845 + $0x130] sm:$0xff]
        %v1469 = vld [vmem:[%s845 + $0x138] sm:$0xff]
        %v1470 = vld [vmem:[%s845 + $0x140] sm:$0xff]
        %v1471 = vld [vmem:[%s845 + $0x148] sm:$0xff]
        %v1472 = vld [vmem:[%s845 + $0x150] sm:$0xff]
        %v1473 = vld [vmem:[%s845 + $0x158] sm:$0xff]
        %v1474 = vld [vmem:[%s845 + $0x160] sm:$0xff]
        %v1475 = vld [vmem:[%s845 + $0x168] sm:$0xff]
        %v1476 = vld [vmem:[%s845 + $0x170] sm:$0xff]
        %v1477 = vld [vmem:[%s845 + $0x178] sm:$0xff]
        %v1478 = vld [vmem:[%s845 + $0x180] sm:$0xff]
        %v1479 = vld [vmem:[%s845 + $0x188] sm:$0xff]
        %v1480 = vld [vmem:[%s845 + $0x190] sm:$0xff]
        %v1481 = vld [vmem:[%s845 + $0x198] sm:$0xff]
        %v1482 = vld [vmem:[%s845 + $0x1a0] sm:$0xff]
        %v1483 = vld [vmem:[%s845 + $0x1a8] sm:$0xff]
        %v1484 = vld [vmem:[%s845 + $0x1b0] sm:$0xff]
        %v1485 = vld [vmem:[%s845 + $0x1b8] sm:$0xff]
        %v1486 = vld [vmem:[%s845 + $0x1c0] sm:$0xff]
        %v1487 = vld [vmem:[%s845 + $0x1c8] sm:$0xff]
        %v1488 = vld [vmem:[%s845 + $0x1d0] sm:$0xff]
        %v1489 = vld [vmem:[%s845 + $0x1d8] sm:$0xff]
        %v1490 = vld [vmem:[%s845 + $0x1e0] sm:$0xff]
        %v1491 = vld [vmem:[%s845 + $0x1e8] sm:$0xff]
        %v1492 = vld [vmem:[%s845 + $0x1f0] sm:$0xff]
        %v1493 = vld [vmem:[%s845 + $0x1f8] sm:$0xff]
        %v1494 = vld [vmem:[%s845 + $0x200] sm:$0xff]
        %v1495 = vld [vmem:[%s845 + $0x208] sm:$0xff]
        %v1496 = vld [vmem:[%s845 + $0x210] sm:$0xff]
        %v1497 = vld [vmem:[%s845 + $0x218] sm:$0xff]
        %v1498 = vld [vmem:[%s845 + $0x220] sm:$0xff]
        %v1499 = vld [vmem:[%s845 + $0x228] sm:$0xff]
        %v1500 = vld [vmem:[%s845 + $0x230] sm:$0xff]
        %v1501 = vld [vmem:[%s845 + $0x238] sm:$0xff]
        %v1502 = vld [vmem:[%s845 + $0x240] sm:$0xff]
        %v1503 = vld [vmem:[%s845 + $0x248] sm:$0xff]
        %v1504 = vld [vmem:[%s845 + $0x250] sm:$0xff]
        %v1505 = vld [vmem:[%s845 + $0x258] sm:$0xff]
        %v1506 = vld [vmem:[%s845 + $0x260] sm:$0xff]
        %v1507 = vld [vmem:[%s845 + $0x268] sm:$0xff]
        %v1508 = vld [vmem:[%s845 + $0x270] sm:$0xff]
        %v1509 = vld [vmem:[%s845 + $0x278] sm:$0xff]
        %v1510 = vld [vmem:[%s845 + $0x280] sm:$0xff]
        %v1511 = vld [vmem:[%s845 + $0x288] sm:$0xff]
        %v1512 = vld [vmem:[%s845 + $0x290] sm:$0xff]
        %v1513 = vld [vmem:[%s845 + $0x298] sm:$0xff]
        %v1514 = vld [vmem:[%s845 + $0x2a0] sm:$0xff]
        %v1515 = vld [vmem:[%s845 + $0x2a8] sm:$0xff]
        %v1516 = vld [vmem:[%s845 + $0x2b0] sm:$0xff]
        %v1517 = vld [vmem:[%s845 + $0x2b8] sm:$0xff]
        %v1518 = vld [vmem:[%s845 + $0x2c0] sm:$0xff]
        %v1519 = vld [vmem:[%s845 + $0x2c8] sm:$0xff]
        %v1520 = vld [vmem:[%s845 + $0x2d0] sm:$0xff]
        %v1521 = vld [vmem:[%s845 + $0x2d8] sm:$0xff]
        %v1522 = vld [vmem:[%s845 + $0x2e0] sm:$0xff]
        %v1523 = vld [vmem:[%s845 + $0x2e8] sm:$0xff]
        %v1524 = vld [vmem:[%s845 + $0x2f0] sm:$0xff]
        %v1525 = vld [vmem:[%s845 + $0x2f8] sm:$0xff]
        %v1526 = vld [vmem:[%s845 + $0x300] sm:$0xff]
        %v1527 = vld [vmem:[%s845 + $0x308] sm:$0xff]
        %v1528 = vld [vmem:[%s845 + $0x310] sm:$0xff]
        %v1529 = vld [vmem:[%s845 + $0x318] sm:$0xff]
        %v1530 = vld [vmem:[%s845 + $0x320] sm:$0xff]
        %v1531 = vld [vmem:[%s845 + $0x328] sm:$0xff]
        %v1532 = vld [vmem:[%s845 + $0x330] sm:$0xff]
        %v1533 = vld [vmem:[%s845 + $0x338] sm:$0xff]
        %v1534 = vld [vmem:[%s845 + $0x340] sm:$0xff]
        %v1535 = vld [vmem:[%s845 + $0x348] sm:$0xff]
        %v1536 = vld [vmem:[%s845 + $0x350] sm:$0xff]
        %v1537 = vld [vmem:[%s845 + $0x358] sm:$0xff]
        %v1538 = vld [vmem:[%s845 + $0x360] sm:$0xff]
        %v1539 = vld [vmem:[%s845 + $0x368] sm:$0xff]
        %v1540 = vld [vmem:[%s845 + $0x370] sm:$0xff]
        %v1541 = vld [vmem:[%s845 + $0x378] sm:$0xff]
        %v1542 = vld [vmem:[%s845 + $0x380] sm:$0xff]
        %v1543 = vld [vmem:[%s845 + $0x388] sm:$0xff]
        %v1544 = vld [vmem:[%s845 + $0x390] sm:$0xff]
        %v1545 = vld [vmem:[%s845 + $0x398] sm:$0xff]
        %v1546 = vld [vmem:[%s845 + $0x3a0] sm:$0xff]
        %v1547 = vld [vmem:[%s845 + $0x3a8] sm:$0xff]
        %v1548 = vld [vmem:[%s845 + $0x3b0] sm:$0xff]
        %v1549 = vld [vmem:[%s845 + $0x3b8] sm:$0xff]
        %v1550 = vld [vmem:[%s845 + $0x3c0] sm:$0xff]
        %v1551 = vld [vmem:[%s845 + $0x3c8] sm:$0xff]
        %v1552 = vld [vmem:[%s845 + $0x3d0] sm:$0xff]
        %v1553 = vld [vmem:[%s845 + $0x3d8] sm:$0xff]
        %v1554 = vld [vmem:[%s845 + $0x3e0] sm:$0xff]
        %v1555 = vld [vmem:[%s845 + $0x3e8] sm:$0xff]
        %v1556 = vld [vmem:[%s845 + $0x3f0] sm:$0xff]
        %v1557 = vld [vmem:[%s845 + $0x3f8] sm:$0xff]
        %v1558 = vld [vmem:[%s845 + $0x400] sm:$0xff]
        %v1559 = vld [vmem:[%s845 + $0x408] sm:$0xff]
        %v1560 = vld [vmem:[%s845 + $0x410] sm:$0xff]
        %v1561 = vld [vmem:[%s845 + $0x418] sm:$0xff]
        %v1562 = vld [vmem:[%s845 + $0x420] sm:$0xff]
        %v1563 = vld [vmem:[%s845 + $0x428] sm:$0xff]
        %v1564 = vld [vmem:[%s845 + $0x430] sm:$0xff]
        %v1565 = vld [vmem:[%s845 + $0x438] sm:$0xff]
        %v1566 = vld [vmem:[%s845 + $0x440] sm:$0xff]
        %v1567 = vld [vmem:[%s845 + $0x448] sm:$0xff]
        %v1568 = vld [vmem:[%s845 + $0x450] sm:$0xff]
        %v1569 = vld [vmem:[%s845 + $0x458] sm:$0xff]
        %v1570 = vld [vmem:[%s845 + $0x460] sm:$0xff]
        %v1571 = vld [vmem:[%s845 + $0x468] sm:$0xff]
        %v1572 = vld [vmem:[%s845 + $0x470] sm:$0xff]
        %v1573 = vld [vmem:[%s845 + $0x478] sm:$0xff]
        %v1718 = vunpack.c.l.b16 %v1430
        %v1719 = vunpack.c.h.b16 %v1430
        %v1720 = vunpack.c.l.b16 %v1431
        %v1721 = vunpack.c.h.b16 %v1431
        %v1722 = vunpack.c.l.b16 %v1432
        %v1723 = vunpack.c.h.b16 %v1432
        %v1724 = vunpack.c.l.b16 %v1433
        %v1725 = vunpack.c.h.b16 %v1433
        %v1726 = vunpack.c.l.b16 %v1434
        %v1727 = vunpack.c.h.b16 %v1434
        %v1728 = vunpack.c.l.b16 %v1435
        %v1729 = vunpack.c.h.b16 %v1435
        %v1730 = vunpack.c.l.b16 %v1436
        %v1731 = vunpack.c.h.b16 %v1436
        %v1732 = vunpack.c.l.b16 %v1437
        %v1733 = vunpack.c.h.b16 %v1437
        %v1734 = vunpack.c.l.b16 %v1438
        %v1735 = vunpack.c.h.b16 %v1438
        %v1736 = vunpack.c.l.b16 %v1439
        %v1737 = vunpack.c.h.b16 %v1439
        %v1738 = vunpack.c.l.b16 %v1440
        %v1739 = vunpack.c.h.b16 %v1440
        %v1740 = vunpack.c.l.b16 %v1441
        %v1741 = vunpack.c.h.b16 %v1441
        %v1742 = vunpack.c.l.b16 %v1442
        %v1743 = vunpack.c.h.b16 %v1442
        %v1744 = vunpack.c.l.b16 %v1443
        %v1745 = vunpack.c.h.b16 %v1443
        %v1746 = vunpack.c.l.b16 %v1444
        %v1747 = vunpack.c.h.b16 %v1444
        %v1748 = vunpack.c.l.b16 %v1445
        %v1749 = vunpack.c.h.b16 %v1445
        %v1750 = vunpack.c.l.b16 %v1446
        %v1751 = vunpack.c.h.b16 %v1446
        %v1752 = vunpack.c.l.b16 %v1447
        %v1753 = vunpack.c.h.b16 %v1447
        %v1754 = vunpack.c.l.b16 %v1448
        %v1755 = vunpack.c.h.b16 %v1448
        %v1756 = vunpack.c.l.b16 %v1449
        %v1757 = vunpack.c.h.b16 %v1449
        %v1758 = vunpack.c.l.b16 %v1450
        %v1759 = vunpack.c.h.b16 %v1450
        %v1760 = vunpack.c.l.b16 %v1451
        %v1761 = vunpack.c.h.b16 %v1451
        %v1762 = vunpack.c.l.b16 %v1452
        %v1763 = vunpack.c.h.b16 %v1452
        %v1764 = vunpack.c.l.b16 %v1453
        %v1765 = vunpack.c.h.b16 %v1453
        %v1766 = vunpack.c.l.b16 %v1454
        %v1767 = vunpack.c.h.b16 %v1454
        %v1768 = vunpack.c.l.b16 %v1455
        %v1769 = vunpack.c.h.b16 %v1455
        %v1770 = vunpack.c.l.b16 %v1456
        %v1771 = vunpack.c.h.b16 %v1456
        %v1772 = vunpack.c.l.b16 %v1457
        %v1773 = vunpack.c.h.b16 %v1457
        %v1774 = vunpack.c.l.b16 %v1458
        %v1775 = vunpack.c.h.b16 %v1458
        %v1776 = vunpack.c.l.b16 %v1459
        %v1777 = vunpack.c.h.b16 %v1459
        %v1778 = vunpack.c.l.b16 %v1460
        %v1779 = vunpack.c.h.b16 %v1460
        %v1780 = vunpack.c.l.b16 %v1461
        %v1781 = vunpack.c.h.b16 %v1461
        %v1782 = vunpack.c.l.b16 %v1462
        %v1783 = vunpack.c.h.b16 %v1462
        %v1784 = vunpack.c.l.b16 %v1463
        %v1785 = vunpack.c.h.b16 %v1463
        %v1786 = vunpack.c.l.b16 %v1464
        %v1787 = vunpack.c.h.b16 %v1464
        %v1788 = vunpack.c.l.b16 %v1465
        %v1789 = vunpack.c.h.b16 %v1465
        %v1790 = vunpack.c.l.b16 %v1466
        %v1791 = vunpack.c.h.b16 %v1466
        %v1792 = vunpack.c.l.b16 %v1467
        %v1793 = vunpack.c.h.b16 %v1467
        %v1794 = vunpack.c.l.b16 %v1468
        %v1795 = vunpack.c.h.b16 %v1468
        %v1796 = vunpack.c.l.b16 %v1469
        %v1797 = vunpack.c.h.b16 %v1469
        %v1798 = vunpack.c.l.b16 %v1470
        %v1799 = vunpack.c.h.b16 %v1470
        %v1800 = vunpack.c.l.b16 %v1471
        %v1801 = vunpack.c.h.b16 %v1471
        %v1802 = vunpack.c.l.b16 %v1472
        %v1803 = vunpack.c.h.b16 %v1472
        %v1804 = vunpack.c.l.b16 %v1473
        %v1805 = vunpack.c.h.b16 %v1473
        %v1806 = vunpack.c.l.b16 %v1474
        %v1807 = vunpack.c.h.b16 %v1474
        %v1808 = vunpack.c.l.b16 %v1475
        %v1809 = vunpack.c.h.b16 %v1475
        %v1810 = vunpack.c.l.b16 %v1476
        %v1811 = vunpack.c.h.b16 %v1476
        %v1812 = vunpack.c.l.b16 %v1477
        %v1813 = vunpack.c.h.b16 %v1477
        %v1814 = vunpack.c.l.b16 %v1478
        %v1815 = vunpack.c.h.b16 %v1478
        %v1816 = vunpack.c.l.b16 %v1479
        %v1817 = vunpack.c.h.b16 %v1479
        %v1818 = vunpack.c.l.b16 %v1480
        %v1819 = vunpack.c.h.b16 %v1480
        %v1820 = vunpack.c.l.b16 %v1481
        %v1821 = vunpack.c.h.b16 %v1481
        %v1822 = vunpack.c.l.b16 %v1482
        %v1823 = vunpack.c.h.b16 %v1482
        %v1824 = vunpack.c.l.b16 %v1483
        %v1825 = vunpack.c.h.b16 %v1483
        %v1826 = vunpack.c.l.b16 %v1484
        %v1827 = vunpack.c.h.b16 %v1484
        %v1828 = vunpack.c.l.b16 %v1485
        %v1829 = vunpack.c.h.b16 %v1485
        %v1830 = vunpack.c.l.b16 %v1486
        %v1831 = vunpack.c.h.b16 %v1486
        %v1832 = vunpack.c.l.b16 %v1487
        %v1833 = vunpack.c.h.b16 %v1487
        %v1834 = vunpack.c.l.b16 %v1488
        %v1835 = vunpack.c.h.b16 %v1488
        %v1836 = vunpack.c.l.b16 %v1489
        %v1837 = vunpack.c.h.b16 %v1489
        %v1838 = vunpack.c.l.b16 %v1490
        %v1839 = vunpack.c.h.b16 %v1490
        %v1840 = vunpack.c.l.b16 %v1491
        %v1841 = vunpack.c.h.b16 %v1491
        %v1842 = vunpack.c.l.b16 %v1492
        %v1843 = vunpack.c.h.b16 %v1492
        %v1844 = vunpack.c.l.b16 %v1493
        %v1845 = vunpack.c.h.b16 %v1493
        %v1846 = vunpack.c.l.b16 %v1494
        %v1847 = vunpack.c.h.b16 %v1494
        %v1848 = vunpack.c.l.b16 %v1495
        %v1849 = vunpack.c.h.b16 %v1495
        %v1850 = vunpack.c.l.b16 %v1496
        %v1851 = vunpack.c.h.b16 %v1496
        %v1852 = vunpack.c.l.b16 %v1497
        %v1853 = vunpack.c.h.b16 %v1497
        %v1854 = vunpack.c.l.b16 %v1498
        %v1855 = vunpack.c.h.b16 %v1498
        %v1856 = vunpack.c.l.b16 %v1499
        %v1857 = vunpack.c.h.b16 %v1499
        %v1858 = vunpack.c.l.b16 %v1500
        %v1859 = vunpack.c.h.b16 %v1500
        %v1860 = vunpack.c.l.b16 %v1501
        %v1861 = vunpack.c.h.b16 %v1501
        %v1862 = vunpack.c.l.b16 %v1502
        %v1863 = vunpack.c.h.b16 %v1502
        %v1864 = vunpack.c.l.b16 %v1503
        %v1865 = vunpack.c.h.b16 %v1503
        %v1866 = vunpack.c.l.b16 %v1504
        %v1867 = vunpack.c.h.b16 %v1504
        %v1868 = vunpack.c.l.b16 %v1505
        %v1869 = vunpack.c.h.b16 %v1505
        %v1870 = vunpack.c.l.b16 %v1506
        %v1871 = vunpack.c.h.b16 %v1506
        %v1872 = vunpack.c.l.b16 %v1507
        %v1873 = vunpack.c.h.b16 %v1507
        %v1874 = vunpack.c.l.b16 %v1508
        %v1875 = vunpack.c.h.b16 %v1508
        %v1876 = vunpack.c.l.b16 %v1509
        %v1877 = vunpack.c.h.b16 %v1509
        %v1878 = vunpack.c.l.b16 %v1510
        %v1879 = vunpack.c.h.b16 %v1510
        %v1880 = vunpack.c.l.b16 %v1511
        %v1881 = vunpack.c.h.b16 %v1511
        %v1882 = vunpack.c.l.b16 %v1512
        %v1883 = vunpack.c.h.b16 %v1512
        %v1884 = vunpack.c.l.b16 %v1513
        %v1885 = vunpack.c.h.b16 %v1513
        %v1886 = vunpack.c.l.b16 %v1514
        %v1887 = vunpack.c.h.b16 %v1514
        %v1888 = vunpack.c.l.b16 %v1515
        %v1889 = vunpack.c.h.b16 %v1515
        %v1890 = vunpack.c.l.b16 %v1516
        %v1891 = vunpack.c.h.b16 %v1516
        %v1892 = vunpack.c.l.b16 %v1517
        %v1893 = vunpack.c.h.b16 %v1517
        %v1894 = vunpack.c.l.b16 %v1518
        %v1895 = vunpack.c.h.b16 %v1518
        %v1896 = vunpack.c.l.b16 %v1519
        %v1897 = vunpack.c.h.b16 %v1519
        %v1898 = vunpack.c.l.b16 %v1520
        %v1899 = vunpack.c.h.b16 %v1520
        %v1900 = vunpack.c.l.b16 %v1521
        %v1901 = vunpack.c.h.b16 %v1521
        %v1902 = vunpack.c.l.b16 %v1522
        %v1903 = vunpack.c.h.b16 %v1522
        %v1904 = vunpack.c.l.b16 %v1523
        %v1905 = vunpack.c.h.b16 %v1523
        %v1906 = vunpack.c.l.b16 %v1524
        %v1907 = vunpack.c.h.b16 %v1524
        %v1908 = vunpack.c.l.b16 %v1525
        %v1909 = vunpack.c.h.b16 %v1525
        %v1910 = vunpack.c.l.b16 %v1526
        %v1911 = vunpack.c.h.b16 %v1526
        %v1912 = vunpack.c.l.b16 %v1527
        %v1913 = vunpack.c.h.b16 %v1527
        %v1914 = vunpack.c.l.b16 %v1528
        %v1915 = vunpack.c.h.b16 %v1528
        %v1916 = vunpack.c.l.b16 %v1529
        %v1917 = vunpack.c.h.b16 %v1529
        %v1918 = vunpack.c.l.b16 %v1530
        %v1919 = vunpack.c.h.b16 %v1530
        %v1920 = vunpack.c.l.b16 %v1531
        %v1921 = vunpack.c.h.b16 %v1531
        %v1922 = vunpack.c.l.b16 %v1532
        %v1923 = vunpack.c.h.b16 %v1532
        %v1924 = vunpack.c.l.b16 %v1533
        %v1925 = vunpack.c.h.b16 %v1533
        %v1926 = vunpack.c.l.b16 %v1534
        %v1927 = vunpack.c.h.b16 %v1534
        %v1928 = vunpack.c.l.b16 %v1535
        %v1929 = vunpack.c.h.b16 %v1535
        %v1930 = vunpack.c.l.b16 %v1536
        %v1931 = vunpack.c.h.b16 %v1536
        %v1932 = vunpack.c.l.b16 %v1537
        %v1933 = vunpack.c.h.b16 %v1537
        %v1934 = vunpack.c.l.b16 %v1538
        %v1935 = vunpack.c.h.b16 %v1538
        %v1936 = vunpack.c.l.b16 %v1539
        %v1937 = vunpack.c.h.b16 %v1539
        %v1938 = vunpack.c.l.b16 %v1540
        %v1939 = vunpack.c.h.b16 %v1540
        %v1940 = vunpack.c.l.b16 %v1541
        %v1941 = vunpack.c.h.b16 %v1541
        %v1942 = vunpack.c.l.b16 %v1542
        %v1943 = vunpack.c.h.b16 %v1542
        %v1944 = vunpack.c.l.b16 %v1543
        %v1945 = vunpack.c.h.b16 %v1543
        %v1946 = vunpack.c.l.b16 %v1544
        %v1947 = vunpack.c.h.b16 %v1544
        %v1948 = vunpack.c.l.b16 %v1545
        %v1949 = vunpack.c.h.b16 %v1545
        %v1950 = vunpack.c.l.b16 %v1546
        %v1951 = vunpack.c.h.b16 %v1546
        %v1952 = vunpack.c.l.b16 %v1547
        %v1953 = vunpack.c.h.b16 %v1547
        %v1954 = vunpack.c.l.b16 %v1548
        %v1955 = vunpack.c.h.b16 %v1548
        %v1956 = vunpack.c.l.b16 %v1549
        %v1957 = vunpack.c.h.b16 %v1549
        %v1958 = vunpack.c.l.b16 %v1550
        %v1959 = vunpack.c.h.b16 %v1550
        %v1960 = vunpack.c.l.b16 %v1551
        %v1961 = vunpack.c.h.b16 %v1551
        %v1962 = vunpack.c.l.b16 %v1552
        %v1963 = vunpack.c.h.b16 %v1552
        %v1964 = vunpack.c.l.b16 %v1553
        %v1965 = vunpack.c.h.b16 %v1553
        %v1966 = vunpack.c.l.b16 %v1554
        %v1967 = vunpack.c.h.b16 %v1554
        %v1968 = vunpack.c.l.b16 %v1555
        %v1969 = vunpack.c.h.b16 %v1555
        %v1970 = vunpack.c.l.b16 %v1556
        %v1971 = vunpack.c.h.b16 %v1556
        %v1972 = vunpack.c.l.b16 %v1557
        %v1973 = vunpack.c.h.b16 %v1557
        %v1974 = vunpack.c.l.b16 %v1558
        %v1975 = vunpack.c.h.b16 %v1558
        %v1976 = vunpack.c.l.b16 %v1559
        %v1977 = vunpack.c.h.b16 %v1559
        %v1978 = vunpack.c.l.b16 %v1560
        %v1979 = vunpack.c.h.b16 %v1560
        %v1980 = vunpack.c.l.b16 %v1561
        %v1981 = vunpack.c.h.b16 %v1561
        %v1982 = vunpack.c.l.b16 %v1562
        %v1983 = vunpack.c.h.b16 %v1562
        %v1984 = vunpack.c.l.b16 %v1563
        %v1985 = vunpack.c.h.b16 %v1563
        %v1986 = vunpack.c.l.b16 %v1564
        %v1987 = vunpack.c.h.b16 %v1564
        %v1988 = vunpack.c.l.b16 %v1565
        %v1989 = vunpack.c.h.b16 %v1565
        %v1990 = vunpack.c.l.b16 %v1566
        %v1991 = vunpack.c.h.b16 %v1566
        %v1992 = vunpack.c.l.b16 %v1567
        %v1993 = vunpack.c.h.b16 %v1567
        %v1994 = vunpack.c.l.b16 %v1568
        %v1995 = vunpack.c.h.b16 %v1568
        %v1996 = vunpack.c.l.b16 %v1569
        %v1997 = vunpack.c.h.b16 %v1569
        %v1998 = vunpack.c.l.b16 %v1570
        %v1999 = vunpack.c.h.b16 %v1570
        %v2000 = vunpack.c.l.b16 %v1571
        %v2001 = vunpack.c.h.b16 %v1571
        %v2002 = vunpack.c.l.b16 %v1572
        %v2003 = vunpack.c.h.b16 %v1572
        %v2004 = vunpack.c.l.b16 %v1573
        %v2005 = vunpack.c.h.b16 %v1573
        %v2006 = vpack.c.b16 %v1720, %v1718
        %v2007 = vpack.c.b16 %v1721, %v1719
        %v2008 = vpack.c.b16 %v1724, %v1722
        %v2009 = vpack.c.b16 %v1725, %v1723
        %v2010 = vpack.c.b16 %v1728, %v1726
        %v2011 = vpack.c.b16 %v1729, %v1727
        %v2012 = vpack.c.b16 %v1732, %v1730
        %v2013 = vpack.c.b16 %v1733, %v1731
        %v2014 = vpack.c.b16 %v1736, %v1734
        %v2015 = vpack.c.b16 %v1737, %v1735
        %v2016 = vpack.c.b16 %v1740, %v1738
        %v2017 = vpack.c.b16 %v1741, %v1739
        %v2018 = vpack.c.b16 %v1744, %v1742
        %v2019 = vpack.c.b16 %v1745, %v1743
        %v2020 = vpack.c.b16 %v1748, %v1746
        %v2021 = vpack.c.b16 %v1749, %v1747
        %v2022 = vpack.c.b16 %v1752, %v1750
        %v2023 = vpack.c.b16 %v1753, %v1751
        %v2024 = vpack.c.b16 %v1756, %v1754
        %v2025 = vpack.c.b16 %v1757, %v1755
        %v2026 = vpack.c.b16 %v1760, %v1758
        %v2027 = vpack.c.b16 %v1761, %v1759
        %v2028 = vpack.c.b16 %v1764, %v1762
        %v2029 = vpack.c.b16 %v1765, %v1763
        %v2030 = vpack.c.b16 %v1768, %v1766
        %v2031 = vpack.c.b16 %v1769, %v1767
        %v2032 = vpack.c.b16 %v1772, %v1770
        %v2033 = vpack.c.b16 %v1773, %v1771
        %v2034 = vpack.c.b16 %v1776, %v1774
        %v2035 = vpack.c.b16 %v1777, %v1775
        %v2036 = vpack.c.b16 %v1780, %v1778
        %v2037 = vpack.c.b16 %v1781, %v1779
        %v2038 = vpack.c.b16 %v1784, %v1782
        %v2039 = vpack.c.b16 %v1785, %v1783
        %v2040 = vpack.c.b16 %v1788, %v1786
        %v2041 = vpack.c.b16 %v1789, %v1787
        %v2042 = vpack.c.b16 %v1792, %v1790
        %v2043 = vpack.c.b16 %v1793, %v1791
        %v2044 = vpack.c.b16 %v1796, %v1794
        %v2045 = vpack.c.b16 %v1797, %v1795
        %v2046 = vpack.c.b16 %v1800, %v1798
        %v2047 = vpack.c.b16 %v1801, %v1799
        %v2048 = vpack.c.b16 %v1804, %v1802
        %v2049 = vpack.c.b16 %v1805, %v1803
        %v2050 = vpack.c.b16 %v1808, %v1806
        %v2051 = vpack.c.b16 %v1809, %v1807
        %v2052 = vpack.c.b16 %v1812, %v1810
        %v2053 = vpack.c.b16 %v1813, %v1811
        %v2054 = vpack.c.b16 %v1816, %v1814
        %v2055 = vpack.c.b16 %v1817, %v1815
        %v2056 = vpack.c.b16 %v1820, %v1818
        %v2057 = vpack.c.b16 %v1821, %v1819
        %v2058 = vpack.c.b16 %v1824, %v1822
        %v2059 = vpack.c.b16 %v1825, %v1823
        %v2060 = vpack.c.b16 %v1828, %v1826
        %v2061 = vpack.c.b16 %v1829, %v1827
        %v2062 = vpack.c.b16 %v1832, %v1830
        %v2063 = vpack.c.b16 %v1833, %v1831
        %v2064 = vpack.c.b16 %v1836, %v1834
        %v2065 = vpack.c.b16 %v1837, %v1835
        %v2066 = vpack.c.b16 %v1840, %v1838
        %v2067 = vpack.c.b16 %v1841, %v1839
        %v2068 = vpack.c.b16 %v1844, %v1842
        %v2069 = vpack.c.b16 %v1845, %v1843
        %v2070 = vpack.c.b16 %v1848, %v1846
        %v2071 = vpack.c.b16 %v1849, %v1847
        %v2072 = vpack.c.b16 %v1852, %v1850
        %v2073 = vpack.c.b16 %v1853, %v1851
        %v2074 = vpack.c.b16 %v1856, %v1854
        %v2075 = vpack.c.b16 %v1857, %v1855
        %v2076 = vpack.c.b16 %v1860, %v1858
        %v2077 = vpack.c.b16 %v1861, %v1859
        %v2078 = vpack.c.b16 %v1864, %v1862
        %v2079 = vpack.c.b16 %v1865, %v1863
        %v2080 = vpack.c.b16 %v1868, %v1866
        %v2081 = vpack.c.b16 %v1869, %v1867
        %v2082 = vpack.c.b16 %v1872, %v1870
        %v2083 = vpack.c.b16 %v1873, %v1871
        %v2084 = vpack.c.b16 %v1876, %v1874
        %v2085 = vpack.c.b16 %v1877, %v1875
        %v2086 = vpack.c.b16 %v1880, %v1878
        %v2087 = vpack.c.b16 %v1881, %v1879
        %v2088 = vpack.c.b16 %v1884, %v1882
        %v2089 = vpack.c.b16 %v1885, %v1883
        %v2090 = vpack.c.b16 %v1888, %v1886
        %v2091 = vpack.c.b16 %v1889, %v1887
        %v2092 = vpack.c.b16 %v1892, %v1890
        %v2093 = vpack.c.b16 %v1893, %v1891
        %v2094 = vpack.c.b16 %v1896, %v1894
        %v2095 = vpack.c.b16 %v1897, %v1895
        %v2096 = vpack.c.b16 %v1900, %v1898
        %v2097 = vpack.c.b16 %v1901, %v1899
        %v2098 = vpack.c.b16 %v1904, %v1902
        %v2099 = vpack.c.b16 %v1905, %v1903
        %v2100 = vpack.c.b16 %v1908, %v1906
        %v2101 = vpack.c.b16 %v1909, %v1907
        %v2102 = vpack.c.b16 %v1912, %v1910
        %v2103 = vpack.c.b16 %v1913, %v1911
        %v2104 = vpack.c.b16 %v1916, %v1914
        %v2105 = vpack.c.b16 %v1917, %v1915
        %v2106 = vpack.c.b16 %v1920, %v1918
        %v2107 = vpack.c.b16 %v1921, %v1919
        %v2108 = vpack.c.b16 %v1924, %v1922
        %v2109 = vpack.c.b16 %v1925, %v1923
        %v2110 = vpack.c.b16 %v1928, %v1926
        %v2111 = vpack.c.b16 %v1929, %v1927
        %v2112 = vpack.c.b16 %v1932, %v1930
        %v2113 = vpack.c.b16 %v1933, %v1931
        %v2114 = vpack.c.b16 %v1936, %v1934
        %v2115 = vpack.c.b16 %v1937, %v1935
        %v2116 = vpack.c.b16 %v1940, %v1938
        %v2117 = vpack.c.b16 %v1941, %v1939
        %v2118 = vpack.c.b16 %v1944, %v1942
        %v2119 = vpack.c.b16 %v1945, %v1943
        %v2120 = vpack.c.b16 %v1948, %v1946
        %v2121 = vpack.c.b16 %v1949, %v1947
        %v2122 = vpack.c.b16 %v1952, %v1950
        %v2123 = vpack.c.b16 %v1953, %v1951
        %v2124 = vpack.c.b16 %v1956, %v1954
        %v2125 = vpack.c.b16 %v1957, %v1955
        %v2126 = vpack.c.b16 %v1960, %v1958
        %v2127 = vpack.c.b16 %v1961, %v1959
        %v2128 = vpack.c.b16 %v1964, %v1962
        %v2129 = vpack.c.b16 %v1965, %v1963
        %v2130 = vpack.c.b16 %v1968, %v1966
        %v2131 = vpack.c.b16 %v1969, %v1967
        %v2132 = vpack.c.b16 %v1972, %v1970
        %v2133 = vpack.c.b16 %v1973, %v1971
        %v2134 = vpack.c.b16 %v1976, %v1974
        %v2135 = vpack.c.b16 %v1977, %v1975
        %v2136 = vpack.c.b16 %v1980, %v1978
        %v2137 = vpack.c.b16 %v1981, %v1979
        %v2138 = vpack.c.b16 %v1984, %v1982
        %v2139 = vpack.c.b16 %v1985, %v1983
        %v2140 = vpack.c.b16 %v1988, %v1986
        %v2141 = vpack.c.b16 %v1989, %v1987
        %v2142 = vpack.c.b16 %v1992, %v1990
        %v2143 = vpack.c.b16 %v1993, %v1991
        %v2144 = vpack.c.b16 %v1996, %v1994
        %v2145 = vpack.c.b16 %v1997, %v1995
        %v2146 = vpack.c.b16 %v2000, %v1998
        %v2147 = vpack.c.b16 %v2001, %v1999
        %v2148 = vpack.c.b16 %v2004, %v2002
        %v2149 = vpack.c.b16 %v2005, %v2003
        %2294 = vmatprep.subr.bf16.mxu0 %v2007
        %2295 = vmatpush1.bf16.msra.mxu0 %v2006
        %2296 = vmatprep.subr.bf16.mxu0 %v2009
        %2297 = vmatpush1.bf16.msra.mxu0 %v2008
        %2298 = vmatprep.subr.bf16.mxu0 %v2011
        %2299 = vmatpush1.bf16.msra.mxu0 %v2010
        %2300 = vmatprep.subr.bf16.mxu0 %v2013
        %2301 = vmatpush1.bf16.msra.mxu0 %v2012
        %2302 = vmatprep.subr.bf16.mxu0 %v2015
        %2303 = vmatpush1.bf16.msra.mxu0 %v2014
        %2304 = vmatprep.subr.bf16.mxu0 %v2017
        %2305 = vmatpush1.bf16.msra.mxu0 %v2016
        %2306 = vmatprep.subr.bf16.mxu0 %v2019
        %2307 = vmatpush1.bf16.msra.mxu0 %v2018
        %2308 = vmatprep.subr.bf16.mxu0 %v2021
        %2309 = vmatpush1.bf16.msra.mxu0 %v2020
        %2310 = vmatprep.subr.bf16.mxu0 %v2023
        %2311 = vmatpush1.bf16.msra.mxu0 %v2022
        %2312 = vmatprep.subr.bf16.mxu0 %v2025
        %2313 = vmatpush1.bf16.msra.mxu0 %v2024
        %2314 = vmatprep.subr.bf16.mxu0 %v2027
        %2315 = vmatpush1.bf16.msra.mxu0 %v2026
        %2316 = vmatprep.subr.bf16.mxu0 %v2029
        %2317 = vmatpush1.bf16.msra.mxu0 %v2028
        %2318 = vmatprep.subr.bf16.mxu0 %v2031
        %2319 = vmatpush1.bf16.msra.mxu0 %v2030
        %2320 = vmatprep.subr.bf16.mxu0 %v2033
        %2321 = vmatpush1.bf16.msra.mxu0 %v2032
        %2322 = vmatprep.subr.bf16.mxu0 %v2035
        %2323 = vmatpush1.bf16.msra.mxu0 %v2034
        %2324 = vmatprep.subr.bf16.mxu0 %v2037
        %2325 = vmatpush1.bf16.msra.mxu0 %v2036
        %2326 = vmatprep.mubr.bf16.mxu0 %v1287
        %2327 = vmatmul.mubr.bf16.gmra.mrb[0].mxu0 %v1286
        %v2328 = vpop.f32.mrb[0].mxu0
        %v2329 = vadd.f32 0.0, %v2328
        %v2330 = vpop.f32.mrb[0].mxu0
        %v2331 = vadd.f32 0.0, %v2330
        %v2332 = vpop.f32.mrb[0].mxu0
        %v2333 = vadd.f32 0.0, %v2332
        %v2334 = vpop.f32.mrb[0].mxu0
        %v2335 = vadd.f32 0.0, %v2334
        %2336 = vmatprep.mubr.bf16.mxu0 %v1296
        %2337 = vmatmul.mubr.bf16.gmra.mrb[0].mxu0 %v1295
        %v2338 = vpop.f32.mrb[0].mxu0
        %v2339 = vadd.f32 0.0, %v2338
        %v2340 = vpop.f32.mrb[0].mxu0
        %v2341 = vadd.f32 0.0, %v2340
        %v2342 = vpop.f32.mrb[0].mxu0
        %v2343 = vadd.f32 0.0, %v2342
        %v2344 = vpop.f32.mrb[0].mxu0
        %v2345 = vadd.f32 0.0, %v2344
        %2346 = vmatprep.mubr.bf16.mxu0 %v1305
        %2347 = vmatmul.mubr.bf16.gmra.mrb[0].mxu0 %v1304
        %v2348 = vpop.f32.mrb[0].mxu0
        %v2349 = vadd.f32 0.0, %v2348
        %v2350 = vpop.f32.mrb[0].mxu0
        %v2351 = vadd.f32 0.0, %v2350
        %v2352 = vpop.f32.mrb[0].mxu0
        %v2353 = vadd.f32 0.0, %v2352
        %v2354 = vpop.f32.mrb[0].mxu0
        %v2355 = vadd.f32 0.0, %v2354
        %2356 = vmatprep.mubr.bf16.mxu0 %v1314
        %2357 = vmatmul.mubr.bf16.gmra.mrb[0].mxu0 %v1313
        %v2358 = vpop.f32.mrb[0].mxu0
        %v2359 = vadd.f32 0.0, %v2358
        %v2360 = vpop.f32.mrb[0].mxu0
        %v2361 = vadd.f32 0.0, %v2360
        %v2362 = vpop.f32.mrb[0].mxu0
        %v2363 = vadd.f32 0.0, %v2362
        %v2364 = vpop.f32.mrb[0].mxu0
        %v2365 = vadd.f32 0.0, %v2364
        %2366 = vmatprep.mubr.bf16.mxu0 %v1323
        %2367 = vmatmul.mubr.bf16.gmra.mrb[0].mxu0 %v1322
        %v2368 = vpop.f32.mrb[0].mxu0
        %v2369 = vadd.f32 0.0, %v2368
        %v2370 = vpop.f32.mrb[0].mxu0
        %v2371 = vadd.f32 0.0, %v2370
        %v2372 = vpop.f32.mrb[0].mxu0
        %v2373 = vadd.f32 0.0, %v2372
        %v2374 = vpop.f32.mrb[0].mxu0
        %v2375 = vadd.f32 0.0, %v2374
        %2376 = vmatprep.mubr.bf16.mxu0 %v1332
        %2377 = vmatmul.mubr.bf16.gmra.mrb[0].mxu0 %v1331
        %v2378 = vpop.f32.mrb[0].mxu0
        %v2379 = vadd.f32 0.0, %v2378
        %v2380 = vpop.f32.mrb[0].mxu0
        %v2381 = vadd.f32 0.0, %v2380
        %v2382 = vpop.f32.mrb[0].mxu0
        %v2383 = vadd.f32 0.0, %v2382
        %v2384 = vpop.f32.mrb[0].mxu0
        %v2385 = vadd.f32 0.0, %v2384
        %2386 = vmatprep.mubr.bf16.mxu0 %v1341
        %2387 = vmatmul.mubr.bf16.gmra.mrb[0].mxu0 %v1340
        %v2388 = vpop.f32.mrb[0].mxu0
        %v2389 = vadd.f32 0.0, %v2388
        %v2390 = vpop.f32.mrb[0].mxu0
        %v2391 = vadd.f32 0.0, %v2390
        %v2392 = vpop.f32.mrb[0].mxu0
        %v2393 = vadd.f32 0.0, %v2392
        %v2394 = vpop.f32.mrb[0].mxu0
        %v2395 = vadd.f32 0.0, %v2394
        %2396 = vmatprep.mubr.bf16.mxu0 %v1350
        %2397 = vmatmul.mubr.bf16.gmra.mrb[0].mxu0 %v1349
        %v2398 = vpop.f32.mrb[0].mxu0
        %v2399 = vadd.f32 0.0, %v2398
        %v2400 = vpop.f32.mrb[0].mxu0
        %v2401 = vadd.f32 0.0, %v2400
        %v2402 = vpop.f32.mrb[0].mxu0
        %v2403 = vadd.f32 0.0, %v2402
        %v2404 = vpop.f32.mrb[0].mxu0
        %v2405 = vadd.f32 0.0, %v2404
        %2406 = vmatprep.mubr.bf16.mxu0 %v1359
        %2407 = vmatmul.mubr.bf16.gmra.mrb[0].mxu0 %v1358
        %v2408 = vpop.f32.mrb[0].mxu0
        %v2409 = vadd.f32 0.0, %v2408
        %v2410 = vpop.f32.mrb[0].mxu0
        %v2411 = vadd.f32 0.0, %v2410
        %v2412 = vpop.f32.mrb[0].mxu0
        %v2413 = vadd.f32 0.0, %v2412
        %v2414 = vpop.f32.mrb[0].mxu0
        %v2415 = vadd.f32 0.0, %v2414
        %2416 = vmatprep.mubr.bf16.mxu0 %v1368
        %2417 = vmatmul.mubr.bf16.gmra.mrb[0].mxu0 %v1367
        %v2418 = vpop.f32.mrb[0].mxu0
        %v2419 = vadd.f32 0.0, %v2418
        %v2420 = vpop.f32.mrb[0].mxu0
        %v2421 = vadd.f32 0.0, %v2420
        %v2422 = vpop.f32.mrb[0].mxu0
        %v2423 = vadd.f32 0.0, %v2422
        %v2424 = vpop.f32.mrb[0].mxu0
        %v2425 = vadd.f32 0.0, %v2424
        %2426 = vmatprep.mubr.bf16.mxu0 %v1377
        %2427 = vmatmul.mubr.bf16.gmra.mrb[0].mxu0 %v1376
        %v2428 = vpop.f32.mrb[0].mxu0
        %v2429 = vadd.f32 0.0, %v2428
        %v2430 = vpop.f32.mrb[0].mxu0
        %v2431 = vadd.f32 0.0, %v2430
        %v2432 = vpop.f32.mrb[0].mxu0
        %v2433 = vadd.f32 0.0, %v2432
        %v2434 = vpop.f32.mrb[0].mxu0
        %v2435 = vadd.f32 0.0, %v2434
        %2436 = vmatprep.mubr.bf16.mxu0 %v1386
        %2437 = vmatmul.mubr.bf16.gmra.mrb[0].mxu0 %v1385
        %v2438 = vpop.f32.mrb[0].mxu0
        %v2439 = vadd.f32 0.0, %v2438
        %v2440 = vpop.f32.mrb[0].mxu0
        %v2441 = vadd.f32 0.0, %v2440
        %v2442 = vpop.f32.mrb[0].mxu0
        %v2443 = vadd.f32 0.0, %v2442
        %v2444 = vpop.f32.mrb[0].mxu0
        %v2445 = vadd.f32 0.0, %v2444
        %2446 = vmatprep.mubr.bf16.mxu0 %v1395
        %2447 = vmatmul.mubr.bf16.gmra.mrb[0].mxu0 %v1394
        %v2448 = vpop.f32.mrb[0].mxu0
        %v2449 = vadd.f32 0.0, %v2448
        %v2450 = vpop.f32.mrb[0].mxu0
        %v2451 = vadd.f32 0.0, %v2450
        %v2452 = vpop.f32.mrb[0].mxu0
        %v2453 = vadd.f32 0.0, %v2452
        %v2454 = vpop.f32.mrb[0].mxu0
        %v2455 = vadd.f32 0.0, %v2454
        %2456 = vmatprep.mubr.bf16.mxu0 %v1404
        %2457 = vmatmul.mubr.bf16.gmra.mrb[0].mxu0 %v1403
        %v2458 = vpop.f32.mrb[0].mxu0
        %v2459 = vadd.f32 0.0, %v2458
        %v2460 = vpop.f32.mrb[0].mxu0
        %v2461 = vadd.f32 0.0, %v2460
        %v2462 = vpop.f32.mrb[0].mxu0
        %v2463 = vadd.f32 0.0, %v2462
        %v2464 = vpop.f32.mrb[0].mxu0
        %v2465 = vadd.f32 0.0, %v2464
        %2466 = vmatprep.mubr.bf16.mxu0 %v1413
        %2467 = vmatmul.mubr.bf16.gmra.mrb[0].mxu0 %v1412
        %v2468 = vpop.f32.mrb[0].mxu0
        %v2469 = vadd.f32 0.0, %v2468
        %v2470 = vpop.f32.mrb[0].mxu0
        %v2471 = vadd.f32 0.0, %v2470
        %v2472 = vpop.f32.mrb[0].mxu0
        %v2473 = vadd.f32 0.0, %v2472
        %v2474 = vpop.f32.mrb[0].mxu0
        %v2475 = vadd.f32 0.0, %v2474
        %2476 = vmatprep.mubr.bf16.mxu0 %v1422
        %2477 = vmatmul.mubr.bf16.gmra.mrb[0].mxu0 %v1421
        %v2478 = vpop.f32.mrb[0].mxu0
        %v2479 = vadd.f32 0.0, %v2478
        %v2480 = vpop.f32.mrb[0].mxu0
        %v2481 = vadd.f32 0.0, %v2480
        %v2482 = vpop.f32.mrb[0].mxu0
        %v2483 = vadd.f32 0.0, %v2482
        %v2484 = vpop.f32.mrb[0].mxu0
        %v2485 = vadd.f32 0.0, %v2484
        %2486 = vdwg.mxu0
        %2487 = vmatprep.subr.bf16.mxu0 %v2039
        %2488 = vmatpush1.bf16.msra.mxu0 %v2038
        %2489 = vmatprep.subr.bf16.mxu0 %v2041
        %2490 = vmatpush1.bf16.msra.mxu0 %v2040
        %2491 = vmatprep.subr.bf16.mxu0 %v2043
        %2492 = vmatpush1.bf16.msra.mxu0 %v2042
        %2493 = vmatprep.subr.bf16.mxu0 %v2045
        %2494 = vmatpush1.bf16.msra.mxu0 %v2044
        %2495 = vmatprep.subr.bf16.mxu0 %v2047
        %2496 = vmatpush1.bf16.msra.mxu0 %v2046
        %2497 = vmatprep.subr.bf16.mxu0 %v2049
        %2498 = vmatpush1.bf16.msra.mxu0 %v2048
        %2499 = vmatprep.subr.bf16.mxu0 %v2051
        %2500 = vmatpush1.bf16.msra.mxu0 %v2050
        %2501 = vmatprep.subr.bf16.mxu0 %v2053
        %2502 = vmatpush1.bf16.msra.mxu0 %v2052
        %2503 = vmatprep.subr.bf16.mxu0 %v2055
        %2504 = vmatpush1.bf16.msra.mxu0 %v2054
        %2505 = vmatprep.subr.bf16.mxu0 %v2057
        %2506 = vmatpush1.bf16.msra.mxu0 %v2056
        %2507 = vmatprep.subr.bf16.mxu0 %v2059
        %2508 = vmatpush1.bf16.msra.mxu0 %v2058
        %2509 = vmatprep.subr.bf16.mxu0 %v2061
        %2510 = vmatpush1.bf16.msra.mxu0 %v2060
        %2511 = vmatprep.subr.bf16.mxu0 %v2063
        %2512 = vmatpush1.bf16.msra.mxu0 %v2062
        %2513 = vmatprep.subr.bf16.mxu0 %v2065
        %2514 = vmatpush1.bf16.msra.mxu0 %v2064
        %2515 = vmatprep.subr.bf16.mxu0 %v2067
        %2516 = vmatpush1.bf16.msra.mxu0 %v2066
        %2517 = vmatprep.subr.bf16.mxu0 %v2069
        %2518 = vmatpush1.bf16.msra.mxu0 %v2068
        %2519 = vmatprep.mubr.bf16.mxu0 %v1289
        %2520 = vmatmul.mubr.bf16.gmra.mrb[0].mxu0 %v1288
        %v2521 = vpop.f32.mrb[0].mxu0
        %v2522 = vadd.f32 %v2329, %v2521
        %v2523 = vpop.f32.mrb[0].mxu0
        %v2524 = vadd.f32 %v2331, %v2523
        %v2525 = vpop.f32.mrb[0].mxu0
        %v2526 = vadd.f32 %v2333, %v2525
        %v2527 = vpop.f32.mrb[0].mxu0
        %v2528 = vadd.f32 %v2335, %v2527
        %2529 = vmatprep.mubr.bf16.mxu0 %v1298
        %2530 = vmatmul.mubr.bf16.gmra.mrb[0].mxu0 %v1297
        %v2531 = vpop.f32.mrb[0].mxu0
        %v2532 = vadd.f32 %v2339, %v2531
        %v2533 = vpop.f32.mrb[0].mxu0
        %v2534 = vadd.f32 %v2341, %v2533
        %v2535 = vpop.f32.mrb[0].mxu0
        %v2536 = vadd.f32 %v2343, %v2535
        %v2537 = vpop.f32.mrb[0].mxu0
        %v2538 = vadd.f32 %v2345, %v2537
        %2539 = vmatprep.mubr.bf16.mxu0 %v1307
        %2540 = vmatmul.mubr.bf16.gmra.mrb[0].mxu0 %v1306
        %v2541 = vpop.f32.mrb[0].mxu0
        %v2542 = vadd.f32 %v2349, %v2541
        %v2543 = vpop.f32.mrb[0].mxu0
        %v2544 = vadd.f32 %v2351, %v2543
        %v2545 = vpop.f32.mrb[0].mxu0
        %v2546 = vadd.f32 %v2353, %v2545
        %v2547 = vpop.f32.mrb[0].mxu0
        %v2548 = vadd.f32 %v2355, %v2547
        %2549 = vmatprep.mubr.bf16.mxu0 %v1316
        %2550 = vmatmul.mubr.bf16.gmra.mrb[0].mxu0 %v1315
        %v2551 = vpop.f32.mrb[0].mxu0
        %v2552 = vadd.f32 %v2359, %v2551
        %v2553 = vpop.f32.mrb[0].mxu0
        %v2554 = vadd.f32 %v2361, %v2553
        %v2555 = vpop.f32.mrb[0].mxu0
        %v2556 = vadd.f32 %v2363, %v2555
        %v2557 = vpop.f32.mrb[0].mxu0
        %v2558 = vadd.f32 %v2365, %v2557
        %2559 = vmatprep.mubr.bf16.mxu0 %v1325
        %2560 = vmatmul.mubr.bf16.gmra.mrb[0].mxu0 %v1324
        %v2561 = vpop.f32.mrb[0].mxu0
        %v2562 = vadd.f32 %v2369, %v2561
        %v2563 = vpop.f32.mrb[0].mxu0
        %v2564 = vadd.f32 %v2371, %v2563
        %v2565 = vpop.f32.mrb[0].mxu0
        %v2566 = vadd.f32 %v2373, %v2565
        %v2567 = vpop.f32.mrb[0].mxu0
        %v2568 = vadd.f32 %v2375, %v2567
        %2569 = vmatprep.mubr.bf16.mxu0 %v1334
        %2570 = vmatmul.mubr.bf16.gmra.mrb[0].mxu0 %v1333
        %v2571 = vpop.f32.mrb[0].mxu0
        %v2572 = vadd.f32 %v2379, %v2571
        %v2573 = vpop.f32.mrb[0].mxu0
        %v2574 = vadd.f32 %v2381, %v2573
        %v2575 = vpop.f32.mrb[0].mxu0
        %v2576 = vadd.f32 %v2383, %v2575
        %v2577 = vpop.f32.mrb[0].mxu0
        %v2578 = vadd.f32 %v2385, %v2577
        %2579 = vmatprep.mubr.bf16.mxu0 %v1343
        %2580 = vmatmul.mubr.bf16.gmra.mrb[0].mxu0 %v1342
        %v2581 = vpop.f32.mrb[0].mxu0
        %v2582 = vadd.f32 %v2389, %v2581
        %v2583 = vpop.f32.mrb[0].mxu0
        %v2584 = vadd.f32 %v2391, %v2583
        %v2585 = vpop.f32.mrb[0].mxu0
        %v2586 = vadd.f32 %v2393, %v2585
        %v2587 = vpop.f32.mrb[0].mxu0
        %v2588 = vadd.f32 %v2395, %v2587
        %2589 = vmatprep.mubr.bf16.mxu0 %v1352
        %2590 = vmatmul.mubr.bf16.gmra.mrb[0].mxu0 %v1351
        %v2591 = vpop.f32.mrb[0].mxu0
        %v2592 = vadd.f32 %v2399, %v2591
        %v2593 = vpop.f32.mrb[0].mxu0
        %v2594 = vadd.f32 %v2401, %v2593
        %v2595 = vpop.f32.mrb[0].mxu0
        %v2596 = vadd.f32 %v2403, %v2595
        %v2597 = vpop.f32.mrb[0].mxu0
        %v2598 = vadd.f32 %v2405, %v2597
        %2599 = vmatprep.mubr.bf16.mxu0 %v1361
        %2600 = vmatmul.mubr.bf16.gmra.mrb[0].mxu0 %v1360
        %v2601 = vpop.f32.mrb[0].mxu0
        %v2602 = vadd.f32 %v2409, %v2601
        %v2603 = vpop.f32.mrb[0].mxu0
        %v2604 = vadd.f32 %v2411, %v2603
        %v2605 = vpop.f32.mrb[0].mxu0
        %v2606 = vadd.f32 %v2413, %v2605
        %v2607 = vpop.f32.mrb[0].mxu0
        %v2608 = vadd.f32 %v2415, %v2607
        %2609 = vmatprep.mubr.bf16.mxu0 %v1370
        %2610 = vmatmul.mubr.bf16.gmra.mrb[0].mxu0 %v1369
        %v2611 = vpop.f32.mrb[0].mxu0
        %v2612 = vadd.f32 %v2419, %v2611
        %v2613 = vpop.f32.mrb[0].mxu0
        %v2614 = vadd.f32 %v2421, %v2613
        %v2615 = vpop.f32.mrb[0].mxu0
        %v2616 = vadd.f32 %v2423, %v2615
        %v2617 = vpop.f32.mrb[0].mxu0
        %v2618 = vadd.f32 %v2425, %v2617
        %2619 = vmatprep.mubr.bf16.mxu0 %v1379
        %2620 = vmatmul.mubr.bf16.gmra.mrb[0].mxu0 %v1378
        %v2621 = vpop.f32.mrb[0].mxu0
        %v2622 = vadd.f32 %v2429, %v2621
        %v2623 = vpop.f32.mrb[0].mxu0
        %v2624 = vadd.f32 %v2431, %v2623
        %v2625 = vpop.f32.mrb[0].mxu0
        %v2626 = vadd.f32 %v2433, %v2625
        %v2627 = vpop.f32.mrb[0].mxu0
        %v2628 = vadd.f32 %v2435, %v2627
        %2629 = vmatprep.mubr.bf16.mxu0 %v1388
        %2630 = vmatmul.mubr.bf16.gmra.mrb[0].mxu0 %v1387
        %v2631 = vpop.f32.mrb[0].mxu0
        %v2632 = vadd.f32 %v2439, %v2631
        %v2633 = vpop.f32.mrb[0].mxu0
        %v2634 = vadd.f32 %v2441, %v2633
        %v2635 = vpop.f32.mrb[0].mxu0
        %v2636 = vadd.f32 %v2443, %v2635
        %v2637 = vpop.f32.mrb[0].mxu0
        %v2638 = vadd.f32 %v2445, %v2637
        %2639 = vmatprep.mubr.bf16.mxu0 %v1397
        %2640 = vmatmul.mubr.bf16.gmra.mrb[0].mxu0 %v1396
        %v2641 = vpop.f32.mrb[0].mxu0
        %v2642 = vadd.f32 %v2449, %v2641
        %v2643 = vpop.f32.mrb[0].mxu0
        %v2644 = vadd.f32 %v2451, %v2643
        %v2645 = vpop.f32.mrb[0].mxu0
        %v2646 = vadd.f32 %v2453, %v2645
        %v2647 = vpop.f32.mrb[0].mxu0
        %v2648 = vadd.f32 %v2455, %v2647
        %2649 = vmatprep.mubr.bf16.mxu0 %v1406
        %2650 = vmatmul.mubr.bf16.gmra.mrb[0].mxu0 %v1405
        %v2651 = vpop.f32.mrb[0].mxu0
        %v2652 = vadd.f32 %v2459, %v2651
        %v2653 = vpop.f32.mrb[0].mxu0
        %v2654 = vadd.f32 %v2461, %v2653
        %v2655 = vpop.f32.mrb[0].mxu0
        %v2656 = vadd.f32 %v2463, %v2655
        %v2657 = vpop.f32.mrb[0].mxu0
        %v2658 = vadd.f32 %v2465, %v2657
        %2659 = vmatprep.mubr.bf16.mxu0 %v1415
        %2660 = vmatmul.mubr.bf16.gmra.mrb[0].mxu0 %v1414
        %v2661 = vpop.f32.mrb[0].mxu0
        %v2662 = vadd.f32 %v2469, %v2661
        %v2663 = vpop.f32.mrb[0].mxu0
        %v2664 = vadd.f32 %v2471, %v2663
        %v2665 = vpop.f32.mrb[0].mxu0
        %v2666 = vadd.f32 %v2473, %v2665
        %v2667 = vpop.f32.mrb[0].mxu0
        %v2668 = vadd.f32 %v2475, %v2667
        %2669 = vmatprep.mubr.bf16.mxu0 %v1424
        %2670 = vmatmul.mubr.bf16.gmra.mrb[0].mxu0 %v1423
        %v2671 = vpop.f32.mrb[0].mxu0
        %v2672 = vadd.f32 %v2479, %v2671
        %v2673 = vpop.f32.mrb[0].mxu0
        %v2674 = vadd.f32 %v2481, %v2673
        %v2675 = vpop.f32.mrb[0].mxu0
        %v2676 = vadd.f32 %v2483, %v2675
        %v2677 = vpop.f32.mrb[0].mxu0
        %v2678 = vadd.f32 %v2485, %v2677
        %2679 = vdwg.mxu0
        %2680 = vmatprep.subr.bf16.mxu0 %v2071
        %2681 = vmatpush1.bf16.msra.mxu0 %v2070
        %2682 = vmatprep.subr.bf16.mxu0 %v2073
        %2683 = vmatpush1.bf16.msra.mxu0 %v2072
        %2684 = vmatprep.subr.bf16.mxu0 %v2075
        %2685 = vmatpush1.bf16.msra.mxu0 %v2074
        %2686 = vmatprep.subr.bf16.mxu0 %v2077
        %2687 = vmatpush1.bf16.msra.mxu0 %v2076
        %2688 = vmatprep.subr.bf16.mxu0 %v2079
        %2689 = vmatpush1.bf16.msra.mxu0 %v2078
        %2690 = vmatprep.subr.bf16.mxu0 %v2081
        %2691 = vmatpush1.bf16.msra.mxu0 %v2080
        %2692 = vmatprep.subr.bf16.mxu0 %v2083
        %2693 = vmatpush1.bf16.msra.mxu0 %v2082
        %2694 = vmatprep.subr.bf16.mxu0 %v2085
        %2695 = vmatpush1.bf16.msra.mxu0 %v2084
        %2696 = vmatprep.subr.bf16.mxu0 %v2087
        %2697 = vmatpush1.bf16.msra.mxu0 %v2086
        %2698 = vmatprep.subr.bf16.mxu0 %v2089
        %2699 = vmatpush1.bf16.msra.mxu0 %v2088
        %2700 = vmatprep.subr.bf16.mxu0 %v2091
        %2701 = vmatpush1.bf16.msra.mxu0 %v2090
        %2702 = vmatprep.subr.bf16.mxu0 %v2093
        %2703 = vmatpush1.bf16.msra.mxu0 %v2092
        %2704 = vmatprep.subr.bf16.mxu0 %v2095
        %2705 = vmatpush1.bf16.msra.mxu0 %v2094
        %2706 = vmatprep.subr.bf16.mxu0 %v2097
        %2707 = vmatpush1.bf16.msra.mxu0 %v2096
        %2708 = vmatprep.subr.bf16.mxu0 %v2099
        %2709 = vmatpush1.bf16.msra.mxu0 %v2098
        %2710 = vmatprep.subr.bf16.mxu0 %v2101
        %2711 = vmatpush1.bf16.msra.mxu0 %v2100
        %2712 = vmatprep.mubr.bf16.mxu0 %v1291
        %2713 = vmatmul.mubr.bf16.gmra.mrb[0].mxu0 %v1290
        %v2714 = vpop.f32.mrb[0].mxu0
        %v2715 = vadd.f32 %v2522, %v2714
        %v2716 = vpop.f32.mrb[0].mxu0
        %v2717 = vadd.f32 %v2524, %v2716
        %v2718 = vpop.f32.mrb[0].mxu0
        %v2719 = vadd.f32 %v2526, %v2718
        %v2720 = vpop.f32.mrb[0].mxu0
        %v2721 = vadd.f32 %v2528, %v2720
        %2722 = vmatprep.mubr.bf16.mxu0 %v1300
        %2723 = vmatmul.mubr.bf16.gmra.mrb[0].mxu0 %v1299
        %v2724 = vpop.f32.mrb[0].mxu0
        %v2725 = vadd.f32 %v2532, %v2724
        %v2726 = vpop.f32.mrb[0].mxu0
        %v2727 = vadd.f32 %v2534, %v2726
        %v2728 = vpop.f32.mrb[0].mxu0
        %v2729 = vadd.f32 %v2536, %v2728
        %v2730 = vpop.f32.mrb[0].mxu0
        %v2731 = vadd.f32 %v2538, %v2730
        %2732 = vmatprep.mubr.bf16.mxu0 %v1309
        %2733 = vmatmul.mubr.bf16.gmra.mrb[0].mxu0 %v1308
        %v2734 = vpop.f32.mrb[0].mxu0
        %v2735 = vadd.f32 %v2542, %v2734
        %v2736 = vpop.f32.mrb[0].mxu0
        %v2737 = vadd.f32 %v2544, %v2736
        %v2738 = vpop.f32.mrb[0].mxu0
        %v2739 = vadd.f32 %v2546, %v2738
        %v2740 = vpop.f32.mrb[0].mxu0
        %v2741 = vadd.f32 %v2548, %v2740
        %2742 = vmatprep.mubr.bf16.mxu0 %v1318
        %2743 = vmatmul.mubr.bf16.gmra.mrb[0].mxu0 %v1317
        %v2744 = vpop.f32.mrb[0].mxu0
        %v2745 = vadd.f32 %v2552, %v2744
        %v2746 = vpop.f32.mrb[0].mxu0
        %v2747 = vadd.f32 %v2554, %v2746
        %v2748 = vpop.f32.mrb[0].mxu0
        %v2749 = vadd.f32 %v2556, %v2748
        %v2750 = vpop.f32.mrb[0].mxu0
        %v2751 = vadd.f32 %v2558, %v2750
        %2752 = vmatprep.mubr.bf16.mxu0 %v1327
        %2753 = vmatmul.mubr.bf16.gmra.mrb[0].mxu0 %v1326
        %v2754 = vpop.f32.mrb[0].mxu0
        %v2755 = vadd.f32 %v2562, %v2754
        %v2756 = vpop.f32.mrb[0].mxu0
        %v2757 = vadd.f32 %v2564, %v2756
        %v2758 = vpop.f32.mrb[0].mxu0
        %v2759 = vadd.f32 %v2566, %v2758
        %v2760 = vpop.f32.mrb[0].mxu0
        %v2761 = vadd.f32 %v2568, %v2760
        %2762 = vmatprep.mubr.bf16.mxu0 %v1336
        %2763 = vmatmul.mubr.bf16.gmra.mrb[0].mxu0 %v1335
        %v2764 = vpop.f32.mrb[0].mxu0
        %v2765 = vadd.f32 %v2572, %v2764
        %v2766 = vpop.f32.mrb[0].mxu0
        %v2767 = vadd.f32 %v2574, %v2766
        %v2768 = vpop.f32.mrb[0].mxu0
        %v2769 = vadd.f32 %v2576, %v2768
        %v2770 = vpop.f32.mrb[0].mxu0
        %v2771 = vadd.f32 %v2578, %v2770
        %2772 = vmatprep.mubr.bf16.mxu0 %v1345
        %2773 = vmatmul.mubr.bf16.gmra.mrb[0].mxu0 %v1344
        %v2774 = vpop.f32.mrb[0].mxu0
        %v2775 = vadd.f32 %v2582, %v2774
        %v2776 = vpop.f32.mrb[0].mxu0
        %v2777 = vadd.f32 %v2584, %v2776
        %v2778 = vpop.f32.mrb[0].mxu0
        %v2779 = vadd.f32 %v2586, %v2778
        %v2780 = vpop.f32.mrb[0].mxu0
        %v2781 = vadd.f32 %v2588, %v2780
        %2782 = vmatprep.mubr.bf16.mxu0 %v1354
        %2783 = vmatmul.mubr.bf16.gmra.mrb[0].mxu0 %v1353
        %v2784 = vpop.f32.mrb[0].mxu0
        %v2785 = vadd.f32 %v2592, %v2784
        %v2786 = vpop.f32.mrb[0].mxu0
        %v2787 = vadd.f32 %v2594, %v2786
        %v2788 = vpop.f32.mrb[0].mxu0
        %v2789 = vadd.f32 %v2596, %v2788
        %v2790 = vpop.f32.mrb[0].mxu0
        %v2791 = vadd.f32 %v2598, %v2790
        %2792 = vmatprep.mubr.bf16.mxu0 %v1363
        %2793 = vmatmul.mubr.bf16.gmra.mrb[0].mxu0 %v1362
        %v2794 = vpop.f32.mrb[0].mxu0
        %v2795 = vadd.f32 %v2602, %v2794
        %v2796 = vpop.f32.mrb[0].mxu0
        %v2797 = vadd.f32 %v2604, %v2796
        %v2798 = vpop.f32.mrb[0].mxu0
        %v2799 = vadd.f32 %v2606, %v2798
        %v2800 = vpop.f32.mrb[0].mxu0
        %v2801 = vadd.f32 %v2608, %v2800
        %2802 = vmatprep.mubr.bf16.mxu0 %v1372
        %2803 = vmatmul.mubr.bf16.gmra.mrb[0].mxu0 %v1371
        %v2804 = vpop.f32.mrb[0].mxu0
        %v2805 = vadd.f32 %v2612, %v2804
        %v2806 = vpop.f32.mrb[0].mxu0
        %v2807 = vadd.f32 %v2614, %v2806
        %v2808 = vpop.f32.mrb[0].mxu0
        %v2809 = vadd.f32 %v2616, %v2808
        %v2810 = vpop.f32.mrb[0].mxu0
        %v2811 = vadd.f32 %v2618, %v2810
        %2812 = vmatprep.mubr.bf16.mxu0 %v1381
        %2813 = vmatmul.mubr.bf16.gmra.mrb[0].mxu0 %v1380
        %v2814 = vpop.f32.mrb[0].mxu0
        %v2815 = vadd.f32 %v2622, %v2814
        %v2816 = vpop.f32.mrb[0].mxu0
        %v2817 = vadd.f32 %v2624, %v2816
        %v2818 = vpop.f32.mrb[0].mxu0
        %v2819 = vadd.f32 %v2626, %v2818
        %v2820 = vpop.f32.mrb[0].mxu0
        %v2821 = vadd.f32 %v2628, %v2820
        %2822 = vmatprep.mubr.bf16.mxu0 %v1390
        %2823 = vmatmul.mubr.bf16.gmra.mrb[0].mxu0 %v1389
        %v2824 = vpop.f32.mrb[0].mxu0
        %v2825 = vadd.f32 %v2632, %v2824
        %v2826 = vpop.f32.mrb[0].mxu0
        %v2827 = vadd.f32 %v2634, %v2826
        %v2828 = vpop.f32.mrb[0].mxu0
        %v2829 = vadd.f32 %v2636, %v2828
        %v2830 = vpop.f32.mrb[0].mxu0
        %v2831 = vadd.f32 %v2638, %v2830
        %2832 = vmatprep.mubr.bf16.mxu0 %v1399
        %2833 = vmatmul.mubr.bf16.gmra.mrb[0].mxu0 %v1398
        %v2834 = vpop.f32.mrb[0].mxu0
        %v2835 = vadd.f32 %v2642, %v2834
        %v2836 = vpop.f32.mrb[0].mxu0
        %v2837 = vadd.f32 %v2644, %v2836
        %v2838 = vpop.f32.mrb[0].mxu0
        %v2839 = vadd.f32 %v2646, %v2838
        %v2840 = vpop.f32.mrb[0].mxu0
        %v2841 = vadd.f32 %v2648, %v2840
        %2842 = vmatprep.mubr.bf16.mxu0 %v1408
        %2843 = vmatmul.mubr.bf16.gmra.mrb[0].mxu0 %v1407
        %v2844 = vpop.f32.mrb[0].mxu0
        %v2845 = vadd.f32 %v2652, %v2844
        %v2846 = vpop.f32.mrb[0].mxu0
        %v2847 = vadd.f32 %v2654, %v2846
        %v2848 = vpop.f32.mrb[0].mxu0
        %v2849 = vadd.f32 %v2656, %v2848
        %v2850 = vpop.f32.mrb[0].mxu0
        %v2851 = vadd.f32 %v2658, %v2850
        %2852 = vmatprep.mubr.bf16.mxu0 %v1417
        %2853 = vmatmul.mubr.bf16.gmra.mrb[0].mxu0 %v1416
        %v2854 = vpop.f32.mrb[0].mxu0
        %v2855 = vadd.f32 %v2662, %v2854
        %v2856 = vpop.f32.mrb[0].mxu0
        %v2857 = vadd.f32 %v2664, %v2856
        %v2858 = vpop.f32.mrb[0].mxu0
        %v2859 = vadd.f32 %v2666, %v2858
        %v2860 = vpop.f32.mrb[0].mxu0
        %v2861 = vadd.f32 %v2668, %v2860
        %2862 = vmatprep.mubr.bf16.mxu0 %v1426
        %2863 = vmatmul.mubr.bf16.gmra.mrb[0].mxu0 %v1425
        %v2864 = vpop.f32.mrb[0].mxu0
        %v2865 = vadd.f32 %v2672, %v2864
        %v2866 = vpop.f32.mrb[0].mxu0
        %v2867 = vadd.f32 %v2674, %v2866
        %v2868 = vpop.f32.mrb[0].mxu0
        %v2869 = vadd.f32 %v2676, %v2868
        %v2870 = vpop.f32.mrb[0].mxu0
        %v2871 = vadd.f32 %v2678, %v2870
        %2872 = vdwg.mxu0
        %2873 = vmatprep.subr.bf16.mxu0 %v2103
        %2874 = vmatpush1.bf16.msra.mxu0 %v2102
        %2875 = vmatprep.subr.bf16.mxu0 %v2105
        %2876 = vmatpush1.bf16.msra.mxu0 %v2104
        %2877 = vmatprep.subr.bf16.mxu0 %v2107
        %2878 = vmatpush1.bf16.msra.mxu0 %v2106
        %2879 = vmatprep.subr.bf16.mxu0 %v2109
        %2880 = vmatpush1.bf16.msra.mxu0 %v2108
        %2881 = vmatprep.subr.bf16.mxu0 %v2111
        %2882 = vmatpush1.bf16.msra.mxu0 %v2110
        %2883 = vmatprep.subr.bf16.mxu0 %v2113
        %2884 = vmatpush1.bf16.msra.mxu0 %v2112
        %2885 = vmatprep.subr.bf16.mxu0 %v2115
        %2886 = vmatpush1.bf16.msra.mxu0 %v2114
        %2887 = vmatprep.subr.bf16.mxu0 %v2117
        %2888 = vmatpush1.bf16.msra.mxu0 %v2116
        %2889 = vmatprep.subr.bf16.mxu0 %v2119
        %2890 = vmatpush1.bf16.msra.mxu0 %v2118
        %2891 = vmatprep.subr.bf16.mxu0 %v2121
        %2892 = vmatpush1.bf16.msra.mxu0 %v2120
        %2893 = vmatprep.subr.bf16.mxu0 %v2123
        %2894 = vmatpush1.bf16.msra.mxu0 %v2122
        %2895 = vmatprep.subr.bf16.mxu0 %v2125
        %2896 = vmatpush1.bf16.msra.mxu0 %v2124
        %2897 = vmatprep.subr.bf16.mxu0 %v2127
        %2898 = vmatpush1.bf16.msra.mxu0 %v2126
        %2899 = vmatprep.subr.bf16.mxu0 %v2129
        %2900 = vmatpush1.bf16.msra.mxu0 %v2128
        %2901 = vmatprep.subr.bf16.mxu0 %v2131
        %2902 = vmatpush1.bf16.msra.mxu0 %v2130
        %2903 = vmatprep.subr.bf16.mxu0 %v2133
        %2904 = vmatpush1.bf16.msra.mxu0 %v2132
        %2905 = vmatprep.mubr.bf16.mxu0 %v1293
        %2906 = vmatmul.mubr.bf16.gmra.mrb[0].mxu0 %v1292
        %v2907 = vpop.f32.mrb[0].mxu0
        %v2908 = vadd.f32 %v2715, %v2907
        %v2909 = vpop.f32.mrb[0].mxu0
        %v2910 = vadd.f32 %v2717, %v2909
        %v2911 = vpop.f32.mrb[0].mxu0
        %v2912 = vadd.f32 %v2719, %v2911
        %v2913 = vpop.f32.mrb[0].mxu0
        %v2914 = vadd.f32 %v2721, %v2913
        %2915 = vmatprep.mubr.bf16.mxu0 %v1302
        %2916 = vmatmul.mubr.bf16.gmra.mrb[0].mxu0 %v1301
        %v2917 = vpop.f32.mrb[0].mxu0
        %v2918 = vadd.f32 %v2725, %v2917
        %v2919 = vpop.f32.mrb[0].mxu0
        %v2920 = vadd.f32 %v2727, %v2919
        %v2921 = vpop.f32.mrb[0].mxu0
        %v2922 = vadd.f32 %v2729, %v2921
        %v2923 = vpop.f32.mrb[0].mxu0
        %v2924 = vadd.f32 %v2731, %v2923
        %2925 = vmatprep.mubr.bf16.mxu0 %v1311
        %2926 = vmatmul.mubr.bf16.gmra.mrb[0].mxu0 %v1310
        %v2927 = vpop.f32.mrb[0].mxu0
        %v2928 = vadd.f32 %v2735, %v2927
        %v2929 = vpop.f32.mrb[0].mxu0
        %v2930 = vadd.f32 %v2737, %v2929
        %v2931 = vpop.f32.mrb[0].mxu0
        %v2932 = vadd.f32 %v2739, %v2931
        %v2933 = vpop.f32.mrb[0].mxu0
        %v2934 = vadd.f32 %v2741, %v2933
        %2935 = vmatprep.mubr.bf16.mxu0 %v1320
        %2936 = vmatmul.mubr.bf16.gmra.mrb[0].mxu0 %v1319
        %v2937 = vpop.f32.mrb[0].mxu0
        %v2938 = vadd.f32 %v2745, %v2937
        %v2939 = vpop.f32.mrb[0].mxu0
        %v2940 = vadd.f32 %v2747, %v2939
        %v2941 = vpop.f32.mrb[0].mxu0
        %v2942 = vadd.f32 %v2749, %v2941
        %v2943 = vpop.f32.mrb[0].mxu0
        %v2944 = vadd.f32 %v2751, %v2943
        %2945 = vmatprep.mubr.bf16.mxu0 %v1329
        %2946 = vmatmul.mubr.bf16.gmra.mrb[0].mxu0 %v1328
        %v2947 = vpop.f32.mrb[0].mxu0
        %v2948 = vadd.f32 %v2755, %v2947
        %v2949 = vpop.f32.mrb[0].mxu0
        %v2950 = vadd.f32 %v2757, %v2949
        %v2951 = vpop.f32.mrb[0].mxu0
        %v2952 = vadd.f32 %v2759, %v2951
        %v2953 = vpop.f32.mrb[0].mxu0
        %v2954 = vadd.f32 %v2761, %v2953
        %2955 = vmatprep.mubr.bf16.mxu0 %v1338
        %2956 = vmatmul.mubr.bf16.gmra.mrb[0].mxu0 %v1337
        %v2957 = vpop.f32.mrb[0].mxu0
        %v2958 = vadd.f32 %v2765, %v2957
        %v2959 = vpop.f32.mrb[0].mxu0
        %v2960 = vadd.f32 %v2767, %v2959
        %v2961 = vpop.f32.mrb[0].mxu0
        %v2962 = vadd.f32 %v2769, %v2961
        %v2963 = vpop.f32.mrb[0].mxu0
        %v2964 = vadd.f32 %v2771, %v2963
        %2965 = vmatprep.mubr.bf16.mxu0 %v1347
        %2966 = vmatmul.mubr.bf16.gmra.mrb[0].mxu0 %v1346
        %v2967 = vpop.f32.mrb[0].mxu0
        %v2968 = vadd.f32 %v2775, %v2967
        %v2969 = vpop.f32.mrb[0].mxu0
        %v2970 = vadd.f32 %v2777, %v2969
        %v2971 = vpop.f32.mrb[0].mxu0
        %v2972 = vadd.f32 %v2779, %v2971
        %v2973 = vpop.f32.mrb[0].mxu0
        %v2974 = vadd.f32 %v2781, %v2973
        %2975 = vmatprep.mubr.bf16.mxu0 %v1356
        %2976 = vmatmul.mubr.bf16.gmra.mrb[0].mxu0 %v1355
        %v2977 = vpop.f32.mrb[0].mxu0
        %v2978 = vadd.f32 %v2785, %v2977
        %v2979 = vpop.f32.mrb[0].mxu0
        %v2980 = vadd.f32 %v2787, %v2979
        %v2981 = vpop.f32.mrb[0].mxu0
        %v2982 = vadd.f32 %v2789, %v2981
        %v2983 = vpop.f32.mrb[0].mxu0
        %v2984 = vadd.f32 %v2791, %v2983
        %2985 = vmatprep.mubr.bf16.mxu0 %v1365
        %2986 = vmatmul.mubr.bf16.gmra.mrb[0].mxu0 %v1364
        %v2987 = vpop.f32.mrb[0].mxu0
        %v2988 = vadd.f32 %v2795, %v2987
        %v2989 = vpop.f32.mrb[0].mxu0
        %v2990 = vadd.f32 %v2797, %v2989
        %v2991 = vpop.f32.mrb[0].mxu0
        %v2992 = vadd.f32 %v2799, %v2991
        %v2993 = vpop.f32.mrb[0].mxu0
        %v2994 = vadd.f32 %v2801, %v2993
        %2995 = vmatprep.mubr.bf16.mxu0 %v1374
        %2996 = vmatmul.mubr.bf16.gmra.mrb[0].mxu0 %v1373
        %v2997 = vpop.f32.mrb[0].mxu0
        %v2998 = vadd.f32 %v2805, %v2997
        %v2999 = vpop.f32.mrb[0].mxu0
        %v3000 = vadd.f32 %v2807, %v2999
        %v3001 = vpop.f32.mrb[0].mxu0
        %v3002 = vadd.f32 %v2809, %v3001
        %v3003 = vpop.f32.mrb[0].mxu0
        %v3004 = vadd.f32 %v2811, %v3003
        %3005 = vmatprep.mubr.bf16.mxu0 %v1383
        %3006 = vmatmul.mubr.bf16.gmra.mrb[0].mxu0 %v1382
        %v3007 = vpop.f32.mrb[0].mxu0
        %v3008 = vadd.f32 %v2815, %v3007
        %v3009 = vpop.f32.mrb[0].mxu0
        %v3010 = vadd.f32 %v2817, %v3009
        %v3011 = vpop.f32.mrb[0].mxu0
        %v3012 = vadd.f32 %v2819, %v3011
        %v3013 = vpop.f32.mrb[0].mxu0
        %v3014 = vadd.f32 %v2821, %v3013
        %3015 = vmatprep.mubr.bf16.mxu0 %v1392
        %3016 = vmatmul.mubr.bf16.gmra.mrb[0].mxu0 %v1391
        %v3017 = vpop.f32.mrb[0].mxu0
        %v3018 = vadd.f32 %v2825, %v3017
        %v3019 = vpop.f32.mrb[0].mxu0
        %v3020 = vadd.f32 %v2827, %v3019
        %v3021 = vpop.f32.mrb[0].mxu0
        %v3022 = vadd.f32 %v2829, %v3021
        %v3023 = vpop.f32.mrb[0].mxu0
        %v3024 = vadd.f32 %v2831, %v3023
        %3025 = vmatprep.mubr.bf16.mxu0 %v1401
        %3026 = vmatmul.mubr.bf16.gmra.mrb[0].mxu0 %v1400
        %v3027 = vpop.f32.mrb[0].mxu0
        %v3028 = vadd.f32 %v2835, %v3027
        %v3029 = vpop.f32.mrb[0].mxu0
        %v3030 = vadd.f32 %v2837, %v3029
        %v3031 = vpop.f32.mrb[0].mxu0
        %v3032 = vadd.f32 %v2839, %v3031
        %v3033 = vpop.f32.mrb[0].mxu0
        %v3034 = vadd.f32 %v2841, %v3033
        %3035 = vmatprep.mubr.bf16.mxu0 %v1410
        %3036 = vmatmul.mubr.bf16.gmra.mrb[0].mxu0 %v1409
        %v3037 = vpop.f32.mrb[0].mxu0
        %v3038 = vadd.f32 %v2845, %v3037
        %v3039 = vpop.f32.mrb[0].mxu0
        %v3040 = vadd.f32 %v2847, %v3039
        %v3041 = vpop.f32.mrb[0].mxu0
        %v3042 = vadd.f32 %v2849, %v3041
        %v3043 = vpop.f32.mrb[0].mxu0
        %v3044 = vadd.f32 %v2851, %v3043
        %3045 = vmatprep.mubr.bf16.mxu0 %v1419
        %3046 = vmatmul.mubr.bf16.gmra.mrb[0].mxu0 %v1418
        %v3047 = vpop.f32.mrb[0].mxu0
        %v3048 = vadd.f32 %v2855, %v3047
        %v3049 = vpop.f32.mrb[0].mxu0
        %v3050 = vadd.f32 %v2857, %v3049
        %v3051 = vpop.f32.mrb[0].mxu0
        %v3052 = vadd.f32 %v2859, %v3051
        %v3053 = vpop.f32.mrb[0].mxu0
        %v3054 = vadd.f32 %v2861, %v3053
        %3055 = vmatprep.mubr.bf16.mxu0 %v1428
        %3056 = vmatmul.mubr.bf16.gmra.mrb[0].mxu0 %v1427
        %v3057 = vpop.f32.mrb[0].mxu0
        %v3058 = vadd.f32 %v2865, %v3057
        %v3059 = vpop.f32.mrb[0].mxu0
        %v3060 = vadd.f32 %v2867, %v3059
        %v3061 = vpop.f32.mrb[0].mxu0
        %v3062 = vadd.f32 %v2869, %v3061
        %v3063 = vpop.f32.mrb[0].mxu0
        %v3064 = vadd.f32 %v2871, %v3063
        %3065 = vdwg.mxu0
        %3066 = vmatprep.subr.bf16.mxu0 %v2135
        %3067 = vmatpush1.bf16.msra.mxu0 %v2134
        %3068 = vmatprep.subr.bf16.mxu0 %v2137
        %3069 = vmatpush1.bf16.msra.mxu0 %v2136
        %3070 = vmatprep.subr.bf16.mxu0 %v2139
        %3071 = vmatpush1.bf16.msra.mxu0 %v2138
        %3072 = vmatprep.subr.bf16.mxu0 %v2141
        %3073 = vmatpush1.bf16.msra.mxu0 %v2140
        %3074 = vmatprep.subr.bf16.mxu0 %v2143
        %3075 = vmatpush1.bf16.msra.mxu0 %v2142
        %3076 = vmatprep.subr.bf16.mxu0 %v2145
        %3077 = vmatpush1.bf16.msra.mxu0 %v2144
        %3078 = vmatprep.subr.bf16.mxu0 %v2147
        %3079 = vmatpush1.bf16.msra.mxu0 %v2146
        %3080 = vmatprep.subr.bf16.mxu0 %v2149
        %3081 = vmatpush1.bf16.msra.mxu0 %v2148
        %3082 = vmatprep.subr.bf16.mxu0 0
        %3083 = vmatpush1.bf16.msra.mxu0 0
        %3084 = vmatprep.subr.bf16.mxu0 0
        %3085 = vmatpush1.bf16.msra.mxu0 0
        %3086 = vmatprep.subr.bf16.mxu0 0
        %3087 = vmatpush1.bf16.msra.mxu0 0
        %3088 = vmatprep.subr.bf16.mxu0 0
        %3089 = vmatpush1.bf16.msra.mxu0 0
        %3090 = vmatprep.subr.bf16.mxu0 0
        %3091 = vmatpush1.bf16.msra.mxu0 0
        %3092 = vmatprep.subr.bf16.mxu0 0
        %3093 = vmatpush1.bf16.msra.mxu0 0
        %3094 = vmatprep.subr.bf16.mxu0 0
        %3095 = vmatpush1.bf16.msra.mxu0 0
        %3096 = vmatprep.subr.bf16.mxu0 0
        %3097 = vmatpush1.bf16.msra.mxu0 0
        %3098 = vmatprep.mubr.bf16.mxu0 0
        %3099 = vmatmul.mubr.bf16.gmra.mrb[0].mxu0 %v1294
        %v3100 = vpop.f32.mrb[0].mxu0
        %v3101 = vadd.f32 %v2908, %v3100
        %v3102 = vpop.f32.mrb[0].mxu0
        %v3103 = vadd.f32 %v2910, %v3102
        %v3104 = vpop.f32.mrb[0].mxu0
        %v3105 = vadd.f32 %v2912, %v3104
        %v3106 = vpop.f32.mrb[0].mxu0
        %v3107 = vadd.f32 %v2914, %v3106
        %3108 = vmatprep.mubr.bf16.mxu0 0
        %3109 = vmatmul.mubr.bf16.gmra.mrb[0].mxu0 %v1303
        %v3110 = vpop.f32.mrb[0].mxu0
        %v3111 = vadd.f32 %v2918, %v3110
        %v3112 = vpop.f32.mrb[0].mxu0
        %v3113 = vadd.f32 %v2920, %v3112
        %v3114 = vpop.f32.mrb[0].mxu0
        %v3115 = vadd.f32 %v2922, %v3114
        %v3116 = vpop.f32.mrb[0].mxu0
        %v3117 = vadd.f32 %v2924, %v3116
        %3118 = vmatprep.mubr.bf16.mxu0 0
        %3119 = vmatmul.mubr.bf16.gmra.mrb[0].mxu0 %v1312
        %v3120 = vpop.f32.mrb[0].mxu0
        %v3121 = vadd.f32 %v2928, %v3120
        %v3122 = vpop.f32.mrb[0].mxu0
        %v3123 = vadd.f32 %v2930, %v3122
        %v3124 = vpop.f32.mrb[0].mxu0
        %v3125 = vadd.f32 %v2932, %v3124
        %v3126 = vpop.f32.mrb[0].mxu0
        %v3127 = vadd.f32 %v2934, %v3126
        %3128 = vmatprep.mubr.bf16.mxu0 0
        %3129 = vmatmul.mubr.bf16.gmra.mrb[0].mxu0 %v1321
        %v3130 = vpop.f32.mrb[0].mxu0
        %v3131 = vadd.f32 %v2938, %v3130
        %v3132 = vpop.f32.mrb[0].mxu0
        %v3133 = vadd.f32 %v2940, %v3132
        %v3134 = vpop.f32.mrb[0].mxu0
        %v3135 = vadd.f32 %v2942, %v3134
        %v3136 = vpop.f32.mrb[0].mxu0
        %v3137 = vadd.f32 %v2944, %v3136
        %3138 = vmatprep.mubr.bf16.mxu0 0
        %3139 = vmatmul.mubr.bf16.gmra.mrb[0].mxu0 %v1330
        %v3140 = vpop.f32.mrb[0].mxu0
        %v3141 = vadd.f32 %v2948, %v3140
        %v3142 = vpop.f32.mrb[0].mxu0
        %v3143 = vadd.f32 %v2950, %v3142
        %v3144 = vpop.f32.mrb[0].mxu0
        %v3145 = vadd.f32 %v2952, %v3144
        %v3146 = vpop.f32.mrb[0].mxu0
        %v3147 = vadd.f32 %v2954, %v3146
        %3148 = vmatprep.mubr.bf16.mxu0 0
        %3149 = vmatmul.mubr.bf16.gmra.mrb[0].mxu0 %v1339
        %v3150 = vpop.f32.mrb[0].mxu0
        %v3151 = vadd.f32 %v2958, %v3150
        %v3152 = vpop.f32.mrb[0].mxu0
        %v3153 = vadd.f32 %v2960, %v3152
        %v3154 = vpop.f32.mrb[0].mxu0
        %v3155 = vadd.f32 %v2962, %v3154
        %v3156 = vpop.f32.mrb[0].mxu0
        %v3157 = vadd.f32 %v2964, %v3156
        %3158 = vmatprep.mubr.bf16.mxu0 0
        %3159 = vmatmul.mubr.bf16.gmra.mrb[0].mxu0 %v1348
        %v3160 = vpop.f32.mrb[0].mxu0
        %v3161 = vadd.f32 %v2968, %v3160
        %v3162 = vpop.f32.mrb[0].mxu0
        %v3163 = vadd.f32 %v2970, %v3162
        %v3164 = vpop.f32.mrb[0].mxu0
        %v3165 = vadd.f32 %v2972, %v3164
        %v3166 = vpop.f32.mrb[0].mxu0
        %v3167 = vadd.f32 %v2974, %v3166
        %3168 = vmatprep.mubr.bf16.mxu0 0
        %3169 = vmatmul.mubr.bf16.gmra.mrb[0].mxu0 %v1357
        %v3170 = vpop.f32.mrb[0].mxu0
        %v3171 = vadd.f32 %v2978, %v3170
        %v3172 = vpop.f32.mrb[0].mxu0
        %v3173 = vadd.f32 %v2980, %v3172
        %v3174 = vpop.f32.mrb[0].mxu0
        %v3175 = vadd.f32 %v2982, %v3174
        %v3176 = vpop.f32.mrb[0].mxu0
        %v3177 = vadd.f32 %v2984, %v3176
        %3178 = vmatprep.mubr.bf16.mxu0 0
        %3179 = vmatmul.mubr.bf16.gmra.mrb[0].mxu0 %v1366
        %v3180 = vpop.f32.mrb[0].mxu0
        %v3181 = vadd.f32 %v2988, %v3180
        %v3182 = vpop.f32.mrb[0].mxu0
        %v3183 = vadd.f32 %v2990, %v3182
        %v3184 = vpop.f32.mrb[0].mxu0
        %v3185 = vadd.f32 %v2992, %v3184
        %v3186 = vpop.f32.mrb[0].mxu0
        %v3187 = vadd.f32 %v2994, %v3186
        %3188 = vmatprep.mubr.bf16.mxu0 0
        %3189 = vmatmul.mubr.bf16.gmra.mrb[0].mxu0 %v1375
        %v3190 = vpop.f32.mrb[0].mxu0
        %v3191 = vadd.f32 %v2998, %v3190
        %v3192 = vpop.f32.mrb[0].mxu0
        %v3193 = vadd.f32 %v3000, %v3192
        %v3194 = vpop.f32.mrb[0].mxu0
        %v3195 = vadd.f32 %v3002, %v3194
        %v3196 = vpop.f32.mrb[0].mxu0
        %v3197 = vadd.f32 %v3004, %v3196
        %3198 = vmatprep.mubr.bf16.mxu0 0
        %3199 = vmatmul.mubr.bf16.gmra.mrb[0].mxu0 %v1384
        %v3200 = vpop.f32.mrb[0].mxu0
        %v3201 = vadd.f32 %v3008, %v3200
        %v3202 = vpop.f32.mrb[0].mxu0
        %v3203 = vadd.f32 %v3010, %v3202
        %v3204 = vpop.f32.mrb[0].mxu0
        %v3205 = vadd.f32 %v3012, %v3204
        %v3206 = vpop.f32.mrb[0].mxu0
        %v3207 = vadd.f32 %v3014, %v3206
        %3208 = vmatprep.mubr.bf16.mxu0 0
        %3209 = vmatmul.mubr.bf16.gmra.mrb[0].mxu0 %v1393
        %v3210 = vpop.f32.mrb[0].mxu0
        %v3211 = vadd.f32 %v3018, %v3210
        %v3212 = vpop.f32.mrb[0].mxu0
        %v3213 = vadd.f32 %v3020, %v3212
        %v3214 = vpop.f32.mrb[0].mxu0
        %v3215 = vadd.f32 %v3022, %v3214
        %v3216 = vpop.f32.mrb[0].mxu0
        %v3217 = vadd.f32 %v3024, %v3216
        %3218 = vmatprep.mubr.bf16.mxu0 0
        %3219 = vmatmul.mubr.bf16.gmra.mrb[0].mxu0 %v1402
        %v3220 = vpop.f32.mrb[0].mxu0
        %v3221 = vadd.f32 %v3028, %v3220
        %v3222 = vpop.f32.mrb[0].mxu0
        %v3223 = vadd.f32 %v3030, %v3222
        %v3224 = vpop.f32.mrb[0].mxu0
        %v3225 = vadd.f32 %v3032, %v3224
        %v3226 = vpop.f32.mrb[0].mxu0
        %v3227 = vadd.f32 %v3034, %v3226
        %3228 = vmatprep.mubr.bf16.mxu0 0
        %3229 = vmatmul.mubr.bf16.gmra.mrb[0].mxu0 %v1411
        %v3230 = vpop.f32.mrb[0].mxu0
        %v3231 = vadd.f32 %v3038, %v3230
        %v3232 = vpop.f32.mrb[0].mxu0
        %v3233 = vadd.f32 %v3040, %v3232
        %v3234 = vpop.f32.mrb[0].mxu0
        %v3235 = vadd.f32 %v3042, %v3234
        %v3236 = vpop.f32.mrb[0].mxu0
        %v3237 = vadd.f32 %v3044, %v3236
        %3238 = vmatprep.mubr.bf16.mxu0 0
        %3239 = vmatmul.mubr.bf16.gmra.mrb[0].mxu0 %v1420
        %v3240 = vpop.f32.mrb[0].mxu0
        %v3241 = vadd.f32 %v3048, %v3240
        %v3242 = vpop.f32.mrb[0].mxu0
        %v3243 = vadd.f32 %v3050, %v3242
        %v3244 = vpop.f32.mrb[0].mxu0
        %v3245 = vadd.f32 %v3052, %v3244
        %v3246 = vpop.f32.mrb[0].mxu0
        %v3247 = vadd.f32 %v3054, %v3246
        %3248 = vmatprep.mubr.bf16.mxu0 0
        %3249 = vmatmul.mubr.bf16.gmra.mrb[0].mxu0 %v1429
        %v3250 = vpop.f32.mrb[0].mxu0
        %v3251 = vadd.f32 %v3058, %v3250
        %v3252 = vpop.f32.mrb[0].mxu0
        %v3253 = vadd.f32 %v3060, %v3252
        %v3254 = vpop.f32.mrb[0].mxu0
        %v3255 = vadd.f32 %v3062, %v3254
        %v3256 = vpop.f32.mrb[0].mxu0
        %v3257 = vadd.f32 %v3064, %v3256
        %3258 = vdwg.mxu0
        %v3259 = vadd.f32 %v934, %v3101
        %v3260 = vadd.f32 %v935, %v3103
        %v3261 = vadd.f32 %v936, %v3105
        %v3262 = vadd.f32 %v937, %v3107
        %v3263 = vadd.f32 %v938, %v3111
        %v3264 = vadd.f32 %v939, %v3113
        %v3265 = vadd.f32 %v940, %v3115
        %v3266 = vadd.f32 %v941, %v3117
        %v3267 = vadd.f32 %v942, %v3121
        %v3268 = vadd.f32 %v943, %v3123
        %v3269 = vadd.f32 %v944, %v3125
        %v3270 = vadd.f32 %v945, %v3127
        %v3271 = vadd.f32 %v946, %v3131
        %v3272 = vadd.f32 %v947, %v3133
        %v3273 = vadd.f32 %v948, %v3135
        %v3274 = vadd.f32 %v949, %v3137
        %v3275 = vadd.f32 %v950, %v3141
        %v3276 = vadd.f32 %v951, %v3143
        %v3277 = vadd.f32 %v952, %v3145
        %v3278 = vadd.f32 %v953, %v3147
        %v3279 = vadd.f32 %v954, %v3151
        %v3280 = vadd.f32 %v955, %v3153
        %v3281 = vadd.f32 %v956, %v3155
        %v3282 = vadd.f32 %v957, %v3157
        %v3283 = vadd.f32 %v958, %v3161
        %v3284 = vadd.f32 %v959, %v3163
        %v3285 = vadd.f32 %v960, %v3165
        %v3286 = vadd.f32 %v961, %v3167
        %v3287 = vadd.f32 %v962, %v3171
        %v3288 = vadd.f32 %v963, %v3173
        %v3289 = vadd.f32 %v964, %v3175
        %v3290 = vadd.f32 %v965, %v3177
        %v3291 = vadd.f32 %v966, %v3181
        %v3292 = vadd.f32 %v967, %v3183
        %v3293 = vadd.f32 %v968, %v3185
        %v3294 = vadd.f32 %v969, %v3187
        %v3295 = vadd.f32 %v970, %v3191
        %v3296 = vadd.f32 %v971, %v3193
        %v3297 = vadd.f32 %v972, %v3195
        %v3298 = vadd.f32 %v973, %v3197
        %v3299 = vadd.f32 %v974, %v3201
        %v3300 = vadd.f32 %v975, %v3203
        %v3301 = vadd.f32 %v976, %v3205
        %v3302 = vadd.f32 %v977, %v3207
        %v3303 = vadd.f32 %v978, %v3211
        %v3304 = vadd.f32 %v979, %v3213
        %v3305 = vadd.f32 %v980, %v3215
        %v3306 = vadd.f32 %v981, %v3217
        %v3307 = vadd.f32 %v982, %v3221
        %v3308 = vadd.f32 %v983, %v3223
        %v3309 = vadd.f32 %v984, %v3225
        %v3310 = vadd.f32 %v985, %v3227
        %v3311 = vadd.f32 %v986, %v3231
        %v3312 = vadd.f32 %v987, %v3233
        %v3313 = vadd.f32 %v988, %v3235
        %v3314 = vadd.f32 %v989, %v3237
        %v3315 = vadd.f32 %v990, %v3241
        %v3316 = vadd.f32 %v991, %v3243
        %v3317 = vadd.f32 %v992, %v3245
        %v3318 = vadd.f32 %v993, %v3247
        %v3319 = vadd.f32 %v994, %v3251
        %v3320 = vadd.f32 %v995, %v3253
        %v3321 = vadd.f32 %v996, %v3255
        %v3322 = vadd.f32 %v997, %v3257
        %3323 = vst [vmem:[#allocation2] sm:$0xff] %v3259
        %3324 = vst [vmem:[#allocation2 + $0x8] sm:$0xff] %v3260
        %3325 = vst [vmem:[#allocation2 + $0x10] sm:$0xff] %v3261
        %3326 = vst [vmem:[#allocation2 + $0x18] sm:$0xff] %v3262
        %3327 = vst [vmem:[#allocation2 + $0x20] sm:$0xff] %v3263
        %3328 = vst [vmem:[#allocation2 + $0x28] sm:$0xff] %v3264
        %3329 = vst [vmem:[#allocation2 + $0x30] sm:$0xff] %v3265
        %3330 = vst [vmem:[#allocation2 + $0x38] sm:$0xff] %v3266
        %3331 = vst [vmem:[#allocation2 + $0x40] sm:$0xff] %v3267
        %3332 = vst [vmem:[#allocation2 + $0x48] sm:$0xff] %v3268
        %3333 = vst [vmem:[#allocation2 + $0x50] sm:$0xff] %v3269
        %3334 = vst [vmem:[#allocation2 + $0x58] sm:$0xff] %v3270
        %3335 = vst [vmem:[#allocation2 + $0x60] sm:$0xff] %v3271
        %3336 = vst [vmem:[#allocation2 + $0x68] sm:$0xff] %v3272
        %3337 = vst [vmem:[#allocation2 + $0x70] sm:$0xff] %v3273
        %3338 = vst [vmem:[#allocation2 + $0x78] sm:$0xff] %v3274
        %3339 = vst [vmem:[#allocation2 + $0x80] sm:$0xff] %v3275
        %3340 = vst [vmem:[#allocation2 + $0x88] sm:$0xff] %v3276
        %3341 = vst [vmem:[#allocation2 + $0x90] sm:$0xff] %v3277
        %3342 = vst [vmem:[#allocation2 + $0x98] sm:$0xff] %v3278
        %3343 = vst [vmem:[#allocation2 + $0xa0] sm:$0xff] %v3279
        %3344 = vst [vmem:[#allocation2 + $0xa8] sm:$0xff] %v3280
        %3345 = vst [vmem:[#allocation2 + $0xb0] sm:$0xff] %v3281
        %3346 = vst [vmem:[#allocation2 + $0xb8] sm:$0xff] %v3282
        %3347 = vst [vmem:[#allocation2 + $0xc0] sm:$0xff] %v3283
        %3348 = vst [vmem:[#allocation2 + $0xc8] sm:$0xff] %v3284
        %3349 = vst [vmem:[#allocation2 + $0xd0] sm:$0xff] %v3285
        %3350 = vst [vmem:[#allocation2 + $0xd8] sm:$0xff] %v3286
        %3351 = vst [vmem:[#allocation2 + $0xe0] sm:$0xff] %v3287
        %3352 = vst [vmem:[#allocation2 + $0xe8] sm:$0xff] %v3288
        %3353 = vst [vmem:[#allocation2 + $0xf0] sm:$0xff] %v3289
        %3354 = vst [vmem:[#allocation2 + $0xf8] sm:$0xff] %v3290
        %3355 = vst [vmem:[#allocation2 + $0x100] sm:$0xff] %v3291
        %3356 = vst [vmem:[#allocation2 + $0x108] sm:$0xff] %v3292
        %3357 = vst [vmem:[#allocation2 + $0x110] sm:$0xff] %v3293
        %3358 = vst [vmem:[#allocation2 + $0x118] sm:$0xff] %v3294
        %3359 = vst [vmem:[#allocation2 + $0x120] sm:$0xff] %v3295
        %3360 = vst [vmem:[#allocation2 + $0x128] sm:$0xff] %v3296
        %3361 = vst [vmem:[#allocation2 + $0x130] sm:$0xff] %v3297
        %3362 = vst [vmem:[#allocation2 + $0x138] sm:$0xff] %v3298
        %3363 = vst [vmem:[#allocation2 + $0x140] sm:$0xff] %v3299
        %3364 = vst [vmem:[#allocation2 + $0x148] sm:$0xff] %v3300
        %3365 = vst [vmem:[#allocation2 + $0x150] sm:$0xff] %v3301
        %3366 = vst [vmem:[#allocation2 + $0x158] sm:$0xff] %v3302
        %3367 = vst [vmem:[#allocation2 + $0x160] sm:$0xff] %v3303
        %3368 = vst [vmem:[#allocation2 + $0x168] sm:$0xff] %v3304
        %3369 = vst [vmem:[#allocation2 + $0x170] sm:$0xff] %v3305
        %3370 = vst [vmem:[#allocation2 + $0x178] sm:$0xff] %v3306
        %3371 = vst [vmem:[#allocation2 + $0x180] sm:$0xff] %v3307
        %3372 = vst [vmem:[#allocation2 + $0x188] sm:$0xff] %v3308
        %3373 = vst [vmem:[#allocation2 + $0x190] sm:$0xff] %v3309
        %3374 = vst [vmem:[#allocation2 + $0x198] sm:$0xff] %v3310
        %3375 = vst [vmem:[#allocation2 + $0x1a0] sm:$0xff] %v3311
        %3376 = vst [vmem:[#allocation2 + $0x1a8] sm:$0xff] %v3312
        %3377 = vst [vmem:[#allocation2 + $0x1b0] sm:$0xff] %v3313
        %3378 = vst [vmem:[#allocation2 + $0x1b8] sm:$0xff] %v3314
        %3379 = vst [vmem:[#allocation2 + $0x1c0] sm:$0xff] %v3315
        %3380 = vst [vmem:[#allocation2 + $0x1c8] sm:$0xff] %v3316
        %3381 = vst [vmem:[#allocation2 + $0x1d0] sm:$0xff] %v3317
        %3382 = vst [vmem:[#allocation2 + $0x1d8] sm:$0xff] %v3318
        %3383 = vst [vmem:[#allocation2 + $0x1e0] sm:$0xff] %v3319
        %3384 = vst [vmem:[#allocation2 + $0x1e8] sm:$0xff] %v3320
        %3385 = vst [vmem:[#allocation2 + $0x1f0] sm:$0xff] %v3321
        %3386 = vst [vmem:[#allocation2 + $0x1f8] sm:$0xff] %v3322
        %p3387 = scmp.eq.s32.totalorder %s21, 1
        // Predicated region
        $region60: #{_stage1.4} parent=50 // pred_check
          %p3388 = pneg %p3387
        $region61: #{_stage1.4} parent=50 // pred_check_branch
          %3390 = sbr.rel (%p3388) target = $region63
        $region62: #{_stage1.4} parent=50 // pred_region
          %v3391 = vld [vmem:[#allocation2] sm:$0xff]
          %v3392 = vld [vmem:[#allocation2 + $0x8] sm:$0xff]
          %v3393 = vld [vmem:[#allocation2 + $0x10] sm:$0xff]
          %v3394 = vld [vmem:[#allocation2 + $0x18] sm:$0xff]
          %v3395 = vld [vmem:[#allocation2 + $0x20] sm:$0xff]
          %v3396 = vld [vmem:[#allocation2 + $0x28] sm:$0xff]
          %v3397 = vld [vmem:[#allocation2 + $0x30] sm:$0xff]
          %v3398 = vld [vmem:[#allocation2 + $0x38] sm:$0xff]
          %v3399 = vld [vmem:[#allocation2 + $0x40] sm:$0xff]
          %v3400 = vld [vmem:[#allocation2 + $0x48] sm:$0xff]
          %v3401 = vld [vmem:[#allocation2 + $0x50] sm:$0xff]
          %v3402 = vld [vmem:[#allocation2 + $0x58] sm:$0xff]
          %v3403 = vld [vmem:[#allocation2 + $0x60] sm:$0xff]
          %v3404 = vld [vmem:[#allocation2 + $0x68] sm:$0xff]
          %v3405 = vld [vmem:[#allocation2 + $0x70] sm:$0xff]
          %v3406 = vld [vmem:[#allocation2 + $0x78] sm:$0xff]
          %v3407 = vld [vmem:[#allocation2 + $0x80] sm:$0xff]
          %v3408 = vld [vmem:[#allocation2 + $0x88] sm:$0xff]
          %v3409 = vld [vmem:[#allocation2 + $0x90] sm:$0xff]
          %v3410 = vld [vmem:[#allocation2 + $0x98] sm:$0xff]
          %v3411 = vld [vmem:[#allocation2 + $0xa0] sm:$0xff]
          %v3412 = vld [vmem:[#allocation2 + $0xa8] sm:$0xff]
          %v3413 = vld [vmem:[#allocation2 + $0xb0] sm:$0xff]
          %v3414 = vld [vmem:[#allocation2 + $0xb8] sm:$0xff]
          %v3415 = vld [vmem:[#allocation2 + $0xc0] sm:$0xff]
          %v3416 = vld [vmem:[#allocation2 + $0xc8] sm:$0xff]
          %v3417 = vld [vmem:[#allocation2 + $0xd0] sm:$0xff]
          %v3418 = vld [vmem:[#allocation2 + $0xd8] sm:$0xff]
          %v3419 = vld [vmem:[#allocation2 + $0xe0] sm:$0xff]
          %v3420 = vld [vmem:[#allocation2 + $0xe8] sm:$0xff]
          %v3421 = vld [vmem:[#allocation2 + $0xf0] sm:$0xff]
          %v3422 = vld [vmem:[#allocation2 + $0xf8] sm:$0xff]
          %v3423 = vld [vmem:[#allocation2 + $0x100] sm:$0xff]
          %v3424 = vld [vmem:[#allocation2 + $0x108] sm:$0xff]
          %v3425 = vld [vmem:[#allocation2 + $0x110] sm:$0xff]
          %v3426 = vld [vmem:[#allocation2 + $0x118] sm:$0xff]
          %v3427 = vld [vmem:[#allocation2 + $0x120] sm:$0xff]
          %v3428 = vld [vmem:[#allocation2 + $0x128] sm:$0xff]
          %v3429 = vld [vmem:[#allocation2 + $0x130] sm:$0xff]
          %v3430 = vld [vmem:[#allocation2 + $0x138] sm:$0xff]
          %v3431 = vld [vmem:[#allocation2 + $0x140] sm:$0xff]
          %v3432 = vld [vmem:[#allocation2 + $0x148] sm:$0xff]
          %v3433 = vld [vmem:[#allocation2 + $0x150] sm:$0xff]
          %v3434 = vld [vmem:[#allocation2 + $0x158] sm:$0xff]
          %v3435 = vld [vmem:[#allocation2 + $0x160] sm:$0xff]
          %v3436 = vld [vmem:[#allocation2 + $0x168] sm:$0xff]
          %v3437 = vld [vmem:[#allocation2 + $0x170] sm:$0xff]
          %v3438 = vld [vmem:[#allocation2 + $0x178] sm:$0xff]
          %v3439 = vld [vmem:[#allocation2 + $0x180] sm:$0xff]
          %v3440 = vld [vmem:[#allocation2 + $0x188] sm:$0xff]
          %v3441 = vld [vmem:[#allocation2 + $0x190] sm:$0xff]
          %v3442 = vld [vmem:[#allocation2 + $0x198] sm:$0xff]
          %v3443 = vld [vmem:[#allocation2 + $0x1a0] sm:$0xff]
          %v3444 = vld [vmem:[#allocation2 + $0x1a8] sm:$0xff]
          %v3445 = vld [vmem:[#allocation2 + $0x1b0] sm:$0xff]
          %v3446 = vld [vmem:[#allocation2 + $0x1b8] sm:$0xff]
          %v3447 = vld [vmem:[#allocation2 + $0x1c0] sm:$0xff]
          %v3448 = vld [vmem:[#allocation2 + $0x1c8] sm:$0xff]
          %v3449 = vld [vmem:[#allocation2 + $0x1d0] sm:$0xff]
          %v3450 = vld [vmem:[#allocation2 + $0x1d8] sm:$0xff]
          %v3451 = vld [vmem:[#allocation2 + $0x1e0] sm:$0xff]
          %v3452 = vld [vmem:[#allocation2 + $0x1e8] sm:$0xff]
          %v3453 = vld [vmem:[#allocation2 + $0x1f0] sm:$0xff]
          %v3454 = vld [vmem:[#allocation2 + $0x1f8] sm:$0xff]
          %v3455 = vld [vmem:[%s851] sm:$0x3]
          %v3457 = vlaneseq
          %v3458 = vshrl.u32 %v3457, 7
          %v3459 = vsub.s32 0, %v3458
          %v3460 = vrot.slane %v3455, %v3459
          %v3461 = vlaneseq
          %v3462 = vshrl.u32 %v3461, 7
          %v3463 = vsub.s32 1, %v3462
          %v3464 = vrot.slane %v3455, %v3463
          %v3467 = vadd.f32 %v3391, %v3460
          %v3468 = vadd.f32 %v3392, %v3464
          %v3469 = vadd.f32 %v3393, %v3460
          %v3470 = vadd.f32 %v3394, %v3464
          %v3471 = vadd.f32 %v3395, %v3460
          %v3472 = vadd.f32 %v3396, %v3464
          %v3473 = vadd.f32 %v3397, %v3460
          %v3474 = vadd.f32 %v3398, %v3464
          %v3475 = vadd.f32 %v3399, %v3460
          %v3476 = vadd.f32 %v3400, %v3464
          %v3477 = vadd.f32 %v3401, %v3460
          %v3478 = vadd.f32 %v3402, %v3464
          %v3479 = vadd.f32 %v3403, %v3460
          %v3480 = vadd.f32 %v3404, %v3464
          %v3481 = vadd.f32 %v3405, %v3460
          %v3482 = vadd.f32 %v3406, %v3464
          %v3483 = vadd.f32 %v3407, %v3460
          %v3484 = vadd.f32 %v3408, %v3464
          %v3485 = vadd.f32 %v3409, %v3460
          %v3486 = vadd.f32 %v3410, %v3464
          %v3487 = vadd.f32 %v3411, %v3460
          %v3488 = vadd.f32 %v3412, %v3464
          %v3489 = vadd.f32 %v3413, %v3460
          %v3490 = vadd.f32 %v3414, %v3464
          %v3491 = vadd.f32 %v3415, %v3460
          %v3492 = vadd.f32 %v3416, %v3464
          %v3493 = vadd.f32 %v3417, %v3460
          %v3494 = vadd.f32 %v3418, %v3464
          %v3495 = vadd.f32 %v3419, %v3460
          %v3496 = vadd.f32 %v3420, %v3464
          %v3497 = vadd.f32 %v3421, %v3460
          %v3498 = vadd.f32 %v3422, %v3464
          %v3499 = vadd.f32 %v3423, %v3460
          %v3500 = vadd.f32 %v3424, %v3464
          %v3501 = vadd.f32 %v3425, %v3460
          %v3502 = vadd.f32 %v3426, %v3464
          %v3503 = vadd.f32 %v3427, %v3460
          %v3504 = vadd.f32 %v3428, %v3464
          %v3505 = vadd.f32 %v3429, %v3460
          %v3506 = vadd.f32 %v3430, %v3464
          %v3507 = vadd.f32 %v3431, %v3460
          %v3508 = vadd.f32 %v3432, %v3464
          %v3509 = vadd.f32 %v3433, %v3460
          %v3510 = vadd.f32 %v3434, %v3464
          %v3511 = vadd.f32 %v3435, %v3460
          %v3512 = vadd.f32 %v3436, %v3464
          %v3513 = vadd.f32 %v3437, %v3460
          %v3514 = vadd.f32 %v3438, %v3464
          %v3515 = vadd.f32 %v3439, %v3460
          %v3516 = vadd.f32 %v3440, %v3464
          %v3517 = vadd.f32 %v3441, %v3460
          %v3518 = vadd.f32 %v3442, %v3464
          %v3519 = vadd.f32 %v3443, %v3460
          %v3520 = vadd.f32 %v3444, %v3464
          %v3521 = vadd.f32 %v3445, %v3460
          %v3522 = vadd.f32 %v3446, %v3464
          %v3523 = vadd.f32 %v3447, %v3460
          %v3524 = vadd.f32 %v3448, %v3464
          %v3525 = vadd.f32 %v3449, %v3460
          %v3526 = vadd.f32 %v3450, %v3464
          %v3527 = vadd.f32 %v3451, %v3460
          %v3528 = vadd.f32 %v3452, %v3464
          %v3529 = vadd.f32 %v3453, %v3460
          %v3530 = vadd.f32 %v3454, %v3464
          %v3531 = vmax.f32 %v3467, 0.0
          %v3532 = vmax.f32 %v3468, 0.0
          %v3533 = vmax.f32 %v3469, 0.0
          %v3534 = vmax.f32 %v3470, 0.0
          %v3535 = vmax.f32 %v3471, 0.0
          %v3536 = vmax.f32 %v3472, 0.0
          %v3537 = vmax.f32 %v3473, 0.0
          %v3538 = vmax.f32 %v3474, 0.0
          %v3539 = vmax.f32 %v3475, 0.0
          %v3540 = vmax.f32 %v3476, 0.0
          %v3541 = vmax.f32 %v3477, 0.0
          %v3542 = vmax.f32 %v3478, 0.0
          %v3543 = vmax.f32 %v3479, 0.0
          %v3544 = vmax.f32 %v3480, 0.0
          %v3545 = vmax.f32 %v3481, 0.0
          %v3546 = vmax.f32 %v3482, 0.0
          %v3547 = vmax.f32 %v3483, 0.0
          %v3548 = vmax.f32 %v3484, 0.0
          %v3549 = vmax.f32 %v3485, 0.0
          %v3550 = vmax.f32 %v3486, 0.0
          %v3551 = vmax.f32 %v3487, 0.0
          %v3552 = vmax.f32 %v3488, 0.0
          %v3553 = vmax.f32 %v3489, 0.0
          %v3554 = vmax.f32 %v3490, 0.0
          %v3555 = vmax.f32 %v3491, 0.0
          %v3556 = vmax.f32 %v3492, 0.0
          %v3557 = vmax.f32 %v3493, 0.0
          %v3558 = vmax.f32 %v3494, 0.0
          %v3559 = vmax.f32 %v3495, 0.0
          %v3560 = vmax.f32 %v3496, 0.0
          %v3561 = vmax.f32 %v3497, 0.0
          %v3562 = vmax.f32 %v3498, 0.0
          %v3563 = vmax.f32 %v3499, 0.0
          %v3564 = vmax.f32 %v3500, 0.0
          %v3565 = vmax.f32 %v3501, 0.0
          %v3566 = vmax.f32 %v3502, 0.0
          %v3567 = vmax.f32 %v3503, 0.0
          %v3568 = vmax.f32 %v3504, 0.0
          %v3569 = vmax.f32 %v3505, 0.0
          %v3570 = vmax.f32 %v3506, 0.0
          %v3571 = vmax.f32 %v3507, 0.0
          %v3572 = vmax.f32 %v3508, 0.0
          %v3573 = vmax.f32 %v3509, 0.0
          %v3574 = vmax.f32 %v3510, 0.0
          %v3575 = vmax.f32 %v3511, 0.0
          %v3576 = vmax.f32 %v3512, 0.0
          %v3577 = vmax.f32 %v3513, 0.0
          %v3578 = vmax.f32 %v3514, 0.0
          %v3579 = vmax.f32 %v3515, 0.0
          %v3580 = vmax.f32 %v3516, 0.0
          %v3581 = vmax.f32 %v3517, 0.0
          %v3582 = vmax.f32 %v3518, 0.0
          %v3583 = vmax.f32 %v3519, 0.0
          %v3584 = vmax.f32 %v3520, 0.0
          %v3585 = vmax.f32 %v3521, 0.0
          %v3586 = vmax.f32 %v3522, 0.0
          %v3587 = vmax.f32 %v3523, 0.0
          %v3588 = vmax.f32 %v3524, 0.0
          %v3589 = vmax.f32 %v3525, 0.0
          %v3590 = vmax.f32 %v3526, 0.0
          %v3591 = vmax.f32 %v3527, 0.0
          %v3592 = vmax.f32 %v3528, 0.0
          %v3593 = vmax.f32 %v3529, 0.0
          %v3594 = vmax.f32 %v3530, 0.0
          %3595 = vst [vmem:[%s862] sm:$0xff] %v3531
          %3596 = vst [vmem:[%s862 + $0x8] sm:$0xff] %v3532
          %3597 = vst [vmem:[%s862 + $0x10] sm:$0xff] %v3533
          %3598 = vst [vmem:[%s862 + $0x18] sm:$0xff] %v3534
          %3599 = vst [vmem:[%s862 + $0x20] sm:$0xff] %v3535
          %3600 = vst [vmem:[%s862 + $0x28] sm:$0xff] %v3536
          %3601 = vst [vmem:[%s862 + $0x30] sm:$0xff] %v3537
          %3602 = vst [vmem:[%s862 + $0x38] sm:$0xff] %v3538
          %3603 = vst [vmem:[%s862 + $0x40] sm:$0xff] %v3539
          %3604 = vst [vmem:[%s862 + $0x48] sm:$0xff] %v3540
          %3605 = vst [vmem:[%s862 + $0x50] sm:$0xff] %v3541
          %3606 = vst [vmem:[%s862 + $0x58] sm:$0xff] %v3542
          %3607 = vst [vmem:[%s862 + $0x60] sm:$0xff] %v3543
          %3608 = vst [vmem:[%s862 + $0x68] sm:$0xff] %v3544
          %3609 = vst [vmem:[%s862 + $0x70] sm:$0xff] %v3545
          %3610 = vst [vmem:[%s862 + $0x78] sm:$0xff] %v3546
          %3611 = vst [vmem:[%s862 + $0x80] sm:$0xff] %v3547
          %3612 = vst [vmem:[%s862 + $0x88] sm:$0xff] %v3548
          %3613 = vst [vmem:[%s862 + $0x90] sm:$0xff] %v3549
          %3614 = vst [vmem:[%s862 + $0x98] sm:$0xff] %v3550
          %3615 = vst [vmem:[%s862 + $0xa0] sm:$0xff] %v3551
          %3616 = vst [vmem:[%s862 + $0xa8] sm:$0xff] %v3552
          %3617 = vst [vmem:[%s862 + $0xb0] sm:$0xff] %v3553
          %3618 = vst [vmem:[%s862 + $0xb8] sm:$0xff] %v3554
          %3619 = vst [vmem:[%s862 + $0xc0] sm:$0xff] %v3555
          %3620 = vst [vmem:[%s862 + $0xc8] sm:$0xff] %v3556
          %3621 = vst [vmem:[%s862 + $0xd0] sm:$0xff] %v3557
          %3622 = vst [vmem:[%s862 + $0xd8] sm:$0xff] %v3558
          %3623 = vst [vmem:[%s862 + $0xe0] sm:$0xff] %v3559
          %3624 = vst [vmem:[%s862 + $0xe8] sm:$0xff] %v3560
          %3625 = vst [vmem:[%s862 + $0xf0] sm:$0xff] %v3561
          %3626 = vst [vmem:[%s862 + $0xf8] sm:$0xff] %v3562
          %3627 = vst [vmem:[%s862 + $0x100] sm:$0xff] %v3563
          %3628 = vst [vmem:[%s862 + $0x108] sm:$0xff] %v3564
          %3629 = vst [vmem:[%s862 + $0x110] sm:$0xff] %v3565
          %3630 = vst [vmem:[%s862 + $0x118] sm:$0xff] %v3566
          %3631 = vst [vmem:[%s862 + $0x120] sm:$0xff] %v3567
          %3632 = vst [vmem:[%s862 + $0x128] sm:$0xff] %v3568
          %3633 = vst [vmem:[%s862 + $0x130] sm:$0xff] %v3569
          %3634 = vst [vmem:[%s862 + $0x138] sm:$0xff] %v3570
          %3635 = vst [vmem:[%s862 + $0x140] sm:$0xff] %v3571
          %3636 = vst [vmem:[%s862 + $0x148] sm:$0xff] %v3572
          %3637 = vst [vmem:[%s862 + $0x150] sm:$0xff] %v3573
          %3638 = vst [vmem:[%s862 + $0x158] sm:$0xff] %v3574
          %3639 = vst [vmem:[%s862 + $0x160] sm:$0xff] %v3575
          %3640 = vst [vmem:[%s862 + $0x168] sm:$0xff] %v3576
          %3641 = vst [vmem:[%s862 + $0x170] sm:$0xff] %v3577
          %3642 = vst [vmem:[%s862 + $0x178] sm:$0xff] %v3578
          %3643 = vst [vmem:[%s862 + $0x180] sm:$0xff] %v3579
          %3644 = vst [vmem:[%s862 + $0x188] sm:$0xff] %v3580
          %3645 = vst [vmem:[%s862 + $0x190] sm:$0xff] %v3581
          %3646 = vst [vmem:[%s862 + $0x198] sm:$0xff] %v3582
          %3647 = vst [vmem:[%s862 + $0x1a0] sm:$0xff] %v3583
          %3648 = vst [vmem:[%s862 + $0x1a8] sm:$0xff] %v3584
          %3649 = vst [vmem:[%s862 + $0x1b0] sm:$0xff] %v3585
          %3650 = vst [vmem:[%s862 + $0x1b8] sm:$0xff] %v3586
          %3651 = vst [vmem:[%s862 + $0x1c0] sm:$0xff] %v3587
          %3652 = vst [vmem:[%s862 + $0x1c8] sm:$0xff] %v3588
          %3653 = vst [vmem:[%s862 + $0x1d0] sm:$0xff] %v3589
          %3654 = vst [vmem:[%s862 + $0x1d8] sm:$0xff] %v3590
          %3655 = vst [vmem:[%s862 + $0x1e0] sm:$0xff] %v3591
          %3656 = vst [vmem:[%s862 + $0x1e8] sm:$0xff] %v3592
          %3657 = vst [vmem:[%s862 + $0x1f0] sm:$0xff] %v3593
          %3658 = vst [vmem:[%s862 + $0x1f8] sm:$0xff] %v3594
        $region63: #{_stage1.4} parent=50 // pred_fallthru
          _
        %s3659 = smul.u32 32, %s19
        %s3660 = smul.u32 2, %s20
        %p3661 = scmp.lt.s32.totalorder %s3659, 95
        %s3662 = scalar_select %p3661, %s3659, 95
        %p3663 = scmp.lt.s32.totalorder %s3660, 1
        %s3664 = scalar_select %p3663, %s3660, 1
        %s3665 = smul.addr %s3662, 2
        %s3666 = sadd.s32 %s3664, %s3665
        %s3667 = smul.addr %s3666, 8
        %s3668 = scalar_lea.vmem %s3, %s3667
        // Predicated region
        $region64: #{_stage1.4} parent=50 // pred_check
          %p3669 = pneg %p135
        $region65: #{_stage1.4} parent=50 // pred_check_branch
          %3671 = sbr.rel (%p3669) target = $region67
        $region66: #{_stage1.4} parent=50 // pred_region
          %s3672 = smul.u32 32, %s19
          %s3673 = smul.u32 2, %s20
        $region67: #{_stage1.4} parent=50 // pred_fallthru
          _
      $region51: #{_stage1.4} parent=5 // pred_fallthru
        _
      %p3674 = scmp.le.s32.totalorder 2, %s9
      // Predicated region
      $region68: #{_stage1.4} parent=5 // pred_check
        %p3675 = pneg %p3674
      $region69: #{_stage1.4} parent=5 // pred_check_branch
        %3677 = sbr.rel (%p3675) target = $region71
      $region70: #{_stage1.4} parent=5 // pred_region
        %s3678 = ssub.s32 %s9, 2
        // Predicated region
        $region72: #{_stage1.4} parent=70 // pred_check
          %p3679 = pneg %p141
        $region73: #{_stage1.4} parent=70 // pred_check_branch
          %3681 = sbr.rel (%p3679) target = $region75
        $region74: #{_stage1.4} parent=70 // pred_region
          %s3682 = smul.u32 32, %s22
          %s3683 = smul.u32 2, %s23
          %p3684 = scmp.lt.s32.totalorder %s3682, 95
          %s3685 = scalar_select %p3684, %s3682, 95
          %p3686 = scmp.lt.s32.totalorder %s3683, 1
          %s3687 = scalar_select %p3686, %s3683, 1
          %s3688 = smul.addr %s3685, 2
          %s3689 = sadd.s32 %s3687, %s3688
          %s3690 = smul.addr %s3689, 8
          %s3691 = scalar_lea.vmem %s3, %s3690
        $region75: #{_stage1.4} parent=70 // pred_fallthru
          _
      $region71: #{_stage1.4} parent=5 // pred_fallthru
        _
    $region6: #{_stage1.4} parent=1 // loop_footer
      %s13 = sadd.s32 1, %s9
    $region7: #{_stage1.4} parent=1 // loop_footer_branch
      %8 = sbr.rel target = $region3
    $region8: #{_stage1.4} parent=1 // loop_exit
      _

</llo_original>
